<compile_context>
chip_gen: v7x
topology: tpu7x:2x2x1
jax: 0.10.0
libtpu: 0.0.40
codegen_flags: <defaults>
</compile_context>

<pallas_src>
import functools

import jax
import jax.numpy as jnp
from jax.experimental import pallas as pl
from jax.experimental.pallas import tpu as pltpu


def _classifier_kernel(x_ref, w_ref, b_ref, o_ref, *scratch,
                       dilations, paddings, max_pad, h_out, w_out,
                       wp, tk, nk, cout_p, w_resident):
    """Grid = (batch, cin_tiles); Cin reduction axis last ("arbitrary").

    x_ref : [Hp*Wp, tk]                 zero-padded flattened NHWC slab (bf16)
    w_ref : resident [nb, 3, Cin, 3*cout_p] | streamed [nb, 3, tk, 3*cout_p]
    b_ref : [1, cout_p]                 summed biases (f32)
    o_ref : [H_out, W_out, cout_p]
    scratch (nk > 1 only): acc_ref [H_out*Wp, cout_p] f32
    """
    m_full = h_out * wp
    use_ds = w_resident and nk > 1
    if use_ds:
        kstart = pl.multiple_of(pl.program_id(1) * tk, tk)

    def tap_parts():
        """Yield one [m_full, cout_p] f32 partial per (branch, kh): a single
        wide MXU pass covers the 3 kw taps; each tap lands on its output
        column via an XLU sublane roll (no unaligned slices/stores)."""
        for bi, (dil, pad) in enumerate(zip(dilations, paddings)):
            base = max_pad - pad                                # static >= 0
            for kh in range(3):
                oh = base + kh * dil                            # static
                # Sublane-aligned window: whole W rows, H handled by offset.
                xm = x_ref[oh * wp:(oh + h_out) * wp, :]        # [m_full, tk]
                if use_ds:
                    wslab = w_ref[bi, kh, pl.ds(kstart, tk), :]
                else:
                    wslab = w_ref[bi, kh]                       # [tk, 3*cout_p]
                y = jnp.dot(xm, wslab, preferred_element_type=jnp.float32)
                part = None
                for kw in range(3):
                    ow = base + kw * dil                        # static
                    col = y[:, kw * cout_p:(kw + 1) * cout_p]   # lane-aligned
                    if ow:
                        col = pltpu.roll(col, shift=(-ow) % m_full, axis=0)
                    part = col if part is None else part + col
                yield part

    def write_output(acc):
        out = acc + b_ref[...].astype(jnp.float32)
        out = out.reshape(h_out, wp, cout_p)[:, :w_out, :]
        o_ref[...] = out.astype(o_ref.dtype)

    if nk == 1:
        # Single K chunk: no scratch, no init/finalize passes.
        total = None
        for part in tap_parts():
            total = part if total is None else total + part
        write_output(total)
    else:
        acc_ref = scratch[0]
        kidx = pl.program_id(1)

        @pl.when(kidx == 0)
        def _init():
            acc_ref[...] = jnp.zeros_like(acc_ref)

        for part in tap_parts():
            acc_ref[...] += part

        @pl.when(kidx == nk - 1)
        def _finalize():
            write_output(acc_ref[...])


def classifier_module_forward(x_nchw, weights, biases, dilations, paddings,
                              compute_dtype=jnp.bfloat16):
    """weights: [B, 3, 3, Cin, Cout], biases: [B, Cout], x_nchw: [N, Cin, H, W]."""
    dilations = tuple(int(d) for d in dilations)
    paddings = tuple(int(p) for p in paddings)
    n, cin, h, w = x_nchw.shape
    nb, kh3, kw3, cin_w, cout = weights.shape
    assert kh3 == 3 and kw3 == 3
    assert cin_w == cin and nb == len(dilations) == len(paddings)

    # Per-branch output size (stride 1, kernel 3): H + 2p - 2d; must all agree.
    outs = {(h + 2 * p - 2 * d, w + 2 * p - 2 * d)
            for d, p in zip(dilations, paddings)}
    assert len(outs) == 1, "branches must produce identical output shapes"
    h_out, w_out = outs.pop()
    assert h_out > 0 and w_out > 0

    max_pad = max(paddings)
    hp = h + 2 * max_pad
    wp = -(-(w + 2 * max_pad) // 8) * 8          # sublane-aligned padded width
    extra_w = wp - (w + 2 * max_pad)
    cout_p = -(-cout // 128) * 128               # lane-dense output channels

    # NCHW -> NHWC, halo zero-pad (+ W alignment pad), cast, flatten H*W.
    # TODO(synk): fold this pad/transpose into the kernel to save an HBM pass.
    x_nhwc = jnp.transpose(x_nchw, (0, 2, 3, 1))
    x_pad = jnp.pad(
        x_nhwc,
        ((0, 0), (max_pad, max_pad), (max_pad, max_pad + extra_w), (0, 0)),
    ).astype(compute_dtype)
    x_flat = x_pad.reshape(n, hp * wp, cin)

    # Fused-kw weight layout: [nb, kh, Cin, 3*cout_p] (kw taps concatenated on
    # the lane axis so one MXU pass covers all three taps).
    w_pad = jnp.pad(weights,
                    ((0, 0), (0, 0), (0, 0), (0, 0), (0, cout_p - cout)))
    w_fused = jnp.transpose(w_pad, (0, 1, 3, 2, 4)).reshape(
        nb, 3, cin, 3 * cout_p).astype(compute_dtype)

    # Each branch's bias is added exactly once to the summed output.
    b_sum = jnp.pad(biases.sum(axis=0).astype(jnp.float32),
                    (0, cout_p - cout)).reshape(1, cout_p)

    # ---------------- per-chip VMEM budget & tiling -------------------------
    try:
        vmem_cap = int(pltpu.get_tpu_info().vmem_capacity_bytes)
    except Exception:
        vmem_cap = 64 * 1024 * 1024              # conservative (v7x)
    budget = vmem_cap - (8 << 20)                # headroom for the compiler

    csz = jnp.dtype(compute_dtype).itemsize
    osz = jnp.dtype(x_nchw.dtype).itemsize
    full_w_bytes = nb * 3 * cin * 3 * cout_p * csz
    m_full = h_out * wp

    def cin_tile_candidates():
        if cin <= 512 or cin % 128 != 0:
            return [cin]
        cands = [t for t in (512, 384, 256, 128) if cin % t == 0]
        return cands or [cin]

    def footprint(tk, resident):
        x_blk = 2 * hp * wp * tk * csz                        # double-buffered
        w_blk = 2 * (full_w_bytes if resident
                     else nb * 3 * tk * 3 * cout_p * csz)
        o_blk = 2 * h_out * w_out * cout_p * osz
        acc = m_full * cout_p * 4
        tmp = m_full * (3 * cout_p + 2 * cout_p) * 4          # matmul/roll temps
        return x_blk + w_blk + o_blk + acc + tmp + cout_p * 8

    tks = cin_tile_candidates()

    def pick_tk(resident):
        for t in tks:
            if footprint(t, resident) <= budget:
                return t
        return None

    w_resident = True
    tk = pick_tk(True)
    if tk is None:
        w_resident = False
        tk = pick_tk(False) or tks[-1]
    nk = cin // tk

    need = footprint(tk, w_resident)
    vmem_limit = int(min(vmem_cap - (2 << 20), max(need * 1.25, 16 << 20)))

    kernel = functools.partial(
        _classifier_kernel,
        dilations=dilations, paddings=paddings, max_pad=max_pad,
        h_out=h_out, w_out=w_out, wp=wp, tk=tk, nk=nk, cout_p=cout_p,
        w_resident=w_resident)

    if w_resident:
        # Constant index_map: DMA'd once, stays resident across the grid.
        w_spec = pl.BlockSpec((nb, 3, cin, 3 * cout_p),
                              lambda i, kidx: (0, 0, 0, 0))
    else:
        w_spec = pl.BlockSpec((nb, 3, tk, 3 * cout_p),
                              lambda i, kidx: (0, 0, kidx, 0))

    scratch_shapes = []
    if nk > 1:
        scratch_shapes.append(pltpu.VMEM((m_full, cout_p), jnp.float32))

    out_nhwc = pl.pallas_call(
        kernel,
        out_shape=jax.ShapeDtypeStruct((n, h_out, w_out, cout_p), x_nchw.dtype),
        grid_spec=pltpu.PrefetchScalarGridSpec(
            num_scalar_prefetch=0,
            grid=(n, nk),
            in_specs=[
                pl.BlockSpec((None, hp * wp, tk), lambda i, kidx: (i, 0, kidx)),
                w_spec,
                pl.BlockSpec((1, cout_p), lambda i, kidx: (0, 0)),
            ],
            out_specs=pl.BlockSpec((None, h_out, w_out, cout_p),
                                   lambda i, kidx: (i, 0, 0, 0)),
            scratch_shapes=scratch_shapes,
        ),
        compiler_params=pltpu.CompilerParams(
            dimension_semantics=("parallel", "arbitrary"),
            vmem_limit_bytes=vmem_limit),
    )(x_flat, w_fused, b_sum)

    # Drop lane padding, back to NCHW.
    return jnp.transpose(out_nhwc[..., :cout], (0, 3, 1, 2))


def _reference_forward(x_nchw, weights, biases, dilations, paddings):
    """Plain-JAX reference (lax conv) for correctness checking."""
    out = None
    for bi, (d, p) in enumerate(zip(dilations, paddings)):
        w_oihw = jnp.transpose(weights[bi], (3, 2, 0, 1))
        y = jax.lax.conv_general_dilated(
            x_nchw, w_oihw,
            window_strides=(1, 1),
            padding=((p, p), (p, p)),
            rhs_dilation=(d, d),
            dimension_numbers=("NCHW", "OIHW", "NCHW"))
        y = y + biases[bi][None, :, None, None]
        out = y if out is None else out + y
    return out


if __name__ == "__main__":
    # Module configuration (standard ASPP-like head, shrunk for the example).
    inplanes = 4
    num_classes = 5
    dilation_series = [1, 2, 4]
    padding_series = [1, 2, 4]
    n_branch = len(dilation_series)

    key = jax.random.PRNGKey(0)
    kx, kwt, kb = jax.random.split(key, 3)
    # Kernel-layout weights: [B, 3, 3, Cin, Cout] (weight.data.normal_(0, 0.01)).
    weights = 0.01 * jax.random.normal(
        kwt, (n_branch, 3, 3, inplanes, num_classes), dtype=jnp.float32)
    biases = 0.1 * jax.random.normal(kb, (n_branch, num_classes),
                                     dtype=jnp.float32)

    # Input: PyTorch NCHW, small shapes.
    x = jax.random.normal(kx, (2, inplanes, 16, 16), dtype=jnp.float32)

    out = classifier_module_forward(x, weights, biases,
                                    dilation_series, padding_series)
    out = jax.block_until_ready(out)

    ref = _reference_forward(x, weights, biases,
                             dilation_series, padding_series)
    assert out.shape == ref.shape == (2, num_classes, 16, 16)
    # bf16 MXU inputs with f32 accumulation: tolerance accounts for bf16 error.
    assert jnp.allclose(out, ref, atol=1e-2, rtol=5e-2), "mismatch vs reference"

    print("KERNEL_OK")
</pallas_src>

<mosaic_0001>
module attributes {stable_mosaic.version = 11 : i64} {
  func.func @_classifier_kernel(%arg0: i32, %arg1: i32, %arg2: memref<1x576x4xbf16, #tpu.memory_space<vmem>>, %arg3: memref<3x3x4x384xbf16, #tpu.memory_space<vmem>>, %arg4: memref<1x128xf32, #tpu.memory_space<vmem>>, %arg5: memref<1x16x16x128xf32, #tpu.memory_space<vmem>>) attributes {dimension_semantics = [#tpu.dimension_semantics<parallel>, #tpu.dimension_semantics<arbitrary>], iteration_bounds = array<i64: 2, 1>, scalar_prefetch = 0 : i64, scratch_operands = 0 : i64, tpu.core_type = #tpu.core_type<tc>, window_params = [{transform_indices = @transform_0, window_bounds = array<i64: 1, 576, 4>}, {pipeline_mode = #tpu.pipeline_mode<synchronous>, transform_indices = @transform_1, window_bounds = array<i64: 3, 3, 4, 384>}, {pipeline_mode = #tpu.pipeline_mode<synchronous>, transform_indices = @transform_2, window_bounds = array<i64: 1, 128>}, {transform_indices = @transform_3, window_bounds = array<i64: 1, 16, 16, 128>}]} {
    %c0 = arith.constant 0 : index
    %c72 = arith.constant 72 : index
    %c0_0 = arith.constant 0 : index
    %0 = vector.load %arg2[%c0, %c72, %c0_0] : memref<1x576x4xbf16, #tpu.memory_space<vmem>>, vector<1x384x4xbf16>
    %1 = vector.shape_cast %0 : vector<1x384x4xbf16> to vector<384x4xbf16>
    %c0_1 = arith.constant 0 : index
    %c0_2 = arith.constant 0 : index
    %c0_3 = arith.constant 0 : index
    %c0_4 = arith.constant 0 : index
    %2 = vector.load %arg3[%c0_1, %c0_2, %c0_3, %c0_4] : memref<3x3x4x384xbf16, #tpu.memory_space<vmem>>, vector<1x1x4x384xbf16>
    %3 = vector.shape_cast %2 : vector<1x1x4x384xbf16> to vector<4x384xbf16>
    %cst = arith.constant dense<0.000000e+00> : vector<384x384xf32>
    %4 = tpu.matmul %1, %3, %cst {dimension_numbers = #tpu.dot_dimension_numbers<[1], [0], [0], [1], [0, 0, 1, 1], [], []>} : vector<384x4xbf16>, vector<4x384xbf16>, vector<384x384xf32> -> vector<384x384xf32>
    %5 = vector.extract_strided_slice %4 {offsets = [0, 0], sizes = [384, 128], strides = [1, 1]} : vector<384x384xf32> to vector<384x128xf32>
    %c381_i32 = arith.constant 381 : i32
    %6 = tpu.dynamic_rotate %5 by %c381_i32 dim 0 : vector<384x128xf32>, i32 -> vector<384x128xf32>
    %7 = vector.extract_strided_slice %4 {offsets = [0, 128], sizes = [384, 128], strides = [1, 1]} : vector<384x384xf32> to vector<384x128xf32>
    %c380_i32 = arith.constant 380 : i32
    %8 = tpu.dynamic_rotate %7 by %c380_i32 dim 0 : vector<384x128xf32>, i32 -> vector<384x128xf32>
    %9 = arith.addf %6, %8 : vector<384x128xf32>
    %10 = vector.extract_strided_slice %4 {offsets = [0, 256], sizes = [384, 128], strides = [1, 1]} : vector<384x384xf32> to vector<384x128xf32>
    %c379_i32 = arith.constant 379 : i32
    %11 = tpu.dynamic_rotate %10 by %c379_i32 dim 0 : vector<384x128xf32>, i32 -> vector<384x128xf32>
    %12 = arith.addf %9, %11 : vector<384x128xf32>
    %c0_5 = arith.constant 0 : index
    %c96 = arith.constant 96 : index
    %c0_6 = arith.constant 0 : index
    %13 = vector.load %arg2[%c0_5, %c96, %c0_6] : memref<1x576x4xbf16, #tpu.memory_space<vmem>>, vector<1x384x4xbf16>
    %14 = vector.shape_cast %13 : vector<1x384x4xbf16> to vector<384x4xbf16>
    %c0_7 = arith.constant 0 : index
    %c1 = arith.constant 1 : index
    %c0_8 = arith.constant 0 : index
    %c0_9 = arith.constant 0 : index
    %15 = vector.load %arg3[%c0_7, %c1, %c0_8, %c0_9] : memref<3x3x4x384xbf16, #tpu.memory_space<vmem>>, vector<1x1x4x384xbf16>
    %16 = vector.shape_cast %15 : vector<1x1x4x384xbf16> to vector<4x384xbf16>
    %cst_10 = arith.constant dense<0.000000e+00> : vector<384x384xf32>
    %17 = tpu.matmul %14, %16, %cst_10 {dimension_numbers = #tpu.dot_dimension_numbers<[1], [0], [0], [1], [0, 0, 1, 1], [], []>} : vector<384x4xbf16>, vector<4x384xbf16>, vector<384x384xf32> -> vector<384x384xf32>
    %18 = vector.extract_strided_slice %17 {offsets = [0, 0], sizes = [384, 128], strides = [1, 1]} : vector<384x384xf32> to vector<384x128xf32>
    %c381_i32_11 = arith.constant 381 : i32
    %19 = tpu.dynamic_rotate %18 by %c381_i32_11 dim 0 : vector<384x128xf32>, i32 -> vector<384x128xf32>
    %20 = vector.extract_strided_slice %17 {offsets = [0, 128], sizes = [384, 128], strides = [1, 1]} : vector<384x384xf32> to vector<384x128xf32>
    %c380_i32_12 = arith.constant 380 : i32
    %21 = tpu.dynamic_rotate %20 by %c380_i32_12 dim 0 : vector<384x128xf32>, i32 -> vector<384x128xf32>
    %22 = arith.addf %19, %21 : vector<384x128xf32>
    %23 = vector.extract_strided_slice %17 {offsets = [0, 256], sizes = [384, 128], strides = [1, 1]} : vector<384x384xf32> to vector<384x128xf32>
    %c379_i32_13 = arith.constant 379 : i32
    %24 = tpu.dynamic_rotate %23 by %c379_i32_13 dim 0 : vector<384x128xf32>, i32 -> vector<384x128xf32>
    %25 = arith.addf %22, %24 : vector<384x128xf32>
    %26 = arith.addf %12, %25 : vector<384x128xf32>
    %c0_14 = arith.constant 0 : index
    %c120 = arith.constant 120 : index
    %c0_15 = arith.constant 0 : index
    %27 = vector.load %arg2[%c0_14, %c120, %c0_15] : memref<1x576x4xbf16, #tpu.memory_space<vmem>>, vector<1x384x4xbf16>
    %28 = vector.shape_cast %27 : vector<1x384x4xbf16> to vector<384x4xbf16>
    %c0_16 = arith.constant 0 : index
    %c2 = arith.constant 2 : index
    %c0_17 = arith.constant 0 : index
    %c0_18 = arith.constant 0 : index
    %29 = vector.load %arg3[%c0_16, %c2, %c0_17, %c0_18] : memref<3x3x4x384xbf16, #tpu.memory_space<vmem>>, vector<1x1x4x384xbf16>
    %30 = vector.shape_cast %29 : vector<1x1x4x384xbf16> to vector<4x384xbf16>
    %cst_19 = arith.constant dense<0.000000e+00> : vector<384x384xf32>
    %31 = tpu.matmul %28, %30, %cst_19 {dimension_numbers = #tpu.dot_dimension_numbers<[1], [0], [0], [1], [0, 0, 1, 1], [], []>} : vector<384x4xbf16>, vector<4x384xbf16>, vector<384x384xf32> -> vector<384x384xf32>
    %32 = vector.extract_strided_slice %31 {offsets = [0, 0], sizes = [384, 128], strides = [1, 1]} : vector<384x384xf32> to vector<384x128xf32>
    %c381_i32_20 = arith.constant 381 : i32
    %33 = tpu.dynamic_rotate %32 by %c381_i32_20 dim 0 : vector<384x128xf32>, i32 -> vector<384x128xf32>
    %34 = vector.extract_strided_slice %31 {offsets = [0, 128], sizes = [384, 128], strides = [1, 1]} : vector<384x384xf32> to vector<384x128xf32>
    %c380_i32_21 = arith.constant 380 : i32
    %35 = tpu.dynamic_rotate %34 by %c380_i32_21 dim 0 : vector<384x128xf32>, i32 -> vector<384x128xf32>
    %36 = arith.addf %33, %35 : vector<384x128xf32>
    %37 = vector.extract_strided_slice %31 {offsets = [0, 256], sizes = [384, 128], strides = [1, 1]} : vector<384x384xf32> to vector<384x128xf32>
    %c379_i32_22 = arith.constant 379 : i32
    %38 = tpu.dynamic_rotate %37 by %c379_i32_22 dim 0 : vector<384x128xf32>, i32 -> vector<384x128xf32>
    %39 = arith.addf %36, %38 : vector<384x128xf32>
    %40 = arith.addf %26, %39 : vector<384x128xf32>
    %c0_23 = arith.constant 0 : index
    %c48 = arith.constant 48 : index
    %c0_24 = arith.constant 0 : index
    %41 = vector.load %arg2[%c0_23, %c48, %c0_24] : memref<1x576x4xbf16, #tpu.memory_space<vmem>>, vector<1x384x4xbf16>
    %42 = vector.shape_cast %41 : vector<1x384x4xbf16> to vector<384x4xbf16>
    %c1_25 = arith.constant 1 : index
    %c0_26 = arith.constant 0 : index
    %c0_27 = arith.constant 0 : index
    %c0_28 = arith.constant 0 : index
    %43 = vector.load %arg3[%c1_25, %c0_26, %c0_27, %c0_28] : memref<3x3x4x384xbf16, #tpu.memory_space<vmem>>, vector<1x1x4x384xbf16>
    %44 = vector.shape_cast %43 : vector<1x1x4x384xbf16> to vector<4x384xbf16>
    %cst_29 = arith.constant dense<0.000000e+00> : vector<384x384xf32>
    %45 = tpu.matmul %42, %44, %cst_29 {dimension_numbers = #tpu.dot_dimension_numbers<[1], [0], [0], [1], [0, 0, 1, 1], [], []>} : vector<384x4xbf16>, vector<4x384xbf16>, vector<384x384xf32> -> vector<384x384xf32>
    %46 = vector.extract_strided_slice %45 {offsets = [0, 0], sizes = [384, 128], strides = [1, 1]} : vector<384x384xf32> to vector<384x128xf32>
    %c382_i32 = arith.constant 382 : i32
    %47 = tpu.dynamic_rotate %46 by %c382_i32 dim 0 : vector<384x128xf32>, i32 -> vector<384x128xf32>
    %48 = vector.extract_strided_slice %45 {offsets = [0, 128], sizes = [384, 128], strides = [1, 1]} : vector<384x384xf32> to vector<384x128xf32>
    %c380_i32_30 = arith.constant 380 : i32
    %49 = tpu.dynamic_rotate %48 by %c380_i32_30 dim 0 : vector<384x128xf32>, i32 -> vector<384x128xf32>
    %50 = arith.addf %47, %49 : vector<384x128xf32>
    %51 = vector.extract_strided_slice %45 {offsets = [0, 256], sizes = [384, 128], strides = [1, 1]} : vector<384x384xf32> to vector<384x128xf32>
    %c378_i32 = arith.constant 378 : i32
    %52 = tpu.dynamic_rotate %51 by %c378_i32 dim 0 : vector<384x128xf32>, i32 -> vector<384x128xf32>
    %53 = arith.addf %50, %52 : vector<384x128xf32>
    %54 = arith.addf %40, %53 : vector<384x128xf32>
    %c0_31 = arith.constant 0 : index
    %c96_32 = arith.constant 96 : index
    %c0_33 = arith.constant 0 : index
    %55 = vector.load %arg2[%c0_31, %c96_32, %c0_33] : memref<1x576x4xbf16, #tpu.memory_space<vmem>>, vector<1x384x4xbf16>
    %56 = vector.shape_cast %55 : vector<1x384x4xbf16> to vector<384x4xbf16>
    %c1_34 = arith.constant 1 : index
    %c1_35 = arith.constant 1 : index
    %c0_36 = arith.constant 0 : index
    %c0_37 = arith.constant 0 : index
    %57 = vector.load %arg3[%c1_34, %c1_35, %c0_36, %c0_37] : memref<3x3x4x384xbf16, #tpu.memory_space<vmem>>, vector<1x1x4x384xbf16>
    %58 = vector.shape_cast %57 : vector<1x1x4x384xbf16> to vector<4x384xbf16>
    %cst_38 = arith.constant dense<0.000000e+00> : vector<384x384xf32>
    %59 = tpu.matmul %56, %58, %cst_38 {dimension_numbers = #tpu.dot_dimension_numbers<[1], [0], [0], [1], [0, 0, 1, 1], [], []>} : vector<384x4xbf16>, vector<4x384xbf16>, vector<384x384xf32> -> vector<384x384xf32>
    %60 = vector.extract_strided_slice %59 {offsets = [0, 0], sizes = [384, 128], strides = [1, 1]} : vector<384x384xf32> to vector<384x128xf32>
    %c382_i32_39 = arith.constant 382 : i32
    %61 = tpu.dynamic_rotate %60 by %c382_i32_39 dim 0 : vector<384x128xf32>, i32 -> vector<384x128xf32>
    %62 = vector.extract_strided_slice %59 {offsets = [0, 128], sizes = [384, 128], strides = [1, 1]} : vector<384x384xf32> to vector<384x128xf32>
    %c380_i32_40 = arith.constant 380 : i32
    %63 = tpu.dynamic_rotate %62 by %c380_i32_40 dim 0 : vector<384x128xf32>, i32 -> vector<384x128xf32>
    %64 = arith.addf %61, %63 : vector<384x128xf32>
    %65 = vector.extract_strided_slice %59 {offsets = [0, 256], sizes = [384, 128], strides = [1, 1]} : vector<384x384xf32> to vector<384x128xf32>
    %c378_i32_41 = arith.constant 378 : i32
    %66 = tpu.dynamic_rotate %65 by %c378_i32_41 dim 0 : vector<384x128xf32>, i32 -> vector<384x128xf32>
    %67 = arith.addf %64, %66 : vector<384x128xf32>
    %68 = arith.addf %54, %67 : vector<384x128xf32>
    %c0_42 = arith.constant 0 : index
    %c144 = arith.constant 144 : index
    %c0_43 = arith.constant 0 : index
    %69 = vector.load %arg2[%c0_42, %c144, %c0_43] : memref<1x576x4xbf16, #tpu.memory_space<vmem>>, vector<1x384x4xbf16>
    %70 = vector.shape_cast %69 : vector<1x384x4xbf16> to vector<384x4xbf16>
    %c1_44 = arith.constant 1 : index
    %c2_45 = arith.constant 2 : index
    %c0_46 = arith.constant 0 : index
    %c0_47 = arith.constant 0 : index
    %71 = vector.load %arg3[%c1_44, %c2_45, %c0_46, %c0_47] : memref<3x3x4x384xbf16, #tpu.memory_space<vmem>>, vector<1x1x4x384xbf16>
    %72 = vector.shape_cast %71 : vector<1x1x4x384xbf16> to vector<4x384xbf16>
    %cst_48 = arith.constant dense<0.000000e+00> : vector<384x384xf32>
    %73 = tpu.matmul %70, %72, %cst_48 {dimension_numbers = #tpu.dot_dimension_numbers<[1], [0], [0], [1], [0, 0, 1, 1], [], []>} : vector<384x4xbf16>, vector<4x384xbf16>, vector<384x384xf32> -> vector<384x384xf32>
    %74 = vector.extract_strided_slice %73 {offsets = [0, 0], sizes = [384, 128], strides = [1, 1]} : vector<384x384xf32> to vector<384x128xf32>
    %c382_i32_49 = arith.constant 382 : i32
    %75 = tpu.dynamic_rotate %74 by %c382_i32_49 dim 0 : vector<384x128xf32>, i32 -> vector<384x128xf32>
    %76 = vector.extract_strided_slice %73 {offsets = [0, 128], sizes = [384, 128], strides = [1, 1]} : vector<384x384xf32> to vector<384x128xf32>
    %c380_i32_50 = arith.constant 380 : i32
    %77 = tpu.dynamic_rotate %76 by %c380_i32_50 dim 0 : vector<384x128xf32>, i32 -> vector<384x128xf32>
    %78 = arith.addf %75, %77 : vector<384x128xf32>
    %79 = vector.extract_strided_slice %73 {offsets = [0, 256], sizes = [384, 128], strides = [1, 1]} : vector<384x384xf32> to vector<384x128xf32>
    %c378_i32_51 = arith.constant 378 : i32
    %80 = tpu.dynamic_rotate %79 by %c378_i32_51 dim 0 : vector<384x128xf32>, i32 -> vector<384x128xf32>
    %81 = arith.addf %78, %80 : vector<384x128xf32>
    %82 = arith.addf %68, %81 : vector<384x128xf32>
    %c0_52 = arith.constant 0 : index
    %c0_53 = arith.constant 0 : index
    %c0_54 = arith.constant 0 : index
    %83 = vector.load %arg2[%c0_52, %c0_53, %c0_54] : memref<1x576x4xbf16, #tpu.memory_space<vmem>>, vector<1x384x4xbf16>
    %84 = vector.shape_cast %83 : vector<1x384x4xbf16> to vector<384x4xbf16>
    %c2_55 = arith.constant 2 : index
    %c0_56 = arith.constant 0 : index
    %c0_57 = arith.constant 0 : index
    %c0_58 = arith.constant 0 : index
    %85 = vector.load %arg3[%c2_55, %c0_56, %c0_57, %c0_58] : memref<3x3x4x384xbf16, #tpu.memory_space<vmem>>, vector<1x1x4x384xbf16>
    %86 = vector.shape_cast %85 : vector<1x1x4x384xbf16> to vector<4x384xbf16>
    %cst_59 = arith.constant dense<0.000000e+00> : vector<384x384xf32>
    %87 = tpu.matmul %84, %86, %cst_59 {dimension_numbers = #tpu.dot_dimension_numbers<[1], [0], [0], [1], [0, 0, 1, 1], [], []>} : vector<384x4xbf16>, vector<4x384xbf16>, vector<384x384xf32> -> vector<384x384xf32>
    %88 = vector.extract_strided_slice %87 {offsets = [0, 0], sizes = [384, 128], strides = [1, 1]} : vector<384x384xf32> to vector<384x128xf32>
    %89 = vector.extract_strided_slice %87 {offsets = [0, 128], sizes = [384, 128], strides = [1, 1]} : vector<384x384xf32> to vector<384x128xf32>
    %c380_i32_60 = arith.constant 380 : i32
    %90 = tpu.dynamic_rotate %89 by %c380_i32_60 dim 0 : vector<384x128xf32>, i32 -> vector<384x128xf32>
    %91 = arith.addf %88, %90 : vector<384x128xf32>
    %92 = vector.extract_strided_slice %87 {offsets = [0, 256], sizes = [384, 128], strides = [1, 1]} : vector<384x384xf32> to vector<384x128xf32>
    %c376_i32 = arith.constant 376 : i32
    %93 = tpu.dynamic_rotate %92 by %c376_i32 dim 0 : vector<384x128xf32>, i32 -> vector<384x128xf32>
    %94 = arith.addf %91, %93 : vector<384x128xf32>
    %95 = arith.addf %82, %94 : vector<384x128xf32>
    %c0_61 = arith.constant 0 : index
    %c96_62 = arith.constant 96 : index
    %c0_63 = arith.constant 0 : index
    %96 = vector.load %arg2[%c0_61, %c96_62, %c0_63] : memref<1x576x4xbf16, #tpu.memory_space<vmem>>, vector<1x384x4xbf16>
    %97 = vector.shape_cast %96 : vector<1x384x4xbf16> to vector<384x4xbf16>
    %c2_64 = arith.constant 2 : index
    %c1_65 = arith.constant 1 : index
    %c0_66 = arith.constant 0 : index
    %c0_67 = arith.constant 0 : index
    %98 = vector.load %arg3[%c2_64, %c1_65, %c0_66, %c0_67] : memref<3x3x4x384xbf16, #tpu.memory_space<vmem>>, vector<1x1x4x384xbf16>
    %99 = vector.shape_cast %98 : vector<1x1x4x384xbf16> to vector<4x384xbf16>
    %cst_68 = arith.constant dense<0.000000e+00> : vector<384x384xf32>
    %100 = tpu.matmul %97, %99, %cst_68 {dimension_numbers = #tpu.dot_dimension_numbers<[1], [0], [0], [1], [0, 0, 1, 1], [], []>} : vector<384x4xbf16>, vector<4x384xbf16>, vector<384x384xf32> -> vector<384x384xf32>
    %101 = vector.extract_strided_slice %100 {offsets = [0, 0], sizes = [384, 128], strides = [1, 1]} : vector<384x384xf32> to vector<384x128xf32>
    %102 = vector.extract_strided_slice %100 {offsets = [0, 128], sizes = [384, 128], strides = [1, 1]} : vector<384x384xf32> to vector<384x128xf32>
    %c380_i32_69 = arith.constant 380 : i32
    %103 = tpu.dynamic_rotate %102 by %c380_i32_69 dim 0 : vector<384x128xf32>, i32 -> vector<384x128xf32>
    %104 = arith.addf %101, %103 : vector<384x128xf32>
    %105 = vector.extract_strided_slice %100 {offsets = [0, 256], sizes = [384, 128], strides = [1, 1]} : vector<384x384xf32> to vector<384x128xf32>
    %c376_i32_70 = arith.constant 376 : i32
    %106 = tpu.dynamic_rotate %105 by %c376_i32_70 dim 0 : vector<384x128xf32>, i32 -> vector<384x128xf32>
    %107 = arith.addf %104, %106 : vector<384x128xf32>
    %108 = arith.addf %95, %107 : vector<384x128xf32>
    %c0_71 = arith.constant 0 : index
    %c192 = arith.constant 192 : index
    %c0_72 = arith.constant 0 : index
    %109 = vector.load %arg2[%c0_71, %c192, %c0_72] : memref<1x576x4xbf16, #tpu.memory_space<vmem>>, vector<1x384x4xbf16>
    %110 = vector.shape_cast %109 : vector<1x384x4xbf16> to vector<384x4xbf16>
    %c2_73 = arith.constant 2 : index
    %c2_74 = arith.constant 2 : index
    %c0_75 = arith.constant 0 : index
    %c0_76 = arith.constant 0 : index
    %111 = vector.load %arg3[%c2_73, %c2_74, %c0_75, %c0_76] : memref<3x3x4x384xbf16, #tpu.memory_space<vmem>>, vector<1x1x4x384xbf16>
    %112 = vector.shape_cast %111 : vector<1x1x4x384xbf16> to vector<4x384xbf16>
    %cst_77 = arith.constant dense<0.000000e+00> : vector<384x384xf32>
    %113 = tpu.matmul %110, %112, %cst_77 {dimension_numbers = #tpu.dot_dimension_numbers<[1], [0], [0], [1], [0, 0, 1, 1], [], []>} : vector<384x4xbf16>, vector<4x384xbf16>, vector<384x384xf32> -> vector<384x384xf32>
    %114 = vector.extract_strided_slice %113 {offsets = [0, 0], sizes = [384, 128], strides = [1, 1]} : vector<384x384xf32> to vector<384x128xf32>
    %115 = vector.extract_strided_slice %113 {offsets = [0, 128], sizes = [384, 128], strides = [1, 1]} : vector<384x384xf32> to vector<384x128xf32>
    %c380_i32_78 = arith.constant 380 : i32
    %116 = tpu.dynamic_rotate %115 by %c380_i32_78 dim 0 : vector<384x128xf32>, i32 -> vector<384x128xf32>
    %117 = arith.addf %114, %116 : vector<384x128xf32>
    %118 = vector.extract_strided_slice %113 {offsets = [0, 256], sizes = [384, 128], strides = [1, 1]} : vector<384x384xf32> to vector<384x128xf32>
    %c376_i32_79 = arith.constant 376 : i32
    %119 = tpu.dynamic_rotate %118 by %c376_i32_79 dim 0 : vector<384x128xf32>, i32 -> vector<384x128xf32>
    %120 = arith.addf %117, %119 : vector<384x128xf32>
    %121 = arith.addf %108, %120 : vector<384x128xf32>
    %c0_80 = arith.constant 0 : index
    %c0_81 = arith.constant 0 : index
    %122 = vector.load %arg4[%c0_80, %c0_81] : memref<1x128xf32, #tpu.memory_space<vmem>>, vector<1x128xf32>
    %123 = vector.broadcast %122 : vector<1x128xf32> to vector<384x128xf32>
    %124 = arith.addf %121, %123 : vector<384x128xf32>
    %125 = vector.shape_cast %124 : vector<384x128xf32> to vector<16x24x128xf32>
    %126 = vector.extract_strided_slice %125 {offsets = [0, 0, 0], sizes = [16, 16, 128], strides = [1, 1, 1]} : vector<16x24x128xf32> to vector<16x16x128xf32>
    %c0_82 = arith.constant 0 : index
    %c0_83 = arith.constant 0 : index
    %c0_84 = arith.constant 0 : index
    %c0_85 = arith.constant 0 : index
    %127 = vector.load %arg5[%c0_82, %c0_83, %c0_84, %c0_85] : memref<1x16x16x128xf32, #tpu.memory_space<vmem>>, vector<1x16x16x128xf32>
    %128 = vector.shape_cast %127 : vector<1x16x16x128xf32> to vector<16x16x128xf32>
    %129 = vector.shape_cast %126 : vector<16x16x128xf32> to vector<1x16x16x128xf32>
    tpu.vector_store %arg5[%c0_82, %c0_83, %c0_84, %c0_85], %129 {strides = array<i32>} : memref<1x16x16x128xf32, #tpu.memory_space<vmem>>, vector<1x16x16x128xf32>,
    return
  }
  func.func @transform_0(%arg0: i32, %arg1: i32) -> (i32, i32, i32) {
    %c0_i32 = arith.constant 0 : i32
    %c0_i32_0 = arith.constant 0 : i32
    return %arg0, %c0_i32, %arg1 : i32, i32, i32
  }
  func.func @transform_1(%arg0: i32, %arg1: i32) -> (i32, i32, i32, i32) {
    %c0_i32 = arith.constant 0 : i32
    %c0_i32_0 = arith.constant 0 : i32
    %c0_i32_1 = arith.constant 0 : i32
    %c0_i32_2 = arith.constant 0 : i32
    %c0_i32_3 = arith.constant 0 : i32
    return %c0_i32, %c0_i32_0, %c0_i32_1, %c0_i32_2 : i32, i32, i32, i32
  }
  func.func @transform_2(%arg0: i32, %arg1: i32) -> (i32, i32) {
    %c0_i32 = arith.constant 0 : i32
    %c0_i32_0 = arith.constant 0 : i32
    %c0_i32_1 = arith.constant 0 : i32
    return %c0_i32, %c0_i32_0 : i32, i32
  }
  func.func @transform_3(%arg0: i32, %arg1: i32) -> (i32, i32, i32, i32) {
    %c0_i32 = arith.constant 0 : i32
    %c0_i32_0 = arith.constant 0 : i32
    %c0_i32_1 = arith.constant 0 : i32
    %c0_i32_2 = arith.constant 0 : i32
    return %arg0, %c0_i32, %c0_i32_0, %c0_i32_1 : i32, i32, i32, i32
  }
}

</mosaic_0001>

<llo_original>
// kernel: tpu_custom_call.1
$region0: #{tpu_custom_call.1}
  #allocation0 [shape = 'u32[]', space=smem, size = 0x4, offset = 0x4, fixed_abs, tag = 'smem constant byte address 0x4 - core index']
  #allocation1 [shape = 'u32[144,128]{1,0:T(1,128)}', space=vmem, size = 0x12000, scoped, tag = 'internal scratch']
  %s0 = inlined_call_operand.vmem [shape: bf16[2,576,4], index: 0, kind: input, shape index: {}]
  %s1 = inlined_call_operand.vmem [shape: bf16[3,3,4,384], index: 1, kind: input, shape index: {}]
  %s2 = inlined_call_operand.vmem [shape: f32[1,128], index: 2, kind: input, shape index: {}]
  %s3 = inlined_call_operand.hbm [shape: f32[2,16,16,128], index: 3, kind: output, shape index: {}]
  %s4 = sld [smem:[#allocation0]]
  $region45: #{tpu_custom_call.1} parent=0
    _
  %s6 = ssub.s32 1, %s4
  %s7 = scalar_select 0, %s6, %s4
  $region1: #{tpu_custom_call.1} parent=0
    #allocation2 [shape = 'u8[262144]{0}', space=vmem, size = 0x40000, scoped, tag = 'output window, operand 0']
    #allocation3 [shape = 's32[2]{0}', space=sflag, size = 0x8, scoped, tag = 'scoped memory for tpu_custom_call.1']
    %8 = vsyncpa [#allocation3], 0
    %s9 = scalar_lea.sflag [#allocation3], 1
    %10 = vsyncpa %s9, 0
    loop: start=0, step=1, limit=4
    $region2: #{tpu_custom_call.1} parent=1 // loop_pre_header
      _
    $region3: #{tpu_custom_call.1} parent=1 // loop_header
      %s12 = sphi 0, %s16
      %p13 = scmp.ge.s32.totalorder %s12, 4
      %s19 = sphi 0, %s31
      %s20 = sphi 0, %s27
      %s21 = sphi 0, %s19
      %s22 = sphi 0, %s20
      %s23 = sphi 0, %s21
      %s24 = sphi 0, %s22
      %s36 = sphi 0, %s38
      %s39 = sphi 0, %s36
      %s40 = sphi 0, %s39
      %s56 = sphi 0, %s40
      %s60 = sphi 0, %s60
      %s62 = sphi 0, %s60
      %s63 = sphi 0, %s62
      %s77 = sphi 0, %s63
      %s81 = sphi 0, %s81
      %s83 = sphi 0, %s81
      %s84 = sphi 0, %s83
      %s98 = sphi 0, %s84
      %s104 = sphi 0, %s106
      %s107 = sphi 0, %s104
      %s108 = sphi 0, %s107
      %s124 = sphi 0, %s108
    $region4: #{tpu_custom_call.1} parent=1 // loop_header_branch
      %15 = sbr.rel (%p13) target = $region8
    $region5: #{tpu_custom_call.1} parent=1 // loop_body
      %s17 = ssub.s32 %s12, 1
      %s18 = ssub.s32 %s12, 2
      %s25 = sadd.s32 1, %s20
      %p26 = scmp.ge.s32.totalorder %s25, 1
      %s27 = scalar_select %p26, 0, %s25
      %s28 = sadd.s32 1, %s19
      %s29 = scalar_select %p26, %s28, %s19
      %p30 = scmp.ge.s32.totalorder %s29, 2
      %s31 = scalar_select %p30, 0, %s29
      %s32 = ssub.s32 %s19, %s31
      %s33 = ssub.s32 %s20, %s27
      %s34 = sor.u32 %s32, %s33
      %p35 = scmp.eq.s32.totalorder %s34, 0
      %s37 = sadd.s32 %s36, 1
      %s38 = scalar_select %p35, %s36, %s37
      %p41 = pneg %p35
      %p42 = scmp.eq.s32.totalorder %s12, 1
      %p43 = por %p41, %p42
      %p44 = scmp.ne.s32.totalorder %s36, %s39
      %p45 = scmp.eq.s32.totalorder %s12, 0
      %p46 = por %p44, %p45
      %p47 = scmp.ne.s32.totalorder %s36, %s39
      %p48 = scmp.eq.s32.totalorder %s17, 1
      %p49 = por %p47, %p48
      %p50 = scmp.ne.s32.totalorder %s39, %s40
      %p51 = scmp.eq.s32.totalorder %s17, 0
      %p52 = por %p50, %p51
      %p53 = scmp.ne.s32.totalorder %s39, %s40
      %p54 = scmp.eq.s32.totalorder %s18, 1
      %p55 = por %p53, %p54
      %p57 = scmp.ne.s32.totalorder %s40, %s56
      %p58 = scmp.eq.s32.totalorder %s18, 0
      %p59 = por %p57, %p58
      %s61 = sadd.s32 %s60, 1
      %p64 = scmp.eq.s32.totalorder %s12, 1
      %p65 = scmp.ne.s32.totalorder %s60, %s62
      %p66 = scmp.eq.s32.totalorder %s12, 0
      %p67 = por %p65, %p66
      %p68 = scmp.ne.s32.totalorder %s60, %s62
      %p69 = scmp.eq.s32.totalorder %s17, 1
      %p70 = por %p68, %p69
      %p71 = scmp.ne.s32.totalorder %s62, %s63
      %p72 = scmp.eq.s32.totalorder %s17, 0
      %p73 = por %p71, %p72
      %p74 = scmp.ne.s32.totalorder %s62, %s63
      %p75 = scmp.eq.s32.totalorder %s18, 1
      %p76 = por %p74, %p75
      %p78 = scmp.ne.s32.totalorder %s63, %s77
      %p79 = scmp.eq.s32.totalorder %s18, 0
      %p80 = por %p78, %p79
      %s82 = sadd.s32 %s81, 1
      %p85 = scmp.eq.s32.totalorder %s12, 1
      %p86 = scmp.ne.s32.totalorder %s81, %s83
      %p87 = scmp.eq.s32.totalorder %s12, 0
      %p88 = por %p86, %p87
      %p89 = scmp.ne.s32.totalorder %s81, %s83
      %p90 = scmp.eq.s32.totalorder %s17, 1
      %p91 = por %p89, %p90
      %p92 = scmp.ne.s32.totalorder %s83, %s84
      %p93 = scmp.eq.s32.totalorder %s17, 0
      %p94 = por %p92, %p93
      %p95 = scmp.ne.s32.totalorder %s83, %s84
      %p96 = scmp.eq.s32.totalorder %s18, 1
      %p97 = por %p95, %p96
      %p99 = scmp.ne.s32.totalorder %s84, %s98
      %p100 = scmp.eq.s32.totalorder %s18, 0
      %p101 = por %p99, %p100
      %s102 = ssub.s32 %s19, %s31
      %p103 = scmp.eq.s32.totalorder %s102, 0
      %s105 = sadd.s32 %s104, 1
      %s106 = scalar_select %p103, %s104, %s105
      %p109 = pneg %p103
      %p110 = scmp.eq.s32.totalorder %s12, 1
      %p111 = por %p109, %p110
      %p112 = scmp.ne.s32.totalorder %s104, %s107
      %p113 = scmp.eq.s32.totalorder %s12, 0
      %p114 = por %p112, %p113
      %p115 = scmp.ne.s32.totalorder %s104, %s107
      %p116 = scmp.eq.s32.totalorder %s17, 1
      %p117 = por %p115, %p116
      %p118 = scmp.ne.s32.totalorder %s107, %s108
      %p119 = scmp.eq.s32.totalorder %s17, 0
      %p120 = por %p118, %p119
      %p121 = scmp.ne.s32.totalorder %s107, %s108
      %p122 = scmp.eq.s32.totalorder %s18, 1
      %p123 = por %p121, %p122
      %p125 = scmp.ne.s32.totalorder %s108, %s124
      %p126 = scmp.eq.s32.totalorder %s18, 0
      %p127 = por %p125, %p126
      %p128 = scmp.le.s32.totalorder 1, %s12
      %p129 = scmp.lt.s32.totalorder %s12, 3
      %p130 = pnand %p128, %p129
      %p131 = pneg %p130
      // Predicated region
      $region9: #{tpu_custom_call.1} parent=5 // pred_check
        _
      $region10: #{tpu_custom_call.1} parent=5 // pred_check_branch
        %133 = sbr.rel (%p130) target = $region12
      $region11: #{tpu_custom_call.1} parent=5 // pred_region
        %s134 = ssub.s32 %s12, 1
        // Predicated region
        $region13: #{tpu_custom_call.1} parent=11 // pred_check
          %p135 = pneg %p73
        $region14: #{tpu_custom_call.1} parent=11 // pred_check_branch
          %137 = sbr.rel (%p135) target = $region16
        $region15: #{tpu_custom_call.1} parent=11 // pred_region
          _
        $region16: #{tpu_custom_call.1} parent=11 // pred_fallthru
          _
        // Predicated region
        $region17: #{tpu_custom_call.1} parent=11 // pred_check
          %p138 = pneg %p94
        $region18: #{tpu_custom_call.1} parent=11 // pred_check_branch
          %140 = sbr.rel (%p138) target = $region20
        $region19: #{tpu_custom_call.1} parent=11 // pred_region
          _
        $region20: #{tpu_custom_call.1} parent=11 // pred_fallthru
          _
      $region12: #{tpu_custom_call.1} parent=5 // pred_fallthru
        _
      %p141 = scmp.lt.s32.totalorder %s12, 2
      // Predicated region
      $region21: #{tpu_custom_call.1} parent=5 // pred_check
        %p142 = pneg %p141
      $region22: #{tpu_custom_call.1} parent=5 // pred_check_branch
        %144 = sbr.rel (%p142) target = $region24
      $region23: #{tpu_custom_call.1} parent=5 // pred_region
        // Predicated region
        $region25: #{tpu_custom_call.1} parent=23 // pred_check
          %p145 = pneg %p46
        $region26: #{tpu_custom_call.1} parent=23 // pred_check_branch
          %147 = sbr.rel (%p145) target = $region28
        $region27: #{tpu_custom_call.1} parent=23 // pred_region
          %p148 = scmp.lt.s32.totalorder %s19, 1
          %s149 = scalar_select %p148, %s19, 1
          %p150 = scmp.lt.s32.totalorder %s20, 0
          %s151 = scalar_select %p150, %s20, 0
          %s152 = smul.addr %s149, 72
          %s153 = sadd.s32 %s151, %s152
          %s154 = smul.addr %s153, 4
          %s155 = scalar_lea.vmem %s0, %s154
        $region28: #{tpu_custom_call.1} parent=23 // pred_fallthru
          _
      $region24: #{tpu_custom_call.1} parent=5 // pred_fallthru
        _
      %p156 = scmp.le.s32.totalorder 1, %s12
      %p157 = scmp.lt.s32.totalorder %s12, 3
      %p158 = pnand %p156, %p157
      %p159 = pneg %p158
      // Predicated region
      $region29: #{tpu_custom_call.1} parent=5 // pred_check
        _
      $region30: #{tpu_custom_call.1} parent=5 // pred_check_branch
        %161 = sbr.rel (%p158) target = $region32
      $region31: #{tpu_custom_call.1} parent=5 // pred_region
        %s162 = ssub.s32 %s12, 1
        %p163 = scmp.lt.s32.totalorder %s21, 1
        %s164 = scalar_select %p163, %s21, 1
        %p165 = scmp.lt.s32.totalorder %s22, 0
        %s166 = scalar_select %p165, %s22, 0
        %s167 = smul.addr %s164, 72
        %s168 = sadd.s32 %s166, %s167
        %s169 = smul.addr %s168, 4
        %s170 = scalar_lea.vmem %s0, %s169
        %p171 = pneg %p52
        %p172 = pneg %p49
        %p173 = pneg %p73
        %p174 = pneg %p70
        %p175 = pneg %p94
        %p176 = pneg %p91
        %p177 = pneg %p120
        %p178 = pneg %p117
        %s179 = sand.u32 %s107, 1
        %s180 = scalar_lea.sflag [#allocation3], %s179
        %s181 = sand.u32 %s107, 1
        %s182 = smul.addr %s181, 256
        %s183 = scalar_lea.vmem [#allocation2], %s182
        %p184 = scmp.lt.s32.totalorder %s21, 1
        %s185 = scalar_select %p184, %s21, 1
        %p186 = scmp.lt.s32.totalorder %s22, 0
        %s187 = scalar_select %p186, %s22, 0
        %s188 = smul.addr %s185, 72
        %s189 = sadd.s32 %s187, %s188
        %s190 = smul.addr %s189, 4
        %s191 = scalar_lea.vmem %s0, %s190
        %v193 = vld [vmem:[%s191 + $0x24] sm:$0xf]
        %v194 = vld [vmem:[%s191 + $0x28] sm:$0xf]
        %v195 = vld [vmem:[%s191 + $0x2c] sm:$0xf]
        %v196 = vld [vmem:[%s191 + $0x30] sm:$0xf]
        %v197 = vld [vmem:[%s191 + $0x34] sm:$0xf]
        %v198 = vld [vmem:[%s191 + $0x38] sm:$0xf]
        %v199 = vld [vmem:[%s191 + $0x3c] sm:$0xf]
        %v200 = vld [vmem:[%s191 + $0x40] sm:$0xf]
        %v201 = vld [vmem:[%s191 + $0x44] sm:$0xf]
        %v202 = vld [vmem:[%s191 + $0x48] sm:$0xf]
        %v203 = vld [vmem:[%s191 + $0x4c] sm:$0xf]
        %v204 = vld [vmem:[%s191 + $0x50] sm:$0xf]
        %v205 = vld [vmem:[%s191 + $0x54] sm:$0xf]
        %v206 = vld [vmem:[%s191 + $0x58] sm:$0xf]
        %v207 = vld [vmem:[%s191 + $0x5c] sm:$0xf]
        %v208 = vld [vmem:[%s191 + $0x60] sm:$0xf]
        %v209 = vld [vmem:[%s191 + $0x64] sm:$0xf]
        %v210 = vld [vmem:[%s191 + $0x68] sm:$0xf]
        %v211 = vld [vmem:[%s191 + $0x6c] sm:$0xf]
        %v212 = vld [vmem:[%s191 + $0x70] sm:$0xf]
        %v213 = vld [vmem:[%s191 + $0x74] sm:$0xf]
        %v214 = vld [vmem:[%s191 + $0x78] sm:$0xf]
        %v215 = vld [vmem:[%s191 + $0x7c] sm:$0xf]
        %v216 = vld [vmem:[%s191 + $0x80] sm:$0xf]
        %v217 = vld [vmem:[%s191 + $0x84] sm:$0xf]
        %v218 = vld [vmem:[%s191 + $0x88] sm:$0xf]
        %v219 = vld [vmem:[%s191 + $0x8c] sm:$0xf]
        %v220 = vld [vmem:[%s191 + $0x90] sm:$0xf]
        %v221 = vld [vmem:[%s191 + $0x94] sm:$0xf]
        %v222 = vld [vmem:[%s191 + $0x98] sm:$0xf]
        %v223 = vld [vmem:[%s191 + $0x9c] sm:$0xf]
        %v224 = vld [vmem:[%s191 + $0xa0] sm:$0xf]
        %v225 = vld [vmem:[%s191 + $0xa4] sm:$0xf]
        %v226 = vld [vmem:[%s191 + $0xa8] sm:$0xf]
        %v227 = vld [vmem:[%s191 + $0xac] sm:$0xf]
        %v228 = vld [vmem:[%s191 + $0xb0] sm:$0xf]
        %v229 = vld [vmem:[%s191 + $0xb4] sm:$0xf]
        %v230 = vld [vmem:[%s191 + $0xb8] sm:$0xf]
        %v231 = vld [vmem:[%s191 + $0xbc] sm:$0xf]
        %v232 = vld [vmem:[%s191 + $0xc0] sm:$0xf]
        %v233 = vld [vmem:[%s191 + $0xc4] sm:$0xf]
        %v234 = vld [vmem:[%s191 + $0xc8] sm:$0xf]
        %v235 = vld [vmem:[%s191 + $0xcc] sm:$0xf]
        %v236 = vld [vmem:[%s191 + $0xd0] sm:$0xf]
        %v237 = vld [vmem:[%s191 + $0xd4] sm:$0xf]
        %v238 = vld [vmem:[%s191 + $0xd8] sm:$0xf]
        %v239 = vld [vmem:[%s191 + $0xdc] sm:$0xf]
        %v240 = vld [vmem:[%s191 + $0xe0] sm:$0xf]
        %v241 = vld [vmem:[%s1] sm:$0x3f]
        %v290 = vunpack.c.l.b16 %v193
        %v291 = vunpack.c.l.b16 %v194
        %v292 = vunpack.c.l.b16 %v195
        %v293 = vunpack.c.l.b16 %v196
        %v294 = vunpack.c.l.b16 %v197
        %v295 = vunpack.c.l.b16 %v198
        %v296 = vunpack.c.l.b16 %v199
        %v297 = vunpack.c.l.b16 %v200
        %v298 = vunpack.c.l.b16 %v201
        %v299 = vunpack.c.l.b16 %v202
        %v300 = vunpack.c.l.b16 %v203
        %v301 = vunpack.c.l.b16 %v204
        %v302 = vunpack.c.l.b16 %v205
        %v303 = vunpack.c.l.b16 %v206
        %v304 = vunpack.c.l.b16 %v207
        %v305 = vunpack.c.l.b16 %v208
        %v306 = vunpack.c.l.b16 %v209
        %v307 = vunpack.c.l.b16 %v210
        %v308 = vunpack.c.l.b16 %v211
        %v309 = vunpack.c.l.b16 %v212
        %v310 = vunpack.c.l.b16 %v213
        %v311 = vunpack.c.l.b16 %v214
        %v312 = vunpack.c.l.b16 %v215
        %v313 = vunpack.c.l.b16 %v216
        %v314 = vunpack.c.l.b16 %v217
        %v315 = vunpack.c.l.b16 %v218
        %v316 = vunpack.c.l.b16 %v219
        %v317 = vunpack.c.l.b16 %v220
        %v318 = vunpack.c.l.b16 %v221
        %v319 = vunpack.c.l.b16 %v222
        %v320 = vunpack.c.l.b16 %v223
        %v321 = vunpack.c.l.b16 %v224
        %v322 = vunpack.c.l.b16 %v225
        %v323 = vunpack.c.l.b16 %v226
        %v324 = vunpack.c.l.b16 %v227
        %v325 = vunpack.c.l.b16 %v228
        %v326 = vunpack.c.l.b16 %v229
        %v327 = vunpack.c.l.b16 %v230
        %v328 = vunpack.c.l.b16 %v231
        %v329 = vunpack.c.l.b16 %v232
        %v330 = vunpack.c.l.b16 %v233
        %v331 = vunpack.c.l.b16 %v234
        %v332 = vunpack.c.l.b16 %v235
        %v333 = vunpack.c.l.b16 %v236
        %v334 = vunpack.c.l.b16 %v237
        %v335 = vunpack.c.l.b16 %v238
        %v336 = vunpack.c.l.b16 %v239
        %v337 = vunpack.c.l.b16 %v240
        %v338 = vpack.c.b16 %v291, %v290
        %v339 = vpack.c.b16 %v293, %v292
        %v340 = vpack.c.b16 %v295, %v294
        %v341 = vpack.c.b16 %v297, %v296
        %v342 = vpack.c.b16 %v299, %v298
        %v343 = vpack.c.b16 %v301, %v300
        %v344 = vpack.c.b16 %v303, %v302
        %v345 = vpack.c.b16 %v305, %v304
        %v346 = vpack.c.b16 %v307, %v306
        %v347 = vpack.c.b16 %v309, %v308
        %v348 = vpack.c.b16 %v311, %v310
        %v349 = vpack.c.b16 %v313, %v312
        %v350 = vpack.c.b16 %v315, %v314
        %v351 = vpack.c.b16 %v317, %v316
        %v352 = vpack.c.b16 %v319, %v318
        %v353 = vpack.c.b16 %v321, %v320
        %v354 = vpack.c.b16 %v323, %v322
        %v355 = vpack.c.b16 %v325, %v324
        %v356 = vpack.c.b16 %v327, %v326
        %v357 = vpack.c.b16 %v329, %v328
        %v358 = vpack.c.b16 %v331, %v330
        %v359 = vpack.c.b16 %v333, %v332
        %v360 = vpack.c.b16 %v335, %v334
        %v361 = vpack.c.b16 %v337, %v336
        %v363 = vcombine.high %v241, %v241
        %v365 = vunpack.c.l.s4 1983009808
        %v366 = vunpack.c.0.s8 %v365
        %v367 = vlaneseq
        %v368 = vshrl.u32 %v367, 7
        %v369 = vsub.s32 %v366, %v368
        %v370 = vrot.slane %v241, %v369
        %v372 = vunpack.c.l.s4 1983009808
        %v373 = vunpack.c.0.s8 %v372
        %v374 = vlaneseq
        %v375 = vshrl.u32 %v374, 7
        %v376 = vsub.s32 %v373, %v375
        %v377 = vrot.slane %v363, %v376
        %v378 = vcombine.high %v370, %v370
        %vm379 = vcmask 31744
        %v381 = vsel %vm379, %v338, 0
        %v384 = vsel %vm379, %v339, 0
        %v387 = vsel %vm379, %v340, 0
        %v390 = vsel %vm379, %v341, 0
        %v393 = vsel %vm379, %v342, 0
        %v396 = vsel %vm379, %v343, 0
        %v399 = vsel %vm379, %v344, 0
        %v402 = vsel %vm379, %v345, 0
        %v405 = vsel %vm379, %v346, 0
        %v408 = vsel %vm379, %v347, 0
        %v411 = vsel %vm379, %v348, 0
        %v414 = vsel %vm379, %v349, 0
        %v417 = vsel %vm379, %v350, 0
        %v420 = vsel %vm379, %v351, 0
        %v423 = vsel %vm379, %v352, 0
        %v426 = vsel %vm379, %v353, 0
        %v429 = vsel %vm379, %v354, 0
        %v432 = vsel %vm379, %v355, 0
        %v435 = vsel %vm379, %v356, 0
        %v438 = vsel %vm379, %v357, 0
        %v441 = vsel %vm379, %v358, 0
        %v444 = vsel %vm379, %v359, 0
        %v447 = vsel %vm379, %v360, 0
        %v450 = vsel %vm379, %v361, 0
        %vm452 = vcmask 1041408
        %v454 = vsel %vm452, %v370, 0
        %v457 = vsel %vm452, %v378, 0
        %v460 = vsel %vm452, %v377, 0
        %462 = vmatprep.subr.bf16.mxu0 %v457
        %463 = vmatpush1.bf16.msra.mxu0 %v454
        %464 = vmatprep.subr.bf16.mxu0 0
        %465 = vmatpush1.bf16.msra.mxu0 0
        %466 = vmatprep.subr.bf16.mxu0 0
        %467 = vmatpush1.bf16.msra.mxu0 0
        %468 = vmatprep.subr.bf16.mxu0 0
        %469 = vmatpush1.bf16.msra.mxu0 0
        %470 = vmatprep.subr.bf16.mxu0 0
        %471 = vmatpush1.bf16.msra.mxu0 0
        %472 = vmatprep.subr.bf16.mxu0 0
        %473 = vmatpush1.bf16.msra.mxu0 0
        %474 = vmatprep.subr.bf16.mxu0 0
        %475 = vmatpush1.bf16.msra.mxu0 0
        %476 = vmatprep.subr.bf16.mxu0 0
        %477 = vmatpush1.bf16.msra.mxu0 0
        %478 = vmatprep.subr.bf16.mxu0 0
        %479 = vmatpush1.bf16.msra.mxu0 0
        %480 = vmatprep.subr.bf16.mxu0 0
        %481 = vmatpush1.bf16.msra.mxu0 0
        %482 = vmatprep.subr.bf16.mxu0 0
        %483 = vmatpush1.bf16.msra.mxu0 0
        %484 = vmatprep.subr.bf16.mxu0 0
        %485 = vmatpush1.bf16.msra.mxu0 0
        %486 = vmatprep.subr.bf16.mxu0 0
        %487 = vmatpush1.bf16.msra.mxu0 0
        %488 = vmatprep.subr.bf16.mxu0 0
        %489 = vmatpush1.bf16.msra.mxu0 0
        %490 = vmatprep.subr.bf16.mxu0 0
        %491 = vmatpush1.bf16.msra.mxu0 0
        %492 = vmatprep.subr.bf16.mxu0 0
        %493 = vmatpush1.bf16.msra.mxu0 0
        %494 = vmatprep.mubr.bf16.mxu0 0
        %495 = vmatmul.mubr.bf16.gmra.mrb[0].mxu0 %v381
        %v496 = vpop.f32.mrb[0].mxu0
        %v497 = vadd.f32 0.0, %v496
        %v498 = vpop.f32.mrb[0].mxu0
        %v499 = vadd.f32 0.0, %v498
        %v500 = vpop.f32.mrb[0].mxu0
        %v501 = vadd.f32 0.0, %v500
        %v502 = vpop.f32.mrb[0].mxu0
        %v503 = vadd.f32 0.0, %v502
        %504 = vmatprep.mubr.bf16.mxu0 0
        %505 = vmatmul.mubr.bf16.gmra.mrb[0].mxu0 %v384
        %v506 = vpop.f32.mrb[0].mxu0
        %v507 = vadd.f32 0.0, %v506
        %v508 = vpop.f32.mrb[0].mxu0
        %v509 = vadd.f32 0.0, %v508
        %v510 = vpop.f32.mrb[0].mxu0
        %v511 = vadd.f32 0.0, %v510
        %v512 = vpop.f32.mrb[0].mxu0
        %v513 = vadd.f32 0.0, %v512
        %514 = vmatprep.mubr.bf16.mxu0 0
        %515 = vmatmul.mubr.bf16.gmra.mrb[0].mxu0 %v387
        %v516 = vpop.f32.mrb[0].mxu0
        %v517 = vadd.f32 0.0, %v516
        %v518 = vpop.f32.mrb[0].mxu0
        %v519 = vadd.f32 0.0, %v518
        %v520 = vpop.f32.mrb[0].mxu0
        %v521 = vadd.f32 0.0, %v520
        %v522 = vpop.f32.mrb[0].mxu0
        %v523 = vadd.f32 0.0, %v522
        %524 = vmatprep.mubr.bf16.mxu0 0
        %525 = vmatmul.mubr.bf16.gmra.mrb[0].mxu0 %v390
        %v526 = vpop.f32.mrb[0].mxu0
        %v527 = vadd.f32 0.0, %v526
        %v528 = vpop.f32.mrb[0].mxu0
        %v529 = vadd.f32 0.0, %v528
        %v530 = vpop.f32.mrb[0].mxu0
        %v531 = vadd.f32 0.0, %v530
        %v532 = vpop.f32.mrb[0].mxu0
        %v533 = vadd.f32 0.0, %v532
        %534 = vmatprep.mubr.bf16.mxu0 0
        %535 = vmatmul.mubr.bf16.gmra.mrb[0].mxu0 %v393
        %v536 = vpop.f32.mrb[0].mxu0
        %v537 = vadd.f32 0.0, %v536
        %v538 = vpop.f32.mrb[0].mxu0
        %v539 = vadd.f32 0.0, %v538
        %v540 = vpop.f32.mrb[0].mxu0
        %v541 = vadd.f32 0.0, %v540
        %v542 = vpop.f32.mrb[0].mxu0
        %v543 = vadd.f32 0.0, %v542
        %544 = vmatprep.mubr.bf16.mxu0 0
        %545 = vmatmul.mubr.bf16.gmra.mrb[0].mxu0 %v396
        %v546 = vpop.f32.mrb[0].mxu0
        %v547 = vadd.f32 0.0, %v546
        %v548 = vpop.f32.mrb[0].mxu0
        %v549 = vadd.f32 0.0, %v548
        %v550 = vpop.f32.mrb[0].mxu0
        %v551 = vadd.f32 0.0, %v550
        %v552 = vpop.f32.mrb[0].mxu0
        %v553 = vadd.f32 0.0, %v552
        %554 = vmatprep.mubr.bf16.mxu0 0
        %555 = vmatmul.mubr.bf16.gmra.mrb[0].mxu0 %v399
        %v556 = vpop.f32.mrb[0].mxu0
        %v557 = vadd.f32 0.0, %v556
        %v558 = vpop.f32.mrb[0].mxu0
        %v559 = vadd.f32 0.0, %v558
        %v560 = vpop.f32.mrb[0].mxu0
        %v561 = vadd.f32 0.0, %v560
        %v562 = vpop.f32.mrb[0].mxu0
        %v563 = vadd.f32 0.0, %v562
        %564 = vmatprep.mubr.bf16.mxu0 0
        %565 = vmatmul.mubr.bf16.gmra.mrb[0].mxu0 %v402
        %v566 = vpop.f32.mrb[0].mxu0
        %v567 = vadd.f32 0.0, %v566
        %v568 = vpop.f32.mrb[0].mxu0
        %v569 = vadd.f32 0.0, %v568
        %v570 = vpop.f32.mrb[0].mxu0
        %v571 = vadd.f32 0.0, %v570
        %v572 = vpop.f32.mrb[0].mxu0
        %v573 = vadd.f32 0.0, %v572
        %574 = vmatprep.mubr.bf16.mxu0 0
        %575 = vmatmul.mubr.bf16.gmra.mrb[0].mxu0 %v405
        %v576 = vpop.f32.mrb[0].mxu0
        %v577 = vadd.f32 0.0, %v576
        %v578 = vpop.f32.mrb[0].mxu0
        %v579 = vadd.f32 0.0, %v578
        %v580 = vpop.f32.mrb[0].mxu0
        %v581 = vadd.f32 0.0, %v580
        %v582 = vpop.f32.mrb[0].mxu0
        %v583 = vadd.f32 0.0, %v582
        %584 = vmatprep.mubr.bf16.mxu0 0
        %585 = vmatmul.mubr.bf16.gmra.mrb[0].mxu0 %v408
        %v586 = vpop.f32.mrb[0].mxu0
        %v587 = vadd.f32 0.0, %v586
        %v588 = vpop.f32.mrb[0].mxu0
        %v589 = vadd.f32 0.0, %v588
        %v590 = vpop.f32.mrb[0].mxu0
        %v591 = vadd.f32 0.0, %v590
        %v592 = vpop.f32.mrb[0].mxu0
        %v593 = vadd.f32 0.0, %v592
        %594 = vmatprep.mubr.bf16.mxu0 0
        %595 = vmatmul.mubr.bf16.gmra.mrb[0].mxu0 %v411
        %v596 = vpop.f32.mrb[0].mxu0
        %v597 = vadd.f32 0.0, %v596
        %v598 = vpop.f32.mrb[0].mxu0
        %v599 = vadd.f32 0.0, %v598
        %v600 = vpop.f32.mrb[0].mxu0
        %v601 = vadd.f32 0.0, %v600
        %v602 = vpop.f32.mrb[0].mxu0
        %v603 = vadd.f32 0.0, %v602
        %604 = vmatprep.mubr.bf16.mxu0 0
        %605 = vmatmul.mubr.bf16.gmra.mrb[0].mxu0 %v414
        %v606 = vpop.f32.mrb[0].mxu0
        %v607 = vadd.f32 0.0, %v606
        %v608 = vpop.f32.mrb[0].mxu0
        %v609 = vadd.f32 0.0, %v608
        %v610 = vpop.f32.mrb[0].mxu0
        %v611 = vadd.f32 0.0, %v610
        %v612 = vpop.f32.mrb[0].mxu0
        %v613 = vadd.f32 0.0, %v612
        %614 = vmatprep.mubr.bf16.mxu0 0
        %615 = vmatmul.mubr.bf16.gmra.mrb[0].mxu0 %v417
        %v616 = vpop.f32.mrb[0].mxu0
        %v617 = vadd.f32 0.0, %v616
        %v618 = vpop.f32.mrb[0].mxu0
        %v619 = vadd.f32 0.0, %v618
        %v620 = vpop.f32.mrb[0].mxu0
        %v621 = vadd.f32 0.0, %v620
        %v622 = vpop.f32.mrb[0].mxu0
        %v623 = vadd.f32 0.0, %v622
        %624 = vmatprep.mubr.bf16.mxu0 0
        %625 = vmatmul.mubr.bf16.gmra.mrb[0].mxu0 %v420
        %v626 = vpop.f32.mrb[0].mxu0
        %v627 = vadd.f32 0.0, %v626
        %v628 = vpop.f32.mrb[0].mxu0
        %v629 = vadd.f32 0.0, %v628
        %v630 = vpop.f32.mrb[0].mxu0
        %v631 = vadd.f32 0.0, %v630
        %v632 = vpop.f32.mrb[0].mxu0
        %v633 = vadd.f32 0.0, %v632
        %634 = vmatprep.mubr.bf16.mxu0 0
        %635 = vmatmul.mubr.bf16.gmra.mrb[0].mxu0 %v423
        %v636 = vpop.f32.mrb[0].mxu0
        %v637 = vadd.f32 0.0, %v636
        %v638 = vpop.f32.mrb[0].mxu0
        %v639 = vadd.f32 0.0, %v638
        %v640 = vpop.f32.mrb[0].mxu0
        %v641 = vadd.f32 0.0, %v640
        %v642 = vpop.f32.mrb[0].mxu0
        %v643 = vadd.f32 0.0, %v642
        %644 = vmatprep.mubr.bf16.mxu0 0
        %645 = vmatmul.mubr.bf16.gmra.mrb[0].mxu0 %v426
        %v646 = vpop.f32.mrb[0].mxu0
        %v647 = vadd.f32 0.0, %v646
        %v648 = vpop.f32.mrb[0].mxu0
        %v649 = vadd.f32 0.0, %v648
        %v650 = vpop.f32.mrb[0].mxu0
        %v651 = vadd.f32 0.0, %v650
        %v652 = vpop.f32.mrb[0].mxu0
        %v653 = vadd.f32 0.0, %v652
        %654 = vmatprep.mubr.bf16.mxu0 0
        %655 = vmatmul.mubr.bf16.gmra.mrb[0].mxu0 %v429
        %v656 = vpop.f32.mrb[0].mxu0
        %v657 = vadd.f32 0.0, %v656
        %v658 = vpop.f32.mrb[0].mxu0
        %v659 = vadd.f32 0.0, %v658
        %v660 = vpop.f32.mrb[0].mxu0
        %v661 = vadd.f32 0.0, %v660
        %v662 = vpop.f32.mrb[0].mxu0
        %v663 = vadd.f32 0.0, %v662
        %664 = vmatprep.mubr.bf16.mxu0 0
        %665 = vmatmul.mubr.bf16.gmra.mrb[0].mxu0 %v432
        %v666 = vpop.f32.mrb[0].mxu0
        %v667 = vadd.f32 0.0, %v666
        %v668 = vpop.f32.mrb[0].mxu0
        %v669 = vadd.f32 0.0, %v668
        %v670 = vpop.f32.mrb[0].mxu0
        %v671 = vadd.f32 0.0, %v670
        %v672 = vpop.f32.mrb[0].mxu0
        %v673 = vadd.f32 0.0, %v672
        %674 = vmatprep.mubr.bf16.mxu0 0
        %675 = vmatmul.mubr.bf16.gmra.mrb[0].mxu0 %v435
        %v676 = vpop.f32.mrb[0].mxu0
        %v677 = vadd.f32 0.0, %v676
        %v678 = vpop.f32.mrb[0].mxu0
        %v679 = vadd.f32 0.0, %v678
        %v680 = vpop.f32.mrb[0].mxu0
        %v681 = vadd.f32 0.0, %v680
        %v682 = vpop.f32.mrb[0].mxu0
        %v683 = vadd.f32 0.0, %v682
        %684 = vmatprep.mubr.bf16.mxu0 0
        %685 = vmatmul.mubr.bf16.gmra.mrb[0].mxu0 %v438
        %v686 = vpop.f32.mrb[0].mxu0
        %v687 = vadd.f32 0.0, %v686
        %v688 = vpop.f32.mrb[0].mxu0
        %v689 = vadd.f32 0.0, %v688
        %v690 = vpop.f32.mrb[0].mxu0
        %v691 = vadd.f32 0.0, %v690
        %v692 = vpop.f32.mrb[0].mxu0
        %v693 = vadd.f32 0.0, %v692
        %694 = vmatprep.mubr.bf16.mxu0 0
        %695 = vmatmul.mubr.bf16.gmra.mrb[0].mxu0 %v441
        %v696 = vpop.f32.mrb[0].mxu0
        %v697 = vadd.f32 0.0, %v696
        %v698 = vpop.f32.mrb[0].mxu0
        %v699 = vadd.f32 0.0, %v698
        %v700 = vpop.f32.mrb[0].mxu0
        %v701 = vadd.f32 0.0, %v700
        %v702 = vpop.f32.mrb[0].mxu0
        %v703 = vadd.f32 0.0, %v702
        %704 = vmatprep.mubr.bf16.mxu0 0
        %705 = vmatmul.mubr.bf16.gmra.mrb[0].mxu0 %v444
        %v706 = vpop.f32.mrb[0].mxu0
        %v707 = vadd.f32 0.0, %v706
        %v708 = vpop.f32.mrb[0].mxu0
        %v709 = vadd.f32 0.0, %v708
        %v710 = vpop.f32.mrb[0].mxu0
        %v711 = vadd.f32 0.0, %v710
        %v712 = vpop.f32.mrb[0].mxu0
        %v713 = vadd.f32 0.0, %v712
        %714 = vmatprep.mubr.bf16.mxu0 0
        %715 = vmatmul.mubr.bf16.gmra.mrb[0].mxu0 %v447
        %v716 = vpop.f32.mrb[0].mxu0
        %v717 = vadd.f32 0.0, %v716
        %v718 = vpop.f32.mrb[0].mxu0
        %v719 = vadd.f32 0.0, %v718
        %v720 = vpop.f32.mrb[0].mxu0
        %v721 = vadd.f32 0.0, %v720
        %v722 = vpop.f32.mrb[0].mxu0
        %v723 = vadd.f32 0.0, %v722
        %724 = vmatprep.mubr.bf16.mxu0 0
        %725 = vmatmul.mubr.bf16.gmra.mrb[0].mxu0 %v450
        %v726 = vpop.f32.mrb[0].mxu0
        %v727 = vadd.f32 0.0, %v726
        %v728 = vpop.f32.mrb[0].mxu0
        %v729 = vadd.f32 0.0, %v728
        %v730 = vpop.f32.mrb[0].mxu0
        %v731 = vadd.f32 0.0, %v730
        %v732 = vpop.f32.mrb[0].mxu0
        %v733 = vadd.f32 0.0, %v732
        %734 = vdwg.mxu0
        %735 = vmatprep.subr.bf16.mxu0 0
        %736 = vmatpush1.bf16.msra.mxu0 %v460
        %737 = vmatprep.subr.bf16.mxu0 0
        %738 = vmatpush1.bf16.msra.mxu0 0
        %739 = vmatprep.subr.bf16.mxu0 0
        %740 = vmatpush1.bf16.msra.mxu0 0
        %741 = vmatprep.subr.bf16.mxu0 0
        %742 = vmatpush1.bf16.msra.mxu0 0
        %743 = vmatprep.subr.bf16.mxu0 0
        %744 = vmatpush1.bf16.msra.mxu0 0
        %745 = vmatprep.subr.bf16.mxu0 0
        %746 = vmatpush1.bf16.msra.mxu0 0
        %747 = vmatprep.subr.bf16.mxu0 0
        %748 = vmatpush1.bf16.msra.mxu0 0
        %749 = vmatprep.subr.bf16.mxu0 0
        %750 = vmatpush1.bf16.msra.mxu0 0
        %751 = vmatprep.subr.bf16.mxu0 0
        %752 = vmatpush1.bf16.msra.mxu0 0
        %753 = vmatprep.subr.bf16.mxu0 0
        %754 = vmatpush1.bf16.msra.mxu0 0
        %755 = vmatprep.subr.bf16.mxu0 0
        %756 = vmatpush1.bf16.msra.mxu0 0
        %757 = vmatprep.subr.bf16.mxu0 0
        %758 = vmatpush1.bf16.msra.mxu0 0
        %759 = vmatprep.subr.bf16.mxu0 0
        %760 = vmatpush1.bf16.msra.mxu0 0
        %761 = vmatprep.subr.bf16.mxu0 0
        %762 = vmatpush1.bf16.msra.mxu0 0
        %763 = vmatprep.subr.bf16.mxu0 0
        %764 = vmatpush1.bf16.msra.mxu0 0
        %765 = vmatprep.subr.bf16.mxu0 0
        %766 = vmatpush1.bf16.msra.mxu0 0
        %767 = vmatprep.mubr.bf16.mxu0 0
        %768 = vmatmul.mubr.bf16.gmra.mrb[0].mxu0 %v381
        %v769 = vpop.f32.mrb[0].mxu0
        %v770 = vadd.f32 0.0, %v769
        %v771 = vpop.f32.mrb[0].mxu0
        %v772 = vpop.f32.mrb[0].mxu0
        %v773 = vadd.f32 0.0, %v772
        %v774 = vpop.f32.mrb[0].mxu0
        %775 = vmatprep.mubr.bf16.mxu0 0
        %776 = vmatmul.mubr.bf16.gmra.mrb[0].mxu0 %v384
        %v777 = vpop.f32.mrb[0].mxu0
        %v778 = vadd.f32 0.0, %v777
        %v779 = vpop.f32.mrb[0].mxu0
        %v780 = vpop.f32.mrb[0].mxu0
        %v781 = vadd.f32 0.0, %v780
        %v782 = vpop.f32.mrb[0].mxu0
        %783 = vmatprep.mubr.bf16.mxu0 0
        %784 = vmatmul.mubr.bf16.gmra.mrb[0].mxu0 %v387
        %v785 = vpop.f32.mrb[0].mxu0
        %v786 = vadd.f32 0.0, %v785
        %v787 = vpop.f32.mrb[0].mxu0
        %v788 = vpop.f32.mrb[0].mxu0
        %v789 = vadd.f32 0.0, %v788
        %v790 = vpop.f32.mrb[0].mxu0
        %791 = vmatprep.mubr.bf16.mxu0 0
        %792 = vmatmul.mubr.bf16.gmra.mrb[0].mxu0 %v390
        %v793 = vpop.f32.mrb[0].mxu0
        %v794 = vadd.f32 0.0, %v793
        %v795 = vpop.f32.mrb[0].mxu0
        %v796 = vpop.f32.mrb[0].mxu0
        %v797 = vadd.f32 0.0, %v796
        %v798 = vpop.f32.mrb[0].mxu0
        %799 = vmatprep.mubr.bf16.mxu0 0
        %800 = vmatmul.mubr.bf16.gmra.mrb[0].mxu0 %v393
        %v801 = vpop.f32.mrb[0].mxu0
        %v802 = vadd.f32 0.0, %v801
        %v803 = vpop.f32.mrb[0].mxu0
        %v804 = vpop.f32.mrb[0].mxu0
        %v805 = vadd.f32 0.0, %v804
        %v806 = vpop.f32.mrb[0].mxu0
        %807 = vmatprep.mubr.bf16.mxu0 0
        %808 = vmatmul.mubr.bf16.gmra.mrb[0].mxu0 %v396
        %v809 = vpop.f32.mrb[0].mxu0
        %v810 = vadd.f32 0.0, %v809
        %v811 = vpop.f32.mrb[0].mxu0
        %v812 = vpop.f32.mrb[0].mxu0
        %v813 = vadd.f32 0.0, %v812
        %v814 = vpop.f32.mrb[0].mxu0
        %815 = vmatprep.mubr.bf16.mxu0 0
        %816 = vmatmul.mubr.bf16.gmra.mrb[0].mxu0 %v399
        %v817 = vpop.f32.mrb[0].mxu0
        %v818 = vadd.f32 0.0, %v817
        %v819 = vpop.f32.mrb[0].mxu0
        %v820 = vpop.f32.mrb[0].mxu0
        %v821 = vadd.f32 0.0, %v820
        %v822 = vpop.f32.mrb[0].mxu0
        %823 = vmatprep.mubr.bf16.mxu0 0
        %824 = vmatmul.mubr.bf16.gmra.mrb[0].mxu0 %v402
        %v825 = vpop.f32.mrb[0].mxu0
        %v826 = vadd.f32 0.0, %v825
        %v827 = vpop.f32.mrb[0].mxu0
        %v828 = vpop.f32.mrb[0].mxu0
        %v829 = vadd.f32 0.0, %v828
        %v830 = vpop.f32.mrb[0].mxu0
        %831 = vmatprep.mubr.bf16.mxu0 0
        %832 = vmatmul.mubr.bf16.gmra.mrb[0].mxu0 %v405
        %v833 = vpop.f32.mrb[0].mxu0
        %v834 = vadd.f32 0.0, %v833
        %v835 = vpop.f32.mrb[0].mxu0
        %v836 = vpop.f32.mrb[0].mxu0
        %v837 = vadd.f32 0.0, %v836
        %v838 = vpop.f32.mrb[0].mxu0
        %839 = vmatprep.mubr.bf16.mxu0 0
        %840 = vmatmul.mubr.bf16.gmra.mrb[0].mxu0 %v408
        %v841 = vpop.f32.mrb[0].mxu0
        %v842 = vadd.f32 0.0, %v841
        %v843 = vpop.f32.mrb[0].mxu0
        %v844 = vpop.f32.mrb[0].mxu0
        %v845 = vadd.f32 0.0, %v844
        %v846 = vpop.f32.mrb[0].mxu0
        %847 = vmatprep.mubr.bf16.mxu0 0
        %848 = vmatmul.mubr.bf16.gmra.mrb[0].mxu0 %v411
        %v849 = vpop.f32.mrb[0].mxu0
        %v850 = vadd.f32 0.0, %v849
        %v851 = vpop.f32.mrb[0].mxu0
        %v852 = vpop.f32.mrb[0].mxu0
        %v853 = vadd.f32 0.0, %v852
        %v854 = vpop.f32.mrb[0].mxu0
        %855 = vmatprep.mubr.bf16.mxu0 0
        %856 = vmatmul.mubr.bf16.gmra.mrb[0].mxu0 %v414
        %v857 = vpop.f32.mrb[0].mxu0
        %v858 = vadd.f32 0.0, %v857
        %v859 = vpop.f32.mrb[0].mxu0
        %v860 = vpop.f32.mrb[0].mxu0
        %v861 = vadd.f32 0.0, %v860
        %v862 = vpop.f32.mrb[0].mxu0
        %863 = vmatprep.mubr.bf16.mxu0 0
        %864 = vmatmul.mubr.bf16.gmra.mrb[0].mxu0 %v417
        %v865 = vpop.f32.mrb[0].mxu0
        %v866 = vadd.f32 0.0, %v865
        %v867 = vpop.f32.mrb[0].mxu0
        %v868 = vpop.f32.mrb[0].mxu0
        %v869 = vadd.f32 0.0, %v868
        %v870 = vpop.f32.mrb[0].mxu0
        %871 = vmatprep.mubr.bf16.mxu0 0
        %872 = vmatmul.mubr.bf16.gmra.mrb[0].mxu0 %v420
        %v873 = vpop.f32.mrb[0].mxu0
        %v874 = vadd.f32 0.0, %v873
        %v875 = vpop.f32.mrb[0].mxu0
        %v876 = vpop.f32.mrb[0].mxu0
        %v877 = vadd.f32 0.0, %v876
        %v878 = vpop.f32.mrb[0].mxu0
        %879 = vmatprep.mubr.bf16.mxu0 0
        %880 = vmatmul.mubr.bf16.gmra.mrb[0].mxu0 %v423
        %v881 = vpop.f32.mrb[0].mxu0
        %v882 = vadd.f32 0.0, %v881
        %v883 = vpop.f32.mrb[0].mxu0
        %v884 = vpop.f32.mrb[0].mxu0
        %v885 = vadd.f32 0.0, %v884
        %v886 = vpop.f32.mrb[0].mxu0
        %887 = vmatprep.mubr.bf16.mxu0 0
        %888 = vmatmul.mubr.bf16.gmra.mrb[0].mxu0 %v426
        %v889 = vpop.f32.mrb[0].mxu0
        %v890 = vadd.f32 0.0, %v889
        %v891 = vpop.f32.mrb[0].mxu0
        %v892 = vpop.f32.mrb[0].mxu0
        %v893 = vadd.f32 0.0, %v892
        %v894 = vpop.f32.mrb[0].mxu0
        %895 = vmatprep.mubr.bf16.mxu0 0
        %896 = vmatmul.mubr.bf16.gmra.mrb[0].mxu0 %v429
        %v897 = vpop.f32.mrb[0].mxu0
        %v898 = vadd.f32 0.0, %v897
        %v899 = vpop.f32.mrb[0].mxu0
        %v900 = vpop.f32.mrb[0].mxu0
        %v901 = vadd.f32 0.0, %v900
        %v902 = vpop.f32.mrb[0].mxu0
        %903 = vmatprep.mubr.bf16.mxu0 0
        %904 = vmatmul.mubr.bf16.gmra.mrb[0].mxu0 %v432
        %v905 = vpop.f32.mrb[0].mxu0
        %v906 = vadd.f32 0.0, %v905
        %v907 = vpop.f32.mrb[0].mxu0
        %v908 = vpop.f32.mrb[0].mxu0
        %v909 = vadd.f32 0.0, %v908
        %v910 = vpop.f32.mrb[0].mxu0
        %911 = vmatprep.mubr.bf16.mxu0 0
        %912 = vmatmul.mubr.bf16.gmra.mrb[0].mxu0 %v435
        %v913 = vpop.f32.mrb[0].mxu0
        %v914 = vadd.f32 0.0, %v913
        %v915 = vpop.f32.mrb[0].mxu0
        %v916 = vpop.f32.mrb[0].mxu0
        %v917 = vadd.f32 0.0, %v916
        %v918 = vpop.f32.mrb[0].mxu0
        %919 = vmatprep.mubr.bf16.mxu0 0
        %920 = vmatmul.mubr.bf16.gmra.mrb[0].mxu0 %v438
        %v921 = vpop.f32.mrb[0].mxu0
        %v922 = vadd.f32 0.0, %v921
        %v923 = vpop.f32.mrb[0].mxu0
        %v924 = vpop.f32.mrb[0].mxu0
        %v925 = vadd.f32 0.0, %v924
        %v926 = vpop.f32.mrb[0].mxu0
        %927 = vmatprep.mubr.bf16.mxu0 0
        %928 = vmatmul.mubr.bf16.gmra.mrb[0].mxu0 %v441
        %v929 = vpop.f32.mrb[0].mxu0
        %v930 = vadd.f32 0.0, %v929
        %v931 = vpop.f32.mrb[0].mxu0
        %v932 = vpop.f32.mrb[0].mxu0
        %v933 = vadd.f32 0.0, %v932
        %v934 = vpop.f32.mrb[0].mxu0
        %935 = vmatprep.mubr.bf16.mxu0 0
        %936 = vmatmul.mubr.bf16.gmra.mrb[0].mxu0 %v444
        %v937 = vpop.f32.mrb[0].mxu0
        %v938 = vadd.f32 0.0, %v937
        %v939 = vpop.f32.mrb[0].mxu0
        %v940 = vpop.f32.mrb[0].mxu0
        %v941 = vadd.f32 0.0, %v940
        %v942 = vpop.f32.mrb[0].mxu0
        %943 = vmatprep.mubr.bf16.mxu0 0
        %944 = vmatmul.mubr.bf16.gmra.mrb[0].mxu0 %v447
        %v945 = vpop.f32.mrb[0].mxu0
        %v946 = vadd.f32 0.0, %v945
        %v947 = vpop.f32.mrb[0].mxu0
        %v948 = vpop.f32.mrb[0].mxu0
        %v949 = vadd.f32 0.0, %v948
        %v950 = vpop.f32.mrb[0].mxu0
        %951 = vmatprep.mubr.bf16.mxu0 0
        %952 = vmatmul.mubr.bf16.gmra.mrb[0].mxu0 %v450
        %v953 = vpop.f32.mrb[0].mxu0
        %v954 = vadd.f32 0.0, %v953
        %v955 = vpop.f32.mrb[0].mxu0
        %v956 = vpop.f32.mrb[0].mxu0
        %v957 = vadd.f32 0.0, %v956
        %v958 = vpop.f32.mrb[0].mxu0
        %959 = vdwg.mxu0
        %v960 = vrot.slane %v497, 3
        %v961 = vrot.slane %v501, 3
        %v962 = vrot.slane %v507, 3
        %v963 = vrot.slane %v511, 3
        %v964 = vrot.slane %v517, 3
        %v965 = vrot.slane %v521, 3
        %v966 = vrot.slane %v527, 3
        %v967 = vrot.slane %v531, 3
        %v968 = vrot.slane %v537, 3
        %v969 = vrot.slane %v541, 3
        %v970 = vrot.slane %v547, 3
        %v971 = vrot.slane %v551, 3
        %v972 = vrot.slane %v557, 3
        %v973 = vrot.slane %v561, 3
        %v974 = vrot.slane %v567, 3
        %v975 = vrot.slane %v571, 3
        %v976 = vrot.slane %v577, 3
        %v977 = vrot.slane %v581, 3
        %v978 = vrot.slane %v587, 3
        %v979 = vrot.slane %v591, 3
        %v980 = vrot.slane %v597, 3
        %v981 = vrot.slane %v601, 3
        %v982 = vrot.slane %v607, 3
        %v983 = vrot.slane %v611, 3
        %v984 = vrot.slane %v617, 3
        %v985 = vrot.slane %v621, 3
        %v986 = vrot.slane %v627, 3
        %v987 = vrot.slane %v631, 3
        %v988 = vrot.slane %v637, 3
        %v989 = vrot.slane %v641, 3
        %v990 = vrot.slane %v647, 3
        %v991 = vrot.slane %v651, 3
        %v992 = vrot.slane %v657, 3
        %v993 = vrot.slane %v661, 3
        %v994 = vrot.slane %v667, 3
        %v995 = vrot.slane %v671, 3
        %v996 = vrot.slane %v677, 3
        %v997 = vrot.slane %v681, 3
        %v998 = vrot.slane %v687, 3
        %v999 = vrot.slane %v691, 3
        %v1000 = vrot.slane %v697, 3
        %v1001 = vrot.slane %v701, 3
        %v1002 = vrot.slane %v707, 3
        %v1003 = vrot.slane %v711, 3
        %v1004 = vrot.slane %v717, 3
        %v1005 = vrot.slane %v721, 3
        %v1006 = vrot.slane %v727, 3
        %v1007 = vrot.slane %v731, 3
        %v1008 = vlaneseq
        %v1009 = vshrl.u32 %v1008, 7
        %vm1010 = vcmp.lt.s32.totalorder %v1009, 5
        %v1011 = vsel %vm1010, %v1006, %v1007
        %v1012 = vsel %vm1010, %v1005, %v1006
        %v1013 = vsel %vm1010, %v1003, %v1004
        %v1014 = vsel %vm1010, %v1002, %v1003
        %v1015 = vsel %vm1010, %v1000, %v1001
        %v1016 = vsel %vm1010, %v999, %v1000
        %v1017 = vsel %vm1010, %v997, %v998
        %v1018 = vsel %vm1010, %v996, %v997
        %v1019 = vsel %vm1010, %v994, %v995
        %v1020 = vsel %vm1010, %v993, %v994
        %v1021 = vsel %vm1010, %v991, %v992
        %v1022 = vsel %vm1010, %v990, %v991
        %v1023 = vsel %vm1010, %v988, %v989
        %v1024 = vsel %vm1010, %v987, %v988
        %v1025 = vsel %vm1010, %v985, %v986
        %v1026 = vsel %vm1010, %v984, %v985
        %v1027 = vsel %vm1010, %v982, %v983
        %v1028 = vsel %vm1010, %v981, %v982
        %v1029 = vsel %vm1010, %v979, %v980
        %v1030 = vsel %vm1010, %v978, %v979
        %v1031 = vsel %vm1010, %v976, %v977
        %v1032 = vsel %vm1010, %v975, %v976
        %v1033 = vsel %vm1010, %v973, %v974
        %v1034 = vsel %vm1010, %v972, %v973
        %v1035 = vsel %vm1010, %v970, %v971
        %v1036 = vsel %vm1010, %v969, %v970
        %v1037 = vsel %vm1010, %v967, %v968
        %v1038 = vsel %vm1010, %v966, %v967
        %v1039 = vsel %vm1010, %v964, %v965
        %v1040 = vsel %vm1010, %v963, %v964
        %v1041 = vsel %vm1010, %v961, %v962
        %v1042 = vsel %vm1010, %v960, %v961
        %v1043 = vrot.slane %v499, 4
        %v1044 = vrot.slane %v503, 4
        %v1045 = vrot.slane %v509, 4
        %v1046 = vrot.slane %v513, 4
        %v1047 = vrot.slane %v519, 4
        %v1048 = vrot.slane %v523, 4
        %v1049 = vrot.slane %v529, 4
        %v1050 = vrot.slane %v533, 4
        %v1051 = vrot.slane %v539, 4
        %v1052 = vrot.slane %v543, 4
        %v1053 = vrot.slane %v549, 4
        %v1054 = vrot.slane %v553, 4
        %v1055 = vrot.slane %v559, 4
        %v1056 = vrot.slane %v563, 4
        %v1057 = vrot.slane %v569, 4
        %v1058 = vrot.slane %v573, 4
        %v1059 = vrot.slane %v579, 4
        %v1060 = vrot.slane %v583, 4
        %v1061 = vrot.slane %v589, 4
        %v1062 = vrot.slane %v593, 4
        %v1063 = vrot.slane %v599, 4
        %v1064 = vrot.slane %v603, 4
        %v1065 = vrot.slane %v609, 4
        %v1066 = vrot.slane %v613, 4
        %v1067 = vrot.slane %v619, 4
        %v1068 = vrot.slane %v623, 4
        %v1069 = vrot.slane %v629, 4
        %v1070 = vrot.slane %v633, 4
        %v1071 = vrot.slane %v639, 4
        %v1072 = vrot.slane %v643, 4
        %v1073 = vrot.slane %v649, 4
        %v1074 = vrot.slane %v653, 4
        %v1075 = vrot.slane %v659, 4
        %v1076 = vrot.slane %v663, 4
        %v1077 = vrot.slane %v669, 4
        %v1078 = vrot.slane %v673, 4
        %v1079 = vrot.slane %v679, 4
        %v1080 = vrot.slane %v683, 4
        %v1081 = vrot.slane %v689, 4
        %v1082 = vrot.slane %v693, 4
        %v1083 = vrot.slane %v699, 4
        %v1084 = vrot.slane %v703, 4
        %v1085 = vrot.slane %v709, 4
        %v1086 = vrot.slane %v713, 4
        %v1087 = vrot.slane %v719, 4
        %v1088 = vrot.slane %v723, 4
        %v1089 = vrot.slane %v729, 4
        %v1090 = vrot.slane %v733, 4
        %vm1091 = vcmp.lt.s32.totalorder %v1009, 4
        %v1092 = vsel %vm1091, %v1089, %v1090
        %v1093 = vsel %vm1091, %v1088, %v1089
        %v1094 = vsel %vm1091, %v1086, %v1087
        %v1095 = vsel %vm1091, %v1085, %v1086
        %v1096 = vsel %vm1091, %v1083, %v1084
        %v1097 = vsel %vm1091, %v1082, %v1083
        %v1098 = vsel %vm1091, %v1080, %v1081
        %v1099 = vsel %vm1091, %v1079, %v1080
        %v1100 = vsel %vm1091, %v1077, %v1078
        %v1101 = vsel %vm1091, %v1076, %v1077
        %v1102 = vsel %vm1091, %v1074, %v1075
        %v1103 = vsel %vm1091, %v1073, %v1074
        %v1104 = vsel %vm1091, %v1071, %v1072
        %v1105 = vsel %vm1091, %v1070, %v1071
        %v1106 = vsel %vm1091, %v1068, %v1069
        %v1107 = vsel %vm1091, %v1067, %v1068
        %v1108 = vsel %vm1091, %v1065, %v1066
        %v1109 = vsel %vm1091, %v1064, %v1065
        %v1110 = vsel %vm1091, %v1062, %v1063
        %v1111 = vsel %vm1091, %v1061, %v1062
        %v1112 = vsel %vm1091, %v1059, %v1060
        %v1113 = vsel %vm1091, %v1058, %v1059
        %v1114 = vsel %vm1091, %v1056, %v1057
        %v1115 = vsel %vm1091, %v1055, %v1056
        %v1116 = vsel %vm1091, %v1053, %v1054
        %v1117 = vsel %vm1091, %v1052, %v1053
        %v1118 = vsel %vm1091, %v1050, %v1051
        %v1119 = vsel %vm1091, %v1049, %v1050
        %v1120 = vsel %vm1091, %v1047, %v1048
        %v1121 = vsel %vm1091, %v1046, %v1047
        %v1122 = vsel %vm1091, %v1044, %v1045
        %v1123 = vsel %vm1091, %v1043, %v1044
        %v1124 = vadd.f32 %v1042, %v1123
        %v1125 = vadd.f32 %v1041, %v1122
        %v1126 = vadd.f32 %v1040, %v1121
        %v1127 = vadd.f32 %v1039, %v1120
        %v1128 = vadd.f32 %v1038, %v1119
        %v1129 = vadd.f32 %v1037, %v1118
        %v1130 = vadd.f32 %v1036, %v1117
        %v1131 = vadd.f32 %v1035, %v1116
        %v1132 = vadd.f32 %v1034, %v1115
        %v1133 = vadd.f32 %v1033, %v1114
        %v1134 = vadd.f32 %v1032, %v1113
        %v1135 = vadd.f32 %v1031, %v1112
        %v1136 = vadd.f32 %v1030, %v1111
        %v1137 = vadd.f32 %v1029, %v1110
        %v1138 = vadd.f32 %v1028, %v1109
        %v1139 = vadd.f32 %v1027, %v1108
        %v1140 = vadd.f32 %v1026, %v1107
        %v1141 = vadd.f32 %v1025, %v1106
        %v1142 = vadd.f32 %v1024, %v1105
        %v1143 = vadd.f32 %v1023, %v1104
        %v1144 = vadd.f32 %v1022, %v1103
        %v1145 = vadd.f32 %v1021, %v1102
        %v1146 = vadd.f32 %v1020, %v1101
        %v1147 = vadd.f32 %v1019, %v1100
        %v1148 = vadd.f32 %v1018, %v1099
        %v1149 = vadd.f32 %v1017, %v1098
        %v1150 = vadd.f32 %v1016, %v1097
        %v1151 = vadd.f32 %v1015, %v1096
        %v1152 = vadd.f32 %v1014, %v1095
        %v1153 = vadd.f32 %v1013, %v1094
        %v1154 = vadd.f32 %v1012, %v1093
        %v1155 = vadd.f32 %v1011, %v1092
        %v1156 = vrot.slane %v770, 5
        %v1157 = vrot.slane %v773, 5
        %v1158 = vrot.slane %v778, 5
        %v1159 = vrot.slane %v781, 5
        %v1160 = vrot.slane %v786, 5
        %v1161 = vrot.slane %v789, 5
        %v1162 = vrot.slane %v794, 5
        %v1163 = vrot.slane %v797, 5
        %v1164 = vrot.slane %v802, 5
        %v1165 = vrot.slane %v805, 5
        %v1166 = vrot.slane %v810, 5
        %v1167 = vrot.slane %v813, 5
        %v1168 = vrot.slane %v818, 5
        %v1169 = vrot.slane %v821, 5
        %v1170 = vrot.slane %v826, 5
        %v1171 = vrot.slane %v829, 5
        %v1172 = vrot.slane %v834, 5
        %v1173 = vrot.slane %v837, 5
        %v1174 = vrot.slane %v842, 5
        %v1175 = vrot.slane %v845, 5
        %v1176 = vrot.slane %v850, 5
        %v1177 = vrot.slane %v853, 5
        %v1178 = vrot.slane %v858, 5
        %v1179 = vrot.slane %v861, 5
        %v1180 = vrot.slane %v866, 5
        %v1181 = vrot.slane %v869, 5
        %v1182 = vrot.slane %v874, 5
        %v1183 = vrot.slane %v877, 5
        %v1184 = vrot.slane %v882, 5
        %v1185 = vrot.slane %v885, 5
        %v1186 = vrot.slane %v890, 5
        %v1187 = vrot.slane %v893, 5
        %v1188 = vrot.slane %v898, 5
        %v1189 = vrot.slane %v901, 5
        %v1190 = vrot.slane %v906, 5
        %v1191 = vrot.slane %v909, 5
        %v1192 = vrot.slane %v914, 5
        %v1193 = vrot.slane %v917, 5
        %v1194 = vrot.slane %v922, 5
        %v1195 = vrot.slane %v925, 5
        %v1196 = vrot.slane %v930, 5
        %v1197 = vrot.slane %v933, 5
        %v1198 = vrot.slane %v938, 5
        %v1199 = vrot.slane %v941, 5
        %v1200 = vrot.slane %v946, 5
        %v1201 = vrot.slane %v949, 5
        %v1202 = vrot.slane %v954, 5
        %v1203 = vrot.slane %v957, 5
        %vm1204 = vcmp.lt.s32.totalorder %v1009, 3
        %v1205 = vsel %vm1204, %v1202, %v1203
        %v1206 = vsel %vm1204, %v1201, %v1202
        %v1207 = vsel %vm1204, %v1199, %v1200
        %v1208 = vsel %vm1204, %v1198, %v1199
        %v1209 = vsel %vm1204, %v1196, %v1197
        %v1210 = vsel %vm1204, %v1195, %v1196
        %v1211 = vsel %vm1204, %v1193, %v1194
        %v1212 = vsel %vm1204, %v1192, %v1193
        %v1213 = vsel %vm1204, %v1190, %v1191
        %v1214 = vsel %vm1204, %v1189, %v1190
        %v1215 = vsel %vm1204, %v1187, %v1188
        %v1216 = vsel %vm1204, %v1186, %v1187
        %v1217 = vsel %vm1204, %v1184, %v1185
        %v1218 = vsel %vm1204, %v1183, %v1184
        %v1219 = vsel %vm1204, %v1181, %v1182
        %v1220 = vsel %vm1204, %v1180, %v1181
        %v1221 = vsel %vm1204, %v1178, %v1179
        %v1222 = vsel %vm1204, %v1177, %v1178
        %v1223 = vsel %vm1204, %v1175, %v1176
        %v1224 = vsel %vm1204, %v1174, %v1175
        %v1225 = vsel %vm1204, %v1172, %v1173
        %v1226 = vsel %vm1204, %v1171, %v1172
        %v1227 = vsel %vm1204, %v1169, %v1170
        %v1228 = vsel %vm1204, %v1168, %v1169
        %v1229 = vsel %vm1204, %v1166, %v1167
        %v1230 = vsel %vm1204, %v1165, %v1166
        %v1231 = vsel %vm1204, %v1163, %v1164
        %v1232 = vsel %vm1204, %v1162, %v1163
        %v1233 = vsel %vm1204, %v1160, %v1161
        %v1234 = vsel %vm1204, %v1159, %v1160
        %v1235 = vsel %vm1204, %v1157, %v1158
        %v1236 = vsel %vm1204, %v1156, %v1157
        %v1237 = vadd.f32 %v1124, %v1236
        %v1238 = vadd.f32 %v1125, %v1235
        %v1239 = vadd.f32 %v1126, %v1234
        %v1240 = vadd.f32 %v1127, %v1233
        %v1241 = vadd.f32 %v1128, %v1232
        %v1242 = vadd.f32 %v1129, %v1231
        %v1243 = vadd.f32 %v1130, %v1230
        %v1244 = vadd.f32 %v1131, %v1229
        %v1245 = vadd.f32 %v1132, %v1228
        %v1246 = vadd.f32 %v1133, %v1227
        %v1247 = vadd.f32 %v1134, %v1226
        %v1248 = vadd.f32 %v1135, %v1225
        %v1249 = vadd.f32 %v1136, %v1224
        %v1250 = vadd.f32 %v1137, %v1223
        %v1251 = vadd.f32 %v1138, %v1222
        %v1252 = vadd.f32 %v1139, %v1221
        %v1253 = vadd.f32 %v1140, %v1220
        %v1254 = vadd.f32 %v1141, %v1219
        %v1255 = vadd.f32 %v1142, %v1218
        %v1256 = vadd.f32 %v1143, %v1217
        %v1257 = vadd.f32 %v1144, %v1216
        %v1258 = vadd.f32 %v1145, %v1215
        %v1259 = vadd.f32 %v1146, %v1214
        %v1260 = vadd.f32 %v1147, %v1213
        %v1261 = vadd.f32 %v1148, %v1212
        %v1262 = vadd.f32 %v1149, %v1211
        %v1263 = vadd.f32 %v1150, %v1210
        %v1264 = vadd.f32 %v1151, %v1209
        %v1265 = vadd.f32 %v1152, %v1208
        %v1266 = vadd.f32 %v1153, %v1207
        %v1267 = vadd.f32 %v1154, %v1206
        %v1268 = vadd.f32 %v1155, %v1205
        %v1269 = vld [vmem:[%s191 + $0x30] sm:$0xf]
        %v1270 = vld [vmem:[%s191 + $0x34] sm:$0xf]
        %v1271 = vld [vmem:[%s191 + $0x38] sm:$0xf]
        %v1272 = vld [vmem:[%s191 + $0x3c] sm:$0xf]
        %v1273 = vld [vmem:[%s191 + $0x40] sm:$0xf]
        %v1274 = vld [vmem:[%s191 + $0x44] sm:$0xf]
        %v1275 = vld [vmem:[%s191 + $0x48] sm:$0xf]
        %v1276 = vld [vmem:[%s191 + $0x4c] sm:$0xf]
        %v1277 = vld [vmem:[%s191 + $0x50] sm:$0xf]
        %v1278 = vld [vmem:[%s191 + $0x54] sm:$0xf]
        %v1279 = vld [vmem:[%s191 + $0x58] sm:$0xf]
        %v1280 = vld [vmem:[%s191 + $0x5c] sm:$0xf]
        %v1281 = vld [vmem:[%s191 + $0x60] sm:$0xf]
        %v1282 = vld [vmem:[%s191 + $0x64] sm:$0xf]
        %v1283 = vld [vmem:[%s191 + $0x68] sm:$0xf]
        %v1284 = vld [vmem:[%s191 + $0x6c] sm:$0xf]
        %v1285 = vld [vmem:[%s191 + $0x70] sm:$0xf]
        %v1286 = vld [vmem:[%s191 + $0x74] sm:$0xf]
        %v1287 = vld [vmem:[%s191 + $0x78] sm:$0xf]
        %v1288 = vld [vmem:[%s191 + $0x7c] sm:$0xf]
        %v1289 = vld [vmem:[%s191 + $0x80] sm:$0xf]
        %v1290 = vld [vmem:[%s191 + $0x84] sm:$0xf]
        %v1291 = vld [vmem:[%s191 + $0x88] sm:$0xf]
        %v1292 = vld [vmem:[%s191 + $0x8c] sm:$0xf]
        %v1293 = vld [vmem:[%s191 + $0x90] sm:$0xf]
        %v1294 = vld [vmem:[%s191 + $0x94] sm:$0xf]
        %v1295 = vld [vmem:[%s191 + $0x98] sm:$0xf]
        %v1296 = vld [vmem:[%s191 + $0x9c] sm:$0xf]
        %v1297 = vld [vmem:[%s191 + $0xa0] sm:$0xf]
        %v1298 = vld [vmem:[%s191 + $0xa4] sm:$0xf]
        %v1299 = vld [vmem:[%s191 + $0xa8] sm:$0xf]
        %v1300 = vld [vmem:[%s191 + $0xac] sm:$0xf]
        %v1301 = vld [vmem:[%s191 + $0xb0] sm:$0xf]
        %v1302 = vld [vmem:[%s191 + $0xb4] sm:$0xf]
        %v1303 = vld [vmem:[%s191 + $0xb8] sm:$0xf]
        %v1304 = vld [vmem:[%s191 + $0xbc] sm:$0xf]
        %v1305 = vld [vmem:[%s191 + $0xc0] sm:$0xf]
        %v1306 = vld [vmem:[%s191 + $0xc4] sm:$0xf]
        %v1307 = vld [vmem:[%s191 + $0xc8] sm:$0xf]
        %v1308 = vld [vmem:[%s191 + $0xcc] sm:$0xf]
        %v1309 = vld [vmem:[%s191 + $0xd0] sm:$0xf]
        %v1310 = vld [vmem:[%s191 + $0xd4] sm:$0xf]
        %v1311 = vld [vmem:[%s191 + $0xd8] sm:$0xf]
        %v1312 = vld [vmem:[%s191 + $0xdc] sm:$0xf]
        %v1313 = vld [vmem:[%s191 + $0xe0] sm:$0xf]
        %v1314 = vld [vmem:[%s191 + $0xe4] sm:$0xf]
        %v1315 = vld [vmem:[%s191 + $0xe8] sm:$0xf]
        %v1316 = vld [vmem:[%s191 + $0xec] sm:$0xf]
        %s1317 = scalar_lea.vmem %s1, 6
        %v1318 = vld [vmem:[%s1317] sm:$0x3f]
        %v1367 = vunpack.c.l.b16 %v1269
        %v1368 = vunpack.c.l.b16 %v1270
        %v1369 = vunpack.c.l.b16 %v1271
        %v1370 = vunpack.c.l.b16 %v1272
        %v1371 = vunpack.c.l.b16 %v1273
        %v1372 = vunpack.c.l.b16 %v1274
        %v1373 = vunpack.c.l.b16 %v1275
        %v1374 = vunpack.c.l.b16 %v1276
        %v1375 = vunpack.c.l.b16 %v1277
        %v1376 = vunpack.c.l.b16 %v1278
        %v1377 = vunpack.c.l.b16 %v1279
        %v1378 = vunpack.c.l.b16 %v1280
        %v1379 = vunpack.c.l.b16 %v1281
        %v1380 = vunpack.c.l.b16 %v1282
        %v1381 = vunpack.c.l.b16 %v1283
        %v1382 = vunpack.c.l.b16 %v1284
        %v1383 = vunpack.c.l.b16 %v1285
        %v1384 = vunpack.c.l.b16 %v1286
        %v1385 = vunpack.c.l.b16 %v1287
        %v1386 = vunpack.c.l.b16 %v1288
        %v1387 = vunpack.c.l.b16 %v1289
        %v1388 = vunpack.c.l.b16 %v1290
        %v1389 = vunpack.c.l.b16 %v1291
        %v1390 = vunpack.c.l.b16 %v1292
        %v1391 = vunpack.c.l.b16 %v1293
        %v1392 = vunpack.c.l.b16 %v1294
        %v1393 = vunpack.c.l.b16 %v1295
        %v1394 = vunpack.c.l.b16 %v1296
        %v1395 = vunpack.c.l.b16 %v1297
        %v1396 = vunpack.c.l.b16 %v1298
        %v1397 = vunpack.c.l.b16 %v1299
        %v1398 = vunpack.c.l.b16 %v1300
        %v1399 = vunpack.c.l.b16 %v1301
        %v1400 = vunpack.c.l.b16 %v1302
        %v1401 = vunpack.c.l.b16 %v1303
        %v1402 = vunpack.c.l.b16 %v1304
        %v1403 = vunpack.c.l.b16 %v1305
        %v1404 = vunpack.c.l.b16 %v1306
        %v1405 = vunpack.c.l.b16 %v1307
        %v1406 = vunpack.c.l.b16 %v1308
        %v1407 = vunpack.c.l.b16 %v1309
        %v1408 = vunpack.c.l.b16 %v1310
        %v1409 = vunpack.c.l.b16 %v1311
        %v1410 = vunpack.c.l.b16 %v1312
        %v1411 = vunpack.c.l.b16 %v1313
        %v1412 = vunpack.c.l.b16 %v1314
        %v1413 = vunpack.c.l.b16 %v1315
        %v1414 = vunpack.c.l.b16 %v1316
        %v1415 = vpack.c.b16 %v1368, %v1367
        %v1416 = vpack.c.b16 %v1370, %v1369
        %v1417 = vpack.c.b16 %v1372, %v1371
        %v1418 = vpack.c.b16 %v1374, %v1373
        %v1419 = vpack.c.b16 %v1376, %v1375
        %v1420 = vpack.c.b16 %v1378, %v1377
        %v1421 = vpack.c.b16 %v1380, %v1379
        %v1422 = vpack.c.b16 %v1382, %v1381
        %v1423 = vpack.c.b16 %v1384, %v1383
        %v1424 = vpack.c.b16 %v1386, %v1385
        %v1425 = vpack.c.b16 %v1388, %v1387
        %v1426 = vpack.c.b16 %v1390, %v1389
        %v1427 = vpack.c.b16 %v1392, %v1391
        %v1428 = vpack.c.b16 %v1394, %v1393
        %v1429 = vpack.c.b16 %v1396, %v1395
        %v1430 = vpack.c.b16 %v1398, %v1397
        %v1431 = vpack.c.b16 %v1400, %v1399
        %v1432 = vpack.c.b16 %v1402, %v1401
        %v1433 = vpack.c.b16 %v1404, %v1403
        %v1434 = vpack.c.b16 %v1406, %v1405
        %v1435 = vpack.c.b16 %v1408, %v1407
        %v1436 = vpack.c.b16 %v1410, %v1409
        %v1437 = vpack.c.b16 %v1412, %v1411
        %v1438 = vpack.c.b16 %v1414, %v1413
        %v1440 = vcombine.high %v1318, %v1318
        %v1442 = vunpack.c.l.s4 1983009808
        %v1443 = vunpack.c.0.s8 %v1442
        %v1444 = vlaneseq
        %v1445 = vshrl.u32 %v1444, 7
        %v1446 = vsub.s32 %v1443, %v1445
        %v1447 = vrot.slane %v1318, %v1446
        %v1449 = vunpack.c.l.s4 1983009808
        %v1450 = vunpack.c.0.s8 %v1449
        %v1451 = vlaneseq
        %v1452 = vshrl.u32 %v1451, 7
        %v1453 = vsub.s32 %v1450, %v1452
        %v1454 = vrot.slane %v1440, %v1453
        %v1455 = vcombine.high %v1447, %v1447
        %v1457 = vsel %vm379, %v1415, 0
        %v1460 = vsel %vm379, %v1416, 0
        %v1463 = vsel %vm379, %v1417, 0
        %v1466 = vsel %vm379, %v1418, 0
        %v1469 = vsel %vm379, %v1419, 0
        %v1472 = vsel %vm379, %v1420, 0
        %v1475 = vsel %vm379, %v1421, 0
        %v1478 = vsel %vm379, %v1422, 0
        %v1481 = vsel %vm379, %v1423, 0
        %v1484 = vsel %vm379, %v1424, 0
        %v1487 = vsel %vm379, %v1425, 0
        %v1490 = vsel %vm379, %v1426, 0
        %v1493 = vsel %vm379, %v1427, 0
        %v1496 = vsel %vm379, %v1428, 0
        %v1499 = vsel %vm379, %v1429, 0
        %v1502 = vsel %vm379, %v1430, 0
        %v1505 = vsel %vm379, %v1431, 0
        %v1508 = vsel %vm379, %v1432, 0
        %v1511 = vsel %vm379, %v1433, 0
        %v1514 = vsel %vm379, %v1434, 0
        %v1517 = vsel %vm379, %v1435, 0
        %v1520 = vsel %vm379, %v1436, 0
        %v1523 = vsel %vm379, %v1437, 0
        %v1526 = vsel %vm379, %v1438, 0
        %v1529 = vsel %vm452, %v1447, 0
        %v1532 = vsel %vm452, %v1455, 0
        %v1535 = vsel %vm452, %v1454, 0
        %1537 = vmatprep.subr.bf16.mxu0 %v1532
        %1538 = vmatpush1.bf16.msra.mxu0 %v1529
        %1539 = vmatprep.subr.bf16.mxu0 0
        %1540 = vmatpush1.bf16.msra.mxu0 0
        %1541 = vmatprep.subr.bf16.mxu0 0
        %1542 = vmatpush1.bf16.msra.mxu0 0
        %1543 = vmatprep.subr.bf16.mxu0 0
        %1544 = vmatpush1.bf16.msra.mxu0 0
        %1545 = vmatprep.subr.bf16.mxu0 0
        %1546 = vmatpush1.bf16.msra.mxu0 0
        %1547 = vmatprep.subr.bf16.mxu0 0
        %1548 = vmatpush1.bf16.msra.mxu0 0
        %1549 = vmatprep.subr.bf16.mxu0 0
        %1550 = vmatpush1.bf16.msra.mxu0 0
        %1551 = vmatprep.subr.bf16.mxu0 0
        %1552 = vmatpush1.bf16.msra.mxu0 0
        %1553 = vmatprep.subr.bf16.mxu0 0
        %1554 = vmatpush1.bf16.msra.mxu0 0
        %1555 = vmatprep.subr.bf16.mxu0 0
        %1556 = vmatpush1.bf16.msra.mxu0 0
        %1557 = vmatprep.subr.bf16.mxu0 0
        %1558 = vmatpush1.bf16.msra.mxu0 0
        %1559 = vmatprep.subr.bf16.mxu0 0
        %1560 = vmatpush1.bf16.msra.mxu0 0
        %1561 = vmatprep.subr.bf16.mxu0 0
        %1562 = vmatpush1.bf16.msra.mxu0 0
        %1563 = vmatprep.subr.bf16.mxu0 0
        %1564 = vmatpush1.bf16.msra.mxu0 0
        %1565 = vmatprep.subr.bf16.mxu0 0
        %1566 = vmatpush1.bf16.msra.mxu0 0
        %1567 = vmatprep.subr.bf16.mxu0 0
        %1568 = vmatpush1.bf16.msra.mxu0 0
        %1569 = vmatprep.mubr.bf16.mxu0 0
        %1570 = vmatmul.mubr.bf16.gmra.mrb[0].mxu0 %v1457
        %v1571 = vpop.f32.mrb[0].mxu0
        %v1572 = vadd.f32 0.0, %v1571
        %v1573 = vpop.f32.mrb[0].mxu0
        %v1574 = vadd.f32 0.0, %v1573
        %v1575 = vpop.f32.mrb[0].mxu0
        %v1576 = vadd.f32 0.0, %v1575
        %v1577 = vpop.f32.mrb[0].mxu0
        %v1578 = vadd.f32 0.0, %v1577
        %1579 = vmatprep.mubr.bf16.mxu0 0
        %1580 = vmatmul.mubr.bf16.gmra.mrb[0].mxu0 %v1460
        %v1581 = vpop.f32.mrb[0].mxu0
        %v1582 = vadd.f32 0.0, %v1581
        %v1583 = vpop.f32.mrb[0].mxu0
        %v1584 = vadd.f32 0.0, %v1583
        %v1585 = vpop.f32.mrb[0].mxu0
        %v1586 = vadd.f32 0.0, %v1585
        %v1587 = vpop.f32.mrb[0].mxu0
        %v1588 = vadd.f32 0.0, %v1587
        %1589 = vmatprep.mubr.bf16.mxu0 0
        %1590 = vmatmul.mubr.bf16.gmra.mrb[0].mxu0 %v1463
        %v1591 = vpop.f32.mrb[0].mxu0
        %v1592 = vadd.f32 0.0, %v1591
        %v1593 = vpop.f32.mrb[0].mxu0
        %v1594 = vadd.f32 0.0, %v1593
        %v1595 = vpop.f32.mrb[0].mxu0
        %v1596 = vadd.f32 0.0, %v1595
        %v1597 = vpop.f32.mrb[0].mxu0
        %v1598 = vadd.f32 0.0, %v1597
        %1599 = vmatprep.mubr.bf16.mxu0 0
        %1600 = vmatmul.mubr.bf16.gmra.mrb[0].mxu0 %v1466
        %v1601 = vpop.f32.mrb[0].mxu0
        %v1602 = vadd.f32 0.0, %v1601
        %v1603 = vpop.f32.mrb[0].mxu0
        %v1604 = vadd.f32 0.0, %v1603
        %v1605 = vpop.f32.mrb[0].mxu0
        %v1606 = vadd.f32 0.0, %v1605
        %v1607 = vpop.f32.mrb[0].mxu0
        %v1608 = vadd.f32 0.0, %v1607
        %1609 = vmatprep.mubr.bf16.mxu0 0
        %1610 = vmatmul.mubr.bf16.gmra.mrb[0].mxu0 %v1469
        %v1611 = vpop.f32.mrb[0].mxu0
        %v1612 = vadd.f32 0.0, %v1611
        %v1613 = vpop.f32.mrb[0].mxu0
        %v1614 = vadd.f32 0.0, %v1613
        %v1615 = vpop.f32.mrb[0].mxu0
        %v1616 = vadd.f32 0.0, %v1615
        %v1617 = vpop.f32.mrb[0].mxu0
        %v1618 = vadd.f32 0.0, %v1617
        %1619 = vmatprep.mubr.bf16.mxu0 0
        %1620 = vmatmul.mubr.bf16.gmra.mrb[0].mxu0 %v1472
        %v1621 = vpop.f32.mrb[0].mxu0
        %v1622 = vadd.f32 0.0, %v1621
        %v1623 = vpop.f32.mrb[0].mxu0
        %v1624 = vadd.f32 0.0, %v1623
        %v1625 = vpop.f32.mrb[0].mxu0
        %v1626 = vadd.f32 0.0, %v1625
        %v1627 = vpop.f32.mrb[0].mxu0
        %v1628 = vadd.f32 0.0, %v1627
        %1629 = vmatprep.mubr.bf16.mxu0 0
        %1630 = vmatmul.mubr.bf16.gmra.mrb[0].mxu0 %v1475
        %v1631 = vpop.f32.mrb[0].mxu0
        %v1632 = vadd.f32 0.0, %v1631
        %v1633 = vpop.f32.mrb[0].mxu0
        %v1634 = vadd.f32 0.0, %v1633
        %v1635 = vpop.f32.mrb[0].mxu0
        %v1636 = vadd.f32 0.0, %v1635
        %v1637 = vpop.f32.mrb[0].mxu0
        %v1638 = vadd.f32 0.0, %v1637
        %1639 = vmatprep.mubr.bf16.mxu0 0
        %1640 = vmatmul.mubr.bf16.gmra.mrb[0].mxu0 %v1478
        %v1641 = vpop.f32.mrb[0].mxu0
        %v1642 = vadd.f32 0.0, %v1641
        %v1643 = vpop.f32.mrb[0].mxu0
        %v1644 = vadd.f32 0.0, %v1643
        %v1645 = vpop.f32.mrb[0].mxu0
        %v1646 = vadd.f32 0.0, %v1645
        %v1647 = vpop.f32.mrb[0].mxu0
        %v1648 = vadd.f32 0.0, %v1647
        %1649 = vmatprep.mubr.bf16.mxu0 0
        %1650 = vmatmul.mubr.bf16.gmra.mrb[0].mxu0 %v1481
        %v1651 = vpop.f32.mrb[0].mxu0
        %v1652 = vadd.f32 0.0, %v1651
        %v1653 = vpop.f32.mrb[0].mxu0
        %v1654 = vadd.f32 0.0, %v1653
        %v1655 = vpop.f32.mrb[0].mxu0
        %v1656 = vadd.f32 0.0, %v1655
        %v1657 = vpop.f32.mrb[0].mxu0
        %v1658 = vadd.f32 0.0, %v1657
        %1659 = vmatprep.mubr.bf16.mxu0 0
        %1660 = vmatmul.mubr.bf16.gmra.mrb[0].mxu0 %v1484
        %v1661 = vpop.f32.mrb[0].mxu0
        %v1662 = vadd.f32 0.0, %v1661
        %v1663 = vpop.f32.mrb[0].mxu0
        %v1664 = vadd.f32 0.0, %v1663
        %v1665 = vpop.f32.mrb[0].mxu0
        %v1666 = vadd.f32 0.0, %v1665
        %v1667 = vpop.f32.mrb[0].mxu0
        %v1668 = vadd.f32 0.0, %v1667
        %1669 = vmatprep.mubr.bf16.mxu0 0
        %1670 = vmatmul.mubr.bf16.gmra.mrb[0].mxu0 %v1487
        %v1671 = vpop.f32.mrb[0].mxu0
        %v1672 = vadd.f32 0.0, %v1671
        %v1673 = vpop.f32.mrb[0].mxu0
        %v1674 = vadd.f32 0.0, %v1673
        %v1675 = vpop.f32.mrb[0].mxu0
        %v1676 = vadd.f32 0.0, %v1675
        %v1677 = vpop.f32.mrb[0].mxu0
        %v1678 = vadd.f32 0.0, %v1677
        %1679 = vmatprep.mubr.bf16.mxu0 0
        %1680 = vmatmul.mubr.bf16.gmra.mrb[0].mxu0 %v1490
        %v1681 = vpop.f32.mrb[0].mxu0
        %v1682 = vadd.f32 0.0, %v1681
        %v1683 = vpop.f32.mrb[0].mxu0
        %v1684 = vadd.f32 0.0, %v1683
        %v1685 = vpop.f32.mrb[0].mxu0
        %v1686 = vadd.f32 0.0, %v1685
        %v1687 = vpop.f32.mrb[0].mxu0
        %v1688 = vadd.f32 0.0, %v1687
        %1689 = vmatprep.mubr.bf16.mxu0 0
        %1690 = vmatmul.mubr.bf16.gmra.mrb[0].mxu0 %v1493
        %v1691 = vpop.f32.mrb[0].mxu0
        %v1692 = vadd.f32 0.0, %v1691
        %v1693 = vpop.f32.mrb[0].mxu0
        %v1694 = vadd.f32 0.0, %v1693
        %v1695 = vpop.f32.mrb[0].mxu0
        %v1696 = vadd.f32 0.0, %v1695
        %v1697 = vpop.f32.mrb[0].mxu0
        %v1698 = vadd.f32 0.0, %v1697
        %1699 = vmatprep.mubr.bf16.mxu0 0
        %1700 = vmatmul.mubr.bf16.gmra.mrb[0].mxu0 %v1496
        %v1701 = vpop.f32.mrb[0].mxu0
        %v1702 = vadd.f32 0.0, %v1701
        %v1703 = vpop.f32.mrb[0].mxu0
        %v1704 = vadd.f32 0.0, %v1703
        %v1705 = vpop.f32.mrb[0].mxu0
        %v1706 = vadd.f32 0.0, %v1705
        %v1707 = vpop.f32.mrb[0].mxu0
        %v1708 = vadd.f32 0.0, %v1707
        %1709 = vmatprep.mubr.bf16.mxu0 0
        %1710 = vmatmul.mubr.bf16.gmra.mrb[0].mxu0 %v1499
        %v1711 = vpop.f32.mrb[0].mxu0
        %v1712 = vadd.f32 0.0, %v1711
        %v1713 = vpop.f32.mrb[0].mxu0
        %v1714 = vadd.f32 0.0, %v1713
        %v1715 = vpop.f32.mrb[0].mxu0
        %v1716 = vadd.f32 0.0, %v1715
        %v1717 = vpop.f32.mrb[0].mxu0
        %v1718 = vadd.f32 0.0, %v1717
        %1719 = vmatprep.mubr.bf16.mxu0 0
        %1720 = vmatmul.mubr.bf16.gmra.mrb[0].mxu0 %v1502
        %v1721 = vpop.f32.mrb[0].mxu0
        %v1722 = vadd.f32 0.0, %v1721
        %v1723 = vpop.f32.mrb[0].mxu0
        %v1724 = vadd.f32 0.0, %v1723
        %v1725 = vpop.f32.mrb[0].mxu0
        %v1726 = vadd.f32 0.0, %v1725
        %v1727 = vpop.f32.mrb[0].mxu0
        %v1728 = vadd.f32 0.0, %v1727
        %1729 = vmatprep.mubr.bf16.mxu0 0
        %1730 = vmatmul.mubr.bf16.gmra.mrb[0].mxu0 %v1505
        %v1731 = vpop.f32.mrb[0].mxu0
        %v1732 = vadd.f32 0.0, %v1731
        %v1733 = vpop.f32.mrb[0].mxu0
        %v1734 = vadd.f32 0.0, %v1733
        %v1735 = vpop.f32.mrb[0].mxu0
        %v1736 = vadd.f32 0.0, %v1735
        %v1737 = vpop.f32.mrb[0].mxu0
        %v1738 = vadd.f32 0.0, %v1737
        %1739 = vmatprep.mubr.bf16.mxu0 0
        %1740 = vmatmul.mubr.bf16.gmra.mrb[0].mxu0 %v1508
        %v1741 = vpop.f32.mrb[0].mxu0
        %v1742 = vadd.f32 0.0, %v1741
        %v1743 = vpop.f32.mrb[0].mxu0
        %v1744 = vadd.f32 0.0, %v1743
        %v1745 = vpop.f32.mrb[0].mxu0
        %v1746 = vadd.f32 0.0, %v1745
        %v1747 = vpop.f32.mrb[0].mxu0
        %v1748 = vadd.f32 0.0, %v1747
        %1749 = vmatprep.mubr.bf16.mxu0 0
        %1750 = vmatmul.mubr.bf16.gmra.mrb[0].mxu0 %v1511
        %v1751 = vpop.f32.mrb[0].mxu0
        %v1752 = vadd.f32 0.0, %v1751
        %v1753 = vpop.f32.mrb[0].mxu0
        %v1754 = vadd.f32 0.0, %v1753
        %v1755 = vpop.f32.mrb[0].mxu0
        %v1756 = vadd.f32 0.0, %v1755
        %v1757 = vpop.f32.mrb[0].mxu0
        %v1758 = vadd.f32 0.0, %v1757
        %1759 = vmatprep.mubr.bf16.mxu0 0
        %1760 = vmatmul.mubr.bf16.gmra.mrb[0].mxu0 %v1514
        %v1761 = vpop.f32.mrb[0].mxu0
        %v1762 = vadd.f32 0.0, %v1761
        %v1763 = vpop.f32.mrb[0].mxu0
        %v1764 = vadd.f32 0.0, %v1763
        %v1765 = vpop.f32.mrb[0].mxu0
        %v1766 = vadd.f32 0.0, %v1765
        %v1767 = vpop.f32.mrb[0].mxu0
        %v1768 = vadd.f32 0.0, %v1767
        %1769 = vmatprep.mubr.bf16.mxu0 0
        %1770 = vmatmul.mubr.bf16.gmra.mrb[0].mxu0 %v1517
        %v1771 = vpop.f32.mrb[0].mxu0
        %v1772 = vadd.f32 0.0, %v1771
        %v1773 = vpop.f32.mrb[0].mxu0
        %v1774 = vadd.f32 0.0, %v1773
        %v1775 = vpop.f32.mrb[0].mxu0
        %v1776 = vadd.f32 0.0, %v1775
        %v1777 = vpop.f32.mrb[0].mxu0
        %v1778 = vadd.f32 0.0, %v1777
        %1779 = vmatprep.mubr.bf16.mxu0 0
        %1780 = vmatmul.mubr.bf16.gmra.mrb[0].mxu0 %v1520
        %v1781 = vpop.f32.mrb[0].mxu0
        %v1782 = vadd.f32 0.0, %v1781
        %v1783 = vpop.f32.mrb[0].mxu0
        %v1784 = vadd.f32 0.0, %v1783
        %v1785 = vpop.f32.mrb[0].mxu0
        %v1786 = vadd.f32 0.0, %v1785
        %v1787 = vpop.f32.mrb[0].mxu0
        %v1788 = vadd.f32 0.0, %v1787
        %1789 = vmatprep.mubr.bf16.mxu0 0
        %1790 = vmatmul.mubr.bf16.gmra.mrb[0].mxu0 %v1523
        %v1791 = vpop.f32.mrb[0].mxu0
        %v1792 = vadd.f32 0.0, %v1791
        %v1793 = vpop.f32.mrb[0].mxu0
        %v1794 = vadd.f32 0.0, %v1793
        %v1795 = vpop.f32.mrb[0].mxu0
        %v1796 = vadd.f32 0.0, %v1795
        %v1797 = vpop.f32.mrb[0].mxu0
        %v1798 = vadd.f32 0.0, %v1797
        %1799 = vmatprep.mubr.bf16.mxu0 0
        %1800 = vmatmul.mubr.bf16.gmra.mrb[0].mxu0 %v1526
        %v1801 = vpop.f32.mrb[0].mxu0
        %v1802 = vadd.f32 0.0, %v1801
        %v1803 = vpop.f32.mrb[0].mxu0
        %v1804 = vadd.f32 0.0, %v1803
        %v1805 = vpop.f32.mrb[0].mxu0
        %v1806 = vadd.f32 0.0, %v1805
        %v1807 = vpop.f32.mrb[0].mxu0
        %v1808 = vadd.f32 0.0, %v1807
        %1809 = vdwg.mxu0
        %1810 = vmatprep.subr.bf16.mxu0 0
        %1811 = vmatpush1.bf16.msra.mxu0 %v1535
        %1812 = vmatprep.subr.bf16.mxu0 0
        %1813 = vmatpush1.bf16.msra.mxu0 0
        %1814 = vmatprep.subr.bf16.mxu0 0
        %1815 = vmatpush1.bf16.msra.mxu0 0
        %1816 = vmatprep.subr.bf16.mxu0 0
        %1817 = vmatpush1.bf16.msra.mxu0 0
        %1818 = vmatprep.subr.bf16.mxu0 0
        %1819 = vmatpush1.bf16.msra.mxu0 0
        %1820 = vmatprep.subr.bf16.mxu0 0
        %1821 = vmatpush1.bf16.msra.mxu0 0
        %1822 = vmatprep.subr.bf16.mxu0 0
        %1823 = vmatpush1.bf16.msra.mxu0 0
        %1824 = vmatprep.subr.bf16.mxu0 0
        %1825 = vmatpush1.bf16.msra.mxu0 0
        %1826 = vmatprep.subr.bf16.mxu0 0
        %1827 = vmatpush1.bf16.msra.mxu0 0
        %1828 = vmatprep.subr.bf16.mxu0 0
        %1829 = vmatpush1.bf16.msra.mxu0 0
        %1830 = vmatprep.subr.bf16.mxu0 0
        %1831 = vmatpush1.bf16.msra.mxu0 0
        %1832 = vmatprep.subr.bf16.mxu0 0
        %1833 = vmatpush1.bf16.msra.mxu0 0
        %1834 = vmatprep.subr.bf16.mxu0 0
        %1835 = vmatpush1.bf16.msra.mxu0 0
        %1836 = vmatprep.subr.bf16.mxu0 0
        %1837 = vmatpush1.bf16.msra.mxu0 0
        %1838 = vmatprep.subr.bf16.mxu0 0
        %1839 = vmatpush1.bf16.msra.mxu0 0
        %1840 = vmatprep.subr.bf16.mxu0 0
        %1841 = vmatpush1.bf16.msra.mxu0 0
        %1842 = vmatprep.mubr.bf16.mxu0 0
        %1843 = vmatmul.mubr.bf16.gmra.mrb[0].mxu0 %v1457
        %v1844 = vpop.f32.mrb[0].mxu0
        %v1845 = vadd.f32 0.0, %v1844
        %v1846 = vpop.f32.mrb[0].mxu0
        %v1847 = vpop.f32.mrb[0].mxu0
        %v1848 = vadd.f32 0.0, %v1847
        %v1849 = vpop.f32.mrb[0].mxu0
        %1850 = vmatprep.mubr.bf16.mxu0 0
        %1851 = vmatmul.mubr.bf16.gmra.mrb[0].mxu0 %v1460
        %v1852 = vpop.f32.mrb[0].mxu0
        %v1853 = vadd.f32 0.0, %v1852
        %v1854 = vpop.f32.mrb[0].mxu0
        %v1855 = vpop.f32.mrb[0].mxu0
        %v1856 = vadd.f32 0.0, %v1855
        %v1857 = vpop.f32.mrb[0].mxu0
        %1858 = vmatprep.mubr.bf16.mxu0 0
        %1859 = vmatmul.mubr.bf16.gmra.mrb[0].mxu0 %v1463
        %v1860 = vpop.f32.mrb[0].mxu0
        %v1861 = vadd.f32 0.0, %v1860
        %v1862 = vpop.f32.mrb[0].mxu0
        %v1863 = vpop.f32.mrb[0].mxu0
        %v1864 = vadd.f32 0.0, %v1863
        %v1865 = vpop.f32.mrb[0].mxu0
        %1866 = vmatprep.mubr.bf16.mxu0 0
        %1867 = vmatmul.mubr.bf16.gmra.mrb[0].mxu0 %v1466
        %v1868 = vpop.f32.mrb[0].mxu0
        %v1869 = vadd.f32 0.0, %v1868
        %v1870 = vpop.f32.mrb[0].mxu0
        %v1871 = vpop.f32.mrb[0].mxu0
        %v1872 = vadd.f32 0.0, %v1871
        %v1873 = vpop.f32.mrb[0].mxu0
        %1874 = vmatprep.mubr.bf16.mxu0 0
        %1875 = vmatmul.mubr.bf16.gmra.mrb[0].mxu0 %v1469
        %v1876 = vpop.f32.mrb[0].mxu0
        %v1877 = vadd.f32 0.0, %v1876
        %v1878 = vpop.f32.mrb[0].mxu0
        %v1879 = vpop.f32.mrb[0].mxu0
        %v1880 = vadd.f32 0.0, %v1879
        %v1881 = vpop.f32.mrb[0].mxu0
        %1882 = vmatprep.mubr.bf16.mxu0 0
        %1883 = vmatmul.mubr.bf16.gmra.mrb[0].mxu0 %v1472
        %v1884 = vpop.f32.mrb[0].mxu0
        %v1885 = vadd.f32 0.0, %v1884
        %v1886 = vpop.f32.mrb[0].mxu0
        %v1887 = vpop.f32.mrb[0].mxu0
        %v1888 = vadd.f32 0.0, %v1887
        %v1889 = vpop.f32.mrb[0].mxu0
        %1890 = vmatprep.mubr.bf16.mxu0 0
        %1891 = vmatmul.mubr.bf16.gmra.mrb[0].mxu0 %v1475
        %v1892 = vpop.f32.mrb[0].mxu0
        %v1893 = vadd.f32 0.0, %v1892
        %v1894 = vpop.f32.mrb[0].mxu0
        %v1895 = vpop.f32.mrb[0].mxu0
        %v1896 = vadd.f32 0.0, %v1895
        %v1897 = vpop.f32.mrb[0].mxu0
        %1898 = vmatprep.mubr.bf16.mxu0 0
        %1899 = vmatmul.mubr.bf16.gmra.mrb[0].mxu0 %v1478
        %v1900 = vpop.f32.mrb[0].mxu0
        %v1901 = vadd.f32 0.0, %v1900
        %v1902 = vpop.f32.mrb[0].mxu0
        %v1903 = vpop.f32.mrb[0].mxu0
        %v1904 = vadd.f32 0.0, %v1903
        %v1905 = vpop.f32.mrb[0].mxu0
        %1906 = vmatprep.mubr.bf16.mxu0 0
        %1907 = vmatmul.mubr.bf16.gmra.mrb[0].mxu0 %v1481
        %v1908 = vpop.f32.mrb[0].mxu0
        %v1909 = vadd.f32 0.0, %v1908
        %v1910 = vpop.f32.mrb[0].mxu0
        %v1911 = vpop.f32.mrb[0].mxu0
        %v1912 = vadd.f32 0.0, %v1911
        %v1913 = vpop.f32.mrb[0].mxu0
        %1914 = vmatprep.mubr.bf16.mxu0 0
        %1915 = vmatmul.mubr.bf16.gmra.mrb[0].mxu0 %v1484
        %v1916 = vpop.f32.mrb[0].mxu0
        %v1917 = vadd.f32 0.0, %v1916
        %v1918 = vpop.f32.mrb[0].mxu0
        %v1919 = vpop.f32.mrb[0].mxu0
        %v1920 = vadd.f32 0.0, %v1919
        %v1921 = vpop.f32.mrb[0].mxu0
        %1922 = vmatprep.mubr.bf16.mxu0 0
        %1923 = vmatmul.mubr.bf16.gmra.mrb[0].mxu0 %v1487
        %v1924 = vpop.f32.mrb[0].mxu0
        %v1925 = vadd.f32 0.0, %v1924
        %v1926 = vpop.f32.mrb[0].mxu0
        %v1927 = vpop.f32.mrb[0].mxu0
        %v1928 = vadd.f32 0.0, %v1927
        %v1929 = vpop.f32.mrb[0].mxu0
        %1930 = vmatprep.mubr.bf16.mxu0 0
        %1931 = vmatmul.mubr.bf16.gmra.mrb[0].mxu0 %v1490
        %v1932 = vpop.f32.mrb[0].mxu0
        %v1933 = vadd.f32 0.0, %v1932
        %v1934 = vpop.f32.mrb[0].mxu0
        %v1935 = vpop.f32.mrb[0].mxu0
        %v1936 = vadd.f32 0.0, %v1935
        %v1937 = vpop.f32.mrb[0].mxu0
        %1938 = vmatprep.mubr.bf16.mxu0 0
        %1939 = vmatmul.mubr.bf16.gmra.mrb[0].mxu0 %v1493
        %v1940 = vpop.f32.mrb[0].mxu0
        %v1941 = vadd.f32 0.0, %v1940
        %v1942 = vpop.f32.mrb[0].mxu0
        %v1943 = vpop.f32.mrb[0].mxu0
        %v1944 = vadd.f32 0.0, %v1943
        %v1945 = vpop.f32.mrb[0].mxu0
        %1946 = vmatprep.mubr.bf16.mxu0 0
        %1947 = vmatmul.mubr.bf16.gmra.mrb[0].mxu0 %v1496
        %v1948 = vpop.f32.mrb[0].mxu0
        %v1949 = vadd.f32 0.0, %v1948
        %v1950 = vpop.f32.mrb[0].mxu0
        %v1951 = vpop.f32.mrb[0].mxu0
        %v1952 = vadd.f32 0.0, %v1951
        %v1953 = vpop.f32.mrb[0].mxu0
        %1954 = vmatprep.mubr.bf16.mxu0 0
        %1955 = vmatmul.mubr.bf16.gmra.mrb[0].mxu0 %v1499
        %v1956 = vpop.f32.mrb[0].mxu0
        %v1957 = vadd.f32 0.0, %v1956
        %v1958 = vpop.f32.mrb[0].mxu0
        %v1959 = vpop.f32.mrb[0].mxu0
        %v1960 = vadd.f32 0.0, %v1959
        %v1961 = vpop.f32.mrb[0].mxu0
        %1962 = vmatprep.mubr.bf16.mxu0 0
        %1963 = vmatmul.mubr.bf16.gmra.mrb[0].mxu0 %v1502
        %v1964 = vpop.f32.mrb[0].mxu0
        %v1965 = vadd.f32 0.0, %v1964
        %v1966 = vpop.f32.mrb[0].mxu0
        %v1967 = vpop.f32.mrb[0].mxu0
        %v1968 = vadd.f32 0.0, %v1967
        %v1969 = vpop.f32.mrb[0].mxu0
        %1970 = vmatprep.mubr.bf16.mxu0 0
        %1971 = vmatmul.mubr.bf16.gmra.mrb[0].mxu0 %v1505
        %v1972 = vpop.f32.mrb[0].mxu0
        %v1973 = vadd.f32 0.0, %v1972
        %v1974 = vpop.f32.mrb[0].mxu0
        %v1975 = vpop.f32.mrb[0].mxu0
        %v1976 = vadd.f32 0.0, %v1975
        %v1977 = vpop.f32.mrb[0].mxu0
        %1978 = vmatprep.mubr.bf16.mxu0 0
        %1979 = vmatmul.mubr.bf16.gmra.mrb[0].mxu0 %v1508
        %v1980 = vpop.f32.mrb[0].mxu0
        %v1981 = vadd.f32 0.0, %v1980
        %v1982 = vpop.f32.mrb[0].mxu0
        %v1983 = vpop.f32.mrb[0].mxu0
        %v1984 = vadd.f32 0.0, %v1983
        %v1985 = vpop.f32.mrb[0].mxu0
        %1986 = vmatprep.mubr.bf16.mxu0 0
        %1987 = vmatmul.mubr.bf16.gmra.mrb[0].mxu0 %v1511
        %v1988 = vpop.f32.mrb[0].mxu0
        %v1989 = vadd.f32 0.0, %v1988
        %v1990 = vpop.f32.mrb[0].mxu0
        %v1991 = vpop.f32.mrb[0].mxu0
        %v1992 = vadd.f32 0.0, %v1991
        %v1993 = vpop.f32.mrb[0].mxu0
        %1994 = vmatprep.mubr.bf16.mxu0 0
        %1995 = vmatmul.mubr.bf16.gmra.mrb[0].mxu0 %v1514
        %v1996 = vpop.f32.mrb[0].mxu0
        %v1997 = vadd.f32 0.0, %v1996
        %v1998 = vpop.f32.mrb[0].mxu0
        %v1999 = vpop.f32.mrb[0].mxu0
        %v2000 = vadd.f32 0.0, %v1999
        %v2001 = vpop.f32.mrb[0].mxu0
        %2002 = vmatprep.mubr.bf16.mxu0 0
        %2003 = vmatmul.mubr.bf16.gmra.mrb[0].mxu0 %v1517
        %v2004 = vpop.f32.mrb[0].mxu0
        %v2005 = vadd.f32 0.0, %v2004
        %v2006 = vpop.f32.mrb[0].mxu0
        %v2007 = vpop.f32.mrb[0].mxu0
        %v2008 = vadd.f32 0.0, %v2007
        %v2009 = vpop.f32.mrb[0].mxu0
        %2010 = vmatprep.mubr.bf16.mxu0 0
        %2011 = vmatmul.mubr.bf16.gmra.mrb[0].mxu0 %v1520
        %v2012 = vpop.f32.mrb[0].mxu0
        %v2013 = vadd.f32 0.0, %v2012
        %v2014 = vpop.f32.mrb[0].mxu0
        %v2015 = vpop.f32.mrb[0].mxu0
        %v2016 = vadd.f32 0.0, %v2015
        %v2017 = vpop.f32.mrb[0].mxu0
        %2018 = vmatprep.mubr.bf16.mxu0 0
        %2019 = vmatmul.mubr.bf16.gmra.mrb[0].mxu0 %v1523
        %v2020 = vpop.f32.mrb[0].mxu0
        %v2021 = vadd.f32 0.0, %v2020
        %v2022 = vpop.f32.mrb[0].mxu0
        %v2023 = vpop.f32.mrb[0].mxu0
        %v2024 = vadd.f32 0.0, %v2023
        %v2025 = vpop.f32.mrb[0].mxu0
        %2026 = vmatprep.mubr.bf16.mxu0 0
        %2027 = vmatmul.mubr.bf16.gmra.mrb[0].mxu0 %v1526
        %v2028 = vpop.f32.mrb[0].mxu0
        %v2029 = vadd.f32 0.0, %v2028
        %v2030 = vpop.f32.mrb[0].mxu0
        %v2031 = vpop.f32.mrb[0].mxu0
        %v2032 = vadd.f32 0.0, %v2031
        %v2033 = vpop.f32.mrb[0].mxu0
        %2034 = vdwg.mxu0
        %v2035 = vrot.slane %v1572, 3
        %v2036 = vrot.slane %v1576, 3
        %v2037 = vrot.slane %v1582, 3
        %v2038 = vrot.slane %v1586, 3
        %v2039 = vrot.slane %v1592, 3
        %v2040 = vrot.slane %v1596, 3
        %v2041 = vrot.slane %v1602, 3
        %v2042 = vrot.slane %v1606, 3
        %v2043 = vrot.slane %v1612, 3
        %v2044 = vrot.slane %v1616, 3
        %v2045 = vrot.slane %v1622, 3
        %v2046 = vrot.slane %v1626, 3
        %v2047 = vrot.slane %v1632, 3
        %v2048 = vrot.slane %v1636, 3
        %v2049 = vrot.slane %v1642, 3
        %v2050 = vrot.slane %v1646, 3
        %v2051 = vrot.slane %v1652, 3
        %v2052 = vrot.slane %v1656, 3
        %v2053 = vrot.slane %v1662, 3
        %v2054 = vrot.slane %v1666, 3
        %v2055 = vrot.slane %v1672, 3
        %v2056 = vrot.slane %v1676, 3
        %v2057 = vrot.slane %v1682, 3
        %v2058 = vrot.slane %v1686, 3
        %v2059 = vrot.slane %v1692, 3
        %v2060 = vrot.slane %v1696, 3
        %v2061 = vrot.slane %v1702, 3
        %v2062 = vrot.slane %v1706, 3
        %v2063 = vrot.slane %v1712, 3
        %v2064 = vrot.slane %v1716, 3
        %v2065 = vrot.slane %v1722, 3
        %v2066 = vrot.slane %v1726, 3
        %v2067 = vrot.slane %v1732, 3
        %v2068 = vrot.slane %v1736, 3
        %v2069 = vrot.slane %v1742, 3
        %v2070 = vrot.slane %v1746, 3
        %v2071 = vrot.slane %v1752, 3
        %v2072 = vrot.slane %v1756, 3
        %v2073 = vrot.slane %v1762, 3
        %v2074 = vrot.slane %v1766, 3
        %v2075 = vrot.slane %v1772, 3
        %v2076 = vrot.slane %v1776, 3
        %v2077 = vrot.slane %v1782, 3
        %v2078 = vrot.slane %v1786, 3
        %v2079 = vrot.slane %v1792, 3
        %v2080 = vrot.slane %v1796, 3
        %v2081 = vrot.slane %v1802, 3
        %v2082 = vrot.slane %v1806, 3
        %v2083 = vsel %vm1010, %v2081, %v2082
        %v2084 = vsel %vm1010, %v2080, %v2081
        %v2085 = vsel %vm1010, %v2078, %v2079
        %v2086 = vsel %vm1010, %v2077, %v2078
        %v2087 = vsel %vm1010, %v2075, %v2076
        %v2088 = vsel %vm1010, %v2074, %v2075
        %v2089 = vsel %vm1010, %v2072, %v2073
        %v2090 = vsel %vm1010, %v2071, %v2072
        %v2091 = vsel %vm1010, %v2069, %v2070
        %v2092 = vsel %vm1010, %v2068, %v2069
        %v2093 = vsel %vm1010, %v2066, %v2067
        %v2094 = vsel %vm1010, %v2065, %v2066
        %v2095 = vsel %vm1010, %v2063, %v2064
        %v2096 = vsel %vm1010, %v2062, %v2063
        %v2097 = vsel %vm1010, %v2060, %v2061
        %v2098 = vsel %vm1010, %v2059, %v2060
        %v2099 = vsel %vm1010, %v2057, %v2058
        %v2100 = vsel %vm1010, %v2056, %v2057
        %v2101 = vsel %vm1010, %v2054, %v2055
        %v2102 = vsel %vm1010, %v2053, %v2054
        %v2103 = vsel %vm1010, %v2051, %v2052
        %v2104 = vsel %vm1010, %v2050, %v2051
        %v2105 = vsel %vm1010, %v2048, %v2049
        %v2106 = vsel %vm1010, %v2047, %v2048
        %v2107 = vsel %vm1010, %v2045, %v2046
        %v2108 = vsel %vm1010, %v2044, %v2045
        %v2109 = vsel %vm1010, %v2042, %v2043
        %v2110 = vsel %vm1010, %v2041, %v2042
        %v2111 = vsel %vm1010, %v2039, %v2040
        %v2112 = vsel %vm1010, %v2038, %v2039
        %v2113 = vsel %vm1010, %v2036, %v2037
        %v2114 = vsel %vm1010, %v2035, %v2036
        %v2115 = vrot.slane %v1574, 4
        %v2116 = vrot.slane %v1578, 4
        %v2117 = vrot.slane %v1584, 4
        %v2118 = vrot.slane %v1588, 4
        %v2119 = vrot.slane %v1594, 4
        %v2120 = vrot.slane %v1598, 4
        %v2121 = vrot.slane %v1604, 4
        %v2122 = vrot.slane %v1608, 4
        %v2123 = vrot.slane %v1614, 4
        %v2124 = vrot.slane %v1618, 4
        %v2125 = vrot.slane %v1624, 4
        %v2126 = vrot.slane %v1628, 4
        %v2127 = vrot.slane %v1634, 4
        %v2128 = vrot.slane %v1638, 4
        %v2129 = vrot.slane %v1644, 4
        %v2130 = vrot.slane %v1648, 4
        %v2131 = vrot.slane %v1654, 4
        %v2132 = vrot.slane %v1658, 4
        %v2133 = vrot.slane %v1664, 4
        %v2134 = vrot.slane %v1668, 4
        %v2135 = vrot.slane %v1674, 4
        %v2136 = vrot.slane %v1678, 4
        %v2137 = vrot.slane %v1684, 4
        %v2138 = vrot.slane %v1688, 4
        %v2139 = vrot.slane %v1694, 4
        %v2140 = vrot.slane %v1698, 4
        %v2141 = vrot.slane %v1704, 4
        %v2142 = vrot.slane %v1708, 4
        %v2143 = vrot.slane %v1714, 4
        %v2144 = vrot.slane %v1718, 4
        %v2145 = vrot.slane %v1724, 4
        %v2146 = vrot.slane %v1728, 4
        %v2147 = vrot.slane %v1734, 4
        %v2148 = vrot.slane %v1738, 4
        %v2149 = vrot.slane %v1744, 4
        %v2150 = vrot.slane %v1748, 4
        %v2151 = vrot.slane %v1754, 4
        %v2152 = vrot.slane %v1758, 4
        %v2153 = vrot.slane %v1764, 4
        %v2154 = vrot.slane %v1768, 4
        %v2155 = vrot.slane %v1774, 4
        %v2156 = vrot.slane %v1778, 4
        %v2157 = vrot.slane %v1784, 4
        %v2158 = vrot.slane %v1788, 4
        %v2159 = vrot.slane %v1794, 4
        %v2160 = vrot.slane %v1798, 4
        %v2161 = vrot.slane %v1804, 4
        %v2162 = vrot.slane %v1808, 4
        %v2163 = vsel %vm1091, %v2161, %v2162
        %v2164 = vsel %vm1091, %v2160, %v2161
        %v2165 = vsel %vm1091, %v2158, %v2159
        %v2166 = vsel %vm1091, %v2157, %v2158
        %v2167 = vsel %vm1091, %v2155, %v2156
        %v2168 = vsel %vm1091, %v2154, %v2155
        %v2169 = vsel %vm1091, %v2152, %v2153
        %v2170 = vsel %vm1091, %v2151, %v2152
        %v2171 = vsel %vm1091, %v2149, %v2150
        %v2172 = vsel %vm1091, %v2148, %v2149
        %v2173 = vsel %vm1091, %v2146, %v2147
        %v2174 = vsel %vm1091, %v2145, %v2146
        %v2175 = vsel %vm1091, %v2143, %v2144
        %v2176 = vsel %vm1091, %v2142, %v2143
        %v2177 = vsel %vm1091, %v2140, %v2141
        %v2178 = vsel %vm1091, %v2139, %v2140
        %v2179 = vsel %vm1091, %v2137, %v2138
        %v2180 = vsel %vm1091, %v2136, %v2137
        %v2181 = vsel %vm1091, %v2134, %v2135
        %v2182 = vsel %vm1091, %v2133, %v2134
        %v2183 = vsel %vm1091, %v2131, %v2132
        %v2184 = vsel %vm1091, %v2130, %v2131
        %v2185 = vsel %vm1091, %v2128, %v2129
        %v2186 = vsel %vm1091, %v2127, %v2128
        %v2187 = vsel %vm1091, %v2125, %v2126
        %v2188 = vsel %vm1091, %v2124, %v2125
        %v2189 = vsel %vm1091, %v2122, %v2123
        %v2190 = vsel %vm1091, %v2121, %v2122
        %v2191 = vsel %vm1091, %v2119, %v2120
        %v2192 = vsel %vm1091, %v2118, %v2119
        %v2193 = vsel %vm1091, %v2116, %v2117
        %v2194 = vsel %vm1091, %v2115, %v2116
        %v2195 = vadd.f32 %v2114, %v2194
        %v2196 = vadd.f32 %v2113, %v2193
        %v2197 = vadd.f32 %v2112, %v2192
        %v2198 = vadd.f32 %v2111, %v2191
        %v2199 = vadd.f32 %v2110, %v2190
        %v2200 = vadd.f32 %v2109, %v2189
        %v2201 = vadd.f32 %v2108, %v2188
        %v2202 = vadd.f32 %v2107, %v2187
        %v2203 = vadd.f32 %v2106, %v2186
        %v2204 = vadd.f32 %v2105, %v2185
        %v2205 = vadd.f32 %v2104, %v2184
        %v2206 = vadd.f32 %v2103, %v2183
        %v2207 = vadd.f32 %v2102, %v2182
        %v2208 = vadd.f32 %v2101, %v2181
        %v2209 = vadd.f32 %v2100, %v2180
        %v2210 = vadd.f32 %v2099, %v2179
        %v2211 = vadd.f32 %v2098, %v2178
        %v2212 = vadd.f32 %v2097, %v2177
        %v2213 = vadd.f32 %v2096, %v2176
        %v2214 = vadd.f32 %v2095, %v2175
        %v2215 = vadd.f32 %v2094, %v2174
        %v2216 = vadd.f32 %v2093, %v2173
        %v2217 = vadd.f32 %v2092, %v2172
        %v2218 = vadd.f32 %v2091, %v2171
        %v2219 = vadd.f32 %v2090, %v2170
        %v2220 = vadd.f32 %v2089, %v2169
        %v2221 = vadd.f32 %v2088, %v2168
        %v2222 = vadd.f32 %v2087, %v2167
        %v2223 = vadd.f32 %v2086, %v2166
        %v2224 = vadd.f32 %v2085, %v2165
        %v2225 = vadd.f32 %v2084, %v2164
        %v2226 = vadd.f32 %v2083, %v2163
        %v2227 = vrot.slane %v1845, 5
        %v2228 = vrot.slane %v1848, 5
        %v2229 = vrot.slane %v1853, 5
        %v2230 = vrot.slane %v1856, 5
        %v2231 = vrot.slane %v1861, 5
        %v2232 = vrot.slane %v1864, 5
        %v2233 = vrot.slane %v1869, 5
        %v2234 = vrot.slane %v1872, 5
        %v2235 = vrot.slane %v1877, 5
        %v2236 = vrot.slane %v1880, 5
        %v2237 = vrot.slane %v1885, 5
        %v2238 = vrot.slane %v1888, 5
        %v2239 = vrot.slane %v1893, 5
        %v2240 = vrot.slane %v1896, 5
        %v2241 = vrot.slane %v1901, 5
        %v2242 = vrot.slane %v1904, 5
        %v2243 = vrot.slane %v1909, 5
        %v2244 = vrot.slane %v1912, 5
        %v2245 = vrot.slane %v1917, 5
        %v2246 = vrot.slane %v1920, 5
        %v2247 = vrot.slane %v1925, 5
        %v2248 = vrot.slane %v1928, 5
        %v2249 = vrot.slane %v1933, 5
        %v2250 = vrot.slane %v1936, 5
        %v2251 = vrot.slane %v1941, 5
        %v2252 = vrot.slane %v1944, 5
        %v2253 = vrot.slane %v1949, 5
        %v2254 = vrot.slane %v1952, 5
        %v2255 = vrot.slane %v1957, 5
        %v2256 = vrot.slane %v1960, 5
        %v2257 = vrot.slane %v1965, 5
        %v2258 = vrot.slane %v1968, 5
        %v2259 = vrot.slane %v1973, 5
        %v2260 = vrot.slane %v1976, 5
        %v2261 = vrot.slane %v1981, 5
        %v2262 = vrot.slane %v1984, 5
        %v2263 = vrot.slane %v1989, 5
        %v2264 = vrot.slane %v1992, 5
        %v2265 = vrot.slane %v1997, 5
        %v2266 = vrot.slane %v2000, 5
        %v2267 = vrot.slane %v2005, 5
        %v2268 = vrot.slane %v2008, 5
        %v2269 = vrot.slane %v2013, 5
        %v2270 = vrot.slane %v2016, 5
        %v2271 = vrot.slane %v2021, 5
        %v2272 = vrot.slane %v2024, 5
        %v2273 = vrot.slane %v2029, 5
        %v2274 = vrot.slane %v2032, 5
        %v2275 = vsel %vm1204, %v2273, %v2274
        %v2276 = vsel %vm1204, %v2272, %v2273
        %v2277 = vsel %vm1204, %v2270, %v2271
        %v2278 = vsel %vm1204, %v2269, %v2270
        %v2279 = vsel %vm1204, %v2267, %v2268
        %v2280 = vsel %vm1204, %v2266, %v2267
        %v2281 = vsel %vm1204, %v2264, %v2265
        %v2282 = vsel %vm1204, %v2263, %v2264
        %v2283 = vsel %vm1204, %v2261, %v2262
        %v2284 = vsel %vm1204, %v2260, %v2261
        %v2285 = vsel %vm1204, %v2258, %v2259
        %v2286 = vsel %vm1204, %v2257, %v2258
        %v2287 = vsel %vm1204, %v2255, %v2256
        %v2288 = vsel %vm1204, %v2254, %v2255
        %v2289 = vsel %vm1204, %v2252, %v2253
        %v2290 = vsel %vm1204, %v2251, %v2252
        %v2291 = vsel %vm1204, %v2249, %v2250
        %v2292 = vsel %vm1204, %v2248, %v2249
        %v2293 = vsel %vm1204, %v2246, %v2247
        %v2294 = vsel %vm1204, %v2245, %v2246
        %v2295 = vsel %vm1204, %v2243, %v2244
        %v2296 = vsel %vm1204, %v2242, %v2243
        %v2297 = vsel %vm1204, %v2240, %v2241
        %v2298 = vsel %vm1204, %v2239, %v2240
        %v2299 = vsel %vm1204, %v2237, %v2238
        %v2300 = vsel %vm1204, %v2236, %v2237
        %v2301 = vsel %vm1204, %v2234, %v2235
        %v2302 = vsel %vm1204, %v2233, %v2234
        %v2303 = vsel %vm1204, %v2231, %v2232
        %v2304 = vsel %vm1204, %v2230, %v2231
        %v2305 = vsel %vm1204, %v2228, %v2229
        %v2306 = vsel %vm1204, %v2227, %v2228
        %v2307 = vadd.f32 %v2195, %v2306
        %v2308 = vadd.f32 %v2196, %v2305
        %v2309 = vadd.f32 %v2197, %v2304
        %v2310 = vadd.f32 %v2198, %v2303
        %v2311 = vadd.f32 %v2199, %v2302
        %v2312 = vadd.f32 %v2200, %v2301
        %v2313 = vadd.f32 %v2201, %v2300
        %v2314 = vadd.f32 %v2202, %v2299
        %v2315 = vadd.f32 %v2203, %v2298
        %v2316 = vadd.f32 %v2204, %v2297
        %v2317 = vadd.f32 %v2205, %v2296
        %v2318 = vadd.f32 %v2206, %v2295
        %v2319 = vadd.f32 %v2207, %v2294
        %v2320 = vadd.f32 %v2208, %v2293
        %v2321 = vadd.f32 %v2209, %v2292
        %v2322 = vadd.f32 %v2210, %v2291
        %v2323 = vadd.f32 %v2211, %v2290
        %v2324 = vadd.f32 %v2212, %v2289
        %v2325 = vadd.f32 %v2213, %v2288
        %v2326 = vadd.f32 %v2214, %v2287
        %v2327 = vadd.f32 %v2215, %v2286
        %v2328 = vadd.f32 %v2216, %v2285
        %v2329 = vadd.f32 %v2217, %v2284
        %v2330 = vadd.f32 %v2218, %v2283
        %v2331 = vadd.f32 %v2219, %v2282
        %v2332 = vadd.f32 %v2220, %v2281
        %v2333 = vadd.f32 %v2221, %v2280
        %v2334 = vadd.f32 %v2222, %v2279
        %v2335 = vadd.f32 %v2223, %v2278
        %v2336 = vadd.f32 %v2224, %v2277
        %v2337 = vadd.f32 %v2225, %v2276
        %v2338 = vadd.f32 %v2226, %v2275
        %v2339 = vadd.f32 %v1237, %v2307
        %v2340 = vadd.f32 %v1238, %v2308
        %v2341 = vadd.f32 %v1239, %v2309
        %v2342 = vadd.f32 %v1240, %v2310
        %v2343 = vadd.f32 %v1241, %v2311
        %v2344 = vadd.f32 %v1242, %v2312
        %v2345 = vadd.f32 %v1243, %v2313
        %v2346 = vadd.f32 %v1244, %v2314
        %v2347 = vadd.f32 %v1245, %v2315
        %v2348 = vadd.f32 %v1246, %v2316
        %v2349 = vadd.f32 %v1247, %v2317
        %v2350 = vadd.f32 %v1248, %v2318
        %v2351 = vadd.f32 %v1249, %v2319
        %v2352 = vadd.f32 %v1250, %v2320
        %v2353 = vadd.f32 %v1251, %v2321
        %v2354 = vadd.f32 %v1252, %v2322
        %v2355 = vadd.f32 %v1253, %v2323
        %v2356 = vadd.f32 %v1254, %v2324
        %v2357 = vadd.f32 %v1255, %v2325
        %v2358 = vadd.f32 %v1256, %v2326
        %v2359 = vadd.f32 %v1257, %v2327
        %v2360 = vadd.f32 %v1258, %v2328
        %v2361 = vadd.f32 %v1259, %v2329
        %v2362 = vadd.f32 %v1260, %v2330
        %v2363 = vadd.f32 %v1261, %v2331
        %v2364 = vadd.f32 %v1262, %v2332
        %v2365 = vadd.f32 %v1263, %v2333
        %v2366 = vadd.f32 %v1264, %v2334
        %v2367 = vadd.f32 %v1265, %v2335
        %v2368 = vadd.f32 %v1266, %v2336
        %v2369 = vadd.f32 %v1267, %v2337
        %v2370 = vadd.f32 %v1268, %v2338
        %v2371 = vld [vmem:[%s191 + $0x3c] sm:$0xf]
        %v2372 = vld [vmem:[%s191 + $0x40] sm:$0xf]
        %v2373 = vld [vmem:[%s191 + $0x44] sm:$0xf]
        %v2374 = vld [vmem:[%s191 + $0x48] sm:$0xf]
        %v2375 = vld [vmem:[%s191 + $0x4c] sm:$0xf]
        %v2376 = vld [vmem:[%s191 + $0x50] sm:$0xf]
        %v2377 = vld [vmem:[%s191 + $0x54] sm:$0xf]
        %v2378 = vld [vmem:[%s191 + $0x58] sm:$0xf]
        %v2379 = vld [vmem:[%s191 + $0x5c] sm:$0xf]
        %v2380 = vld [vmem:[%s191 + $0x60] sm:$0xf]
        %v2381 = vld [vmem:[%s191 + $0x64] sm:$0xf]
        %v2382 = vld [vmem:[%s191 + $0x68] sm:$0xf]
        %v2383 = vld [vmem:[%s191 + $0x6c] sm:$0xf]
        %v2384 = vld [vmem:[%s191 + $0x70] sm:$0xf]
        %v2385 = vld [vmem:[%s191 + $0x74] sm:$0xf]
        %v2386 = vld [vmem:[%s191 + $0x78] sm:$0xf]
        %v2387 = vld [vmem:[%s191 + $0x7c] sm:$0xf]
        %v2388 = vld [vmem:[%s191 + $0x80] sm:$0xf]
        %v2389 = vld [vmem:[%s191 + $0x84] sm:$0xf]
        %v2390 = vld [vmem:[%s191 + $0x88] sm:$0xf]
        %v2391 = vld [vmem:[%s191 + $0x8c] sm:$0xf]
        %v2392 = vld [vmem:[%s191 + $0x90] sm:$0xf]
        %v2393 = vld [vmem:[%s191 + $0x94] sm:$0xf]
        %v2394 = vld [vmem:[%s191 + $0x98] sm:$0xf]
        %v2395 = vld [vmem:[%s191 + $0x9c] sm:$0xf]
        %v2396 = vld [vmem:[%s191 + $0xa0] sm:$0xf]
        %v2397 = vld [vmem:[%s191 + $0xa4] sm:$0xf]
        %v2398 = vld [vmem:[%s191 + $0xa8] sm:$0xf]
        %v2399 = vld [vmem:[%s191 + $0xac] sm:$0xf]
        %v2400 = vld [vmem:[%s191 + $0xb0] sm:$0xf]
        %v2401 = vld [vmem:[%s191 + $0xb4] sm:$0xf]
        %v2402 = vld [vmem:[%s191 + $0xb8] sm:$0xf]
        %v2403 = vld [vmem:[%s191 + $0xbc] sm:$0xf]
        %v2404 = vld [vmem:[%s191 + $0xc0] sm:$0xf]
        %v2405 = vld [vmem:[%s191 + $0xc4] sm:$0xf]
        %v2406 = vld [vmem:[%s191 + $0xc8] sm:$0xf]
        %v2407 = vld [vmem:[%s191 + $0xcc] sm:$0xf]
        %v2408 = vld [vmem:[%s191 + $0xd0] sm:$0xf]
        %v2409 = vld [vmem:[%s191 + $0xd4] sm:$0xf]
        %v2410 = vld [vmem:[%s191 + $0xd8] sm:$0xf]
        %v2411 = vld [vmem:[%s191 + $0xdc] sm:$0xf]
        %v2412 = vld [vmem:[%s191 + $0xe0] sm:$0xf]
        %v2413 = vld [vmem:[%s191 + $0xe4] sm:$0xf]
        %v2414 = vld [vmem:[%s191 + $0xe8] sm:$0xf]
        %v2415 = vld [vmem:[%s191 + $0xec] sm:$0xf]
        %v2416 = vld [vmem:[%s191 + $0xf0] sm:$0xf]
        %v2417 = vld [vmem:[%s191 + $0xf4] sm:$0xf]
        %v2418 = vld [vmem:[%s191 + $0xf8] sm:$0xf]
        %s2419 = scalar_lea.vmem %s1, 12
        %v2420 = vld [vmem:[%s2419] sm:$0x3f]
        %v2469 = vunpack.c.l.b16 %v2371
        %v2470 = vunpack.c.l.b16 %v2372
        %v2471 = vunpack.c.l.b16 %v2373
        %v2472 = vunpack.c.l.b16 %v2374
        %v2473 = vunpack.c.l.b16 %v2375
        %v2474 = vunpack.c.l.b16 %v2376
        %v2475 = vunpack.c.l.b16 %v2377
        %v2476 = vunpack.c.l.b16 %v2378
        %v2477 = vunpack.c.l.b16 %v2379
        %v2478 = vunpack.c.l.b16 %v2380
        %v2479 = vunpack.c.l.b16 %v2381
        %v2480 = vunpack.c.l.b16 %v2382
        %v2481 = vunpack.c.l.b16 %v2383
        %v2482 = vunpack.c.l.b16 %v2384
        %v2483 = vunpack.c.l.b16 %v2385
        %v2484 = vunpack.c.l.b16 %v2386
        %v2485 = vunpack.c.l.b16 %v2387
        %v2486 = vunpack.c.l.b16 %v2388
        %v2487 = vunpack.c.l.b16 %v2389
        %v2488 = vunpack.c.l.b16 %v2390
        %v2489 = vunpack.c.l.b16 %v2391
        %v2490 = vunpack.c.l.b16 %v2392
        %v2491 = vunpack.c.l.b16 %v2393
        %v2492 = vunpack.c.l.b16 %v2394
        %v2493 = vunpack.c.l.b16 %v2395
        %v2494 = vunpack.c.l.b16 %v2396
        %v2495 = vunpack.c.l.b16 %v2397
        %v2496 = vunpack.c.l.b16 %v2398
        %v2497 = vunpack.c.l.b16 %v2399
        %v2498 = vunpack.c.l.b16 %v2400
        %v2499 = vunpack.c.l.b16 %v2401
        %v2500 = vunpack.c.l.b16 %v2402
        %v2501 = vunpack.c.l.b16 %v2403
        %v2502 = vunpack.c.l.b16 %v2404
        %v2503 = vunpack.c.l.b16 %v2405
        %v2504 = vunpack.c.l.b16 %v2406
        %v2505 = vunpack.c.l.b16 %v2407
        %v2506 = vunpack.c.l.b16 %v2408
        %v2507 = vunpack.c.l.b16 %v2409
        %v2508 = vunpack.c.l.b16 %v2410
        %v2509 = vunpack.c.l.b16 %v2411
        %v2510 = vunpack.c.l.b16 %v2412
        %v2511 = vunpack.c.l.b16 %v2413
        %v2512 = vunpack.c.l.b16 %v2414
        %v2513 = vunpack.c.l.b16 %v2415
        %v2514 = vunpack.c.l.b16 %v2416
        %v2515 = vunpack.c.l.b16 %v2417
        %v2516 = vunpack.c.l.b16 %v2418
        %v2517 = vpack.c.b16 %v2470, %v2469
        %v2518 = vpack.c.b16 %v2472, %v2471
        %v2519 = vpack.c.b16 %v2474, %v2473
        %v2520 = vpack.c.b16 %v2476, %v2475
        %v2521 = vpack.c.b16 %v2478, %v2477
        %v2522 = vpack.c.b16 %v2480, %v2479
        %v2523 = vpack.c.b16 %v2482, %v2481
        %v2524 = vpack.c.b16 %v2484, %v2483
        %v2525 = vpack.c.b16 %v2486, %v2485
        %v2526 = vpack.c.b16 %v2488, %v2487
        %v2527 = vpack.c.b16 %v2490, %v2489
        %v2528 = vpack.c.b16 %v2492, %v2491
        %v2529 = vpack.c.b16 %v2494, %v2493
        %v2530 = vpack.c.b16 %v2496, %v2495
        %v2531 = vpack.c.b16 %v2498, %v2497
        %v2532 = vpack.c.b16 %v2500, %v2499
        %v2533 = vpack.c.b16 %v2502, %v2501
        %v2534 = vpack.c.b16 %v2504, %v2503
        %v2535 = vpack.c.b16 %v2506, %v2505
        %v2536 = vpack.c.b16 %v2508, %v2507
        %v2537 = vpack.c.b16 %v2510, %v2509
        %v2538 = vpack.c.b16 %v2512, %v2511
        %v2539 = vpack.c.b16 %v2514, %v2513
        %v2540 = vpack.c.b16 %v2516, %v2515
        %v2542 = vcombine.high %v2420, %v2420
        %v2544 = vunpack.c.l.s4 1983009808
        %v2545 = vunpack.c.0.s8 %v2544
        %v2546 = vlaneseq
        %v2547 = vshrl.u32 %v2546, 7
        %v2548 = vsub.s32 %v2545, %v2547
        %v2549 = vrot.slane %v2420, %v2548
        %v2551 = vunpack.c.l.s4 1983009808
        %v2552 = vunpack.c.0.s8 %v2551
        %v2553 = vlaneseq
        %v2554 = vshrl.u32 %v2553, 7
        %v2555 = vsub.s32 %v2552, %v2554
        %v2556 = vrot.slane %v2542, %v2555
        %v2557 = vcombine.high %v2549, %v2549
        %v2559 = vsel %vm379, %v2517, 0
        %v2562 = vsel %vm379, %v2518, 0
        %v2565 = vsel %vm379, %v2519, 0
        %v2568 = vsel %vm379, %v2520, 0
        %v2571 = vsel %vm379, %v2521, 0
        %v2574 = vsel %vm379, %v2522, 0
        %v2577 = vsel %vm379, %v2523, 0
        %v2580 = vsel %vm379, %v2524, 0
        %v2583 = vsel %vm379, %v2525, 0
        %v2586 = vsel %vm379, %v2526, 0
        %v2589 = vsel %vm379, %v2527, 0
        %v2592 = vsel %vm379, %v2528, 0
        %v2595 = vsel %vm379, %v2529, 0
        %v2598 = vsel %vm379, %v2530, 0
        %v2601 = vsel %vm379, %v2531, 0
        %v2604 = vsel %vm379, %v2532, 0
        %v2607 = vsel %vm379, %v2533, 0
        %v2610 = vsel %vm379, %v2534, 0
        %v2613 = vsel %vm379, %v2535, 0
        %v2616 = vsel %vm379, %v2536, 0
        %v2619 = vsel %vm379, %v2537, 0
        %v2622 = vsel %vm379, %v2538, 0
        %v2625 = vsel %vm379, %v2539, 0
        %v2628 = vsel %vm379, %v2540, 0
        %v2631 = vsel %vm452, %v2549, 0
        %v2634 = vsel %vm452, %v2557, 0
        %v2637 = vsel %vm452, %v2556, 0
        %2639 = vmatprep.subr.bf16.mxu0 %v2634
        %2640 = vmatpush1.bf16.msra.mxu0 %v2631
        %2641 = vmatprep.subr.bf16.mxu0 0
        %2642 = vmatpush1.bf16.msra.mxu0 0
        %2643 = vmatprep.subr.bf16.mxu0 0
        %2644 = vmatpush1.bf16.msra.mxu0 0
        %2645 = vmatprep.subr.bf16.mxu0 0
        %2646 = vmatpush1.bf16.msra.mxu0 0
        %2647 = vmatprep.subr.bf16.mxu0 0
        %2648 = vmatpush1.bf16.msra.mxu0 0
        %2649 = vmatprep.subr.bf16.mxu0 0
        %2650 = vmatpush1.bf16.msra.mxu0 0
        %2651 = vmatprep.subr.bf16.mxu0 0
        %2652 = vmatpush1.bf16.msra.mxu0 0
        %2653 = vmatprep.subr.bf16.mxu0 0
        %2654 = vmatpush1.bf16.msra.mxu0 0
        %2655 = vmatprep.subr.bf16.mxu0 0
        %2656 = vmatpush1.bf16.msra.mxu0 0
        %2657 = vmatprep.subr.bf16.mxu0 0
        %2658 = vmatpush1.bf16.msra.mxu0 0
        %2659 = vmatprep.subr.bf16.mxu0 0
        %2660 = vmatpush1.bf16.msra.mxu0 0
        %2661 = vmatprep.subr.bf16.mxu0 0
        %2662 = vmatpush1.bf16.msra.mxu0 0
        %2663 = vmatprep.subr.bf16.mxu0 0
        %2664 = vmatpush1.bf16.msra.mxu0 0
        %2665 = vmatprep.subr.bf16.mxu0 0
        %2666 = vmatpush1.bf16.msra.mxu0 0
        %2667 = vmatprep.subr.bf16.mxu0 0
        %2668 = vmatpush1.bf16.msra.mxu0 0
        %2669 = vmatprep.subr.bf16.mxu0 0
        %2670 = vmatpush1.bf16.msra.mxu0 0
        %2671 = vmatprep.mubr.bf16.mxu0 0
        %2672 = vmatmul.mubr.bf16.gmra.mrb[0].mxu0 %v2559
        %v2673 = vpop.f32.mrb[0].mxu0
        %v2674 = vadd.f32 0.0, %v2673
        %v2675 = vpop.f32.mrb[0].mxu0
        %v2676 = vadd.f32 0.0, %v2675
        %v2677 = vpop.f32.mrb[0].mxu0
        %v2678 = vadd.f32 0.0, %v2677
        %v2679 = vpop.f32.mrb[0].mxu0
        %v2680 = vadd.f32 0.0, %v2679
        %2681 = vmatprep.mubr.bf16.mxu0 0
        %2682 = vmatmul.mubr.bf16.gmra.mrb[0].mxu0 %v2562
        %v2683 = vpop.f32.mrb[0].mxu0
        %v2684 = vadd.f32 0.0, %v2683
        %v2685 = vpop.f32.mrb[0].mxu0
        %v2686 = vadd.f32 0.0, %v2685
        %v2687 = vpop.f32.mrb[0].mxu0
        %v2688 = vadd.f32 0.0, %v2687
        %v2689 = vpop.f32.mrb[0].mxu0
        %v2690 = vadd.f32 0.0, %v2689
        %2691 = vmatprep.mubr.bf16.mxu0 0
        %2692 = vmatmul.mubr.bf16.gmra.mrb[0].mxu0 %v2565
        %v2693 = vpop.f32.mrb[0].mxu0
        %v2694 = vadd.f32 0.0, %v2693
        %v2695 = vpop.f32.mrb[0].mxu0
        %v2696 = vadd.f32 0.0, %v2695
        %v2697 = vpop.f32.mrb[0].mxu0
        %v2698 = vadd.f32 0.0, %v2697
        %v2699 = vpop.f32.mrb[0].mxu0
        %v2700 = vadd.f32 0.0, %v2699
        %2701 = vmatprep.mubr.bf16.mxu0 0
        %2702 = vmatmul.mubr.bf16.gmra.mrb[0].mxu0 %v2568
        %v2703 = vpop.f32.mrb[0].mxu0
        %v2704 = vadd.f32 0.0, %v2703
        %v2705 = vpop.f32.mrb[0].mxu0
        %v2706 = vadd.f32 0.0, %v2705
        %v2707 = vpop.f32.mrb[0].mxu0
        %v2708 = vadd.f32 0.0, %v2707
        %v2709 = vpop.f32.mrb[0].mxu0
        %v2710 = vadd.f32 0.0, %v2709
        %2711 = vmatprep.mubr.bf16.mxu0 0
        %2712 = vmatmul.mubr.bf16.gmra.mrb[0].mxu0 %v2571
        %v2713 = vpop.f32.mrb[0].mxu0
        %v2714 = vadd.f32 0.0, %v2713
        %v2715 = vpop.f32.mrb[0].mxu0
        %v2716 = vadd.f32 0.0, %v2715
        %v2717 = vpop.f32.mrb[0].mxu0
        %v2718 = vadd.f32 0.0, %v2717
        %v2719 = vpop.f32.mrb[0].mxu0
        %v2720 = vadd.f32 0.0, %v2719
        %2721 = vmatprep.mubr.bf16.mxu0 0
        %2722 = vmatmul.mubr.bf16.gmra.mrb[0].mxu0 %v2574
        %v2723 = vpop.f32.mrb[0].mxu0
        %v2724 = vadd.f32 0.0, %v2723
        %v2725 = vpop.f32.mrb[0].mxu0
        %v2726 = vadd.f32 0.0, %v2725
        %v2727 = vpop.f32.mrb[0].mxu0
        %v2728 = vadd.f32 0.0, %v2727
        %v2729 = vpop.f32.mrb[0].mxu0
        %v2730 = vadd.f32 0.0, %v2729
        %2731 = vmatprep.mubr.bf16.mxu0 0
        %2732 = vmatmul.mubr.bf16.gmra.mrb[0].mxu0 %v2577
        %v2733 = vpop.f32.mrb[0].mxu0
        %v2734 = vadd.f32 0.0, %v2733
        %v2735 = vpop.f32.mrb[0].mxu0
        %v2736 = vadd.f32 0.0, %v2735
        %v2737 = vpop.f32.mrb[0].mxu0
        %v2738 = vadd.f32 0.0, %v2737
        %v2739 = vpop.f32.mrb[0].mxu0
        %v2740 = vadd.f32 0.0, %v2739
        %2741 = vmatprep.mubr.bf16.mxu0 0
        %2742 = vmatmul.mubr.bf16.gmra.mrb[0].mxu0 %v2580
        %v2743 = vpop.f32.mrb[0].mxu0
        %v2744 = vadd.f32 0.0, %v2743
        %v2745 = vpop.f32.mrb[0].mxu0
        %v2746 = vadd.f32 0.0, %v2745
        %v2747 = vpop.f32.mrb[0].mxu0
        %v2748 = vadd.f32 0.0, %v2747
        %v2749 = vpop.f32.mrb[0].mxu0
        %v2750 = vadd.f32 0.0, %v2749
        %2751 = vmatprep.mubr.bf16.mxu0 0
        %2752 = vmatmul.mubr.bf16.gmra.mrb[0].mxu0 %v2583
        %v2753 = vpop.f32.mrb[0].mxu0
        %v2754 = vadd.f32 0.0, %v2753
        %v2755 = vpop.f32.mrb[0].mxu0
        %v2756 = vadd.f32 0.0, %v2755
        %v2757 = vpop.f32.mrb[0].mxu0
        %v2758 = vadd.f32 0.0, %v2757
        %v2759 = vpop.f32.mrb[0].mxu0
        %v2760 = vadd.f32 0.0, %v2759
        %2761 = vmatprep.mubr.bf16.mxu0 0
        %2762 = vmatmul.mubr.bf16.gmra.mrb[0].mxu0 %v2586
        %v2763 = vpop.f32.mrb[0].mxu0
        %v2764 = vadd.f32 0.0, %v2763
        %v2765 = vpop.f32.mrb[0].mxu0
        %v2766 = vadd.f32 0.0, %v2765
        %v2767 = vpop.f32.mrb[0].mxu0
        %v2768 = vadd.f32 0.0, %v2767
        %v2769 = vpop.f32.mrb[0].mxu0
        %v2770 = vadd.f32 0.0, %v2769
        %2771 = vmatprep.mubr.bf16.mxu0 0
        %2772 = vmatmul.mubr.bf16.gmra.mrb[0].mxu0 %v2589
        %v2773 = vpop.f32.mrb[0].mxu0
        %v2774 = vadd.f32 0.0, %v2773
        %v2775 = vpop.f32.mrb[0].mxu0
        %v2776 = vadd.f32 0.0, %v2775
        %v2777 = vpop.f32.mrb[0].mxu0
        %v2778 = vadd.f32 0.0, %v2777
        %v2779 = vpop.f32.mrb[0].mxu0
        %v2780 = vadd.f32 0.0, %v2779
        %2781 = vmatprep.mubr.bf16.mxu0 0
        %2782 = vmatmul.mubr.bf16.gmra.mrb[0].mxu0 %v2592
        %v2783 = vpop.f32.mrb[0].mxu0
        %v2784 = vadd.f32 0.0, %v2783
        %v2785 = vpop.f32.mrb[0].mxu0
        %v2786 = vadd.f32 0.0, %v2785
        %v2787 = vpop.f32.mrb[0].mxu0
        %v2788 = vadd.f32 0.0, %v2787
        %v2789 = vpop.f32.mrb[0].mxu0
        %v2790 = vadd.f32 0.0, %v2789
        %2791 = vmatprep.mubr.bf16.mxu0 0
        %2792 = vmatmul.mubr.bf16.gmra.mrb[0].mxu0 %v2595
        %v2793 = vpop.f32.mrb[0].mxu0
        %v2794 = vadd.f32 0.0, %v2793
        %v2795 = vpop.f32.mrb[0].mxu0
        %v2796 = vadd.f32 0.0, %v2795
        %v2797 = vpop.f32.mrb[0].mxu0
        %v2798 = vadd.f32 0.0, %v2797
        %v2799 = vpop.f32.mrb[0].mxu0
        %v2800 = vadd.f32 0.0, %v2799
        %2801 = vmatprep.mubr.bf16.mxu0 0
        %2802 = vmatmul.mubr.bf16.gmra.mrb[0].mxu0 %v2598
        %v2803 = vpop.f32.mrb[0].mxu0
        %v2804 = vadd.f32 0.0, %v2803
        %v2805 = vpop.f32.mrb[0].mxu0
        %v2806 = vadd.f32 0.0, %v2805
        %v2807 = vpop.f32.mrb[0].mxu0
        %v2808 = vadd.f32 0.0, %v2807
        %v2809 = vpop.f32.mrb[0].mxu0
        %v2810 = vadd.f32 0.0, %v2809
        %2811 = vmatprep.mubr.bf16.mxu0 0
        %2812 = vmatmul.mubr.bf16.gmra.mrb[0].mxu0 %v2601
        %v2813 = vpop.f32.mrb[0].mxu0
        %v2814 = vadd.f32 0.0, %v2813
        %v2815 = vpop.f32.mrb[0].mxu0
        %v2816 = vadd.f32 0.0, %v2815
        %v2817 = vpop.f32.mrb[0].mxu0
        %v2818 = vadd.f32 0.0, %v2817
        %v2819 = vpop.f32.mrb[0].mxu0
        %v2820 = vadd.f32 0.0, %v2819
        %2821 = vmatprep.mubr.bf16.mxu0 0
        %2822 = vmatmul.mubr.bf16.gmra.mrb[0].mxu0 %v2604
        %v2823 = vpop.f32.mrb[0].mxu0
        %v2824 = vadd.f32 0.0, %v2823
        %v2825 = vpop.f32.mrb[0].mxu0
        %v2826 = vadd.f32 0.0, %v2825
        %v2827 = vpop.f32.mrb[0].mxu0
        %v2828 = vadd.f32 0.0, %v2827
        %v2829 = vpop.f32.mrb[0].mxu0
        %v2830 = vadd.f32 0.0, %v2829
        %2831 = vmatprep.mubr.bf16.mxu0 0
        %2832 = vmatmul.mubr.bf16.gmra.mrb[0].mxu0 %v2607
        %v2833 = vpop.f32.mrb[0].mxu0
        %v2834 = vadd.f32 0.0, %v2833
        %v2835 = vpop.f32.mrb[0].mxu0
        %v2836 = vadd.f32 0.0, %v2835
        %v2837 = vpop.f32.mrb[0].mxu0
        %v2838 = vadd.f32 0.0, %v2837
        %v2839 = vpop.f32.mrb[0].mxu0
        %v2840 = vadd.f32 0.0, %v2839
        %2841 = vmatprep.mubr.bf16.mxu0 0
        %2842 = vmatmul.mubr.bf16.gmra.mrb[0].mxu0 %v2610
        %v2843 = vpop.f32.mrb[0].mxu0
        %v2844 = vadd.f32 0.0, %v2843
        %v2845 = vpop.f32.mrb[0].mxu0
        %v2846 = vadd.f32 0.0, %v2845
        %v2847 = vpop.f32.mrb[0].mxu0
        %v2848 = vadd.f32 0.0, %v2847
        %v2849 = vpop.f32.mrb[0].mxu0
        %v2850 = vadd.f32 0.0, %v2849
        %2851 = vmatprep.mubr.bf16.mxu0 0
        %2852 = vmatmul.mubr.bf16.gmra.mrb[0].mxu0 %v2613
        %v2853 = vpop.f32.mrb[0].mxu0
        %v2854 = vadd.f32 0.0, %v2853
        %v2855 = vpop.f32.mrb[0].mxu0
        %v2856 = vadd.f32 0.0, %v2855
        %v2857 = vpop.f32.mrb[0].mxu0
        %v2858 = vadd.f32 0.0, %v2857
        %v2859 = vpop.f32.mrb[0].mxu0
        %v2860 = vadd.f32 0.0, %v2859
        %2861 = vmatprep.mubr.bf16.mxu0 0
        %2862 = vmatmul.mubr.bf16.gmra.mrb[0].mxu0 %v2616
        %v2863 = vpop.f32.mrb[0].mxu0
        %v2864 = vadd.f32 0.0, %v2863
        %v2865 = vpop.f32.mrb[0].mxu0
        %v2866 = vadd.f32 0.0, %v2865
        %v2867 = vpop.f32.mrb[0].mxu0
        %v2868 = vadd.f32 0.0, %v2867
        %v2869 = vpop.f32.mrb[0].mxu0
        %v2870 = vadd.f32 0.0, %v2869
        %2871 = vmatprep.mubr.bf16.mxu0 0
        %2872 = vmatmul.mubr.bf16.gmra.mrb[0].mxu0 %v2619
        %v2873 = vpop.f32.mrb[0].mxu0
        %v2874 = vadd.f32 0.0, %v2873
        %v2875 = vpop.f32.mrb[0].mxu0
        %v2876 = vadd.f32 0.0, %v2875
        %v2877 = vpop.f32.mrb[0].mxu0
        %v2878 = vadd.f32 0.0, %v2877
        %v2879 = vpop.f32.mrb[0].mxu0
        %v2880 = vadd.f32 0.0, %v2879
        %2881 = vmatprep.mubr.bf16.mxu0 0
        %2882 = vmatmul.mubr.bf16.gmra.mrb[0].mxu0 %v2622
        %v2883 = vpop.f32.mrb[0].mxu0
        %v2884 = vadd.f32 0.0, %v2883
        %v2885 = vpop.f32.mrb[0].mxu0
        %v2886 = vadd.f32 0.0, %v2885
        %v2887 = vpop.f32.mrb[0].mxu0
        %v2888 = vadd.f32 0.0, %v2887
        %v2889 = vpop.f32.mrb[0].mxu0
        %v2890 = vadd.f32 0.0, %v2889
        %2891 = vmatprep.mubr.bf16.mxu0 0
        %2892 = vmatmul.mubr.bf16.gmra.mrb[0].mxu0 %v2625
        %v2893 = vpop.f32.mrb[0].mxu0
        %v2894 = vadd.f32 0.0, %v2893
        %v2895 = vpop.f32.mrb[0].mxu0
        %v2896 = vadd.f32 0.0, %v2895
        %v2897 = vpop.f32.mrb[0].mxu0
        %v2898 = vadd.f32 0.0, %v2897
        %v2899 = vpop.f32.mrb[0].mxu0
        %v2900 = vadd.f32 0.0, %v2899
        %2901 = vmatprep.mubr.bf16.mxu0 0
        %2902 = vmatmul.mubr.bf16.gmra.mrb[0].mxu0 %v2628
        %v2903 = vpop.f32.mrb[0].mxu0
        %v2904 = vadd.f32 0.0, %v2903
        %v2905 = vpop.f32.mrb[0].mxu0
        %v2906 = vadd.f32 0.0, %v2905
        %v2907 = vpop.f32.mrb[0].mxu0
        %v2908 = vadd.f32 0.0, %v2907
        %v2909 = vpop.f32.mrb[0].mxu0
        %v2910 = vadd.f32 0.0, %v2909
        %2911 = vdwg.mxu0
        %2912 = vmatprep.subr.bf16.mxu0 0
        %2913 = vmatpush1.bf16.msra.mxu0 %v2637
        %2914 = vmatprep.subr.bf16.mxu0 0
        %2915 = vmatpush1.bf16.msra.mxu0 0
        %2916 = vmatprep.subr.bf16.mxu0 0
        %2917 = vmatpush1.bf16.msra.mxu0 0
        %2918 = vmatprep.subr.bf16.mxu0 0
        %2919 = vmatpush1.bf16.msra.mxu0 0
        %2920 = vmatprep.subr.bf16.mxu0 0
        %2921 = vmatpush1.bf16.msra.mxu0 0
        %2922 = vmatprep.subr.bf16.mxu0 0
        %2923 = vmatpush1.bf16.msra.mxu0 0
        %2924 = vmatprep.subr.bf16.mxu0 0
        %2925 = vmatpush1.bf16.msra.mxu0 0
        %2926 = vmatprep.subr.bf16.mxu0 0
        %2927 = vmatpush1.bf16.msra.mxu0 0
        %2928 = vmatprep.subr.bf16.mxu0 0
        %2929 = vmatpush1.bf16.msra.mxu0 0
        %2930 = vmatprep.subr.bf16.mxu0 0
        %2931 = vmatpush1.bf16.msra.mxu0 0
        %2932 = vmatprep.subr.bf16.mxu0 0
        %2933 = vmatpush1.bf16.msra.mxu0 0
        %2934 = vmatprep.subr.bf16.mxu0 0
        %2935 = vmatpush1.bf16.msra.mxu0 0
        %2936 = vmatprep.subr.bf16.mxu0 0
        %2937 = vmatpush1.bf16.msra.mxu0 0
        %2938 = vmatprep.subr.bf16.mxu0 0
        %2939 = vmatpush1.bf16.msra.mxu0 0
        %2940 = vmatprep.subr.bf16.mxu0 0
        %2941 = vmatpush1.bf16.msra.mxu0 0
        %2942 = vmatprep.subr.bf16.mxu0 0
        %2943 = vmatpush1.bf16.msra.mxu0 0
        %2944 = vmatprep.mubr.bf16.mxu0 0
        %2945 = vmatmul.mubr.bf16.gmra.mrb[0].mxu0 %v2559
        %v2946 = vpop.f32.mrb[0].mxu0
        %v2947 = vadd.f32 0.0, %v2946
        %v2948 = vpop.f32.mrb[0].mxu0
        %v2949 = vpop.f32.mrb[0].mxu0
        %v2950 = vadd.f32 0.0, %v2949
        %v2951 = vpop.f32.mrb[0].mxu0
        %2952 = vmatprep.mubr.bf16.mxu0 0
        %2953 = vmatmul.mubr.bf16.gmra.mrb[0].mxu0 %v2562
        %v2954 = vpop.f32.mrb[0].mxu0
        %v2955 = vadd.f32 0.0, %v2954
        %v2956 = vpop.f32.mrb[0].mxu0
        %v2957 = vpop.f32.mrb[0].mxu0
        %v2958 = vadd.f32 0.0, %v2957
        %v2959 = vpop.f32.mrb[0].mxu0
        %2960 = vmatprep.mubr.bf16.mxu0 0
        %2961 = vmatmul.mubr.bf16.gmra.mrb[0].mxu0 %v2565
        %v2962 = vpop.f32.mrb[0].mxu0
        %v2963 = vadd.f32 0.0, %v2962
        %v2964 = vpop.f32.mrb[0].mxu0
        %v2965 = vpop.f32.mrb[0].mxu0
        %v2966 = vadd.f32 0.0, %v2965
        %v2967 = vpop.f32.mrb[0].mxu0
        %2968 = vmatprep.mubr.bf16.mxu0 0
        %2969 = vmatmul.mubr.bf16.gmra.mrb[0].mxu0 %v2568
        %v2970 = vpop.f32.mrb[0].mxu0
        %v2971 = vadd.f32 0.0, %v2970
        %v2972 = vpop.f32.mrb[0].mxu0
        %v2973 = vpop.f32.mrb[0].mxu0
        %v2974 = vadd.f32 0.0, %v2973
        %v2975 = vpop.f32.mrb[0].mxu0
        %2976 = vmatprep.mubr.bf16.mxu0 0
        %2977 = vmatmul.mubr.bf16.gmra.mrb[0].mxu0 %v2571
        %v2978 = vpop.f32.mrb[0].mxu0
        %v2979 = vadd.f32 0.0, %v2978
        %v2980 = vpop.f32.mrb[0].mxu0
        %v2981 = vpop.f32.mrb[0].mxu0
        %v2982 = vadd.f32 0.0, %v2981
        %v2983 = vpop.f32.mrb[0].mxu0
        %2984 = vmatprep.mubr.bf16.mxu0 0
        %2985 = vmatmul.mubr.bf16.gmra.mrb[0].mxu0 %v2574
        %v2986 = vpop.f32.mrb[0].mxu0
        %v2987 = vadd.f32 0.0, %v2986
        %v2988 = vpop.f32.mrb[0].mxu0
        %v2989 = vpop.f32.mrb[0].mxu0
        %v2990 = vadd.f32 0.0, %v2989
        %v2991 = vpop.f32.mrb[0].mxu0
        %2992 = vmatprep.mubr.bf16.mxu0 0
        %2993 = vmatmul.mubr.bf16.gmra.mrb[0].mxu0 %v2577
        %v2994 = vpop.f32.mrb[0].mxu0
        %v2995 = vadd.f32 0.0, %v2994
        %v2996 = vpop.f32.mrb[0].mxu0
        %v2997 = vpop.f32.mrb[0].mxu0
        %v2998 = vadd.f32 0.0, %v2997
        %v2999 = vpop.f32.mrb[0].mxu0
        %3000 = vmatprep.mubr.bf16.mxu0 0
        %3001 = vmatmul.mubr.bf16.gmra.mrb[0].mxu0 %v2580
        %v3002 = vpop.f32.mrb[0].mxu0
        %v3003 = vadd.f32 0.0, %v3002
        %v3004 = vpop.f32.mrb[0].mxu0
        %v3005 = vpop.f32.mrb[0].mxu0
        %v3006 = vadd.f32 0.0, %v3005
        %v3007 = vpop.f32.mrb[0].mxu0
        %3008 = vmatprep.mubr.bf16.mxu0 0
        %3009 = vmatmul.mubr.bf16.gmra.mrb[0].mxu0 %v2583
        %v3010 = vpop.f32.mrb[0].mxu0
        %v3011 = vadd.f32 0.0, %v3010
        %v3012 = vpop.f32.mrb[0].mxu0
        %v3013 = vpop.f32.mrb[0].mxu0
        %v3014 = vadd.f32 0.0, %v3013
        %v3015 = vpop.f32.mrb[0].mxu0
        %3016 = vmatprep.mubr.bf16.mxu0 0
        %3017 = vmatmul.mubr.bf16.gmra.mrb[0].mxu0 %v2586
        %v3018 = vpop.f32.mrb[0].mxu0
        %v3019 = vadd.f32 0.0, %v3018
        %v3020 = vpop.f32.mrb[0].mxu0
        %v3021 = vpop.f32.mrb[0].mxu0
        %v3022 = vadd.f32 0.0, %v3021
        %v3023 = vpop.f32.mrb[0].mxu0
        %3024 = vmatprep.mubr.bf16.mxu0 0
        %3025 = vmatmul.mubr.bf16.gmra.mrb[0].mxu0 %v2589
        %v3026 = vpop.f32.mrb[0].mxu0
        %v3027 = vadd.f32 0.0, %v3026
        %v3028 = vpop.f32.mrb[0].mxu0
        %v3029 = vpop.f32.mrb[0].mxu0
        %v3030 = vadd.f32 0.0, %v3029
        %v3031 = vpop.f32.mrb[0].mxu0
        %3032 = vmatprep.mubr.bf16.mxu0 0
        %3033 = vmatmul.mubr.bf16.gmra.mrb[0].mxu0 %v2592
        %v3034 = vpop.f32.mrb[0].mxu0
        %v3035 = vadd.f32 0.0, %v3034
        %v3036 = vpop.f32.mrb[0].mxu0
        %v3037 = vpop.f32.mrb[0].mxu0
        %v3038 = vadd.f32 0.0, %v3037
        %v3039 = vpop.f32.mrb[0].mxu0
        %3040 = vmatprep.mubr.bf16.mxu0 0
        %3041 = vmatmul.mubr.bf16.gmra.mrb[0].mxu0 %v2595
        %v3042 = vpop.f32.mrb[0].mxu0
        %v3043 = vadd.f32 0.0, %v3042
        %v3044 = vpop.f32.mrb[0].mxu0
        %v3045 = vpop.f32.mrb[0].mxu0
        %v3046 = vadd.f32 0.0, %v3045
        %v3047 = vpop.f32.mrb[0].mxu0
        %3048 = vmatprep.mubr.bf16.mxu0 0
        %3049 = vmatmul.mubr.bf16.gmra.mrb[0].mxu0 %v2598
        %v3050 = vpop.f32.mrb[0].mxu0
        %v3051 = vadd.f32 0.0, %v3050
        %v3052 = vpop.f32.mrb[0].mxu0
        %v3053 = vpop.f32.mrb[0].mxu0
        %v3054 = vadd.f32 0.0, %v3053
        %v3055 = vpop.f32.mrb[0].mxu0
        %3056 = vmatprep.mubr.bf16.mxu0 0
        %3057 = vmatmul.mubr.bf16.gmra.mrb[0].mxu0 %v2601
        %v3058 = vpop.f32.mrb[0].mxu0
        %v3059 = vadd.f32 0.0, %v3058
        %v3060 = vpop.f32.mrb[0].mxu0
        %v3061 = vpop.f32.mrb[0].mxu0
        %v3062 = vadd.f32 0.0, %v3061
        %v3063 = vpop.f32.mrb[0].mxu0
        %3064 = vmatprep.mubr.bf16.mxu0 0
        %3065 = vmatmul.mubr.bf16.gmra.mrb[0].mxu0 %v2604
        %v3066 = vpop.f32.mrb[0].mxu0
        %v3067 = vadd.f32 0.0, %v3066
        %v3068 = vpop.f32.mrb[0].mxu0
        %v3069 = vpop.f32.mrb[0].mxu0
        %v3070 = vadd.f32 0.0, %v3069
        %v3071 = vpop.f32.mrb[0].mxu0
        %3072 = vmatprep.mubr.bf16.mxu0 0
        %3073 = vmatmul.mubr.bf16.gmra.mrb[0].mxu0 %v2607
        %v3074 = vpop.f32.mrb[0].mxu0
        %v3075 = vadd.f32 0.0, %v3074
        %v3076 = vpop.f32.mrb[0].mxu0
        %v3077 = vpop.f32.mrb[0].mxu0
        %v3078 = vadd.f32 0.0, %v3077
        %v3079 = vpop.f32.mrb[0].mxu0
        %3080 = vmatprep.mubr.bf16.mxu0 0
        %3081 = vmatmul.mubr.bf16.gmra.mrb[0].mxu0 %v2610
        %v3082 = vpop.f32.mrb[0].mxu0
        %v3083 = vadd.f32 0.0, %v3082
        %v3084 = vpop.f32.mrb[0].mxu0
        %v3085 = vpop.f32.mrb[0].mxu0
        %v3086 = vadd.f32 0.0, %v3085
        %v3087 = vpop.f32.mrb[0].mxu0
        %3088 = vmatprep.mubr.bf16.mxu0 0
        %3089 = vmatmul.mubr.bf16.gmra.mrb[0].mxu0 %v2613
        %v3090 = vpop.f32.mrb[0].mxu0
        %v3091 = vadd.f32 0.0, %v3090
        %v3092 = vpop.f32.mrb[0].mxu0
        %v3093 = vpop.f32.mrb[0].mxu0
        %v3094 = vadd.f32 0.0, %v3093
        %v3095 = vpop.f32.mrb[0].mxu0
        %3096 = vmatprep.mubr.bf16.mxu0 0
        %3097 = vmatmul.mubr.bf16.gmra.mrb[0].mxu0 %v2616
        %v3098 = vpop.f32.mrb[0].mxu0
        %v3099 = vadd.f32 0.0, %v3098
        %v3100 = vpop.f32.mrb[0].mxu0
        %v3101 = vpop.f32.mrb[0].mxu0
        %v3102 = vadd.f32 0.0, %v3101
        %v3103 = vpop.f32.mrb[0].mxu0
        %3104 = vmatprep.mubr.bf16.mxu0 0
        %3105 = vmatmul.mubr.bf16.gmra.mrb[0].mxu0 %v2619
        %v3106 = vpop.f32.mrb[0].mxu0
        %v3107 = vadd.f32 0.0, %v3106
        %v3108 = vpop.f32.mrb[0].mxu0
        %v3109 = vpop.f32.mrb[0].mxu0
        %v3110 = vadd.f32 0.0, %v3109
        %v3111 = vpop.f32.mrb[0].mxu0
        %3112 = vmatprep.mubr.bf16.mxu0 0
        %3113 = vmatmul.mubr.bf16.gmra.mrb[0].mxu0 %v2622
        %v3114 = vpop.f32.mrb[0].mxu0
        %v3115 = vadd.f32 0.0, %v3114
        %v3116 = vpop.f32.mrb[0].mxu0
        %v3117 = vpop.f32.mrb[0].mxu0
        %v3118 = vadd.f32 0.0, %v3117
        %v3119 = vpop.f32.mrb[0].mxu0
        %3120 = vmatprep.mubr.bf16.mxu0 0
        %3121 = vmatmul.mubr.bf16.gmra.mrb[0].mxu0 %v2625
        %v3122 = vpop.f32.mrb[0].mxu0
        %v3123 = vadd.f32 0.0, %v3122
        %v3124 = vpop.f32.mrb[0].mxu0
        %v3125 = vpop.f32.mrb[0].mxu0
        %v3126 = vadd.f32 0.0, %v3125
        %v3127 = vpop.f32.mrb[0].mxu0
        %3128 = vmatprep.mubr.bf16.mxu0 0
        %3129 = vmatmul.mubr.bf16.gmra.mrb[0].mxu0 %v2628
        %v3130 = vpop.f32.mrb[0].mxu0
        %v3131 = vadd.f32 0.0, %v3130
        %v3132 = vpop.f32.mrb[0].mxu0
        %v3133 = vpop.f32.mrb[0].mxu0
        %v3134 = vadd.f32 0.0, %v3133
        %v3135 = vpop.f32.mrb[0].mxu0
        %3136 = vdwg.mxu0
        %v3137 = vrot.slane %v2674, 3
        %v3138 = vrot.slane %v2678, 3
        %v3139 = vrot.slane %v2684, 3
        %v3140 = vrot.slane %v2688, 3
        %v3141 = vrot.slane %v2694, 3
        %v3142 = vrot.slane %v2698, 3
        %v3143 = vrot.slane %v2704, 3
        %v3144 = vrot.slane %v2708, 3
        %v3145 = vrot.slane %v2714, 3
        %v3146 = vrot.slane %v2718, 3
        %v3147 = vrot.slane %v2724, 3
        %v3148 = vrot.slane %v2728, 3
        %v3149 = vrot.slane %v2734, 3
        %v3150 = vrot.slane %v2738, 3
        %v3151 = vrot.slane %v2744, 3
        %v3152 = vrot.slane %v2748, 3
        %v3153 = vrot.slane %v2754, 3
        %v3154 = vrot.slane %v2758, 3
        %v3155 = vrot.slane %v2764, 3
        %v3156 = vrot.slane %v2768, 3
        %v3157 = vrot.slane %v2774, 3
        %v3158 = vrot.slane %v2778, 3
        %v3159 = vrot.slane %v2784, 3
        %v3160 = vrot.slane %v2788, 3
        %v3161 = vrot.slane %v2794, 3
        %v3162 = vrot.slane %v2798, 3
        %v3163 = vrot.slane %v2804, 3
        %v3164 = vrot.slane %v2808, 3
        %v3165 = vrot.slane %v2814, 3
        %v3166 = vrot.slane %v2818, 3
        %v3167 = vrot.slane %v2824, 3
        %v3168 = vrot.slane %v2828, 3
        %v3169 = vrot.slane %v2834, 3
        %v3170 = vrot.slane %v2838, 3
        %v3171 = vrot.slane %v2844, 3
        %v3172 = vrot.slane %v2848, 3
        %v3173 = vrot.slane %v2854, 3
        %v3174 = vrot.slane %v2858, 3
        %v3175 = vrot.slane %v2864, 3
        %v3176 = vrot.slane %v2868, 3
        %v3177 = vrot.slane %v2874, 3
        %v3178 = vrot.slane %v2878, 3
        %v3179 = vrot.slane %v2884, 3
        %v3180 = vrot.slane %v2888, 3
        %v3181 = vrot.slane %v2894, 3
        %v3182 = vrot.slane %v2898, 3
        %v3183 = vrot.slane %v2904, 3
        %v3184 = vrot.slane %v2908, 3
        %v3185 = vsel %vm1010, %v3183, %v3184
        %v3186 = vsel %vm1010, %v3182, %v3183
        %v3187 = vsel %vm1010, %v3180, %v3181
        %v3188 = vsel %vm1010, %v3179, %v3180
        %v3189 = vsel %vm1010, %v3177, %v3178
        %v3190 = vsel %vm1010, %v3176, %v3177
        %v3191 = vsel %vm1010, %v3174, %v3175
        %v3192 = vsel %vm1010, %v3173, %v3174
        %v3193 = vsel %vm1010, %v3171, %v3172
        %v3194 = vsel %vm1010, %v3170, %v3171
        %v3195 = vsel %vm1010, %v3168, %v3169
        %v3196 = vsel %vm1010, %v3167, %v3168
        %v3197 = vsel %vm1010, %v3165, %v3166
        %v3198 = vsel %vm1010, %v3164, %v3165
        %v3199 = vsel %vm1010, %v3162, %v3163
        %v3200 = vsel %vm1010, %v3161, %v3162
        %v3201 = vsel %vm1010, %v3159, %v3160
        %v3202 = vsel %vm1010, %v3158, %v3159
        %v3203 = vsel %vm1010, %v3156, %v3157
        %v3204 = vsel %vm1010, %v3155, %v3156
        %v3205 = vsel %vm1010, %v3153, %v3154
        %v3206 = vsel %vm1010, %v3152, %v3153
        %v3207 = vsel %vm1010, %v3150, %v3151
        %v3208 = vsel %vm1010, %v3149, %v3150
        %v3209 = vsel %vm1010, %v3147, %v3148
        %v3210 = vsel %vm1010, %v3146, %v3147
        %v3211 = vsel %vm1010, %v3144, %v3145
        %v3212 = vsel %vm1010, %v3143, %v3144
        %v3213 = vsel %vm1010, %v3141, %v3142
        %v3214 = vsel %vm1010, %v3140, %v3141
        %v3215 = vsel %vm1010, %v3138, %v3139
        %v3216 = vsel %vm1010, %v3137, %v3138
        %v3217 = vrot.slane %v2676, 4
        %v3218 = vrot.slane %v2680, 4
        %v3219 = vrot.slane %v2686, 4
        %v3220 = vrot.slane %v2690, 4
        %v3221 = vrot.slane %v2696, 4
        %v3222 = vrot.slane %v2700, 4
        %v3223 = vrot.slane %v2706, 4
        %v3224 = vrot.slane %v2710, 4
        %v3225 = vrot.slane %v2716, 4
        %v3226 = vrot.slane %v2720, 4
        %v3227 = vrot.slane %v2726, 4
        %v3228 = vrot.slane %v2730, 4
        %v3229 = vrot.slane %v2736, 4
        %v3230 = vrot.slane %v2740, 4
        %v3231 = vrot.slane %v2746, 4
        %v3232 = vrot.slane %v2750, 4
        %v3233 = vrot.slane %v2756, 4
        %v3234 = vrot.slane %v2760, 4
        %v3235 = vrot.slane %v2766, 4
        %v3236 = vrot.slane %v2770, 4
        %v3237 = vrot.slane %v2776, 4
        %v3238 = vrot.slane %v2780, 4
        %v3239 = vrot.slane %v2786, 4
        %v3240 = vrot.slane %v2790, 4
        %v3241 = vrot.slane %v2796, 4
        %v3242 = vrot.slane %v2800, 4
        %v3243 = vrot.slane %v2806, 4
        %v3244 = vrot.slane %v2810, 4
        %v3245 = vrot.slane %v2816, 4
        %v3246 = vrot.slane %v2820, 4
        %v3247 = vrot.slane %v2826, 4
        %v3248 = vrot.slane %v2830, 4
        %v3249 = vrot.slane %v2836, 4
        %v3250 = vrot.slane %v2840, 4
        %v3251 = vrot.slane %v2846, 4
        %v3252 = vrot.slane %v2850, 4
        %v3253 = vrot.slane %v2856, 4
        %v3254 = vrot.slane %v2860, 4
        %v3255 = vrot.slane %v2866, 4
        %v3256 = vrot.slane %v2870, 4
        %v3257 = vrot.slane %v2876, 4
        %v3258 = vrot.slane %v2880, 4
        %v3259 = vrot.slane %v2886, 4
        %v3260 = vrot.slane %v2890, 4
        %v3261 = vrot.slane %v2896, 4
        %v3262 = vrot.slane %v2900, 4
        %v3263 = vrot.slane %v2906, 4
        %v3264 = vrot.slane %v2910, 4
        %v3265 = vsel %vm1091, %v3263, %v3264
        %v3266 = vsel %vm1091, %v3262, %v3263
        %v3267 = vsel %vm1091, %v3260, %v3261
        %v3268 = vsel %vm1091, %v3259, %v3260
        %v3269 = vsel %vm1091, %v3257, %v3258
        %v3270 = vsel %vm1091, %v3256, %v3257
        %v3271 = vsel %vm1091, %v3254, %v3255
        %v3272 = vsel %vm1091, %v3253, %v3254
        %v3273 = vsel %vm1091, %v3251, %v3252
        %v3274 = vsel %vm1091, %v3250, %v3251
        %v3275 = vsel %vm1091, %v3248, %v3249
        %v3276 = vsel %vm1091, %v3247, %v3248
        %v3277 = vsel %vm1091, %v3245, %v3246
        %v3278 = vsel %vm1091, %v3244, %v3245
        %v3279 = vsel %vm1091, %v3242, %v3243
        %v3280 = vsel %vm1091, %v3241, %v3242
        %v3281 = vsel %vm1091, %v3239, %v3240
        %v3282 = vsel %vm1091, %v3238, %v3239
        %v3283 = vsel %vm1091, %v3236, %v3237
        %v3284 = vsel %vm1091, %v3235, %v3236
        %v3285 = vsel %vm1091, %v3233, %v3234
        %v3286 = vsel %vm1091, %v3232, %v3233
        %v3287 = vsel %vm1091, %v3230, %v3231
        %v3288 = vsel %vm1091, %v3229, %v3230
        %v3289 = vsel %vm1091, %v3227, %v3228
        %v3290 = vsel %vm1091, %v3226, %v3227
        %v3291 = vsel %vm1091, %v3224, %v3225
        %v3292 = vsel %vm1091, %v3223, %v3224
        %v3293 = vsel %vm1091, %v3221, %v3222
        %v3294 = vsel %vm1091, %v3220, %v3221
        %v3295 = vsel %vm1091, %v3218, %v3219
        %v3296 = vsel %vm1091, %v3217, %v3218
        %v3297 = vadd.f32 %v3216, %v3296
        %v3298 = vadd.f32 %v3215, %v3295
        %v3299 = vadd.f32 %v3214, %v3294
        %v3300 = vadd.f32 %v3213, %v3293
        %v3301 = vadd.f32 %v3212, %v3292
        %v3302 = vadd.f32 %v3211, %v3291
        %v3303 = vadd.f32 %v3210, %v3290
        %v3304 = vadd.f32 %v3209, %v3289
        %v3305 = vadd.f32 %v3208, %v3288
        %v3306 = vadd.f32 %v3207, %v3287
        %v3307 = vadd.f32 %v3206, %v3286
        %v3308 = vadd.f32 %v3205, %v3285
        %v3309 = vadd.f32 %v3204, %v3284
        %v3310 = vadd.f32 %v3203, %v3283
        %v3311 = vadd.f32 %v3202, %v3282
        %v3312 = vadd.f32 %v3201, %v3281
        %v3313 = vadd.f32 %v3200, %v3280
        %v3314 = vadd.f32 %v3199, %v3279
        %v3315 = vadd.f32 %v3198, %v3278
        %v3316 = vadd.f32 %v3197, %v3277
        %v3317 = vadd.f32 %v3196, %v3276
        %v3318 = vadd.f32 %v3195, %v3275
        %v3319 = vadd.f32 %v3194, %v3274
        %v3320 = vadd.f32 %v3193, %v3273
        %v3321 = vadd.f32 %v3192, %v3272
        %v3322 = vadd.f32 %v3191, %v3271
        %v3323 = vadd.f32 %v3190, %v3270
        %v3324 = vadd.f32 %v3189, %v3269
        %v3325 = vadd.f32 %v3188, %v3268
        %v3326 = vadd.f32 %v3187, %v3267
        %v3327 = vadd.f32 %v3186, %v3266
        %v3328 = vadd.f32 %v3185, %v3265
        %v3329 = vrot.slane %v2947, 5
        %v3330 = vrot.slane %v2950, 5
        %v3331 = vrot.slane %v2955, 5
        %v3332 = vrot.slane %v2958, 5
        %v3333 = vrot.slane %v2963, 5
        %v3334 = vrot.slane %v2966, 5
        %v3335 = vrot.slane %v2971, 5
        %v3336 = vrot.slane %v2974, 5
        %v3337 = vrot.slane %v2979, 5
        %v3338 = vrot.slane %v2982, 5
        %v3339 = vrot.slane %v2987, 5
        %v3340 = vrot.slane %v2990, 5
        %v3341 = vrot.slane %v2995, 5
        %v3342 = vrot.slane %v2998, 5
        %v3343 = vrot.slane %v3003, 5
        %v3344 = vrot.slane %v3006, 5
        %v3345 = vrot.slane %v3011, 5
        %v3346 = vrot.slane %v3014, 5
        %v3347 = vrot.slane %v3019, 5
        %v3348 = vrot.slane %v3022, 5
        %v3349 = vrot.slane %v3027, 5
        %v3350 = vrot.slane %v3030, 5
        %v3351 = vrot.slane %v3035, 5
        %v3352 = vrot.slane %v3038, 5
        %v3353 = vrot.slane %v3043, 5
        %v3354 = vrot.slane %v3046, 5
        %v3355 = vrot.slane %v3051, 5
        %v3356 = vrot.slane %v3054, 5
        %v3357 = vrot.slane %v3059, 5
        %v3358 = vrot.slane %v3062, 5
        %v3359 = vrot.slane %v3067, 5
        %v3360 = vrot.slane %v3070, 5
        %v3361 = vrot.slane %v3075, 5
        %v3362 = vrot.slane %v3078, 5
        %v3363 = vrot.slane %v3083, 5
        %v3364 = vrot.slane %v3086, 5
        %v3365 = vrot.slane %v3091, 5
        %v3366 = vrot.slane %v3094, 5
        %v3367 = vrot.slane %v3099, 5
        %v3368 = vrot.slane %v3102, 5
        %v3369 = vrot.slane %v3107, 5
        %v3370 = vrot.slane %v3110, 5
        %v3371 = vrot.slane %v3115, 5
        %v3372 = vrot.slane %v3118, 5
        %v3373 = vrot.slane %v3123, 5
        %v3374 = vrot.slane %v3126, 5
        %v3375 = vrot.slane %v3131, 5
        %v3376 = vrot.slane %v3134, 5
        %v3377 = vsel %vm1204, %v3375, %v3376
        %v3378 = vsel %vm1204, %v3374, %v3375
        %v3379 = vsel %vm1204, %v3372, %v3373
        %v3380 = vsel %vm1204, %v3371, %v3372
        %v3381 = vsel %vm1204, %v3369, %v3370
        %v3382 = vsel %vm1204, %v3368, %v3369
        %v3383 = vsel %vm1204, %v3366, %v3367
        %v3384 = vsel %vm1204, %v3365, %v3366
        %v3385 = vsel %vm1204, %v3363, %v3364
        %v3386 = vsel %vm1204, %v3362, %v3363
        %v3387 = vsel %vm1204, %v3360, %v3361
        %v3388 = vsel %vm1204, %v3359, %v3360
        %v3389 = vsel %vm1204, %v3357, %v3358
        %v3390 = vsel %vm1204, %v3356, %v3357
        %v3391 = vsel %vm1204, %v3354, %v3355
        %v3392 = vsel %vm1204, %v3353, %v3354
        %v3393 = vsel %vm1204, %v3351, %v3352
        %v3394 = vsel %vm1204, %v3350, %v3351
        %v3395 = vsel %vm1204, %v3348, %v3349
        %v3396 = vsel %vm1204, %v3347, %v3348
        %v3397 = vsel %vm1204, %v3345, %v3346
        %v3398 = vsel %vm1204, %v3344, %v3345
        %v3399 = vsel %vm1204, %v3342, %v3343
        %v3400 = vsel %vm1204, %v3341, %v3342
        %v3401 = vsel %vm1204, %v3339, %v3340
        %v3402 = vsel %vm1204, %v3338, %v3339
        %v3403 = vsel %vm1204, %v3336, %v3337
        %v3404 = vsel %vm1204, %v3335, %v3336
        %v3405 = vsel %vm1204, %v3333, %v3334
        %v3406 = vsel %vm1204, %v3332, %v3333
        %v3407 = vsel %vm1204, %v3330, %v3331
        %v3408 = vsel %vm1204, %v3329, %v3330
        %v3409 = vadd.f32 %v3297, %v3408
        %v3410 = vadd.f32 %v3298, %v3407
        %v3411 = vadd.f32 %v3299, %v3406
        %v3412 = vadd.f32 %v3300, %v3405
        %v3413 = vadd.f32 %v3301, %v3404
        %v3414 = vadd.f32 %v3302, %v3403
        %v3415 = vadd.f32 %v3303, %v3402
        %v3416 = vadd.f32 %v3304, %v3401
        %v3417 = vadd.f32 %v3305, %v3400
        %v3418 = vadd.f32 %v3306, %v3399
        %v3419 = vadd.f32 %v3307, %v3398
        %v3420 = vadd.f32 %v3308, %v3397
        %v3421 = vadd.f32 %v3309, %v3396
        %v3422 = vadd.f32 %v3310, %v3395
        %v3423 = vadd.f32 %v3311, %v3394
        %v3424 = vadd.f32 %v3312, %v3393
        %v3425 = vadd.f32 %v3313, %v3392
        %v3426 = vadd.f32 %v3314, %v3391
        %v3427 = vadd.f32 %v3315, %v3390
        %v3428 = vadd.f32 %v3316, %v3389
        %v3429 = vadd.f32 %v3317, %v3388
        %v3430 = vadd.f32 %v3318, %v3387
        %v3431 = vadd.f32 %v3319, %v3386
        %v3432 = vadd.f32 %v3320, %v3385
        %v3433 = vadd.f32 %v3321, %v3384
        %v3434 = vadd.f32 %v3322, %v3383
        %v3435 = vadd.f32 %v3323, %v3382
        %v3436 = vadd.f32 %v3324, %v3381
        %v3437 = vadd.f32 %v3325, %v3380
        %v3438 = vadd.f32 %v3326, %v3379
        %v3439 = vadd.f32 %v3327, %v3378
        %v3440 = vadd.f32 %v3328, %v3377
        %v3441 = vadd.f32 %v2339, %v3409
        %v3442 = vadd.f32 %v2340, %v3410
        %v3443 = vadd.f32 %v2341, %v3411
        %v3444 = vadd.f32 %v2342, %v3412
        %v3445 = vadd.f32 %v2343, %v3413
        %v3446 = vadd.f32 %v2344, %v3414
        %v3447 = vadd.f32 %v2345, %v3415
        %v3448 = vadd.f32 %v2346, %v3416
        %v3449 = vadd.f32 %v2347, %v3417
        %v3450 = vadd.f32 %v2348, %v3418
        %v3451 = vadd.f32 %v2349, %v3419
        %v3452 = vadd.f32 %v2350, %v3420
        %v3453 = vadd.f32 %v2351, %v3421
        %v3454 = vadd.f32 %v2352, %v3422
        %v3455 = vadd.f32 %v2353, %v3423
        %v3456 = vadd.f32 %v2354, %v3424
        %v3457 = vadd.f32 %v2355, %v3425
        %v3458 = vadd.f32 %v2356, %v3426
        %v3459 = vadd.f32 %v2357, %v3427
        %v3460 = vadd.f32 %v2358, %v3428
        %v3461 = vadd.f32 %v2359, %v3429
        %v3462 = vadd.f32 %v2360, %v3430
        %v3463 = vadd.f32 %v2361, %v3431
        %v3464 = vadd.f32 %v2362, %v3432
        %v3465 = vadd.f32 %v2363, %v3433
        %v3466 = vadd.f32 %v2364, %v3434
        %v3467 = vadd.f32 %v2365, %v3435
        %v3468 = vadd.f32 %v2366, %v3436
        %v3469 = vadd.f32 %v2367, %v3437
        %v3470 = vadd.f32 %v2368, %v3438
        %v3471 = vadd.f32 %v2369, %v3439
        %v3472 = vadd.f32 %v2370, %v3440
        %v3473 = vld [vmem:[%s191 + $0x18] sm:$0xf]
        %v3474 = vld [vmem:[%s191 + $0x1c] sm:$0xf]
        %v3475 = vld [vmem:[%s191 + $0x20] sm:$0xf]
        %v3476 = vld [vmem:[%s191 + $0x24] sm:$0xf]
        %v3477 = vld [vmem:[%s191 + $0x28] sm:$0xf]
        %v3478 = vld [vmem:[%s191 + $0x2c] sm:$0xf]
        %v3479 = vld [vmem:[%s191 + $0x30] sm:$0xf]
        %v3480 = vld [vmem:[%s191 + $0x34] sm:$0xf]
        %v3481 = vld [vmem:[%s191 + $0x38] sm:$0xf]
        %v3482 = vld [vmem:[%s191 + $0x3c] sm:$0xf]
        %v3483 = vld [vmem:[%s191 + $0x40] sm:$0xf]
        %v3484 = vld [vmem:[%s191 + $0x44] sm:$0xf]
        %v3485 = vld [vmem:[%s191 + $0x48] sm:$0xf]
        %v3486 = vld [vmem:[%s191 + $0x4c] sm:$0xf]
        %v3487 = vld [vmem:[%s191 + $0x50] sm:$0xf]
        %v3488 = vld [vmem:[%s191 + $0x54] sm:$0xf]
        %v3489 = vld [vmem:[%s191 + $0x58] sm:$0xf]
        %v3490 = vld [vmem:[%s191 + $0x5c] sm:$0xf]
        %v3491 = vld [vmem:[%s191 + $0x60] sm:$0xf]
        %v3492 = vld [vmem:[%s191 + $0x64] sm:$0xf]
        %v3493 = vld [vmem:[%s191 + $0x68] sm:$0xf]
        %v3494 = vld [vmem:[%s191 + $0x6c] sm:$0xf]
        %v3495 = vld [vmem:[%s191 + $0x70] sm:$0xf]
        %v3496 = vld [vmem:[%s191 + $0x74] sm:$0xf]
        %v3497 = vld [vmem:[%s191 + $0x78] sm:$0xf]
        %v3498 = vld [vmem:[%s191 + $0x7c] sm:$0xf]
        %v3499 = vld [vmem:[%s191 + $0x80] sm:$0xf]
        %v3500 = vld [vmem:[%s191 + $0x84] sm:$0xf]
        %v3501 = vld [vmem:[%s191 + $0x88] sm:$0xf]
        %v3502 = vld [vmem:[%s191 + $0x8c] sm:$0xf]
        %v3503 = vld [vmem:[%s191 + $0x90] sm:$0xf]
        %v3504 = vld [vmem:[%s191 + $0x94] sm:$0xf]
        %v3505 = vld [vmem:[%s191 + $0x98] sm:$0xf]
        %v3506 = vld [vmem:[%s191 + $0x9c] sm:$0xf]
        %v3507 = vld [vmem:[%s191 + $0xa0] sm:$0xf]
        %v3508 = vld [vmem:[%s191 + $0xa4] sm:$0xf]
        %v3509 = vld [vmem:[%s191 + $0xa8] sm:$0xf]
        %v3510 = vld [vmem:[%s191 + $0xac] sm:$0xf]
        %v3511 = vld [vmem:[%s191 + $0xb0] sm:$0xf]
        %v3512 = vld [vmem:[%s191 + $0xb4] sm:$0xf]
        %v3513 = vld [vmem:[%s191 + $0xb8] sm:$0xf]
        %v3514 = vld [vmem:[%s191 + $0xbc] sm:$0xf]
        %v3515 = vld [vmem:[%s191 + $0xc0] sm:$0xf]
        %v3516 = vld [vmem:[%s191 + $0xc4] sm:$0xf]
        %v3517 = vld [vmem:[%s191 + $0xc8] sm:$0xf]
        %v3518 = vld [vmem:[%s191 + $0xcc] sm:$0xf]
        %v3519 = vld [vmem:[%s191 + $0xd0] sm:$0xf]
        %v3520 = vld [vmem:[%s191 + $0xd4] sm:$0xf]
        %s3521 = scalar_lea.vmem %s1, 18
        %v3522 = vld [vmem:[%s3521] sm:$0x3f]
        %v3571 = vunpack.c.l.b16 %v3473
        %v3572 = vunpack.c.l.b16 %v3474
        %v3573 = vunpack.c.l.b16 %v3475
        %v3574 = vunpack.c.l.b16 %v3476
        %v3575 = vunpack.c.l.b16 %v3477
        %v3576 = vunpack.c.l.b16 %v3478
        %v3577 = vunpack.c.l.b16 %v3479
        %v3578 = vunpack.c.l.b16 %v3480
        %v3579 = vunpack.c.l.b16 %v3481
        %v3580 = vunpack.c.l.b16 %v3482
        %v3581 = vunpack.c.l.b16 %v3483
        %v3582 = vunpack.c.l.b16 %v3484
        %v3583 = vunpack.c.l.b16 %v3485
        %v3584 = vunpack.c.l.b16 %v3486
        %v3585 = vunpack.c.l.b16 %v3487
        %v3586 = vunpack.c.l.b16 %v3488
        %v3587 = vunpack.c.l.b16 %v3489
        %v3588 = vunpack.c.l.b16 %v3490
        %v3589 = vunpack.c.l.b16 %v3491
        %v3590 = vunpack.c.l.b16 %v3492
        %v3591 = vunpack.c.l.b16 %v3493
        %v3592 = vunpack.c.l.b16 %v3494
        %v3593 = vunpack.c.l.b16 %v3495
        %v3594 = vunpack.c.l.b16 %v3496
        %v3595 = vunpack.c.l.b16 %v3497
        %v3596 = vunpack.c.l.b16 %v3498
        %v3597 = vunpack.c.l.b16 %v3499
        %v3598 = vunpack.c.l.b16 %v3500
        %v3599 = vunpack.c.l.b16 %v3501
        %v3600 = vunpack.c.l.b16 %v3502
        %v3601 = vunpack.c.l.b16 %v3503
        %v3602 = vunpack.c.l.b16 %v3504
        %v3603 = vunpack.c.l.b16 %v3505
        %v3604 = vunpack.c.l.b16 %v3506
        %v3605 = vunpack.c.l.b16 %v3507
        %v3606 = vunpack.c.l.b16 %v3508
        %v3607 = vunpack.c.l.b16 %v3509
        %v3608 = vunpack.c.l.b16 %v3510
        %v3609 = vunpack.c.l.b16 %v3511
        %v3610 = vunpack.c.l.b16 %v3512
        %v3611 = vunpack.c.l.b16 %v3513
        %v3612 = vunpack.c.l.b16 %v3514
        %v3613 = vunpack.c.l.b16 %v3515
        %v3614 = vunpack.c.l.b16 %v3516
        %v3615 = vunpack.c.l.b16 %v3517
        %v3616 = vunpack.c.l.b16 %v3518
        %v3617 = vunpack.c.l.b16 %v3519
        %v3618 = vunpack.c.l.b16 %v3520
        %v3619 = vpack.c.b16 %v3572, %v3571
        %v3620 = vpack.c.b16 %v3574, %v3573
        %v3621 = vpack.c.b16 %v3576, %v3575
        %v3622 = vpack.c.b16 %v3578, %v3577
        %v3623 = vpack.c.b16 %v3580, %v3579
        %v3624 = vpack.c.b16 %v3582, %v3581
        %v3625 = vpack.c.b16 %v3584, %v3583
        %v3626 = vpack.c.b16 %v3586, %v3585
        %v3627 = vpack.c.b16 %v3588, %v3587
        %v3628 = vpack.c.b16 %v3590, %v3589
        %v3629 = vpack.c.b16 %v3592, %v3591
        %v3630 = vpack.c.b16 %v3594, %v3593
        %v3631 = vpack.c.b16 %v3596, %v3595
        %v3632 = vpack.c.b16 %v3598, %v3597
        %v3633 = vpack.c.b16 %v3600, %v3599
        %v3634 = vpack.c.b16 %v3602, %v3601
        %v3635 = vpack.c.b16 %v3604, %v3603
        %v3636 = vpack.c.b16 %v3606, %v3605
        %v3637 = vpack.c.b16 %v3608, %v3607
        %v3638 = vpack.c.b16 %v3610, %v3609
        %v3639 = vpack.c.b16 %v3612, %v3611
        %v3640 = vpack.c.b16 %v3614, %v3613
        %v3641 = vpack.c.b16 %v3616, %v3615
        %v3642 = vpack.c.b16 %v3618, %v3617
        %v3644 = vcombine.high %v3522, %v3522
        %v3646 = vunpack.c.l.s4 1983009808
        %v3647 = vunpack.c.0.s8 %v3646
        %v3648 = vlaneseq
        %v3649 = vshrl.u32 %v3648, 7
        %v3650 = vsub.s32 %v3647, %v3649
        %v3651 = vrot.slane %v3522, %v3650
        %v3653 = vunpack.c.l.s4 1983009808
        %v3654 = vunpack.c.0.s8 %v3653
        %v3655 = vlaneseq
        %v3656 = vshrl.u32 %v3655, 7
        %v3657 = vsub.s32 %v3654, %v3656
        %v3658 = vrot.slane %v3644, %v3657
        %v3659 = vcombine.high %v3651, %v3651
        %v3661 = vsel %vm379, %v3619, 0
        %v3664 = vsel %vm379, %v3620, 0
        %v3667 = vsel %vm379, %v3621, 0
        %v3670 = vsel %vm379, %v3622, 0
        %v3673 = vsel %vm379, %v3623, 0
        %v3676 = vsel %vm379, %v3624, 0
        %v3679 = vsel %vm379, %v3625, 0
        %v3682 = vsel %vm379, %v3626, 0
        %v3685 = vsel %vm379, %v3627, 0
        %v3688 = vsel %vm379, %v3628, 0
        %v3691 = vsel %vm379, %v3629, 0
        %v3694 = vsel %vm379, %v3630, 0
        %v3697 = vsel %vm379, %v3631, 0
        %v3700 = vsel %vm379, %v3632, 0
        %v3703 = vsel %vm379, %v3633, 0
        %v3706 = vsel %vm379, %v3634, 0
        %v3709 = vsel %vm379, %v3635, 0
        %v3712 = vsel %vm379, %v3636, 0
        %v3715 = vsel %vm379, %v3637, 0
        %v3718 = vsel %vm379, %v3638, 0
        %v3721 = vsel %vm379, %v3639, 0
        %v3724 = vsel %vm379, %v3640, 0
        %v3727 = vsel %vm379, %v3641, 0
        %v3730 = vsel %vm379, %v3642, 0
        %v3733 = vsel %vm452, %v3651, 0
        %v3736 = vsel %vm452, %v3659, 0
        %v3739 = vsel %vm452, %v3658, 0
        %3741 = vmatprep.subr.bf16.mxu0 %v3736
        %3742 = vmatpush1.bf16.msra.mxu0 %v3733
        %3743 = vmatprep.subr.bf16.mxu0 0
        %3744 = vmatpush1.bf16.msra.mxu0 0
        %3745 = vmatprep.subr.bf16.mxu0 0
        %3746 = vmatpush1.bf16.msra.mxu0 0
        %3747 = vmatprep.subr.bf16.mxu0 0
        %3748 = vmatpush1.bf16.msra.mxu0 0
        %3749 = vmatprep.subr.bf16.mxu0 0
        %3750 = vmatpush1.bf16.msra.mxu0 0
        %3751 = vmatprep.subr.bf16.mxu0 0
        %3752 = vmatpush1.bf16.msra.mxu0 0
        %3753 = vmatprep.subr.bf16.mxu0 0
        %3754 = vmatpush1.bf16.msra.mxu0 0
        %3755 = vmatprep.subr.bf16.mxu0 0
        %3756 = vmatpush1.bf16.msra.mxu0 0
        %3757 = vmatprep.subr.bf16.mxu0 0
        %3758 = vmatpush1.bf16.msra.mxu0 0
        %3759 = vmatprep.subr.bf16.mxu0 0
        %3760 = vmatpush1.bf16.msra.mxu0 0
        %3761 = vmatprep.subr.bf16.mxu0 0
        %3762 = vmatpush1.bf16.msra.mxu0 0
        %3763 = vmatprep.subr.bf16.mxu0 0
        %3764 = vmatpush1.bf16.msra.mxu0 0
        %3765 = vmatprep.subr.bf16.mxu0 0
        %3766 = vmatpush1.bf16.msra.mxu0 0
        %3767 = vmatprep.subr.bf16.mxu0 0
        %3768 = vmatpush1.bf16.msra.mxu0 0
        %3769 = vmatprep.subr.bf16.mxu0 0
        %3770 = vmatpush1.bf16.msra.mxu0 0
        %3771 = vmatprep.subr.bf16.mxu0 0
        %3772 = vmatpush1.bf16.msra.mxu0 0
        %3773 = vmatprep.mubr.bf16.mxu0 0
        %3774 = vmatmul.mubr.bf16.gmra.mrb[0].mxu0 %v3661
        %v3775 = vpop.f32.mrb[0].mxu0
        %v3776 = vadd.f32 0.0, %v3775
        %v3777 = vpop.f32.mrb[0].mxu0
        %v3778 = vadd.f32 0.0, %v3777
        %v3779 = vpop.f32.mrb[0].mxu0
        %v3780 = vadd.f32 0.0, %v3779
        %v3781 = vpop.f32.mrb[0].mxu0
        %v3782 = vadd.f32 0.0, %v3781
        %3783 = vmatprep.mubr.bf16.mxu0 0
        %3784 = vmatmul.mubr.bf16.gmra.mrb[0].mxu0 %v3664
        %v3785 = vpop.f32.mrb[0].mxu0
        %v3786 = vadd.f32 0.0, %v3785
        %v3787 = vpop.f32.mrb[0].mxu0
        %v3788 = vadd.f32 0.0, %v3787
        %v3789 = vpop.f32.mrb[0].mxu0
        %v3790 = vadd.f32 0.0, %v3789
        %v3791 = vpop.f32.mrb[0].mxu0
        %v3792 = vadd.f32 0.0, %v3791
        %3793 = vmatprep.mubr.bf16.mxu0 0
        %3794 = vmatmul.mubr.bf16.gmra.mrb[0].mxu0 %v3667
        %v3795 = vpop.f32.mrb[0].mxu0
        %v3796 = vadd.f32 0.0, %v3795
        %v3797 = vpop.f32.mrb[0].mxu0
        %v3798 = vadd.f32 0.0, %v3797
        %v3799 = vpop.f32.mrb[0].mxu0
        %v3800 = vadd.f32 0.0, %v3799
        %v3801 = vpop.f32.mrb[0].mxu0
        %v3802 = vadd.f32 0.0, %v3801
        %3803 = vmatprep.mubr.bf16.mxu0 0
        %3804 = vmatmul.mubr.bf16.gmra.mrb[0].mxu0 %v3670
        %v3805 = vpop.f32.mrb[0].mxu0
        %v3806 = vadd.f32 0.0, %v3805
        %v3807 = vpop.f32.mrb[0].mxu0
        %v3808 = vadd.f32 0.0, %v3807
        %v3809 = vpop.f32.mrb[0].mxu0
        %v3810 = vadd.f32 0.0, %v3809
        %v3811 = vpop.f32.mrb[0].mxu0
        %v3812 = vadd.f32 0.0, %v3811
        %3813 = vmatprep.mubr.bf16.mxu0 0
        %3814 = vmatmul.mubr.bf16.gmra.mrb[0].mxu0 %v3673
        %v3815 = vpop.f32.mrb[0].mxu0
        %v3816 = vadd.f32 0.0, %v3815
        %v3817 = vpop.f32.mrb[0].mxu0
        %v3818 = vadd.f32 0.0, %v3817
        %v3819 = vpop.f32.mrb[0].mxu0
        %v3820 = vadd.f32 0.0, %v3819
        %v3821 = vpop.f32.mrb[0].mxu0
        %v3822 = vadd.f32 0.0, %v3821
        %3823 = vmatprep.mubr.bf16.mxu0 0
        %3824 = vmatmul.mubr.bf16.gmra.mrb[0].mxu0 %v3676
        %v3825 = vpop.f32.mrb[0].mxu0
        %v3826 = vadd.f32 0.0, %v3825
        %v3827 = vpop.f32.mrb[0].mxu0
        %v3828 = vadd.f32 0.0, %v3827
        %v3829 = vpop.f32.mrb[0].mxu0
        %v3830 = vadd.f32 0.0, %v3829
        %v3831 = vpop.f32.mrb[0].mxu0
        %v3832 = vadd.f32 0.0, %v3831
        %3833 = vmatprep.mubr.bf16.mxu0 0
        %3834 = vmatmul.mubr.bf16.gmra.mrb[0].mxu0 %v3679
        %v3835 = vpop.f32.mrb[0].mxu0
        %v3836 = vadd.f32 0.0, %v3835
        %v3837 = vpop.f32.mrb[0].mxu0
        %v3838 = vadd.f32 0.0, %v3837
        %v3839 = vpop.f32.mrb[0].mxu0
        %v3840 = vadd.f32 0.0, %v3839
        %v3841 = vpop.f32.mrb[0].mxu0
        %v3842 = vadd.f32 0.0, %v3841
        %3843 = vmatprep.mubr.bf16.mxu0 0
        %3844 = vmatmul.mubr.bf16.gmra.mrb[0].mxu0 %v3682
        %v3845 = vpop.f32.mrb[0].mxu0
        %v3846 = vadd.f32 0.0, %v3845
        %v3847 = vpop.f32.mrb[0].mxu0
        %v3848 = vadd.f32 0.0, %v3847
        %v3849 = vpop.f32.mrb[0].mxu0
        %v3850 = vadd.f32 0.0, %v3849
        %v3851 = vpop.f32.mrb[0].mxu0
        %v3852 = vadd.f32 0.0, %v3851
        %3853 = vmatprep.mubr.bf16.mxu0 0
        %3854 = vmatmul.mubr.bf16.gmra.mrb[0].mxu0 %v3685
        %v3855 = vpop.f32.mrb[0].mxu0
        %v3856 = vadd.f32 0.0, %v3855
        %v3857 = vpop.f32.mrb[0].mxu0
        %v3858 = vadd.f32 0.0, %v3857
        %v3859 = vpop.f32.mrb[0].mxu0
        %v3860 = vadd.f32 0.0, %v3859
        %v3861 = vpop.f32.mrb[0].mxu0
        %v3862 = vadd.f32 0.0, %v3861
        %3863 = vmatprep.mubr.bf16.mxu0 0
        %3864 = vmatmul.mubr.bf16.gmra.mrb[0].mxu0 %v3688
        %v3865 = vpop.f32.mrb[0].mxu0
        %v3866 = vadd.f32 0.0, %v3865
        %v3867 = vpop.f32.mrb[0].mxu0
        %v3868 = vadd.f32 0.0, %v3867
        %v3869 = vpop.f32.mrb[0].mxu0
        %v3870 = vadd.f32 0.0, %v3869
        %v3871 = vpop.f32.mrb[0].mxu0
        %v3872 = vadd.f32 0.0, %v3871
        %3873 = vmatprep.mubr.bf16.mxu0 0
        %3874 = vmatmul.mubr.bf16.gmra.mrb[0].mxu0 %v3691
        %v3875 = vpop.f32.mrb[0].mxu0
        %v3876 = vadd.f32 0.0, %v3875
        %v3877 = vpop.f32.mrb[0].mxu0
        %v3878 = vadd.f32 0.0, %v3877
        %v3879 = vpop.f32.mrb[0].mxu0
        %v3880 = vadd.f32 0.0, %v3879
        %v3881 = vpop.f32.mrb[0].mxu0
        %v3882 = vadd.f32 0.0, %v3881
        %3883 = vmatprep.mubr.bf16.mxu0 0
        %3884 = vmatmul.mubr.bf16.gmra.mrb[0].mxu0 %v3694
        %v3885 = vpop.f32.mrb[0].mxu0
        %v3886 = vadd.f32 0.0, %v3885
        %v3887 = vpop.f32.mrb[0].mxu0
        %v3888 = vadd.f32 0.0, %v3887
        %v3889 = vpop.f32.mrb[0].mxu0
        %v3890 = vadd.f32 0.0, %v3889
        %v3891 = vpop.f32.mrb[0].mxu0
        %v3892 = vadd.f32 0.0, %v3891
        %3893 = vmatprep.mubr.bf16.mxu0 0
        %3894 = vmatmul.mubr.bf16.gmra.mrb[0].mxu0 %v3697
        %v3895 = vpop.f32.mrb[0].mxu0
        %v3896 = vadd.f32 0.0, %v3895
        %v3897 = vpop.f32.mrb[0].mxu0
        %v3898 = vadd.f32 0.0, %v3897
        %v3899 = vpop.f32.mrb[0].mxu0
        %v3900 = vadd.f32 0.0, %v3899
        %v3901 = vpop.f32.mrb[0].mxu0
        %v3902 = vadd.f32 0.0, %v3901
        %3903 = vmatprep.mubr.bf16.mxu0 0
        %3904 = vmatmul.mubr.bf16.gmra.mrb[0].mxu0 %v3700
        %v3905 = vpop.f32.mrb[0].mxu0
        %v3906 = vadd.f32 0.0, %v3905
        %v3907 = vpop.f32.mrb[0].mxu0
        %v3908 = vadd.f32 0.0, %v3907
        %v3909 = vpop.f32.mrb[0].mxu0
        %v3910 = vadd.f32 0.0, %v3909
        %v3911 = vpop.f32.mrb[0].mxu0
        %v3912 = vadd.f32 0.0, %v3911
        %3913 = vmatprep.mubr.bf16.mxu0 0
        %3914 = vmatmul.mubr.bf16.gmra.mrb[0].mxu0 %v3703
        %v3915 = vpop.f32.mrb[0].mxu0
        %v3916 = vadd.f32 0.0, %v3915
        %v3917 = vpop.f32.mrb[0].mxu0
        %v3918 = vadd.f32 0.0, %v3917
        %v3919 = vpop.f32.mrb[0].mxu0
        %v3920 = vadd.f32 0.0, %v3919
        %v3921 = vpop.f32.mrb[0].mxu0
        %v3922 = vadd.f32 0.0, %v3921
        %3923 = vmatprep.mubr.bf16.mxu0 0
        %3924 = vmatmul.mubr.bf16.gmra.mrb[0].mxu0 %v3706
        %v3925 = vpop.f32.mrb[0].mxu0
        %v3926 = vadd.f32 0.0, %v3925
        %v3927 = vpop.f32.mrb[0].mxu0
        %v3928 = vadd.f32 0.0, %v3927
        %v3929 = vpop.f32.mrb[0].mxu0
        %v3930 = vadd.f32 0.0, %v3929
        %v3931 = vpop.f32.mrb[0].mxu0
        %v3932 = vadd.f32 0.0, %v3931
        %3933 = vmatprep.mubr.bf16.mxu0 0
        %3934 = vmatmul.mubr.bf16.gmra.mrb[0].mxu0 %v3709
        %v3935 = vpop.f32.mrb[0].mxu0
        %v3936 = vadd.f32 0.0, %v3935
        %v3937 = vpop.f32.mrb[0].mxu0
        %v3938 = vadd.f32 0.0, %v3937
        %v3939 = vpop.f32.mrb[0].mxu0
        %v3940 = vadd.f32 0.0, %v3939
        %v3941 = vpop.f32.mrb[0].mxu0
        %v3942 = vadd.f32 0.0, %v3941
        %3943 = vmatprep.mubr.bf16.mxu0 0
        %3944 = vmatmul.mubr.bf16.gmra.mrb[0].mxu0 %v3712
        %v3945 = vpop.f32.mrb[0].mxu0
        %v3946 = vadd.f32 0.0, %v3945
        %v3947 = vpop.f32.mrb[0].mxu0
        %v3948 = vadd.f32 0.0, %v3947
        %v3949 = vpop.f32.mrb[0].mxu0
        %v3950 = vadd.f32 0.0, %v3949
        %v3951 = vpop.f32.mrb[0].mxu0
        %v3952 = vadd.f32 0.0, %v3951
        %3953 = vmatprep.mubr.bf16.mxu0 0
        %3954 = vmatmul.mubr.bf16.gmra.mrb[0].mxu0 %v3715
        %v3955 = vpop.f32.mrb[0].mxu0
        %v3956 = vadd.f32 0.0, %v3955
        %v3957 = vpop.f32.mrb[0].mxu0
        %v3958 = vadd.f32 0.0, %v3957
        %v3959 = vpop.f32.mrb[0].mxu0
        %v3960 = vadd.f32 0.0, %v3959
        %v3961 = vpop.f32.mrb[0].mxu0
        %v3962 = vadd.f32 0.0, %v3961
        %3963 = vmatprep.mubr.bf16.mxu0 0
        %3964 = vmatmul.mubr.bf16.gmra.mrb[0].mxu0 %v3718
        %v3965 = vpop.f32.mrb[0].mxu0
        %v3966 = vadd.f32 0.0, %v3965
        %v3967 = vpop.f32.mrb[0].mxu0
        %v3968 = vadd.f32 0.0, %v3967
        %v3969 = vpop.f32.mrb[0].mxu0
        %v3970 = vadd.f32 0.0, %v3969
        %v3971 = vpop.f32.mrb[0].mxu0
        %v3972 = vadd.f32 0.0, %v3971
        %3973 = vmatprep.mubr.bf16.mxu0 0
        %3974 = vmatmul.mubr.bf16.gmra.mrb[0].mxu0 %v3721
        %v3975 = vpop.f32.mrb[0].mxu0
        %v3976 = vadd.f32 0.0, %v3975
        %v3977 = vpop.f32.mrb[0].mxu0
        %v3978 = vadd.f32 0.0, %v3977
        %v3979 = vpop.f32.mrb[0].mxu0
        %v3980 = vadd.f32 0.0, %v3979
        %v3981 = vpop.f32.mrb[0].mxu0
        %v3982 = vadd.f32 0.0, %v3981
        %3983 = vmatprep.mubr.bf16.mxu0 0
        %3984 = vmatmul.mubr.bf16.gmra.mrb[0].mxu0 %v3724
        %v3985 = vpop.f32.mrb[0].mxu0
        %v3986 = vadd.f32 0.0, %v3985
        %v3987 = vpop.f32.mrb[0].mxu0
        %v3988 = vadd.f32 0.0, %v3987
        %v3989 = vpop.f32.mrb[0].mxu0
        %v3990 = vadd.f32 0.0, %v3989
        %v3991 = vpop.f32.mrb[0].mxu0
        %v3992 = vadd.f32 0.0, %v3991
        %3993 = vmatprep.mubr.bf16.mxu0 0
        %3994 = vmatmul.mubr.bf16.gmra.mrb[0].mxu0 %v3727
        %v3995 = vpop.f32.mrb[0].mxu0
        %v3996 = vadd.f32 0.0, %v3995
        %v3997 = vpop.f32.mrb[0].mxu0
        %v3998 = vadd.f32 0.0, %v3997
        %v3999 = vpop.f32.mrb[0].mxu0
        %v4000 = vadd.f32 0.0, %v3999
        %v4001 = vpop.f32.mrb[0].mxu0
        %v4002 = vadd.f32 0.0, %v4001
        %4003 = vmatprep.mubr.bf16.mxu0 0
        %4004 = vmatmul.mubr.bf16.gmra.mrb[0].mxu0 %v3730
        %v4005 = vpop.f32.mrb[0].mxu0
        %v4006 = vadd.f32 0.0, %v4005
        %v4007 = vpop.f32.mrb[0].mxu0
        %v4008 = vadd.f32 0.0, %v4007
        %v4009 = vpop.f32.mrb[0].mxu0
        %v4010 = vadd.f32 0.0, %v4009
        %v4011 = vpop.f32.mrb[0].mxu0
        %v4012 = vadd.f32 0.0, %v4011
        %4013 = vdwg.mxu0
        %4014 = vmatprep.subr.bf16.mxu0 0
        %4015 = vmatpush1.bf16.msra.mxu0 %v3739
        %4016 = vmatprep.subr.bf16.mxu0 0
        %4017 = vmatpush1.bf16.msra.mxu0 0
        %4018 = vmatprep.subr.bf16.mxu0 0
        %4019 = vmatpush1.bf16.msra.mxu0 0
        %4020 = vmatprep.subr.bf16.mxu0 0
        %4021 = vmatpush1.bf16.msra.mxu0 0
        %4022 = vmatprep.subr.bf16.mxu0 0
        %4023 = vmatpush1.bf16.msra.mxu0 0
        %4024 = vmatprep.subr.bf16.mxu0 0
        %4025 = vmatpush1.bf16.msra.mxu0 0
        %4026 = vmatprep.subr.bf16.mxu0 0
        %4027 = vmatpush1.bf16.msra.mxu0 0
        %4028 = vmatprep.subr.bf16.mxu0 0
        %4029 = vmatpush1.bf16.msra.mxu0 0
        %4030 = vmatprep.subr.bf16.mxu0 0
        %4031 = vmatpush1.bf16.msra.mxu0 0
        %4032 = vmatprep.subr.bf16.mxu0 0
        %4033 = vmatpush1.bf16.msra.mxu0 0
        %4034 = vmatprep.subr.bf16.mxu0 0
        %4035 = vmatpush1.bf16.msra.mxu0 0
        %4036 = vmatprep.subr.bf16.mxu0 0
        %4037 = vmatpush1.bf16.msra.mxu0 0
        %4038 = vmatprep.subr.bf16.mxu0 0
        %4039 = vmatpush1.bf16.msra.mxu0 0
        %4040 = vmatprep.subr.bf16.mxu0 0
        %4041 = vmatpush1.bf16.msra.mxu0 0
        %4042 = vmatprep.subr.bf16.mxu0 0
        %4043 = vmatpush1.bf16.msra.mxu0 0
        %4044 = vmatprep.subr.bf16.mxu0 0
        %4045 = vmatpush1.bf16.msra.mxu0 0
        %4046 = vmatprep.mubr.bf16.mxu0 0
        %4047 = vmatmul.mubr.bf16.gmra.mrb[0].mxu0 %v3661
        %v4048 = vpop.f32.mrb[0].mxu0
        %v4049 = vadd.f32 0.0, %v4048
        %v4050 = vpop.f32.mrb[0].mxu0
        %v4051 = vpop.f32.mrb[0].mxu0
        %v4052 = vadd.f32 0.0, %v4051
        %v4053 = vpop.f32.mrb[0].mxu0
        %4054 = vmatprep.mubr.bf16.mxu0 0
        %4055 = vmatmul.mubr.bf16.gmra.mrb[0].mxu0 %v3664
        %v4056 = vpop.f32.mrb[0].mxu0
        %v4057 = vadd.f32 0.0, %v4056
        %v4058 = vpop.f32.mrb[0].mxu0
        %v4059 = vpop.f32.mrb[0].mxu0
        %v4060 = vadd.f32 0.0, %v4059
        %v4061 = vpop.f32.mrb[0].mxu0
        %4062 = vmatprep.mubr.bf16.mxu0 0
        %4063 = vmatmul.mubr.bf16.gmra.mrb[0].mxu0 %v3667
        %v4064 = vpop.f32.mrb[0].mxu0
        %v4065 = vadd.f32 0.0, %v4064
        %v4066 = vpop.f32.mrb[0].mxu0
        %v4067 = vpop.f32.mrb[0].mxu0
        %v4068 = vadd.f32 0.0, %v4067
        %v4069 = vpop.f32.mrb[0].mxu0
        %4070 = vmatprep.mubr.bf16.mxu0 0
        %4071 = vmatmul.mubr.bf16.gmra.mrb[0].mxu0 %v3670
        %v4072 = vpop.f32.mrb[0].mxu0
        %v4073 = vadd.f32 0.0, %v4072
        %v4074 = vpop.f32.mrb[0].mxu0
        %v4075 = vpop.f32.mrb[0].mxu0
        %v4076 = vadd.f32 0.0, %v4075
        %v4077 = vpop.f32.mrb[0].mxu0
        %4078 = vmatprep.mubr.bf16.mxu0 0
        %4079 = vmatmul.mubr.bf16.gmra.mrb[0].mxu0 %v3673
        %v4080 = vpop.f32.mrb[0].mxu0
        %v4081 = vadd.f32 0.0, %v4080
        %v4082 = vpop.f32.mrb[0].mxu0
        %v4083 = vpop.f32.mrb[0].mxu0
        %v4084 = vadd.f32 0.0, %v4083
        %v4085 = vpop.f32.mrb[0].mxu0
        %4086 = vmatprep.mubr.bf16.mxu0 0
        %4087 = vmatmul.mubr.bf16.gmra.mrb[0].mxu0 %v3676
        %v4088 = vpop.f32.mrb[0].mxu0
        %v4089 = vadd.f32 0.0, %v4088
        %v4090 = vpop.f32.mrb[0].mxu0
        %v4091 = vpop.f32.mrb[0].mxu0
        %v4092 = vadd.f32 0.0, %v4091
        %v4093 = vpop.f32.mrb[0].mxu0
        %4094 = vmatprep.mubr.bf16.mxu0 0
        %4095 = vmatmul.mubr.bf16.gmra.mrb[0].mxu0 %v3679
        %v4096 = vpop.f32.mrb[0].mxu0
        %v4097 = vadd.f32 0.0, %v4096
        %v4098 = vpop.f32.mrb[0].mxu0
        %v4099 = vpop.f32.mrb[0].mxu0
        %v4100 = vadd.f32 0.0, %v4099
        %v4101 = vpop.f32.mrb[0].mxu0
        %4102 = vmatprep.mubr.bf16.mxu0 0
        %4103 = vmatmul.mubr.bf16.gmra.mrb[0].mxu0 %v3682
        %v4104 = vpop.f32.mrb[0].mxu0
        %v4105 = vadd.f32 0.0, %v4104
        %v4106 = vpop.f32.mrb[0].mxu0
        %v4107 = vpop.f32.mrb[0].mxu0
        %v4108 = vadd.f32 0.0, %v4107
        %v4109 = vpop.f32.mrb[0].mxu0
        %4110 = vmatprep.mubr.bf16.mxu0 0
        %4111 = vmatmul.mubr.bf16.gmra.mrb[0].mxu0 %v3685
        %v4112 = vpop.f32.mrb[0].mxu0
        %v4113 = vadd.f32 0.0, %v4112
        %v4114 = vpop.f32.mrb[0].mxu0
        %v4115 = vpop.f32.mrb[0].mxu0
        %v4116 = vadd.f32 0.0, %v4115
        %v4117 = vpop.f32.mrb[0].mxu0
        %4118 = vmatprep.mubr.bf16.mxu0 0
        %4119 = vmatmul.mubr.bf16.gmra.mrb[0].mxu0 %v3688
        %v4120 = vpop.f32.mrb[0].mxu0
        %v4121 = vadd.f32 0.0, %v4120
        %v4122 = vpop.f32.mrb[0].mxu0
        %v4123 = vpop.f32.mrb[0].mxu0
        %v4124 = vadd.f32 0.0, %v4123
        %v4125 = vpop.f32.mrb[0].mxu0
        %4126 = vmatprep.mubr.bf16.mxu0 0
        %4127 = vmatmul.mubr.bf16.gmra.mrb[0].mxu0 %v3691
        %v4128 = vpop.f32.mrb[0].mxu0
        %v4129 = vadd.f32 0.0, %v4128
        %v4130 = vpop.f32.mrb[0].mxu0
        %v4131 = vpop.f32.mrb[0].mxu0
        %v4132 = vadd.f32 0.0, %v4131
        %v4133 = vpop.f32.mrb[0].mxu0
        %4134 = vmatprep.mubr.bf16.mxu0 0
        %4135 = vmatmul.mubr.bf16.gmra.mrb[0].mxu0 %v3694
        %v4136 = vpop.f32.mrb[0].mxu0
        %v4137 = vadd.f32 0.0, %v4136
        %v4138 = vpop.f32.mrb[0].mxu0
        %v4139 = vpop.f32.mrb[0].mxu0
        %v4140 = vadd.f32 0.0, %v4139
        %v4141 = vpop.f32.mrb[0].mxu0
        %4142 = vmatprep.mubr.bf16.mxu0 0
        %4143 = vmatmul.mubr.bf16.gmra.mrb[0].mxu0 %v3697
        %v4144 = vpop.f32.mrb[0].mxu0
        %v4145 = vadd.f32 0.0, %v4144
        %v4146 = vpop.f32.mrb[0].mxu0
        %v4147 = vpop.f32.mrb[0].mxu0
        %v4148 = vadd.f32 0.0, %v4147
        %v4149 = vpop.f32.mrb[0].mxu0
        %4150 = vmatprep.mubr.bf16.mxu0 0
        %4151 = vmatmul.mubr.bf16.gmra.mrb[0].mxu0 %v3700
        %v4152 = vpop.f32.mrb[0].mxu0
        %v4153 = vadd.f32 0.0, %v4152
        %v4154 = vpop.f32.mrb[0].mxu0
        %v4155 = vpop.f32.mrb[0].mxu0
        %v4156 = vadd.f32 0.0, %v4155
        %v4157 = vpop.f32.mrb[0].mxu0
        %4158 = vmatprep.mubr.bf16.mxu0 0
        %4159 = vmatmul.mubr.bf16.gmra.mrb[0].mxu0 %v3703
        %v4160 = vpop.f32.mrb[0].mxu0
        %v4161 = vadd.f32 0.0, %v4160
        %v4162 = vpop.f32.mrb[0].mxu0
        %v4163 = vpop.f32.mrb[0].mxu0
        %v4164 = vadd.f32 0.0, %v4163
        %v4165 = vpop.f32.mrb[0].mxu0
        %4166 = vmatprep.mubr.bf16.mxu0 0
        %4167 = vmatmul.mubr.bf16.gmra.mrb[0].mxu0 %v3706
        %v4168 = vpop.f32.mrb[0].mxu0
        %v4169 = vadd.f32 0.0, %v4168
        %v4170 = vpop.f32.mrb[0].mxu0
        %v4171 = vpop.f32.mrb[0].mxu0
        %v4172 = vadd.f32 0.0, %v4171
        %v4173 = vpop.f32.mrb[0].mxu0
        %4174 = vmatprep.mubr.bf16.mxu0 0
        %4175 = vmatmul.mubr.bf16.gmra.mrb[0].mxu0 %v3709
        %v4176 = vpop.f32.mrb[0].mxu0
        %v4177 = vadd.f32 0.0, %v4176
        %v4178 = vpop.f32.mrb[0].mxu0
        %v4179 = vpop.f32.mrb[0].mxu0
        %v4180 = vadd.f32 0.0, %v4179
        %v4181 = vpop.f32.mrb[0].mxu0
        %4182 = vmatprep.mubr.bf16.mxu0 0
        %4183 = vmatmul.mubr.bf16.gmra.mrb[0].mxu0 %v3712
        %v4184 = vpop.f32.mrb[0].mxu0
        %v4185 = vadd.f32 0.0, %v4184
        %v4186 = vpop.f32.mrb[0].mxu0
        %v4187 = vpop.f32.mrb[0].mxu0
        %v4188 = vadd.f32 0.0, %v4187
        %v4189 = vpop.f32.mrb[0].mxu0
        %4190 = vmatprep.mubr.bf16.mxu0 0
        %4191 = vmatmul.mubr.bf16.gmra.mrb[0].mxu0 %v3715
        %v4192 = vpop.f32.mrb[0].mxu0
        %v4193 = vadd.f32 0.0, %v4192
        %v4194 = vpop.f32.mrb[0].mxu0
        %v4195 = vpop.f32.mrb[0].mxu0
        %v4196 = vadd.f32 0.0, %v4195
        %v4197 = vpop.f32.mrb[0].mxu0
        %4198 = vmatprep.mubr.bf16.mxu0 0
        %4199 = vmatmul.mubr.bf16.gmra.mrb[0].mxu0 %v3718
        %v4200 = vpop.f32.mrb[0].mxu0
        %v4201 = vadd.f32 0.0, %v4200
        %v4202 = vpop.f32.mrb[0].mxu0
        %v4203 = vpop.f32.mrb[0].mxu0
        %v4204 = vadd.f32 0.0, %v4203
        %v4205 = vpop.f32.mrb[0].mxu0
        %4206 = vmatprep.mubr.bf16.mxu0 0
        %4207 = vmatmul.mubr.bf16.gmra.mrb[0].mxu0 %v3721
        %v4208 = vpop.f32.mrb[0].mxu0
        %v4209 = vadd.f32 0.0, %v4208
        %v4210 = vpop.f32.mrb[0].mxu0
        %v4211 = vpop.f32.mrb[0].mxu0
        %v4212 = vadd.f32 0.0, %v4211
        %v4213 = vpop.f32.mrb[0].mxu0
        %4214 = vmatprep.mubr.bf16.mxu0 0
        %4215 = vmatmul.mubr.bf16.gmra.mrb[0].mxu0 %v3724
        %v4216 = vpop.f32.mrb[0].mxu0
        %v4217 = vadd.f32 0.0, %v4216
        %v4218 = vpop.f32.mrb[0].mxu0
        %v4219 = vpop.f32.mrb[0].mxu0
        %v4220 = vadd.f32 0.0, %v4219
        %v4221 = vpop.f32.mrb[0].mxu0
        %4222 = vmatprep.mubr.bf16.mxu0 0
        %4223 = vmatmul.mubr.bf16.gmra.mrb[0].mxu0 %v3727
        %v4224 = vpop.f32.mrb[0].mxu0
        %v4225 = vadd.f32 0.0, %v4224
        %v4226 = vpop.f32.mrb[0].mxu0
        %v4227 = vpop.f32.mrb[0].mxu0
        %v4228 = vadd.f32 0.0, %v4227
        %v4229 = vpop.f32.mrb[0].mxu0
        %4230 = vmatprep.mubr.bf16.mxu0 0
        %4231 = vmatmul.mubr.bf16.gmra.mrb[0].mxu0 %v3730
        %v4232 = vpop.f32.mrb[0].mxu0
        %v4233 = vadd.f32 0.0, %v4232
        %v4234 = vpop.f32.mrb[0].mxu0
        %v4235 = vpop.f32.mrb[0].mxu0
        %v4236 = vadd.f32 0.0, %v4235
        %v4237 = vpop.f32.mrb[0].mxu0
        %4238 = vdwg.mxu0
        %v4239 = vrot.slane %v3776, 2
        %v4240 = vrot.slane %v3780, 2
        %v4241 = vrot.slane %v3786, 2
        %v4242 = vrot.slane %v3790, 2
        %v4243 = vrot.slane %v3796, 2
        %v4244 = vrot.slane %v3800, 2
        %v4245 = vrot.slane %v3806, 2
        %v4246 = vrot.slane %v3810, 2
        %v4247 = vrot.slane %v3816, 2
        %v4248 = vrot.slane %v3820, 2
        %v4249 = vrot.slane %v3826, 2
        %v4250 = vrot.slane %v3830, 2
        %v4251 = vrot.slane %v3836, 2
        %v4252 = vrot.slane %v3840, 2
        %v4253 = vrot.slane %v3846, 2
        %v4254 = vrot.slane %v3850, 2
        %v4255 = vrot.slane %v3856, 2
        %v4256 = vrot.slane %v3860, 2
        %v4257 = vrot.slane %v3866, 2
        %v4258 = vrot.slane %v3870, 2
        %v4259 = vrot.slane %v3876, 2
        %v4260 = vrot.slane %v3880, 2
        %v4261 = vrot.slane %v3886, 2
        %v4262 = vrot.slane %v3890, 2
        %v4263 = vrot.slane %v3896, 2
        %v4264 = vrot.slane %v3900, 2
        %v4265 = vrot.slane %v3906, 2
        %v4266 = vrot.slane %v3910, 2
        %v4267 = vrot.slane %v3916, 2
        %v4268 = vrot.slane %v3920, 2
        %v4269 = vrot.slane %v3926, 2
        %v4270 = vrot.slane %v3930, 2
        %v4271 = vrot.slane %v3936, 2
        %v4272 = vrot.slane %v3940, 2
        %v4273 = vrot.slane %v3946, 2
        %v4274 = vrot.slane %v3950, 2
        %v4275 = vrot.slane %v3956, 2
        %v4276 = vrot.slane %v3960, 2
        %v4277 = vrot.slane %v3966, 2
        %v4278 = vrot.slane %v3970, 2
        %v4279 = vrot.slane %v3976, 2
        %v4280 = vrot.slane %v3980, 2
        %v4281 = vrot.slane %v3986, 2
        %v4282 = vrot.slane %v3990, 2
        %v4283 = vrot.slane %v3996, 2
        %v4284 = vrot.slane %v4000, 2
        %v4285 = vrot.slane %v4006, 2
        %v4286 = vrot.slane %v4010, 2
        %vm4287 = vcmp.lt.s32.totalorder %v1009, 6
        %v4288 = vsel %vm4287, %v4285, %v4286
        %v4289 = vsel %vm4287, %v4284, %v4285
        %v4290 = vsel %vm4287, %v4282, %v4283
        %v4291 = vsel %vm4287, %v4281, %v4282
        %v4292 = vsel %vm4287, %v4279, %v4280
        %v4293 = vsel %vm4287, %v4278, %v4279
        %v4294 = vsel %vm4287, %v4276, %v4277
        %v4295 = vsel %vm4287, %v4275, %v4276
        %v4296 = vsel %vm4287, %v4273, %v4274
        %v4297 = vsel %vm4287, %v4272, %v4273
        %v4298 = vsel %vm4287, %v4270, %v4271
        %v4299 = vsel %vm4287, %v4269, %v4270
        %v4300 = vsel %vm4287, %v4267, %v4268
        %v4301 = vsel %vm4287, %v4266, %v4267
        %v4302 = vsel %vm4287, %v4264, %v4265
        %v4303 = vsel %vm4287, %v4263, %v4264
        %v4304 = vsel %vm4287, %v4261, %v4262
        %v4305 = vsel %vm4287, %v4260, %v4261
        %v4306 = vsel %vm4287, %v4258, %v4259
        %v4307 = vsel %vm4287, %v4257, %v4258
        %v4308 = vsel %vm4287, %v4255, %v4256
        %v4309 = vsel %vm4287, %v4254, %v4255
        %v4310 = vsel %vm4287, %v4252, %v4253
        %v4311 = vsel %vm4287, %v4251, %v4252
        %v4312 = vsel %vm4287, %v4249, %v4250
        %v4313 = vsel %vm4287, %v4248, %v4249
        %v4314 = vsel %vm4287, %v4246, %v4247
        %v4315 = vsel %vm4287, %v4245, %v4246
        %v4316 = vsel %vm4287, %v4243, %v4244
        %v4317 = vsel %vm4287, %v4242, %v4243
        %v4318 = vsel %vm4287, %v4240, %v4241
        %v4319 = vsel %vm4287, %v4239, %v4240
        %v4320 = vrot.slane %v3778, 4
        %v4321 = vrot.slane %v3782, 4
        %v4322 = vrot.slane %v3788, 4
        %v4323 = vrot.slane %v3792, 4
        %v4324 = vrot.slane %v3798, 4
        %v4325 = vrot.slane %v3802, 4
        %v4326 = vrot.slane %v3808, 4
        %v4327 = vrot.slane %v3812, 4
        %v4328 = vrot.slane %v3818, 4
        %v4329 = vrot.slane %v3822, 4
        %v4330 = vrot.slane %v3828, 4
        %v4331 = vrot.slane %v3832, 4
        %v4332 = vrot.slane %v3838, 4
        %v4333 = vrot.slane %v3842, 4
        %v4334 = vrot.slane %v3848, 4
        %v4335 = vrot.slane %v3852, 4
        %v4336 = vrot.slane %v3858, 4
        %v4337 = vrot.slane %v3862, 4
        %v4338 = vrot.slane %v3868, 4
        %v4339 = vrot.slane %v3872, 4
        %v4340 = vrot.slane %v3878, 4
        %v4341 = vrot.slane %v3882, 4
        %v4342 = vrot.slane %v3888, 4
        %v4343 = vrot.slane %v3892, 4
        %v4344 = vrot.slane %v3898, 4
        %v4345 = vrot.slane %v3902, 4
        %v4346 = vrot.slane %v3908, 4
        %v4347 = vrot.slane %v3912, 4
        %v4348 = vrot.slane %v3918, 4
        %v4349 = vrot.slane %v3922, 4
        %v4350 = vrot.slane %v3928, 4
        %v4351 = vrot.slane %v3932, 4
        %v4352 = vrot.slane %v3938, 4
        %v4353 = vrot.slane %v3942, 4
        %v4354 = vrot.slane %v3948, 4
        %v4355 = vrot.slane %v3952, 4
        %v4356 = vrot.slane %v3958, 4
        %v4357 = vrot.slane %v3962, 4
        %v4358 = vrot.slane %v3968, 4
        %v4359 = vrot.slane %v3972, 4
        %v4360 = vrot.slane %v3978, 4
        %v4361 = vrot.slane %v3982, 4
        %v4362 = vrot.slane %v3988, 4
        %v4363 = vrot.slane %v3992, 4
        %v4364 = vrot.slane %v3998, 4
        %v4365 = vrot.slane %v4002, 4
        %v4366 = vrot.slane %v4008, 4
        %v4367 = vrot.slane %v4012, 4
        %v4368 = vsel %vm1091, %v4366, %v4367
        %v4369 = vsel %vm1091, %v4365, %v4366
        %v4370 = vsel %vm1091, %v4363, %v4364
        %v4371 = vsel %vm1091, %v4362, %v4363
        %v4372 = vsel %vm1091, %v4360, %v4361
        %v4373 = vsel %vm1091, %v4359, %v4360
        %v4374 = vsel %vm1091, %v4357, %v4358
        %v4375 = vsel %vm1091, %v4356, %v4357
        %v4376 = vsel %vm1091, %v4354, %v4355
        %v4377 = vsel %vm1091, %v4353, %v4354
        %v4378 = vsel %vm1091, %v4351, %v4352
        %v4379 = vsel %vm1091, %v4350, %v4351
        %v4380 = vsel %vm1091, %v4348, %v4349
        %v4381 = vsel %vm1091, %v4347, %v4348
        %v4382 = vsel %vm1091, %v4345, %v4346
        %v4383 = vsel %vm1091, %v4344, %v4345
        %v4384 = vsel %vm1091, %v4342, %v4343
        %v4385 = vsel %vm1091, %v4341, %v4342
        %v4386 = vsel %vm1091, %v4339, %v4340
        %v4387 = vsel %vm1091, %v4338, %v4339
        %v4388 = vsel %vm1091, %v4336, %v4337
        %v4389 = vsel %vm1091, %v4335, %v4336
        %v4390 = vsel %vm1091, %v4333, %v4334
        %v4391 = vsel %vm1091, %v4332, %v4333
        %v4392 = vsel %vm1091, %v4330, %v4331
        %v4393 = vsel %vm1091, %v4329, %v4330
        %v4394 = vsel %vm1091, %v4327, %v4328
        %v4395 = vsel %vm1091, %v4326, %v4327
        %v4396 = vsel %vm1091, %v4324, %v4325
        %v4397 = vsel %vm1091, %v4323, %v4324
        %v4398 = vsel %vm1091, %v4321, %v4322
        %v4399 = vsel %vm1091, %v4320, %v4321
        %v4400 = vadd.f32 %v4319, %v4399
        %v4401 = vadd.f32 %v4318, %v4398
        %v4402 = vadd.f32 %v4317, %v4397
        %v4403 = vadd.f32 %v4316, %v4396
        %v4404 = vadd.f32 %v4315, %v4395
        %v4405 = vadd.f32 %v4314, %v4394
        %v4406 = vadd.f32 %v4313, %v4393
        %v4407 = vadd.f32 %v4312, %v4392
        %v4408 = vadd.f32 %v4311, %v4391
        %v4409 = vadd.f32 %v4310, %v4390
        %v4410 = vadd.f32 %v4309, %v4389
        %v4411 = vadd.f32 %v4308, %v4388
        %v4412 = vadd.f32 %v4307, %v4387
        %v4413 = vadd.f32 %v4306, %v4386
        %v4414 = vadd.f32 %v4305, %v4385
        %v4415 = vadd.f32 %v4304, %v4384
        %v4416 = vadd.f32 %v4303, %v4383
        %v4417 = vadd.f32 %v4302, %v4382
        %v4418 = vadd.f32 %v4301, %v4381
        %v4419 = vadd.f32 %v4300, %v4380
        %v4420 = vadd.f32 %v4299, %v4379
        %v4421 = vadd.f32 %v4298, %v4378
        %v4422 = vadd.f32 %v4297, %v4377
        %v4423 = vadd.f32 %v4296, %v4376
        %v4424 = vadd.f32 %v4295, %v4375
        %v4425 = vadd.f32 %v4294, %v4374
        %v4426 = vadd.f32 %v4293, %v4373
        %v4427 = vadd.f32 %v4292, %v4372
        %v4428 = vadd.f32 %v4291, %v4371
        %v4429 = vadd.f32 %v4290, %v4370
        %v4430 = vadd.f32 %v4289, %v4369
        %v4431 = vadd.f32 %v4288, %v4368
        %v4432 = vrot.slane %v4049, 6
        %v4433 = vrot.slane %v4052, 6
        %v4434 = vrot.slane %v4057, 6
        %v4435 = vrot.slane %v4060, 6
        %v4436 = vrot.slane %v4065, 6
        %v4437 = vrot.slane %v4068, 6
        %v4438 = vrot.slane %v4073, 6
        %v4439 = vrot.slane %v4076, 6
        %v4440 = vrot.slane %v4081, 6
        %v4441 = vrot.slane %v4084, 6
        %v4442 = vrot.slane %v4089, 6
        %v4443 = vrot.slane %v4092, 6
        %v4444 = vrot.slane %v4097, 6
        %v4445 = vrot.slane %v4100, 6
        %v4446 = vrot.slane %v4105, 6
        %v4447 = vrot.slane %v4108, 6
        %v4448 = vrot.slane %v4113, 6
        %v4449 = vrot.slane %v4116, 6
        %v4450 = vrot.slane %v4121, 6
        %v4451 = vrot.slane %v4124, 6
        %v4452 = vrot.slane %v4129, 6
        %v4453 = vrot.slane %v4132, 6
        %v4454 = vrot.slane %v4137, 6
        %v4455 = vrot.slane %v4140, 6
        %v4456 = vrot.slane %v4145, 6
        %v4457 = vrot.slane %v4148, 6
        %v4458 = vrot.slane %v4153, 6
        %v4459 = vrot.slane %v4156, 6
        %v4460 = vrot.slane %v4161, 6
        %v4461 = vrot.slane %v4164, 6
        %v4462 = vrot.slane %v4169, 6
        %v4463 = vrot.slane %v4172, 6
        %v4464 = vrot.slane %v4177, 6
        %v4465 = vrot.slane %v4180, 6
        %v4466 = vrot.slane %v4185, 6
        %v4467 = vrot.slane %v4188, 6
        %v4468 = vrot.slane %v4193, 6
        %v4469 = vrot.slane %v4196, 6
        %v4470 = vrot.slane %v4201, 6
        %v4471 = vrot.slane %v4204, 6
        %v4472 = vrot.slane %v4209, 6
        %v4473 = vrot.slane %v4212, 6
        %v4474 = vrot.slane %v4217, 6
        %v4475 = vrot.slane %v4220, 6
        %v4476 = vrot.slane %v4225, 6
        %v4477 = vrot.slane %v4228, 6
        %v4478 = vrot.slane %v4233, 6
        %v4479 = vrot.slane %v4236, 6
        %vm4480 = vcmp.lt.s32.totalorder %v1009, 2
        %v4481 = vsel %vm4480, %v4478, %v4479
        %v4482 = vsel %vm4480, %v4477, %v4478
        %v4483 = vsel %vm4480, %v4475, %v4476
        %v4484 = vsel %vm4480, %v4474, %v4475
        %v4485 = vsel %vm4480, %v4472, %v4473
        %v4486 = vsel %vm4480, %v4471, %v4472
        %v4487 = vsel %vm4480, %v4469, %v4470
        %v4488 = vsel %vm4480, %v4468, %v4469
        %v4489 = vsel %vm4480, %v4466, %v4467
        %v4490 = vsel %vm4480, %v4465, %v4466
        %v4491 = vsel %vm4480, %v4463, %v4464
        %v4492 = vsel %vm4480, %v4462, %v4463
        %v4493 = vsel %vm4480, %v4460, %v4461
        %v4494 = vsel %vm4480, %v4459, %v4460
        %v4495 = vsel %vm4480, %v4457, %v4458
        %v4496 = vsel %vm4480, %v4456, %v4457
        %v4497 = vsel %vm4480, %v4454, %v4455
        %v4498 = vsel %vm4480, %v4453, %v4454
        %v4499 = vsel %vm4480, %v4451, %v4452
        %v4500 = vsel %vm4480, %v4450, %v4451
        %v4501 = vsel %vm4480, %v4448, %v4449
        %v4502 = vsel %vm4480, %v4447, %v4448
        %v4503 = vsel %vm4480, %v4445, %v4446
        %v4504 = vsel %vm4480, %v4444, %v4445
        %v4505 = vsel %vm4480, %v4442, %v4443
        %v4506 = vsel %vm4480, %v4441, %v4442
        %v4507 = vsel %vm4480, %v4439, %v4440
        %v4508 = vsel %vm4480, %v4438, %v4439
        %v4509 = vsel %vm4480, %v4436, %v4437
        %v4510 = vsel %vm4480, %v4435, %v4436
        %v4511 = vsel %vm4480, %v4433, %v4434
        %v4512 = vsel %vm4480, %v4432, %v4433
        %v4513 = vadd.f32 %v4400, %v4512
        %v4514 = vadd.f32 %v4401, %v4511
        %v4515 = vadd.f32 %v4402, %v4510
        %v4516 = vadd.f32 %v4403, %v4509
        %v4517 = vadd.f32 %v4404, %v4508
        %v4518 = vadd.f32 %v4405, %v4507
        %v4519 = vadd.f32 %v4406, %v4506
        %v4520 = vadd.f32 %v4407, %v4505
        %v4521 = vadd.f32 %v4408, %v4504
        %v4522 = vadd.f32 %v4409, %v4503
        %v4523 = vadd.f32 %v4410, %v4502
        %v4524 = vadd.f32 %v4411, %v4501
        %v4525 = vadd.f32 %v4412, %v4500
        %v4526 = vadd.f32 %v4413, %v4499
        %v4527 = vadd.f32 %v4414, %v4498
        %v4528 = vadd.f32 %v4415, %v4497
        %v4529 = vadd.f32 %v4416, %v4496
        %v4530 = vadd.f32 %v4417, %v4495
        %v4531 = vadd.f32 %v4418, %v4494
        %v4532 = vadd.f32 %v4419, %v4493
        %v4533 = vadd.f32 %v4420, %v4492
        %v4534 = vadd.f32 %v4421, %v4491
        %v4535 = vadd.f32 %v4422, %v4490
        %v4536 = vadd.f32 %v4423, %v4489
        %v4537 = vadd.f32 %v4424, %v4488
        %v4538 = vadd.f32 %v4425, %v4487
        %v4539 = vadd.f32 %v4426, %v4486
        %v4540 = vadd.f32 %v4427, %v4485
        %v4541 = vadd.f32 %v4428, %v4484
        %v4542 = vadd.f32 %v4429, %v4483
        %v4543 = vadd.f32 %v4430, %v4482
        %v4544 = vadd.f32 %v4431, %v4481
        %v4545 = vadd.f32 %v3441, %v4513
        %v4546 = vadd.f32 %v3442, %v4514
        %v4547 = vadd.f32 %v3443, %v4515
        %v4548 = vadd.f32 %v3444, %v4516
        %v4549 = vadd.f32 %v3445, %v4517
        %v4550 = vadd.f32 %v3446, %v4518
        %v4551 = vadd.f32 %v3447, %v4519
        %v4552 = vadd.f32 %v3448, %v4520
        %v4553 = vadd.f32 %v3449, %v4521
        %v4554 = vadd.f32 %v3450, %v4522
        %v4555 = vadd.f32 %v3451, %v4523
        %v4556 = vadd.f32 %v3452, %v4524
        %v4557 = vadd.f32 %v3453, %v4525
        %v4558 = vadd.f32 %v3454, %v4526
        %v4559 = vadd.f32 %v3455, %v4527
        %v4560 = vadd.f32 %v3456, %v4528
        %v4561 = vadd.f32 %v3457, %v4529
        %v4562 = vadd.f32 %v3458, %v4530
        %v4563 = vadd.f32 %v3459, %v4531
        %v4564 = vadd.f32 %v3460, %v4532
        %v4565 = vadd.f32 %v3461, %v4533
        %v4566 = vadd.f32 %v3462, %v4534
        %v4567 = vadd.f32 %v3463, %v4535
        %v4568 = vadd.f32 %v3464, %v4536
        %v4569 = vadd.f32 %v3465, %v4537
        %v4570 = vadd.f32 %v3466, %v4538
        %v4571 = vadd.f32 %v3467, %v4539
        %v4572 = vadd.f32 %v3468, %v4540
        %v4573 = vadd.f32 %v3469, %v4541
        %v4574 = vadd.f32 %v3470, %v4542
        %v4575 = vadd.f32 %v3471, %v4543
        %v4576 = vadd.f32 %v3472, %v4544
        %s4577 = scalar_lea.vmem %s1, 24
        %v4578 = vld [vmem:[%s4577] sm:$0x3f]
        %v4580 = vcombine.high %v4578, %v4578
        %v4582 = vunpack.c.l.s4 1983009808
        %v4583 = vunpack.c.0.s8 %v4582
        %v4584 = vlaneseq
        %v4585 = vshrl.u32 %v4584, 7
        %v4586 = vsub.s32 %v4583, %v4585
        %v4587 = vrot.slane %v4578, %v4586
        %v4589 = vunpack.c.l.s4 1983009808
        %v4590 = vunpack.c.0.s8 %v4589
        %v4591 = vlaneseq
        %v4592 = vshrl.u32 %v4591, 7
        %v4593 = vsub.s32 %v4590, %v4592
        %v4594 = vrot.slane %v4580, %v4593
        %v4595 = vcombine.high %v4587, %v4587
        %v4597 = vsel %vm452, %v4587, 0
        %v4600 = vsel %vm452, %v4595, 0
        %v4603 = vsel %vm452, %v4594, 0
        %4605 = vmatprep.subr.bf16.mxu0 %v4600
        %4606 = vmatpush1.bf16.msra.mxu0 %v4597
        %4607 = vmatprep.subr.bf16.mxu0 0
        %4608 = vmatpush1.bf16.msra.mxu0 0
        %4609 = vmatprep.subr.bf16.mxu0 0
        %4610 = vmatpush1.bf16.msra.mxu0 0
        %4611 = vmatprep.subr.bf16.mxu0 0
        %4612 = vmatpush1.bf16.msra.mxu0 0
        %4613 = vmatprep.subr.bf16.mxu0 0
        %4614 = vmatpush1.bf16.msra.mxu0 0
        %4615 = vmatprep.subr.bf16.mxu0 0
        %4616 = vmatpush1.bf16.msra.mxu0 0
        %4617 = vmatprep.subr.bf16.mxu0 0
        %4618 = vmatpush1.bf16.msra.mxu0 0
        %4619 = vmatprep.subr.bf16.mxu0 0
        %4620 = vmatpush1.bf16.msra.mxu0 0
        %4621 = vmatprep.subr.bf16.mxu0 0
        %4622 = vmatpush1.bf16.msra.mxu0 0
        %4623 = vmatprep.subr.bf16.mxu0 0
        %4624 = vmatpush1.bf16.msra.mxu0 0
        %4625 = vmatprep.subr.bf16.mxu0 0
        %4626 = vmatpush1.bf16.msra.mxu0 0
        %4627 = vmatprep.subr.bf16.mxu0 0
        %4628 = vmatpush1.bf16.msra.mxu0 0
        %4629 = vmatprep.subr.bf16.mxu0 0
        %4630 = vmatpush1.bf16.msra.mxu0 0
        %4631 = vmatprep.subr.bf16.mxu0 0
        %4632 = vmatpush1.bf16.msra.mxu0 0
        %4633 = vmatprep.subr.bf16.mxu0 0
        %4634 = vmatpush1.bf16.msra.mxu0 0
        %4635 = vmatprep.subr.bf16.mxu0 0
        %4636 = vmatpush1.bf16.msra.mxu0 0
        %4637 = vmatprep.mubr.bf16.mxu0 0
        %4638 = vmatmul.mubr.bf16.gmra.mrb[0].mxu0 %v1457
        %v4639 = vpop.f32.mrb[0].mxu0
        %v4640 = vadd.f32 0.0, %v4639
        %v4641 = vpop.f32.mrb[0].mxu0
        %v4642 = vadd.f32 0.0, %v4641
        %v4643 = vpop.f32.mrb[0].mxu0
        %v4644 = vadd.f32 0.0, %v4643
        %v4645 = vpop.f32.mrb[0].mxu0
        %v4646 = vadd.f32 0.0, %v4645
        %4647 = vmatprep.mubr.bf16.mxu0 0
        %4648 = vmatmul.mubr.bf16.gmra.mrb[0].mxu0 %v1460
        %v4649 = vpop.f32.mrb[0].mxu0
        %v4650 = vadd.f32 0.0, %v4649
        %v4651 = vpop.f32.mrb[0].mxu0
        %v4652 = vadd.f32 0.0, %v4651
        %v4653 = vpop.f32.mrb[0].mxu0
        %v4654 = vadd.f32 0.0, %v4653
        %v4655 = vpop.f32.mrb[0].mxu0
        %v4656 = vadd.f32 0.0, %v4655
        %4657 = vmatprep.mubr.bf16.mxu0 0
        %4658 = vmatmul.mubr.bf16.gmra.mrb[0].mxu0 %v1463
        %v4659 = vpop.f32.mrb[0].mxu0
        %v4660 = vadd.f32 0.0, %v4659
        %v4661 = vpop.f32.mrb[0].mxu0
        %v4662 = vadd.f32 0.0, %v4661
        %v4663 = vpop.f32.mrb[0].mxu0
        %v4664 = vadd.f32 0.0, %v4663
        %v4665 = vpop.f32.mrb[0].mxu0
        %v4666 = vadd.f32 0.0, %v4665
        %4667 = vmatprep.mubr.bf16.mxu0 0
        %4668 = vmatmul.mubr.bf16.gmra.mrb[0].mxu0 %v1466
        %v4669 = vpop.f32.mrb[0].mxu0
        %v4670 = vadd.f32 0.0, %v4669
        %v4671 = vpop.f32.mrb[0].mxu0
        %v4672 = vadd.f32 0.0, %v4671
        %v4673 = vpop.f32.mrb[0].mxu0
        %v4674 = vadd.f32 0.0, %v4673
        %v4675 = vpop.f32.mrb[0].mxu0
        %v4676 = vadd.f32 0.0, %v4675
        %4677 = vmatprep.mubr.bf16.mxu0 0
        %4678 = vmatmul.mubr.bf16.gmra.mrb[0].mxu0 %v1469
        %v4679 = vpop.f32.mrb[0].mxu0
        %v4680 = vadd.f32 0.0, %v4679
        %v4681 = vpop.f32.mrb[0].mxu0
        %v4682 = vadd.f32 0.0, %v4681
        %v4683 = vpop.f32.mrb[0].mxu0
        %v4684 = vadd.f32 0.0, %v4683
        %v4685 = vpop.f32.mrb[0].mxu0
        %v4686 = vadd.f32 0.0, %v4685
        %4687 = vmatprep.mubr.bf16.mxu0 0
        %4688 = vmatmul.mubr.bf16.gmra.mrb[0].mxu0 %v1472
        %v4689 = vpop.f32.mrb[0].mxu0
        %v4690 = vadd.f32 0.0, %v4689
        %v4691 = vpop.f32.mrb[0].mxu0
        %v4692 = vadd.f32 0.0, %v4691
        %v4693 = vpop.f32.mrb[0].mxu0
        %v4694 = vadd.f32 0.0, %v4693
        %v4695 = vpop.f32.mrb[0].mxu0
        %v4696 = vadd.f32 0.0, %v4695
        %4697 = vmatprep.mubr.bf16.mxu0 0
        %4698 = vmatmul.mubr.bf16.gmra.mrb[0].mxu0 %v1475
        %v4699 = vpop.f32.mrb[0].mxu0
        %v4700 = vadd.f32 0.0, %v4699
        %v4701 = vpop.f32.mrb[0].mxu0
        %v4702 = vadd.f32 0.0, %v4701
        %v4703 = vpop.f32.mrb[0].mxu0
        %v4704 = vadd.f32 0.0, %v4703
        %v4705 = vpop.f32.mrb[0].mxu0
        %v4706 = vadd.f32 0.0, %v4705
        %4707 = vmatprep.mubr.bf16.mxu0 0
        %4708 = vmatmul.mubr.bf16.gmra.mrb[0].mxu0 %v1478
        %v4709 = vpop.f32.mrb[0].mxu0
        %v4710 = vadd.f32 0.0, %v4709
        %v4711 = vpop.f32.mrb[0].mxu0
        %v4712 = vadd.f32 0.0, %v4711
        %v4713 = vpop.f32.mrb[0].mxu0
        %v4714 = vadd.f32 0.0, %v4713
        %v4715 = vpop.f32.mrb[0].mxu0
        %v4716 = vadd.f32 0.0, %v4715
        %4717 = vmatprep.mubr.bf16.mxu0 0
        %4718 = vmatmul.mubr.bf16.gmra.mrb[0].mxu0 %v1481
        %v4719 = vpop.f32.mrb[0].mxu0
        %v4720 = vadd.f32 0.0, %v4719
        %v4721 = vpop.f32.mrb[0].mxu0
        %v4722 = vadd.f32 0.0, %v4721
        %v4723 = vpop.f32.mrb[0].mxu0
        %v4724 = vadd.f32 0.0, %v4723
        %v4725 = vpop.f32.mrb[0].mxu0
        %v4726 = vadd.f32 0.0, %v4725
        %4727 = vmatprep.mubr.bf16.mxu0 0
        %4728 = vmatmul.mubr.bf16.gmra.mrb[0].mxu0 %v1484
        %v4729 = vpop.f32.mrb[0].mxu0
        %v4730 = vadd.f32 0.0, %v4729
        %v4731 = vpop.f32.mrb[0].mxu0
        %v4732 = vadd.f32 0.0, %v4731
        %v4733 = vpop.f32.mrb[0].mxu0
        %v4734 = vadd.f32 0.0, %v4733
        %v4735 = vpop.f32.mrb[0].mxu0
        %v4736 = vadd.f32 0.0, %v4735
        %4737 = vmatprep.mubr.bf16.mxu0 0
        %4738 = vmatmul.mubr.bf16.gmra.mrb[0].mxu0 %v1487
        %v4739 = vpop.f32.mrb[0].mxu0
        %v4740 = vadd.f32 0.0, %v4739
        %v4741 = vpop.f32.mrb[0].mxu0
        %v4742 = vadd.f32 0.0, %v4741
        %v4743 = vpop.f32.mrb[0].mxu0
        %v4744 = vadd.f32 0.0, %v4743
        %v4745 = vpop.f32.mrb[0].mxu0
        %v4746 = vadd.f32 0.0, %v4745
        %4747 = vmatprep.mubr.bf16.mxu0 0
        %4748 = vmatmul.mubr.bf16.gmra.mrb[0].mxu0 %v1490
        %v4749 = vpop.f32.mrb[0].mxu0
        %v4750 = vadd.f32 0.0, %v4749
        %v4751 = vpop.f32.mrb[0].mxu0
        %v4752 = vadd.f32 0.0, %v4751
        %v4753 = vpop.f32.mrb[0].mxu0
        %v4754 = vadd.f32 0.0, %v4753
        %v4755 = vpop.f32.mrb[0].mxu0
        %v4756 = vadd.f32 0.0, %v4755
        %4757 = vmatprep.mubr.bf16.mxu0 0
        %4758 = vmatmul.mubr.bf16.gmra.mrb[0].mxu0 %v1493
        %v4759 = vpop.f32.mrb[0].mxu0
        %v4760 = vadd.f32 0.0, %v4759
        %v4761 = vpop.f32.mrb[0].mxu0
        %v4762 = vadd.f32 0.0, %v4761
        %v4763 = vpop.f32.mrb[0].mxu0
        %v4764 = vadd.f32 0.0, %v4763
        %v4765 = vpop.f32.mrb[0].mxu0
        %v4766 = vadd.f32 0.0, %v4765
        %4767 = vmatprep.mubr.bf16.mxu0 0
        %4768 = vmatmul.mubr.bf16.gmra.mrb[0].mxu0 %v1496
        %v4769 = vpop.f32.mrb[0].mxu0
        %v4770 = vadd.f32 0.0, %v4769
        %v4771 = vpop.f32.mrb[0].mxu0
        %v4772 = vadd.f32 0.0, %v4771
        %v4773 = vpop.f32.mrb[0].mxu0
        %v4774 = vadd.f32 0.0, %v4773
        %v4775 = vpop.f32.mrb[0].mxu0
        %v4776 = vadd.f32 0.0, %v4775
        %4777 = vmatprep.mubr.bf16.mxu0 0
        %4778 = vmatmul.mubr.bf16.gmra.mrb[0].mxu0 %v1499
        %v4779 = vpop.f32.mrb[0].mxu0
        %v4780 = vadd.f32 0.0, %v4779
        %v4781 = vpop.f32.mrb[0].mxu0
        %v4782 = vadd.f32 0.0, %v4781
        %v4783 = vpop.f32.mrb[0].mxu0
        %v4784 = vadd.f32 0.0, %v4783
        %v4785 = vpop.f32.mrb[0].mxu0
        %v4786 = vadd.f32 0.0, %v4785
        %4787 = vmatprep.mubr.bf16.mxu0 0
        %4788 = vmatmul.mubr.bf16.gmra.mrb[0].mxu0 %v1502
        %v4789 = vpop.f32.mrb[0].mxu0
        %v4790 = vadd.f32 0.0, %v4789
        %v4791 = vpop.f32.mrb[0].mxu0
        %v4792 = vadd.f32 0.0, %v4791
        %v4793 = vpop.f32.mrb[0].mxu0
        %v4794 = vadd.f32 0.0, %v4793
        %v4795 = vpop.f32.mrb[0].mxu0
        %v4796 = vadd.f32 0.0, %v4795
        %4797 = vmatprep.mubr.bf16.mxu0 0
        %4798 = vmatmul.mubr.bf16.gmra.mrb[0].mxu0 %v1505
        %v4799 = vpop.f32.mrb[0].mxu0
        %v4800 = vadd.f32 0.0, %v4799
        %v4801 = vpop.f32.mrb[0].mxu0
        %v4802 = vadd.f32 0.0, %v4801
        %v4803 = vpop.f32.mrb[0].mxu0
        %v4804 = vadd.f32 0.0, %v4803
        %v4805 = vpop.f32.mrb[0].mxu0
        %v4806 = vadd.f32 0.0, %v4805
        %4807 = vmatprep.mubr.bf16.mxu0 0
        %4808 = vmatmul.mubr.bf16.gmra.mrb[0].mxu0 %v1508
        %v4809 = vpop.f32.mrb[0].mxu0
        %v4810 = vadd.f32 0.0, %v4809
        %v4811 = vpop.f32.mrb[0].mxu0
        %v4812 = vadd.f32 0.0, %v4811
        %v4813 = vpop.f32.mrb[0].mxu0
        %v4814 = vadd.f32 0.0, %v4813
        %v4815 = vpop.f32.mrb[0].mxu0
        %v4816 = vadd.f32 0.0, %v4815
        %4817 = vmatprep.mubr.bf16.mxu0 0
        %4818 = vmatmul.mubr.bf16.gmra.mrb[0].mxu0 %v1511
        %v4819 = vpop.f32.mrb[0].mxu0
        %v4820 = vadd.f32 0.0, %v4819
        %v4821 = vpop.f32.mrb[0].mxu0
        %v4822 = vadd.f32 0.0, %v4821
        %v4823 = vpop.f32.mrb[0].mxu0
        %v4824 = vadd.f32 0.0, %v4823
        %v4825 = vpop.f32.mrb[0].mxu0
        %v4826 = vadd.f32 0.0, %v4825
        %4827 = vmatprep.mubr.bf16.mxu0 0
        %4828 = vmatmul.mubr.bf16.gmra.mrb[0].mxu0 %v1514
        %v4829 = vpop.f32.mrb[0].mxu0
        %v4830 = vadd.f32 0.0, %v4829
        %v4831 = vpop.f32.mrb[0].mxu0
        %v4832 = vadd.f32 0.0, %v4831
        %v4833 = vpop.f32.mrb[0].mxu0
        %v4834 = vadd.f32 0.0, %v4833
        %v4835 = vpop.f32.mrb[0].mxu0
        %v4836 = vadd.f32 0.0, %v4835
        %4837 = vmatprep.mubr.bf16.mxu0 0
        %4838 = vmatmul.mubr.bf16.gmra.mrb[0].mxu0 %v1517
        %v4839 = vpop.f32.mrb[0].mxu0
        %v4840 = vadd.f32 0.0, %v4839
        %v4841 = vpop.f32.mrb[0].mxu0
        %v4842 = vadd.f32 0.0, %v4841
        %v4843 = vpop.f32.mrb[0].mxu0
        %v4844 = vadd.f32 0.0, %v4843
        %v4845 = vpop.f32.mrb[0].mxu0
        %v4846 = vadd.f32 0.0, %v4845
        %4847 = vmatprep.mubr.bf16.mxu0 0
        %4848 = vmatmul.mubr.bf16.gmra.mrb[0].mxu0 %v1520
        %v4849 = vpop.f32.mrb[0].mxu0
        %v4850 = vadd.f32 0.0, %v4849
        %v4851 = vpop.f32.mrb[0].mxu0
        %v4852 = vadd.f32 0.0, %v4851
        %v4853 = vpop.f32.mrb[0].mxu0
        %v4854 = vadd.f32 0.0, %v4853
        %v4855 = vpop.f32.mrb[0].mxu0
        %v4856 = vadd.f32 0.0, %v4855
        %4857 = vmatprep.mubr.bf16.mxu0 0
        %4858 = vmatmul.mubr.bf16.gmra.mrb[0].mxu0 %v1523
        %v4859 = vpop.f32.mrb[0].mxu0
        %v4860 = vadd.f32 0.0, %v4859
        %v4861 = vpop.f32.mrb[0].mxu0
        %v4862 = vadd.f32 0.0, %v4861
        %v4863 = vpop.f32.mrb[0].mxu0
        %v4864 = vadd.f32 0.0, %v4863
        %v4865 = vpop.f32.mrb[0].mxu0
        %v4866 = vadd.f32 0.0, %v4865
        %4867 = vmatprep.mubr.bf16.mxu0 0
        %4868 = vmatmul.mubr.bf16.gmra.mrb[0].mxu0 %v1526
        %v4869 = vpop.f32.mrb[0].mxu0
        %v4870 = vadd.f32 0.0, %v4869
        %v4871 = vpop.f32.mrb[0].mxu0
        %v4872 = vadd.f32 0.0, %v4871
        %v4873 = vpop.f32.mrb[0].mxu0
        %v4874 = vadd.f32 0.0, %v4873
        %v4875 = vpop.f32.mrb[0].mxu0
        %v4876 = vadd.f32 0.0, %v4875
        %4877 = vdwg.mxu0
        %4878 = vmatprep.subr.bf16.mxu0 0
        %4879 = vmatpush1.bf16.msra.mxu0 %v4603
        %4880 = vmatprep.subr.bf16.mxu0 0
        %4881 = vmatpush1.bf16.msra.mxu0 0
        %4882 = vmatprep.subr.bf16.mxu0 0
        %4883 = vmatpush1.bf16.msra.mxu0 0
        %4884 = vmatprep.subr.bf16.mxu0 0
        %4885 = vmatpush1.bf16.msra.mxu0 0
        %4886 = vmatprep.subr.bf16.mxu0 0
        %4887 = vmatpush1.bf16.msra.mxu0 0
        %4888 = vmatprep.subr.bf16.mxu0 0
        %4889 = vmatpush1.bf16.msra.mxu0 0
        %4890 = vmatprep.subr.bf16.mxu0 0
        %4891 = vmatpush1.bf16.msra.mxu0 0
        %4892 = vmatprep.subr.bf16.mxu0 0
        %4893 = vmatpush1.bf16.msra.mxu0 0
        %4894 = vmatprep.subr.bf16.mxu0 0
        %4895 = vmatpush1.bf16.msra.mxu0 0
        %4896 = vmatprep.subr.bf16.mxu0 0
        %4897 = vmatpush1.bf16.msra.mxu0 0
        %4898 = vmatprep.subr.bf16.mxu0 0
        %4899 = vmatpush1.bf16.msra.mxu0 0
        %4900 = vmatprep.subr.bf16.mxu0 0
        %4901 = vmatpush1.bf16.msra.mxu0 0
        %4902 = vmatprep.subr.bf16.mxu0 0
        %4903 = vmatpush1.bf16.msra.mxu0 0
        %4904 = vmatprep.subr.bf16.mxu0 0
        %4905 = vmatpush1.bf16.msra.mxu0 0
        %4906 = vmatprep.subr.bf16.mxu0 0
        %4907 = vmatpush1.bf16.msra.mxu0 0
        %4908 = vmatprep.subr.bf16.mxu0 0
        %4909 = vmatpush1.bf16.msra.mxu0 0
        %4910 = vmatprep.mubr.bf16.mxu0 0
        %4911 = vmatmul.mubr.bf16.gmra.mrb[0].mxu0 %v1457
        %v4912 = vpop.f32.mrb[0].mxu0
        %v4913 = vadd.f32 0.0, %v4912
        %v4914 = vpop.f32.mrb[0].mxu0
        %v4915 = vpop.f32.mrb[0].mxu0
        %v4916 = vadd.f32 0.0, %v4915
        %v4917 = vpop.f32.mrb[0].mxu0
        %4918 = vmatprep.mubr.bf16.mxu0 0
        %4919 = vmatmul.mubr.bf16.gmra.mrb[0].mxu0 %v1460
        %v4920 = vpop.f32.mrb[0].mxu0
        %v4921 = vadd.f32 0.0, %v4920
        %v4922 = vpop.f32.mrb[0].mxu0
        %v4923 = vpop.f32.mrb[0].mxu0
        %v4924 = vadd.f32 0.0, %v4923
        %v4925 = vpop.f32.mrb[0].mxu0
        %4926 = vmatprep.mubr.bf16.mxu0 0
        %4927 = vmatmul.mubr.bf16.gmra.mrb[0].mxu0 %v1463
        %v4928 = vpop.f32.mrb[0].mxu0
        %v4929 = vadd.f32 0.0, %v4928
        %v4930 = vpop.f32.mrb[0].mxu0
        %v4931 = vpop.f32.mrb[0].mxu0
        %v4932 = vadd.f32 0.0, %v4931
        %v4933 = vpop.f32.mrb[0].mxu0
        %4934 = vmatprep.mubr.bf16.mxu0 0
        %4935 = vmatmul.mubr.bf16.gmra.mrb[0].mxu0 %v1466
        %v4936 = vpop.f32.mrb[0].mxu0
        %v4937 = vadd.f32 0.0, %v4936
        %v4938 = vpop.f32.mrb[0].mxu0
        %v4939 = vpop.f32.mrb[0].mxu0
        %v4940 = vadd.f32 0.0, %v4939
        %v4941 = vpop.f32.mrb[0].mxu0
        %4942 = vmatprep.mubr.bf16.mxu0 0
        %4943 = vmatmul.mubr.bf16.gmra.mrb[0].mxu0 %v1469
        %v4944 = vpop.f32.mrb[0].mxu0
        %v4945 = vadd.f32 0.0, %v4944
        %v4946 = vpop.f32.mrb[0].mxu0
        %v4947 = vpop.f32.mrb[0].mxu0
        %v4948 = vadd.f32 0.0, %v4947
        %v4949 = vpop.f32.mrb[0].mxu0
        %4950 = vmatprep.mubr.bf16.mxu0 0
        %4951 = vmatmul.mubr.bf16.gmra.mrb[0].mxu0 %v1472
        %v4952 = vpop.f32.mrb[0].mxu0
        %v4953 = vadd.f32 0.0, %v4952
        %v4954 = vpop.f32.mrb[0].mxu0
        %v4955 = vpop.f32.mrb[0].mxu0
        %v4956 = vadd.f32 0.0, %v4955
        %v4957 = vpop.f32.mrb[0].mxu0
        %4958 = vmatprep.mubr.bf16.mxu0 0
        %4959 = vmatmul.mubr.bf16.gmra.mrb[0].mxu0 %v1475
        %v4960 = vpop.f32.mrb[0].mxu0
        %v4961 = vadd.f32 0.0, %v4960
        %v4962 = vpop.f32.mrb[0].mxu0
        %v4963 = vpop.f32.mrb[0].mxu0
        %v4964 = vadd.f32 0.0, %v4963
        %v4965 = vpop.f32.mrb[0].mxu0
        %4966 = vmatprep.mubr.bf16.mxu0 0
        %4967 = vmatmul.mubr.bf16.gmra.mrb[0].mxu0 %v1478
        %v4968 = vpop.f32.mrb[0].mxu0
        %v4969 = vadd.f32 0.0, %v4968
        %v4970 = vpop.f32.mrb[0].mxu0
        %v4971 = vpop.f32.mrb[0].mxu0
        %v4972 = vadd.f32 0.0, %v4971
        %v4973 = vpop.f32.mrb[0].mxu0
        %4974 = vmatprep.mubr.bf16.mxu0 0
        %4975 = vmatmul.mubr.bf16.gmra.mrb[0].mxu0 %v1481
        %v4976 = vpop.f32.mrb[0].mxu0
        %v4977 = vadd.f32 0.0, %v4976
        %v4978 = vpop.f32.mrb[0].mxu0
        %v4979 = vpop.f32.mrb[0].mxu0
        %v4980 = vadd.f32 0.0, %v4979
        %v4981 = vpop.f32.mrb[0].mxu0
        %4982 = vmatprep.mubr.bf16.mxu0 0
        %4983 = vmatmul.mubr.bf16.gmra.mrb[0].mxu0 %v1484
        %v4984 = vpop.f32.mrb[0].mxu0
        %v4985 = vadd.f32 0.0, %v4984
        %v4986 = vpop.f32.mrb[0].mxu0
        %v4987 = vpop.f32.mrb[0].mxu0
        %v4988 = vadd.f32 0.0, %v4987
        %v4989 = vpop.f32.mrb[0].mxu0
        %4990 = vmatprep.mubr.bf16.mxu0 0
        %4991 = vmatmul.mubr.bf16.gmra.mrb[0].mxu0 %v1487
        %v4992 = vpop.f32.mrb[0].mxu0
        %v4993 = vadd.f32 0.0, %v4992
        %v4994 = vpop.f32.mrb[0].mxu0
        %v4995 = vpop.f32.mrb[0].mxu0
        %v4996 = vadd.f32 0.0, %v4995
        %v4997 = vpop.f32.mrb[0].mxu0
        %4998 = vmatprep.mubr.bf16.mxu0 0
        %4999 = vmatmul.mubr.bf16.gmra.mrb[0].mxu0 %v1490
        %v5000 = vpop.f32.mrb[0].mxu0
        %v5001 = vadd.f32 0.0, %v5000
        %v5002 = vpop.f32.mrb[0].mxu0
        %v5003 = vpop.f32.mrb[0].mxu0
        %v5004 = vadd.f32 0.0, %v5003
        %v5005 = vpop.f32.mrb[0].mxu0
        %5006 = vmatprep.mubr.bf16.mxu0 0
        %5007 = vmatmul.mubr.bf16.gmra.mrb[0].mxu0 %v1493
        %v5008 = vpop.f32.mrb[0].mxu0
        %v5009 = vadd.f32 0.0, %v5008
        %v5010 = vpop.f32.mrb[0].mxu0
        %v5011 = vpop.f32.mrb[0].mxu0
        %v5012 = vadd.f32 0.0, %v5011
        %v5013 = vpop.f32.mrb[0].mxu0
        %5014 = vmatprep.mubr.bf16.mxu0 0
        %5015 = vmatmul.mubr.bf16.gmra.mrb[0].mxu0 %v1496
        %v5016 = vpop.f32.mrb[0].mxu0
        %v5017 = vadd.f32 0.0, %v5016
        %v5018 = vpop.f32.mrb[0].mxu0
        %v5019 = vpop.f32.mrb[0].mxu0
        %v5020 = vadd.f32 0.0, %v5019
        %v5021 = vpop.f32.mrb[0].mxu0
        %5022 = vmatprep.mubr.bf16.mxu0 0
        %5023 = vmatmul.mubr.bf16.gmra.mrb[0].mxu0 %v1499
        %v5024 = vpop.f32.mrb[0].mxu0
        %v5025 = vadd.f32 0.0, %v5024
        %v5026 = vpop.f32.mrb[0].mxu0
        %v5027 = vpop.f32.mrb[0].mxu0
        %v5028 = vadd.f32 0.0, %v5027
        %v5029 = vpop.f32.mrb[0].mxu0
        %5030 = vmatprep.mubr.bf16.mxu0 0
        %5031 = vmatmul.mubr.bf16.gmra.mrb[0].mxu0 %v1502
        %v5032 = vpop.f32.mrb[0].mxu0
        %v5033 = vadd.f32 0.0, %v5032
        %v5034 = vpop.f32.mrb[0].mxu0
        %v5035 = vpop.f32.mrb[0].mxu0
        %v5036 = vadd.f32 0.0, %v5035
        %v5037 = vpop.f32.mrb[0].mxu0
        %5038 = vmatprep.mubr.bf16.mxu0 0
        %5039 = vmatmul.mubr.bf16.gmra.mrb[0].mxu0 %v1505
        %v5040 = vpop.f32.mrb[0].mxu0
        %v5041 = vadd.f32 0.0, %v5040
        %v5042 = vpop.f32.mrb[0].mxu0
        %v5043 = vpop.f32.mrb[0].mxu0
        %v5044 = vadd.f32 0.0, %v5043
        %v5045 = vpop.f32.mrb[0].mxu0
        %5046 = vmatprep.mubr.bf16.mxu0 0
        %5047 = vmatmul.mubr.bf16.gmra.mrb[0].mxu0 %v1508
        %v5048 = vpop.f32.mrb[0].mxu0
        %v5049 = vadd.f32 0.0, %v5048
        %v5050 = vpop.f32.mrb[0].mxu0
        %v5051 = vpop.f32.mrb[0].mxu0
        %v5052 = vadd.f32 0.0, %v5051
        %v5053 = vpop.f32.mrb[0].mxu0
        %5054 = vmatprep.mubr.bf16.mxu0 0
        %5055 = vmatmul.mubr.bf16.gmra.mrb[0].mxu0 %v1511
        %v5056 = vpop.f32.mrb[0].mxu0
        %v5057 = vadd.f32 0.0, %v5056
        %v5058 = vpop.f32.mrb[0].mxu0
        %v5059 = vpop.f32.mrb[0].mxu0
        %v5060 = vadd.f32 0.0, %v5059
        %v5061 = vpop.f32.mrb[0].mxu0
        %5062 = vmatprep.mubr.bf16.mxu0 0
        %5063 = vmatmul.mubr.bf16.gmra.mrb[0].mxu0 %v1514
        %v5064 = vpop.f32.mrb[0].mxu0
        %v5065 = vadd.f32 0.0, %v5064
        %v5066 = vpop.f32.mrb[0].mxu0
        %v5067 = vpop.f32.mrb[0].mxu0
        %v5068 = vadd.f32 0.0, %v5067
        %v5069 = vpop.f32.mrb[0].mxu0
        %5070 = vmatprep.mubr.bf16.mxu0 0
        %5071 = vmatmul.mubr.bf16.gmra.mrb[0].mxu0 %v1517
        %v5072 = vpop.f32.mrb[0].mxu0
        %v5073 = vadd.f32 0.0, %v5072
        %v5074 = vpop.f32.mrb[0].mxu0
        %v5075 = vpop.f32.mrb[0].mxu0
        %v5076 = vadd.f32 0.0, %v5075
        %v5077 = vpop.f32.mrb[0].mxu0
        %5078 = vmatprep.mubr.bf16.mxu0 0
        %5079 = vmatmul.mubr.bf16.gmra.mrb[0].mxu0 %v1520
        %v5080 = vpop.f32.mrb[0].mxu0
        %v5081 = vadd.f32 0.0, %v5080
        %v5082 = vpop.f32.mrb[0].mxu0
        %v5083 = vpop.f32.mrb[0].mxu0
        %v5084 = vadd.f32 0.0, %v5083
        %v5085 = vpop.f32.mrb[0].mxu0
        %5086 = vmatprep.mubr.bf16.mxu0 0
        %5087 = vmatmul.mubr.bf16.gmra.mrb[0].mxu0 %v1523
        %v5088 = vpop.f32.mrb[0].mxu0
        %v5089 = vadd.f32 0.0, %v5088
        %v5090 = vpop.f32.mrb[0].mxu0
        %v5091 = vpop.f32.mrb[0].mxu0
        %v5092 = vadd.f32 0.0, %v5091
        %v5093 = vpop.f32.mrb[0].mxu0
        %5094 = vmatprep.mubr.bf16.mxu0 0
        %5095 = vmatmul.mubr.bf16.gmra.mrb[0].mxu0 %v1526
        %v5096 = vpop.f32.mrb[0].mxu0
        %v5097 = vadd.f32 0.0, %v5096
        %v5098 = vpop.f32.mrb[0].mxu0
        %v5099 = vpop.f32.mrb[0].mxu0
        %v5100 = vadd.f32 0.0, %v5099
        %v5101 = vpop.f32.mrb[0].mxu0
        %5102 = vdwg.mxu0
        %v5103 = vrot.slane %v4640, 2
        %v5104 = vrot.slane %v4644, 2
        %v5105 = vrot.slane %v4650, 2
        %v5106 = vrot.slane %v4654, 2
        %v5107 = vrot.slane %v4660, 2
        %v5108 = vrot.slane %v4664, 2
        %v5109 = vrot.slane %v4670, 2
        %v5110 = vrot.slane %v4674, 2
        %v5111 = vrot.slane %v4680, 2
        %v5112 = vrot.slane %v4684, 2
        %v5113 = vrot.slane %v4690, 2
        %v5114 = vrot.slane %v4694, 2
        %v5115 = vrot.slane %v4700, 2
        %v5116 = vrot.slane %v4704, 2
        %v5117 = vrot.slane %v4710, 2
        %v5118 = vrot.slane %v4714, 2
        %v5119 = vrot.slane %v4720, 2
        %v5120 = vrot.slane %v4724, 2
        %v5121 = vrot.slane %v4730, 2
        %v5122 = vrot.slane %v4734, 2
        %v5123 = vrot.slane %v4740, 2
        %v5124 = vrot.slane %v4744, 2
        %v5125 = vrot.slane %v4750, 2
        %v5126 = vrot.slane %v4754, 2
        %v5127 = vrot.slane %v4760, 2
        %v5128 = vrot.slane %v4764, 2
        %v5129 = vrot.slane %v4770, 2
        %v5130 = vrot.slane %v4774, 2
        %v5131 = vrot.slane %v4780, 2
        %v5132 = vrot.slane %v4784, 2
        %v5133 = vrot.slane %v4790, 2
        %v5134 = vrot.slane %v4794, 2
        %v5135 = vrot.slane %v4800, 2
        %v5136 = vrot.slane %v4804, 2
        %v5137 = vrot.slane %v4810, 2
        %v5138 = vrot.slane %v4814, 2
        %v5139 = vrot.slane %v4820, 2
        %v5140 = vrot.slane %v4824, 2
        %v5141 = vrot.slane %v4830, 2
        %v5142 = vrot.slane %v4834, 2
        %v5143 = vrot.slane %v4840, 2
        %v5144 = vrot.slane %v4844, 2
        %v5145 = vrot.slane %v4850, 2
        %v5146 = vrot.slane %v4854, 2
        %v5147 = vrot.slane %v4860, 2
        %v5148 = vrot.slane %v4864, 2
        %v5149 = vrot.slane %v4870, 2
        %v5150 = vrot.slane %v4874, 2
        %v5151 = vsel %vm4287, %v5149, %v5150
        %v5152 = vsel %vm4287, %v5148, %v5149
        %v5153 = vsel %vm4287, %v5146, %v5147
        %v5154 = vsel %vm4287, %v5145, %v5146
        %v5155 = vsel %vm4287, %v5143, %v5144
        %v5156 = vsel %vm4287, %v5142, %v5143
        %v5157 = vsel %vm4287, %v5140, %v5141
        %v5158 = vsel %vm4287, %v5139, %v5140
        %v5159 = vsel %vm4287, %v5137, %v5138
        %v5160 = vsel %vm4287, %v5136, %v5137
        %v5161 = vsel %vm4287, %v5134, %v5135
        %v5162 = vsel %vm4287, %v5133, %v5134
        %v5163 = vsel %vm4287, %v5131, %v5132
        %v5164 = vsel %vm4287, %v5130, %v5131
        %v5165 = vsel %vm4287, %v5128, %v5129
        %v5166 = vsel %vm4287, %v5127, %v5128
        %v5167 = vsel %vm4287, %v5125, %v5126
        %v5168 = vsel %vm4287, %v5124, %v5125
        %v5169 = vsel %vm4287, %v5122, %v5123
        %v5170 = vsel %vm4287, %v5121, %v5122
        %v5171 = vsel %vm4287, %v5119, %v5120
        %v5172 = vsel %vm4287, %v5118, %v5119
        %v5173 = vsel %vm4287, %v5116, %v5117
        %v5174 = vsel %vm4287, %v5115, %v5116
        %v5175 = vsel %vm4287, %v5113, %v5114
        %v5176 = vsel %vm4287, %v5112, %v5113
        %v5177 = vsel %vm4287, %v5110, %v5111
        %v5178 = vsel %vm4287, %v5109, %v5110
        %v5179 = vsel %vm4287, %v5107, %v5108
        %v5180 = vsel %vm4287, %v5106, %v5107
        %v5181 = vsel %vm4287, %v5104, %v5105
        %v5182 = vsel %vm4287, %v5103, %v5104
        %v5183 = vrot.slane %v4642, 4
        %v5184 = vrot.slane %v4646, 4
        %v5185 = vrot.slane %v4652, 4
        %v5186 = vrot.slane %v4656, 4
        %v5187 = vrot.slane %v4662, 4
        %v5188 = vrot.slane %v4666, 4
        %v5189 = vrot.slane %v4672, 4
        %v5190 = vrot.slane %v4676, 4
        %v5191 = vrot.slane %v4682, 4
        %v5192 = vrot.slane %v4686, 4
        %v5193 = vrot.slane %v4692, 4
        %v5194 = vrot.slane %v4696, 4
        %v5195 = vrot.slane %v4702, 4
        %v5196 = vrot.slane %v4706, 4
        %v5197 = vrot.slane %v4712, 4
        %v5198 = vrot.slane %v4716, 4
        %v5199 = vrot.slane %v4722, 4
        %v5200 = vrot.slane %v4726, 4
        %v5201 = vrot.slane %v4732, 4
        %v5202 = vrot.slane %v4736, 4
        %v5203 = vrot.slane %v4742, 4
        %v5204 = vrot.slane %v4746, 4
        %v5205 = vrot.slane %v4752, 4
        %v5206 = vrot.slane %v4756, 4
        %v5207 = vrot.slane %v4762, 4
        %v5208 = vrot.slane %v4766, 4
        %v5209 = vrot.slane %v4772, 4
        %v5210 = vrot.slane %v4776, 4
        %v5211 = vrot.slane %v4782, 4
        %v5212 = vrot.slane %v4786, 4
        %v5213 = vrot.slane %v4792, 4
        %v5214 = vrot.slane %v4796, 4
        %v5215 = vrot.slane %v4802, 4
        %v5216 = vrot.slane %v4806, 4
        %v5217 = vrot.slane %v4812, 4
        %v5218 = vrot.slane %v4816, 4
        %v5219 = vrot.slane %v4822, 4
        %v5220 = vrot.slane %v4826, 4
        %v5221 = vrot.slane %v4832, 4
        %v5222 = vrot.slane %v4836, 4
        %v5223 = vrot.slane %v4842, 4
        %v5224 = vrot.slane %v4846, 4
        %v5225 = vrot.slane %v4852, 4
        %v5226 = vrot.slane %v4856, 4
        %v5227 = vrot.slane %v4862, 4
        %v5228 = vrot.slane %v4866, 4
        %v5229 = vrot.slane %v4872, 4
        %v5230 = vrot.slane %v4876, 4
        %v5231 = vsel %vm1091, %v5229, %v5230
        %v5232 = vsel %vm1091, %v5228, %v5229
        %v5233 = vsel %vm1091, %v5226, %v5227
        %v5234 = vsel %vm1091, %v5225, %v5226
        %v5235 = vsel %vm1091, %v5223, %v5224
        %v5236 = vsel %vm1091, %v5222, %v5223
        %v5237 = vsel %vm1091, %v5220, %v5221
        %v5238 = vsel %vm1091, %v5219, %v5220
        %v5239 = vsel %vm1091, %v5217, %v5218
        %v5240 = vsel %vm1091, %v5216, %v5217
        %v5241 = vsel %vm1091, %v5214, %v5215
        %v5242 = vsel %vm1091, %v5213, %v5214
        %v5243 = vsel %vm1091, %v5211, %v5212
        %v5244 = vsel %vm1091, %v5210, %v5211
        %v5245 = vsel %vm1091, %v5208, %v5209
        %v5246 = vsel %vm1091, %v5207, %v5208
        %v5247 = vsel %vm1091, %v5205, %v5206
        %v5248 = vsel %vm1091, %v5204, %v5205
        %v5249 = vsel %vm1091, %v5202, %v5203
        %v5250 = vsel %vm1091, %v5201, %v5202
        %v5251 = vsel %vm1091, %v5199, %v5200
        %v5252 = vsel %vm1091, %v5198, %v5199
        %v5253 = vsel %vm1091, %v5196, %v5197
        %v5254 = vsel %vm1091, %v5195, %v5196
        %v5255 = vsel %vm1091, %v5193, %v5194
        %v5256 = vsel %vm1091, %v5192, %v5193
        %v5257 = vsel %vm1091, %v5190, %v5191
        %v5258 = vsel %vm1091, %v5189, %v5190
        %v5259 = vsel %vm1091, %v5187, %v5188
        %v5260 = vsel %vm1091, %v5186, %v5187
        %v5261 = vsel %vm1091, %v5184, %v5185
        %v5262 = vsel %vm1091, %v5183, %v5184
        %v5263 = vadd.f32 %v5182, %v5262
        %v5264 = vadd.f32 %v5181, %v5261
        %v5265 = vadd.f32 %v5180, %v5260
        %v5266 = vadd.f32 %v5179, %v5259
        %v5267 = vadd.f32 %v5178, %v5258
        %v5268 = vadd.f32 %v5177, %v5257
        %v5269 = vadd.f32 %v5176, %v5256
        %v5270 = vadd.f32 %v5175, %v5255
        %v5271 = vadd.f32 %v5174, %v5254
        %v5272 = vadd.f32 %v5173, %v5253
        %v5273 = vadd.f32 %v5172, %v5252
        %v5274 = vadd.f32 %v5171, %v5251
        %v5275 = vadd.f32 %v5170, %v5250
        %v5276 = vadd.f32 %v5169, %v5249
        %v5277 = vadd.f32 %v5168, %v5248
        %v5278 = vadd.f32 %v5167, %v5247
        %v5279 = vadd.f32 %v5166, %v5246
        %v5280 = vadd.f32 %v5165, %v5245
        %v5281 = vadd.f32 %v5164, %v5244
        %v5282 = vadd.f32 %v5163, %v5243
        %v5283 = vadd.f32 %v5162, %v5242
        %v5284 = vadd.f32 %v5161, %v5241
        %v5285 = vadd.f32 %v5160, %v5240
        %v5286 = vadd.f32 %v5159, %v5239
        %v5287 = vadd.f32 %v5158, %v5238
        %v5288 = vadd.f32 %v5157, %v5237
        %v5289 = vadd.f32 %v5156, %v5236
        %v5290 = vadd.f32 %v5155, %v5235
        %v5291 = vadd.f32 %v5154, %v5234
        %v5292 = vadd.f32 %v5153, %v5233
        %v5293 = vadd.f32 %v5152, %v5232
        %v5294 = vadd.f32 %v5151, %v5231
        %v5295 = vrot.slane %v4913, 6
        %v5296 = vrot.slane %v4916, 6
        %v5297 = vrot.slane %v4921, 6
        %v5298 = vrot.slane %v4924, 6
        %v5299 = vrot.slane %v4929, 6
        %v5300 = vrot.slane %v4932, 6
        %v5301 = vrot.slane %v4937, 6
        %v5302 = vrot.slane %v4940, 6
        %v5303 = vrot.slane %v4945, 6
        %v5304 = vrot.slane %v4948, 6
        %v5305 = vrot.slane %v4953, 6
        %v5306 = vrot.slane %v4956, 6
        %v5307 = vrot.slane %v4961, 6
        %v5308 = vrot.slane %v4964, 6
        %v5309 = vrot.slane %v4969, 6
        %v5310 = vrot.slane %v4972, 6
        %v5311 = vrot.slane %v4977, 6
        %v5312 = vrot.slane %v4980, 6
        %v5313 = vrot.slane %v4985, 6
        %v5314 = vrot.slane %v4988, 6
        %v5315 = vrot.slane %v4993, 6
        %v5316 = vrot.slane %v4996, 6
        %v5317 = vrot.slane %v5001, 6
        %v5318 = vrot.slane %v5004, 6
        %v5319 = vrot.slane %v5009, 6
        %v5320 = vrot.slane %v5012, 6
        %v5321 = vrot.slane %v5017, 6
        %v5322 = vrot.slane %v5020, 6
        %v5323 = vrot.slane %v5025, 6
        %v5324 = vrot.slane %v5028, 6
        %v5325 = vrot.slane %v5033, 6
        %v5326 = vrot.slane %v5036, 6
        %v5327 = vrot.slane %v5041, 6
        %v5328 = vrot.slane %v5044, 6
        %v5329 = vrot.slane %v5049, 6
        %v5330 = vrot.slane %v5052, 6
        %v5331 = vrot.slane %v5057, 6
        %v5332 = vrot.slane %v5060, 6
        %v5333 = vrot.slane %v5065, 6
        %v5334 = vrot.slane %v5068, 6
        %v5335 = vrot.slane %v5073, 6
        %v5336 = vrot.slane %v5076, 6
        %v5337 = vrot.slane %v5081, 6
        %v5338 = vrot.slane %v5084, 6
        %v5339 = vrot.slane %v5089, 6
        %v5340 = vrot.slane %v5092, 6
        %v5341 = vrot.slane %v5097, 6
        %v5342 = vrot.slane %v5100, 6
        %v5343 = vsel %vm4480, %v5341, %v5342
        %v5344 = vsel %vm4480, %v5340, %v5341
        %v5345 = vsel %vm4480, %v5338, %v5339
        %v5346 = vsel %vm4480, %v5337, %v5338
        %v5347 = vsel %vm4480, %v5335, %v5336
        %v5348 = vsel %vm4480, %v5334, %v5335
        %v5349 = vsel %vm4480, %v5332, %v5333
        %v5350 = vsel %vm4480, %v5331, %v5332
        %v5351 = vsel %vm4480, %v5329, %v5330
        %v5352 = vsel %vm4480, %v5328, %v5329
        %v5353 = vsel %vm4480, %v5326, %v5327
        %v5354 = vsel %vm4480, %v5325, %v5326
        %v5355 = vsel %vm4480, %v5323, %v5324
        %v5356 = vsel %vm4480, %v5322, %v5323
        %v5357 = vsel %vm4480, %v5320, %v5321
        %v5358 = vsel %vm4480, %v5319, %v5320
        %v5359 = vsel %vm4480, %v5317, %v5318
        %v5360 = vsel %vm4480, %v5316, %v5317
        %v5361 = vsel %vm4480, %v5314, %v5315
        %v5362 = vsel %vm4480, %v5313, %v5314
        %v5363 = vsel %vm4480, %v5311, %v5312
        %v5364 = vsel %vm4480, %v5310, %v5311
        %v5365 = vsel %vm4480, %v5308, %v5309
        %v5366 = vsel %vm4480, %v5307, %v5308
        %v5367 = vsel %vm4480, %v5305, %v5306
        %v5368 = vsel %vm4480, %v5304, %v5305
        %v5369 = vsel %vm4480, %v5302, %v5303
        %v5370 = vsel %vm4480, %v5301, %v5302
        %v5371 = vsel %vm4480, %v5299, %v5300
        %v5372 = vsel %vm4480, %v5298, %v5299
        %v5373 = vsel %vm4480, %v5296, %v5297
        %v5374 = vsel %vm4480, %v5295, %v5296
        %v5375 = vadd.f32 %v5263, %v5374
        %v5376 = vadd.f32 %v5264, %v5373
        %v5377 = vadd.f32 %v5265, %v5372
        %v5378 = vadd.f32 %v5266, %v5371
        %v5379 = vadd.f32 %v5267, %v5370
        %v5380 = vadd.f32 %v5268, %v5369
        %v5381 = vadd.f32 %v5269, %v5368
        %v5382 = vadd.f32 %v5270, %v5367
        %v5383 = vadd.f32 %v5271, %v5366
        %v5384 = vadd.f32 %v5272, %v5365
        %v5385 = vadd.f32 %v5273, %v5364
        %v5386 = vadd.f32 %v5274, %v5363
        %v5387 = vadd.f32 %v5275, %v5362
        %v5388 = vadd.f32 %v5276, %v5361
        %v5389 = vadd.f32 %v5277, %v5360
        %v5390 = vadd.f32 %v5278, %v5359
        %v5391 = vadd.f32 %v5279, %v5358
        %v5392 = vadd.f32 %v5280, %v5357
        %v5393 = vadd.f32 %v5281, %v5356
        %v5394 = vadd.f32 %v5282, %v5355
        %v5395 = vadd.f32 %v5283, %v5354
        %v5396 = vadd.f32 %v5284, %v5353
        %v5397 = vadd.f32 %v5285, %v5352
        %v5398 = vadd.f32 %v5286, %v5351
        %v5399 = vadd.f32 %v5287, %v5350
        %v5400 = vadd.f32 %v5288, %v5349
        %v5401 = vadd.f32 %v5289, %v5348
        %v5402 = vadd.f32 %v5290, %v5347
        %v5403 = vadd.f32 %v5291, %v5346
        %v5404 = vadd.f32 %v5292, %v5345
        %v5405 = vadd.f32 %v5293, %v5344
        %v5406 = vadd.f32 %v5294, %v5343
        %v5407 = vadd.f32 %v4545, %v5375
        %v5408 = vadd.f32 %v4546, %v5376
        %v5409 = vadd.f32 %v4547, %v5377
        %v5410 = vadd.f32 %v4548, %v5378
        %v5411 = vadd.f32 %v4549, %v5379
        %v5412 = vadd.f32 %v4550, %v5380
        %v5413 = vadd.f32 %v4551, %v5381
        %v5414 = vadd.f32 %v4552, %v5382
        %v5415 = vadd.f32 %v4553, %v5383
        %v5416 = vadd.f32 %v4554, %v5384
        %v5417 = vadd.f32 %v4555, %v5385
        %v5418 = vadd.f32 %v4556, %v5386
        %v5419 = vadd.f32 %v4557, %v5387
        %v5420 = vadd.f32 %v4558, %v5388
        %v5421 = vadd.f32 %v4559, %v5389
        %v5422 = vadd.f32 %v4560, %v5390
        %v5423 = vadd.f32 %v4561, %v5391
        %v5424 = vadd.f32 %v4562, %v5392
        %v5425 = vadd.f32 %v4563, %v5393
        %v5426 = vadd.f32 %v4564, %v5394
        %v5427 = vadd.f32 %v4565, %v5395
        %v5428 = vadd.f32 %v4566, %v5396
        %v5429 = vadd.f32 %v4567, %v5397
        %v5430 = vadd.f32 %v4568, %v5398
        %v5431 = vadd.f32 %v4569, %v5399
        %v5432 = vadd.f32 %v4570, %v5400
        %v5433 = vadd.f32 %v4571, %v5401
        %v5434 = vadd.f32 %v4572, %v5402
        %v5435 = vadd.f32 %v4573, %v5403
        %v5436 = vadd.f32 %v4574, %v5404
        %v5437 = vadd.f32 %v4575, %v5405
        %v5438 = vadd.f32 %v4576, %v5406
        %v5439 = vld [vmem:[%s191 + $0x48] sm:$0xf]
        %v5440 = vld [vmem:[%s191 + $0x4c] sm:$0xf]
        %v5441 = vld [vmem:[%s191 + $0x50] sm:$0xf]
        %v5442 = vld [vmem:[%s191 + $0x54] sm:$0xf]
        %v5443 = vld [vmem:[%s191 + $0x58] sm:$0xf]
        %v5444 = vld [vmem:[%s191 + $0x5c] sm:$0xf]
        %v5445 = vld [vmem:[%s191 + $0x60] sm:$0xf]
        %v5446 = vld [vmem:[%s191 + $0x64] sm:$0xf]
        %v5447 = vld [vmem:[%s191 + $0x68] sm:$0xf]
        %v5448 = vld [vmem:[%s191 + $0x6c] sm:$0xf]
        %v5449 = vld [vmem:[%s191 + $0x70] sm:$0xf]
        %v5450 = vld [vmem:[%s191 + $0x74] sm:$0xf]
        %v5451 = vld [vmem:[%s191 + $0x78] sm:$0xf]
        %v5452 = vld [vmem:[%s191 + $0x7c] sm:$0xf]
        %v5453 = vld [vmem:[%s191 + $0x80] sm:$0xf]
        %v5454 = vld [vmem:[%s191 + $0x84] sm:$0xf]
        %v5455 = vld [vmem:[%s191 + $0x88] sm:$0xf]
        %v5456 = vld [vmem:[%s191 + $0x8c] sm:$0xf]
        %v5457 = vld [vmem:[%s191 + $0x90] sm:$0xf]
        %v5458 = vld [vmem:[%s191 + $0x94] sm:$0xf]
        %v5459 = vld [vmem:[%s191 + $0x98] sm:$0xf]
        %v5460 = vld [vmem:[%s191 + $0x9c] sm:$0xf]
        %v5461 = vld [vmem:[%s191 + $0xa0] sm:$0xf]
        %v5462 = vld [vmem:[%s191 + $0xa4] sm:$0xf]
        %v5463 = vld [vmem:[%s191 + $0xa8] sm:$0xf]
        %v5464 = vld [vmem:[%s191 + $0xac] sm:$0xf]
        %v5465 = vld [vmem:[%s191 + $0xb0] sm:$0xf]
        %v5466 = vld [vmem:[%s191 + $0xb4] sm:$0xf]
        %v5467 = vld [vmem:[%s191 + $0xb8] sm:$0xf]
        %v5468 = vld [vmem:[%s191 + $0xbc] sm:$0xf]
        %v5469 = vld [vmem:[%s191 + $0xc0] sm:$0xf]
        %v5470 = vld [vmem:[%s191 + $0xc4] sm:$0xf]
        %v5471 = vld [vmem:[%s191 + $0xc8] sm:$0xf]
        %v5472 = vld [vmem:[%s191 + $0xcc] sm:$0xf]
        %v5473 = vld [vmem:[%s191 + $0xd0] sm:$0xf]
        %v5474 = vld [vmem:[%s191 + $0xd4] sm:$0xf]
        %v5475 = vld [vmem:[%s191 + $0xd8] sm:$0xf]
        %v5476 = vld [vmem:[%s191 + $0xdc] sm:$0xf]
        %v5477 = vld [vmem:[%s191 + $0xe0] sm:$0xf]
        %v5478 = vld [vmem:[%s191 + $0xe4] sm:$0xf]
        %v5479 = vld [vmem:[%s191 + $0xe8] sm:$0xf]
        %v5480 = vld [vmem:[%s191 + $0xec] sm:$0xf]
        %v5481 = vld [vmem:[%s191 + $0xf0] sm:$0xf]
        %v5482 = vld [vmem:[%s191 + $0xf4] sm:$0xf]
        %v5483 = vld [vmem:[%s191 + $0xf8] sm:$0xf]
        %v5484 = vld [vmem:[%s191 + $0xfc] sm:$0xf]
        %v5485 = vld [vmem:[%s191 + $0x100] sm:$0xf]
        %v5486 = vld [vmem:[%s191 + $0x104] sm:$0xf]
        %s5487 = scalar_lea.vmem %s1, 30
        %v5488 = vld [vmem:[%s5487] sm:$0x3f]
        %v5537 = vunpack.c.l.b16 %v5439
        %v5538 = vunpack.c.l.b16 %v5440
        %v5539 = vunpack.c.l.b16 %v5441
        %v5540 = vunpack.c.l.b16 %v5442
        %v5541 = vunpack.c.l.b16 %v5443
        %v5542 = vunpack.c.l.b16 %v5444
        %v5543 = vunpack.c.l.b16 %v5445
        %v5544 = vunpack.c.l.b16 %v5446
        %v5545 = vunpack.c.l.b16 %v5447
        %v5546 = vunpack.c.l.b16 %v5448
        %v5547 = vunpack.c.l.b16 %v5449
        %v5548 = vunpack.c.l.b16 %v5450
        %v5549 = vunpack.c.l.b16 %v5451
        %v5550 = vunpack.c.l.b16 %v5452
        %v5551 = vunpack.c.l.b16 %v5453
        %v5552 = vunpack.c.l.b16 %v5454
        %v5553 = vunpack.c.l.b16 %v5455
        %v5554 = vunpack.c.l.b16 %v5456
        %v5555 = vunpack.c.l.b16 %v5457
        %v5556 = vunpack.c.l.b16 %v5458
        %v5557 = vunpack.c.l.b16 %v5459
        %v5558 = vunpack.c.l.b16 %v5460
        %v5559 = vunpack.c.l.b16 %v5461
        %v5560 = vunpack.c.l.b16 %v5462
        %v5561 = vunpack.c.l.b16 %v5463
        %v5562 = vunpack.c.l.b16 %v5464
        %v5563 = vunpack.c.l.b16 %v5465
        %v5564 = vunpack.c.l.b16 %v5466
        %v5565 = vunpack.c.l.b16 %v5467
        %v5566 = vunpack.c.l.b16 %v5468
        %v5567 = vunpack.c.l.b16 %v5469
        %v5568 = vunpack.c.l.b16 %v5470
        %v5569 = vunpack.c.l.b16 %v5471
        %v5570 = vunpack.c.l.b16 %v5472
        %v5571 = vunpack.c.l.b16 %v5473
        %v5572 = vunpack.c.l.b16 %v5474
        %v5573 = vunpack.c.l.b16 %v5475
        %v5574 = vunpack.c.l.b16 %v5476
        %v5575 = vunpack.c.l.b16 %v5477
        %v5576 = vunpack.c.l.b16 %v5478
        %v5577 = vunpack.c.l.b16 %v5479
        %v5578 = vunpack.c.l.b16 %v5480
        %v5579 = vunpack.c.l.b16 %v5481
        %v5580 = vunpack.c.l.b16 %v5482
        %v5581 = vunpack.c.l.b16 %v5483
        %v5582 = vunpack.c.l.b16 %v5484
        %v5583 = vunpack.c.l.b16 %v5485
        %v5584 = vunpack.c.l.b16 %v5486
        %v5585 = vpack.c.b16 %v5538, %v5537
        %v5586 = vpack.c.b16 %v5540, %v5539
        %v5587 = vpack.c.b16 %v5542, %v5541
        %v5588 = vpack.c.b16 %v5544, %v5543
        %v5589 = vpack.c.b16 %v5546, %v5545
        %v5590 = vpack.c.b16 %v5548, %v5547
        %v5591 = vpack.c.b16 %v5550, %v5549
        %v5592 = vpack.c.b16 %v5552, %v5551
        %v5593 = vpack.c.b16 %v5554, %v5553
        %v5594 = vpack.c.b16 %v5556, %v5555
        %v5595 = vpack.c.b16 %v5558, %v5557
        %v5596 = vpack.c.b16 %v5560, %v5559
        %v5597 = vpack.c.b16 %v5562, %v5561
        %v5598 = vpack.c.b16 %v5564, %v5563
        %v5599 = vpack.c.b16 %v5566, %v5565
        %v5600 = vpack.c.b16 %v5568, %v5567
        %v5601 = vpack.c.b16 %v5570, %v5569
        %v5602 = vpack.c.b16 %v5572, %v5571
        %v5603 = vpack.c.b16 %v5574, %v5573
        %v5604 = vpack.c.b16 %v5576, %v5575
        %v5605 = vpack.c.b16 %v5578, %v5577
        %v5606 = vpack.c.b16 %v5580, %v5579
        %v5607 = vpack.c.b16 %v5582, %v5581
        %v5608 = vpack.c.b16 %v5584, %v5583
        %v5610 = vcombine.high %v5488, %v5488
        %v5612 = vunpack.c.l.s4 1983009808
        %v5613 = vunpack.c.0.s8 %v5612
        %v5614 = vlaneseq
        %v5615 = vshrl.u32 %v5614, 7
        %v5616 = vsub.s32 %v5613, %v5615
        %v5617 = vrot.slane %v5488, %v5616
        %v5619 = vunpack.c.l.s4 1983009808
        %v5620 = vunpack.c.0.s8 %v5619
        %v5621 = vlaneseq
        %v5622 = vshrl.u32 %v5621, 7
        %v5623 = vsub.s32 %v5620, %v5622
        %v5624 = vrot.slane %v5610, %v5623
        %v5625 = vcombine.high %v5617, %v5617
        %v5627 = vsel %vm379, %v5585, 0
        %v5630 = vsel %vm379, %v5586, 0
        %v5633 = vsel %vm379, %v5587, 0
        %v5636 = vsel %vm379, %v5588, 0
        %v5639 = vsel %vm379, %v5589, 0
        %v5642 = vsel %vm379, %v5590, 0
        %v5645 = vsel %vm379, %v5591, 0
        %v5648 = vsel %vm379, %v5592, 0
        %v5651 = vsel %vm379, %v5593, 0
        %v5654 = vsel %vm379, %v5594, 0
        %v5657 = vsel %vm379, %v5595, 0
        %v5660 = vsel %vm379, %v5596, 0
        %v5663 = vsel %vm379, %v5597, 0
        %v5666 = vsel %vm379, %v5598, 0
        %v5669 = vsel %vm379, %v5599, 0
        %v5672 = vsel %vm379, %v5600, 0
        %v5675 = vsel %vm379, %v5601, 0
        %v5678 = vsel %vm379, %v5602, 0
        %v5681 = vsel %vm379, %v5603, 0
        %v5684 = vsel %vm379, %v5604, 0
        %v5687 = vsel %vm379, %v5605, 0
        %v5690 = vsel %vm379, %v5606, 0
        %v5693 = vsel %vm379, %v5607, 0
        %v5696 = vsel %vm379, %v5608, 0
        %v5699 = vsel %vm452, %v5617, 0
        %v5702 = vsel %vm452, %v5625, 0
        %v5705 = vsel %vm452, %v5624, 0
        %5707 = vmatprep.subr.bf16.mxu0 %v5702
        %5708 = vmatpush1.bf16.msra.mxu0 %v5699
        %5709 = vmatprep.subr.bf16.mxu0 0
        %5710 = vmatpush1.bf16.msra.mxu0 0
        %5711 = vmatprep.subr.bf16.mxu0 0
        %5712 = vmatpush1.bf16.msra.mxu0 0
        %5713 = vmatprep.subr.bf16.mxu0 0
        %5714 = vmatpush1.bf16.msra.mxu0 0
        %5715 = vmatprep.subr.bf16.mxu0 0
        %5716 = vmatpush1.bf16.msra.mxu0 0
        %5717 = vmatprep.subr.bf16.mxu0 0
        %5718 = vmatpush1.bf16.msra.mxu0 0
        %5719 = vmatprep.subr.bf16.mxu0 0
        %5720 = vmatpush1.bf16.msra.mxu0 0
        %5721 = vmatprep.subr.bf16.mxu0 0
        %5722 = vmatpush1.bf16.msra.mxu0 0
        %5723 = vmatprep.subr.bf16.mxu0 0
        %5724 = vmatpush1.bf16.msra.mxu0 0
        %5725 = vmatprep.subr.bf16.mxu0 0
        %5726 = vmatpush1.bf16.msra.mxu0 0
        %5727 = vmatprep.subr.bf16.mxu0 0
        %5728 = vmatpush1.bf16.msra.mxu0 0
        %5729 = vmatprep.subr.bf16.mxu0 0
        %5730 = vmatpush1.bf16.msra.mxu0 0
        %5731 = vmatprep.subr.bf16.mxu0 0
        %5732 = vmatpush1.bf16.msra.mxu0 0
        %5733 = vmatprep.subr.bf16.mxu0 0
        %5734 = vmatpush1.bf16.msra.mxu0 0
        %5735 = vmatprep.subr.bf16.mxu0 0
        %5736 = vmatpush1.bf16.msra.mxu0 0
        %5737 = vmatprep.subr.bf16.mxu0 0
        %5738 = vmatpush1.bf16.msra.mxu0 0
        %5739 = vmatprep.mubr.bf16.mxu0 0
        %5740 = vmatmul.mubr.bf16.gmra.mrb[0].mxu0 %v5627
        %v5741 = vpop.f32.mrb[0].mxu0
        %v5742 = vadd.f32 0.0, %v5741
        %v5743 = vpop.f32.mrb[0].mxu0
        %v5744 = vadd.f32 0.0, %v5743
        %v5745 = vpop.f32.mrb[0].mxu0
        %v5746 = vadd.f32 0.0, %v5745
        %v5747 = vpop.f32.mrb[0].mxu0
        %v5748 = vadd.f32 0.0, %v5747
        %5749 = vmatprep.mubr.bf16.mxu0 0
        %5750 = vmatmul.mubr.bf16.gmra.mrb[0].mxu0 %v5630
        %v5751 = vpop.f32.mrb[0].mxu0
        %v5752 = vadd.f32 0.0, %v5751
        %v5753 = vpop.f32.mrb[0].mxu0
        %v5754 = vadd.f32 0.0, %v5753
        %v5755 = vpop.f32.mrb[0].mxu0
        %v5756 = vadd.f32 0.0, %v5755
        %v5757 = vpop.f32.mrb[0].mxu0
        %v5758 = vadd.f32 0.0, %v5757
        %5759 = vmatprep.mubr.bf16.mxu0 0
        %5760 = vmatmul.mubr.bf16.gmra.mrb[0].mxu0 %v5633
        %v5761 = vpop.f32.mrb[0].mxu0
        %v5762 = vadd.f32 0.0, %v5761
        %v5763 = vpop.f32.mrb[0].mxu0
        %v5764 = vadd.f32 0.0, %v5763
        %v5765 = vpop.f32.mrb[0].mxu0
        %v5766 = vadd.f32 0.0, %v5765
        %v5767 = vpop.f32.mrb[0].mxu0
        %v5768 = vadd.f32 0.0, %v5767
        %5769 = vmatprep.mubr.bf16.mxu0 0
        %5770 = vmatmul.mubr.bf16.gmra.mrb[0].mxu0 %v5636
        %v5771 = vpop.f32.mrb[0].mxu0
        %v5772 = vadd.f32 0.0, %v5771
        %v5773 = vpop.f32.mrb[0].mxu0
        %v5774 = vadd.f32 0.0, %v5773
        %v5775 = vpop.f32.mrb[0].mxu0
        %v5776 = vadd.f32 0.0, %v5775
        %v5777 = vpop.f32.mrb[0].mxu0
        %v5778 = vadd.f32 0.0, %v5777
        %5779 = vmatprep.mubr.bf16.mxu0 0
        %5780 = vmatmul.mubr.bf16.gmra.mrb[0].mxu0 %v5639
        %v5781 = vpop.f32.mrb[0].mxu0
        %v5782 = vadd.f32 0.0, %v5781
        %v5783 = vpop.f32.mrb[0].mxu0
        %v5784 = vadd.f32 0.0, %v5783
        %v5785 = vpop.f32.mrb[0].mxu0
        %v5786 = vadd.f32 0.0, %v5785
        %v5787 = vpop.f32.mrb[0].mxu0
        %v5788 = vadd.f32 0.0, %v5787
        %5789 = vmatprep.mubr.bf16.mxu0 0
        %5790 = vmatmul.mubr.bf16.gmra.mrb[0].mxu0 %v5642
        %v5791 = vpop.f32.mrb[0].mxu0
        %v5792 = vadd.f32 0.0, %v5791
        %v5793 = vpop.f32.mrb[0].mxu0
        %v5794 = vadd.f32 0.0, %v5793
        %v5795 = vpop.f32.mrb[0].mxu0
        %v5796 = vadd.f32 0.0, %v5795
        %v5797 = vpop.f32.mrb[0].mxu0
        %v5798 = vadd.f32 0.0, %v5797
        %5799 = vmatprep.mubr.bf16.mxu0 0
        %5800 = vmatmul.mubr.bf16.gmra.mrb[0].mxu0 %v5645
        %v5801 = vpop.f32.mrb[0].mxu0
        %v5802 = vadd.f32 0.0, %v5801
        %v5803 = vpop.f32.mrb[0].mxu0
        %v5804 = vadd.f32 0.0, %v5803
        %v5805 = vpop.f32.mrb[0].mxu0
        %v5806 = vadd.f32 0.0, %v5805
        %v5807 = vpop.f32.mrb[0].mxu0
        %v5808 = vadd.f32 0.0, %v5807
        %5809 = vmatprep.mubr.bf16.mxu0 0
        %5810 = vmatmul.mubr.bf16.gmra.mrb[0].mxu0 %v5648
        %v5811 = vpop.f32.mrb[0].mxu0
        %v5812 = vadd.f32 0.0, %v5811
        %v5813 = vpop.f32.mrb[0].mxu0
        %v5814 = vadd.f32 0.0, %v5813
        %v5815 = vpop.f32.mrb[0].mxu0
        %v5816 = vadd.f32 0.0, %v5815
        %v5817 = vpop.f32.mrb[0].mxu0
        %v5818 = vadd.f32 0.0, %v5817
        %5819 = vmatprep.mubr.bf16.mxu0 0
        %5820 = vmatmul.mubr.bf16.gmra.mrb[0].mxu0 %v5651
        %v5821 = vpop.f32.mrb[0].mxu0
        %v5822 = vadd.f32 0.0, %v5821
        %v5823 = vpop.f32.mrb[0].mxu0
        %v5824 = vadd.f32 0.0, %v5823
        %v5825 = vpop.f32.mrb[0].mxu0
        %v5826 = vadd.f32 0.0, %v5825
        %v5827 = vpop.f32.mrb[0].mxu0
        %v5828 = vadd.f32 0.0, %v5827
        %5829 = vmatprep.mubr.bf16.mxu0 0
        %5830 = vmatmul.mubr.bf16.gmra.mrb[0].mxu0 %v5654
        %v5831 = vpop.f32.mrb[0].mxu0
        %v5832 = vadd.f32 0.0, %v5831
        %v5833 = vpop.f32.mrb[0].mxu0
        %v5834 = vadd.f32 0.0, %v5833
        %v5835 = vpop.f32.mrb[0].mxu0
        %v5836 = vadd.f32 0.0, %v5835
        %v5837 = vpop.f32.mrb[0].mxu0
        %v5838 = vadd.f32 0.0, %v5837
        %5839 = vmatprep.mubr.bf16.mxu0 0
        %5840 = vmatmul.mubr.bf16.gmra.mrb[0].mxu0 %v5657
        %v5841 = vpop.f32.mrb[0].mxu0
        %v5842 = vadd.f32 0.0, %v5841
        %v5843 = vpop.f32.mrb[0].mxu0
        %v5844 = vadd.f32 0.0, %v5843
        %v5845 = vpop.f32.mrb[0].mxu0
        %v5846 = vadd.f32 0.0, %v5845
        %v5847 = vpop.f32.mrb[0].mxu0
        %v5848 = vadd.f32 0.0, %v5847
        %5849 = vmatprep.mubr.bf16.mxu0 0
        %5850 = vmatmul.mubr.bf16.gmra.mrb[0].mxu0 %v5660
        %v5851 = vpop.f32.mrb[0].mxu0
        %v5852 = vadd.f32 0.0, %v5851
        %v5853 = vpop.f32.mrb[0].mxu0
        %v5854 = vadd.f32 0.0, %v5853
        %v5855 = vpop.f32.mrb[0].mxu0
        %v5856 = vadd.f32 0.0, %v5855
        %v5857 = vpop.f32.mrb[0].mxu0
        %v5858 = vadd.f32 0.0, %v5857
        %5859 = vmatprep.mubr.bf16.mxu0 0
        %5860 = vmatmul.mubr.bf16.gmra.mrb[0].mxu0 %v5663
        %v5861 = vpop.f32.mrb[0].mxu0
        %v5862 = vadd.f32 0.0, %v5861
        %v5863 = vpop.f32.mrb[0].mxu0
        %v5864 = vadd.f32 0.0, %v5863
        %v5865 = vpop.f32.mrb[0].mxu0
        %v5866 = vadd.f32 0.0, %v5865
        %v5867 = vpop.f32.mrb[0].mxu0
        %v5868 = vadd.f32 0.0, %v5867
        %5869 = vmatprep.mubr.bf16.mxu0 0
        %5870 = vmatmul.mubr.bf16.gmra.mrb[0].mxu0 %v5666
        %v5871 = vpop.f32.mrb[0].mxu0
        %v5872 = vadd.f32 0.0, %v5871
        %v5873 = vpop.f32.mrb[0].mxu0
        %v5874 = vadd.f32 0.0, %v5873
        %v5875 = vpop.f32.mrb[0].mxu0
        %v5876 = vadd.f32 0.0, %v5875
        %v5877 = vpop.f32.mrb[0].mxu0
        %v5878 = vadd.f32 0.0, %v5877
        %5879 = vmatprep.mubr.bf16.mxu0 0
        %5880 = vmatmul.mubr.bf16.gmra.mrb[0].mxu0 %v5669
        %v5881 = vpop.f32.mrb[0].mxu0
        %v5882 = vadd.f32 0.0, %v5881
        %v5883 = vpop.f32.mrb[0].mxu0
        %v5884 = vadd.f32 0.0, %v5883
        %v5885 = vpop.f32.mrb[0].mxu0
        %v5886 = vadd.f32 0.0, %v5885
        %v5887 = vpop.f32.mrb[0].mxu0
        %v5888 = vadd.f32 0.0, %v5887
        %5889 = vmatprep.mubr.bf16.mxu0 0
        %5890 = vmatmul.mubr.bf16.gmra.mrb[0].mxu0 %v5672
        %v5891 = vpop.f32.mrb[0].mxu0
        %v5892 = vadd.f32 0.0, %v5891
        %v5893 = vpop.f32.mrb[0].mxu0
        %v5894 = vadd.f32 0.0, %v5893
        %v5895 = vpop.f32.mrb[0].mxu0
        %v5896 = vadd.f32 0.0, %v5895
        %v5897 = vpop.f32.mrb[0].mxu0
        %v5898 = vadd.f32 0.0, %v5897
        %5899 = vmatprep.mubr.bf16.mxu0 0
        %5900 = vmatmul.mubr.bf16.gmra.mrb[0].mxu0 %v5675
        %v5901 = vpop.f32.mrb[0].mxu0
        %v5902 = vadd.f32 0.0, %v5901
        %v5903 = vpop.f32.mrb[0].mxu0
        %v5904 = vadd.f32 0.0, %v5903
        %v5905 = vpop.f32.mrb[0].mxu0
        %v5906 = vadd.f32 0.0, %v5905
        %v5907 = vpop.f32.mrb[0].mxu0
        %v5908 = vadd.f32 0.0, %v5907
        %5909 = vmatprep.mubr.bf16.mxu0 0
        %5910 = vmatmul.mubr.bf16.gmra.mrb[0].mxu0 %v5678
        %v5911 = vpop.f32.mrb[0].mxu0
        %v5912 = vadd.f32 0.0, %v5911
        %v5913 = vpop.f32.mrb[0].mxu0
        %v5914 = vadd.f32 0.0, %v5913
        %v5915 = vpop.f32.mrb[0].mxu0
        %v5916 = vadd.f32 0.0, %v5915
        %v5917 = vpop.f32.mrb[0].mxu0
        %v5918 = vadd.f32 0.0, %v5917
        %5919 = vmatprep.mubr.bf16.mxu0 0
        %5920 = vmatmul.mubr.bf16.gmra.mrb[0].mxu0 %v5681
        %v5921 = vpop.f32.mrb[0].mxu0
        %v5922 = vadd.f32 0.0, %v5921
        %v5923 = vpop.f32.mrb[0].mxu0
        %v5924 = vadd.f32 0.0, %v5923
        %v5925 = vpop.f32.mrb[0].mxu0
        %v5926 = vadd.f32 0.0, %v5925
        %v5927 = vpop.f32.mrb[0].mxu0
        %v5928 = vadd.f32 0.0, %v5927
        %5929 = vmatprep.mubr.bf16.mxu0 0
        %5930 = vmatmul.mubr.bf16.gmra.mrb[0].mxu0 %v5684
        %v5931 = vpop.f32.mrb[0].mxu0
        %v5932 = vadd.f32 0.0, %v5931
        %v5933 = vpop.f32.mrb[0].mxu0
        %v5934 = vadd.f32 0.0, %v5933
        %v5935 = vpop.f32.mrb[0].mxu0
        %v5936 = vadd.f32 0.0, %v5935
        %v5937 = vpop.f32.mrb[0].mxu0
        %v5938 = vadd.f32 0.0, %v5937
        %5939 = vmatprep.mubr.bf16.mxu0 0
        %5940 = vmatmul.mubr.bf16.gmra.mrb[0].mxu0 %v5687
        %v5941 = vpop.f32.mrb[0].mxu0
        %v5942 = vadd.f32 0.0, %v5941
        %v5943 = vpop.f32.mrb[0].mxu0
        %v5944 = vadd.f32 0.0, %v5943
        %v5945 = vpop.f32.mrb[0].mxu0
        %v5946 = vadd.f32 0.0, %v5945
        %v5947 = vpop.f32.mrb[0].mxu0
        %v5948 = vadd.f32 0.0, %v5947
        %5949 = vmatprep.mubr.bf16.mxu0 0
        %5950 = vmatmul.mubr.bf16.gmra.mrb[0].mxu0 %v5690
        %v5951 = vpop.f32.mrb[0].mxu0
        %v5952 = vadd.f32 0.0, %v5951
        %v5953 = vpop.f32.mrb[0].mxu0
        %v5954 = vadd.f32 0.0, %v5953
        %v5955 = vpop.f32.mrb[0].mxu0
        %v5956 = vadd.f32 0.0, %v5955
        %v5957 = vpop.f32.mrb[0].mxu0
        %v5958 = vadd.f32 0.0, %v5957
        %5959 = vmatprep.mubr.bf16.mxu0 0
        %5960 = vmatmul.mubr.bf16.gmra.mrb[0].mxu0 %v5693
        %v5961 = vpop.f32.mrb[0].mxu0
        %v5962 = vadd.f32 0.0, %v5961
        %v5963 = vpop.f32.mrb[0].mxu0
        %v5964 = vadd.f32 0.0, %v5963
        %v5965 = vpop.f32.mrb[0].mxu0
        %v5966 = vadd.f32 0.0, %v5965
        %v5967 = vpop.f32.mrb[0].mxu0
        %v5968 = vadd.f32 0.0, %v5967
        %5969 = vmatprep.mubr.bf16.mxu0 0
        %5970 = vmatmul.mubr.bf16.gmra.mrb[0].mxu0 %v5696
        %v5971 = vpop.f32.mrb[0].mxu0
        %v5972 = vadd.f32 0.0, %v5971
        %v5973 = vpop.f32.mrb[0].mxu0
        %v5974 = vadd.f32 0.0, %v5973
        %v5975 = vpop.f32.mrb[0].mxu0
        %v5976 = vadd.f32 0.0, %v5975
        %v5977 = vpop.f32.mrb[0].mxu0
        %v5978 = vadd.f32 0.0, %v5977
        %5979 = vdwg.mxu0
        %5980 = vmatprep.subr.bf16.mxu0 0
        %5981 = vmatpush1.bf16.msra.mxu0 %v5705
        %5982 = vmatprep.subr.bf16.mxu0 0
        %5983 = vmatpush1.bf16.msra.mxu0 0
        %5984 = vmatprep.subr.bf16.mxu0 0
        %5985 = vmatpush1.bf16.msra.mxu0 0
        %5986 = vmatprep.subr.bf16.mxu0 0
        %5987 = vmatpush1.bf16.msra.mxu0 0
        %5988 = vmatprep.subr.bf16.mxu0 0
        %5989 = vmatpush1.bf16.msra.mxu0 0
        %5990 = vmatprep.subr.bf16.mxu0 0
        %5991 = vmatpush1.bf16.msra.mxu0 0
        %5992 = vmatprep.subr.bf16.mxu0 0
        %5993 = vmatpush1.bf16.msra.mxu0 0
        %5994 = vmatprep.subr.bf16.mxu0 0
        %5995 = vmatpush1.bf16.msra.mxu0 0
        %5996 = vmatprep.subr.bf16.mxu0 0
        %5997 = vmatpush1.bf16.msra.mxu0 0
        %5998 = vmatprep.subr.bf16.mxu0 0
        %5999 = vmatpush1.bf16.msra.mxu0 0
        %6000 = vmatprep.subr.bf16.mxu0 0
        %6001 = vmatpush1.bf16.msra.mxu0 0
        %6002 = vmatprep.subr.bf16.mxu0 0
        %6003 = vmatpush1.bf16.msra.mxu0 0
        %6004 = vmatprep.subr.bf16.mxu0 0
        %6005 = vmatpush1.bf16.msra.mxu0 0
        %6006 = vmatprep.subr.bf16.mxu0 0
        %6007 = vmatpush1.bf16.msra.mxu0 0
        %6008 = vmatprep.subr.bf16.mxu0 0
        %6009 = vmatpush1.bf16.msra.mxu0 0
        %6010 = vmatprep.subr.bf16.mxu0 0
        %6011 = vmatpush1.bf16.msra.mxu0 0
        %6012 = vmatprep.mubr.bf16.mxu0 0
        %6013 = vmatmul.mubr.bf16.gmra.mrb[0].mxu0 %v5627
        %v6014 = vpop.f32.mrb[0].mxu0
        %v6015 = vadd.f32 0.0, %v6014
        %v6016 = vpop.f32.mrb[0].mxu0
        %v6017 = vpop.f32.mrb[0].mxu0
        %v6018 = vadd.f32 0.0, %v6017
        %v6019 = vpop.f32.mrb[0].mxu0
        %6020 = vmatprep.mubr.bf16.mxu0 0
        %6021 = vmatmul.mubr.bf16.gmra.mrb[0].mxu0 %v5630
        %v6022 = vpop.f32.mrb[0].mxu0
        %v6023 = vadd.f32 0.0, %v6022
        %v6024 = vpop.f32.mrb[0].mxu0
        %v6025 = vpop.f32.mrb[0].mxu0
        %v6026 = vadd.f32 0.0, %v6025
        %v6027 = vpop.f32.mrb[0].mxu0
        %6028 = vmatprep.mubr.bf16.mxu0 0
        %6029 = vmatmul.mubr.bf16.gmra.mrb[0].mxu0 %v5633
        %v6030 = vpop.f32.mrb[0].mxu0
        %v6031 = vadd.f32 0.0, %v6030
        %v6032 = vpop.f32.mrb[0].mxu0
        %v6033 = vpop.f32.mrb[0].mxu0
        %v6034 = vadd.f32 0.0, %v6033
        %v6035 = vpop.f32.mrb[0].mxu0
        %6036 = vmatprep.mubr.bf16.mxu0 0
        %6037 = vmatmul.mubr.bf16.gmra.mrb[0].mxu0 %v5636
        %v6038 = vpop.f32.mrb[0].mxu0
        %v6039 = vadd.f32 0.0, %v6038
        %v6040 = vpop.f32.mrb[0].mxu0
        %v6041 = vpop.f32.mrb[0].mxu0
        %v6042 = vadd.f32 0.0, %v6041
        %v6043 = vpop.f32.mrb[0].mxu0
        %6044 = vmatprep.mubr.bf16.mxu0 0
        %6045 = vmatmul.mubr.bf16.gmra.mrb[0].mxu0 %v5639
        %v6046 = vpop.f32.mrb[0].mxu0
        %v6047 = vadd.f32 0.0, %v6046
        %v6048 = vpop.f32.mrb[0].mxu0
        %v6049 = vpop.f32.mrb[0].mxu0
        %v6050 = vadd.f32 0.0, %v6049
        %v6051 = vpop.f32.mrb[0].mxu0
        %6052 = vmatprep.mubr.bf16.mxu0 0
        %6053 = vmatmul.mubr.bf16.gmra.mrb[0].mxu0 %v5642
        %v6054 = vpop.f32.mrb[0].mxu0
        %v6055 = vadd.f32 0.0, %v6054
        %v6056 = vpop.f32.mrb[0].mxu0
        %v6057 = vpop.f32.mrb[0].mxu0
        %v6058 = vadd.f32 0.0, %v6057
        %v6059 = vpop.f32.mrb[0].mxu0
        %6060 = vmatprep.mubr.bf16.mxu0 0
        %6061 = vmatmul.mubr.bf16.gmra.mrb[0].mxu0 %v5645
        %v6062 = vpop.f32.mrb[0].mxu0
        %v6063 = vadd.f32 0.0, %v6062
        %v6064 = vpop.f32.mrb[0].mxu0
        %v6065 = vpop.f32.mrb[0].mxu0
        %v6066 = vadd.f32 0.0, %v6065
        %v6067 = vpop.f32.mrb[0].mxu0
        %6068 = vmatprep.mubr.bf16.mxu0 0
        %6069 = vmatmul.mubr.bf16.gmra.mrb[0].mxu0 %v5648
        %v6070 = vpop.f32.mrb[0].mxu0
        %v6071 = vadd.f32 0.0, %v6070
        %v6072 = vpop.f32.mrb[0].mxu0
        %v6073 = vpop.f32.mrb[0].mxu0
        %v6074 = vadd.f32 0.0, %v6073
        %v6075 = vpop.f32.mrb[0].mxu0
        %6076 = vmatprep.mubr.bf16.mxu0 0
        %6077 = vmatmul.mubr.bf16.gmra.mrb[0].mxu0 %v5651
        %v6078 = vpop.f32.mrb[0].mxu0
        %v6079 = vadd.f32 0.0, %v6078
        %v6080 = vpop.f32.mrb[0].mxu0
        %v6081 = vpop.f32.mrb[0].mxu0
        %v6082 = vadd.f32 0.0, %v6081
        %v6083 = vpop.f32.mrb[0].mxu0
        %6084 = vmatprep.mubr.bf16.mxu0 0
        %6085 = vmatmul.mubr.bf16.gmra.mrb[0].mxu0 %v5654
        %v6086 = vpop.f32.mrb[0].mxu0
        %v6087 = vadd.f32 0.0, %v6086
        %v6088 = vpop.f32.mrb[0].mxu0
        %v6089 = vpop.f32.mrb[0].mxu0
        %v6090 = vadd.f32 0.0, %v6089
        %v6091 = vpop.f32.mrb[0].mxu0
        %6092 = vmatprep.mubr.bf16.mxu0 0
        %6093 = vmatmul.mubr.bf16.gmra.mrb[0].mxu0 %v5657
        %v6094 = vpop.f32.mrb[0].mxu0
        %v6095 = vadd.f32 0.0, %v6094
        %v6096 = vpop.f32.mrb[0].mxu0
        %v6097 = vpop.f32.mrb[0].mxu0
        %v6098 = vadd.f32 0.0, %v6097
        %v6099 = vpop.f32.mrb[0].mxu0
        %6100 = vmatprep.mubr.bf16.mxu0 0
        %6101 = vmatmul.mubr.bf16.gmra.mrb[0].mxu0 %v5660
        %v6102 = vpop.f32.mrb[0].mxu0
        %v6103 = vadd.f32 0.0, %v6102
        %v6104 = vpop.f32.mrb[0].mxu0
        %v6105 = vpop.f32.mrb[0].mxu0
        %v6106 = vadd.f32 0.0, %v6105
        %v6107 = vpop.f32.mrb[0].mxu0
        %6108 = vmatprep.mubr.bf16.mxu0 0
        %6109 = vmatmul.mubr.bf16.gmra.mrb[0].mxu0 %v5663
        %v6110 = vpop.f32.mrb[0].mxu0
        %v6111 = vadd.f32 0.0, %v6110
        %v6112 = vpop.f32.mrb[0].mxu0
        %v6113 = vpop.f32.mrb[0].mxu0
        %v6114 = vadd.f32 0.0, %v6113
        %v6115 = vpop.f32.mrb[0].mxu0
        %6116 = vmatprep.mubr.bf16.mxu0 0
        %6117 = vmatmul.mubr.bf16.gmra.mrb[0].mxu0 %v5666
        %v6118 = vpop.f32.mrb[0].mxu0
        %v6119 = vadd.f32 0.0, %v6118
        %v6120 = vpop.f32.mrb[0].mxu0
        %v6121 = vpop.f32.mrb[0].mxu0
        %v6122 = vadd.f32 0.0, %v6121
        %v6123 = vpop.f32.mrb[0].mxu0
        %6124 = vmatprep.mubr.bf16.mxu0 0
        %6125 = vmatmul.mubr.bf16.gmra.mrb[0].mxu0 %v5669
        %v6126 = vpop.f32.mrb[0].mxu0
        %v6127 = vadd.f32 0.0, %v6126
        %v6128 = vpop.f32.mrb[0].mxu0
        %v6129 = vpop.f32.mrb[0].mxu0
        %v6130 = vadd.f32 0.0, %v6129
        %v6131 = vpop.f32.mrb[0].mxu0
        %6132 = vmatprep.mubr.bf16.mxu0 0
        %6133 = vmatmul.mubr.bf16.gmra.mrb[0].mxu0 %v5672
        %v6134 = vpop.f32.mrb[0].mxu0
        %v6135 = vadd.f32 0.0, %v6134
        %v6136 = vpop.f32.mrb[0].mxu0
        %v6137 = vpop.f32.mrb[0].mxu0
        %v6138 = vadd.f32 0.0, %v6137
        %v6139 = vpop.f32.mrb[0].mxu0
        %6140 = vmatprep.mubr.bf16.mxu0 0
        %6141 = vmatmul.mubr.bf16.gmra.mrb[0].mxu0 %v5675
        %v6142 = vpop.f32.mrb[0].mxu0
        %v6143 = vadd.f32 0.0, %v6142
        %v6144 = vpop.f32.mrb[0].mxu0
        %v6145 = vpop.f32.mrb[0].mxu0
        %v6146 = vadd.f32 0.0, %v6145
        %v6147 = vpop.f32.mrb[0].mxu0
        %6148 = vmatprep.mubr.bf16.mxu0 0
        %6149 = vmatmul.mubr.bf16.gmra.mrb[0].mxu0 %v5678
        %v6150 = vpop.f32.mrb[0].mxu0
        %v6151 = vadd.f32 0.0, %v6150
        %v6152 = vpop.f32.mrb[0].mxu0
        %v6153 = vpop.f32.mrb[0].mxu0
        %v6154 = vadd.f32 0.0, %v6153
        %v6155 = vpop.f32.mrb[0].mxu0
        %6156 = vmatprep.mubr.bf16.mxu0 0
        %6157 = vmatmul.mubr.bf16.gmra.mrb[0].mxu0 %v5681
        %v6158 = vpop.f32.mrb[0].mxu0
        %v6159 = vadd.f32 0.0, %v6158
        %v6160 = vpop.f32.mrb[0].mxu0
        %v6161 = vpop.f32.mrb[0].mxu0
        %v6162 = vadd.f32 0.0, %v6161
        %v6163 = vpop.f32.mrb[0].mxu0
        %6164 = vmatprep.mubr.bf16.mxu0 0
        %6165 = vmatmul.mubr.bf16.gmra.mrb[0].mxu0 %v5684
        %v6166 = vpop.f32.mrb[0].mxu0
        %v6167 = vadd.f32 0.0, %v6166
        %v6168 = vpop.f32.mrb[0].mxu0
        %v6169 = vpop.f32.mrb[0].mxu0
        %v6170 = vadd.f32 0.0, %v6169
        %v6171 = vpop.f32.mrb[0].mxu0
        %6172 = vmatprep.mubr.bf16.mxu0 0
        %6173 = vmatmul.mubr.bf16.gmra.mrb[0].mxu0 %v5687
        %v6174 = vpop.f32.mrb[0].mxu0
        %v6175 = vadd.f32 0.0, %v6174
        %v6176 = vpop.f32.mrb[0].mxu0
        %v6177 = vpop.f32.mrb[0].mxu0
        %v6178 = vadd.f32 0.0, %v6177
        %v6179 = vpop.f32.mrb[0].mxu0
        %6180 = vmatprep.mubr.bf16.mxu0 0
        %6181 = vmatmul.mubr.bf16.gmra.mrb[0].mxu0 %v5690
        %v6182 = vpop.f32.mrb[0].mxu0
        %v6183 = vadd.f32 0.0, %v6182
        %v6184 = vpop.f32.mrb[0].mxu0
        %v6185 = vpop.f32.mrb[0].mxu0
        %v6186 = vadd.f32 0.0, %v6185
        %v6187 = vpop.f32.mrb[0].mxu0
        %6188 = vmatprep.mubr.bf16.mxu0 0
        %6189 = vmatmul.mubr.bf16.gmra.mrb[0].mxu0 %v5693
        %v6190 = vpop.f32.mrb[0].mxu0
        %v6191 = vadd.f32 0.0, %v6190
        %v6192 = vpop.f32.mrb[0].mxu0
        %v6193 = vpop.f32.mrb[0].mxu0
        %v6194 = vadd.f32 0.0, %v6193
        %v6195 = vpop.f32.mrb[0].mxu0
        %6196 = vmatprep.mubr.bf16.mxu0 0
        %6197 = vmatmul.mubr.bf16.gmra.mrb[0].mxu0 %v5696
        %v6198 = vpop.f32.mrb[0].mxu0
        %v6199 = vadd.f32 0.0, %v6198
        %v6200 = vpop.f32.mrb[0].mxu0
        %v6201 = vpop.f32.mrb[0].mxu0
        %v6202 = vadd.f32 0.0, %v6201
        %v6203 = vpop.f32.mrb[0].mxu0
        %6204 = vdwg.mxu0
        %v6205 = vrot.slane %v5742, 2
        %v6206 = vrot.slane %v5746, 2
        %v6207 = vrot.slane %v5752, 2
        %v6208 = vrot.slane %v5756, 2
        %v6209 = vrot.slane %v5762, 2
        %v6210 = vrot.slane %v5766, 2
        %v6211 = vrot.slane %v5772, 2
        %v6212 = vrot.slane %v5776, 2
        %v6213 = vrot.slane %v5782, 2
        %v6214 = vrot.slane %v5786, 2
        %v6215 = vrot.slane %v5792, 2
        %v6216 = vrot.slane %v5796, 2
        %v6217 = vrot.slane %v5802, 2
        %v6218 = vrot.slane %v5806, 2
        %v6219 = vrot.slane %v5812, 2
        %v6220 = vrot.slane %v5816, 2
        %v6221 = vrot.slane %v5822, 2
        %v6222 = vrot.slane %v5826, 2
        %v6223 = vrot.slane %v5832, 2
        %v6224 = vrot.slane %v5836, 2
        %v6225 = vrot.slane %v5842, 2
        %v6226 = vrot.slane %v5846, 2
        %v6227 = vrot.slane %v5852, 2
        %v6228 = vrot.slane %v5856, 2
        %v6229 = vrot.slane %v5862, 2
        %v6230 = vrot.slane %v5866, 2
        %v6231 = vrot.slane %v5872, 2
        %v6232 = vrot.slane %v5876, 2
        %v6233 = vrot.slane %v5882, 2
        %v6234 = vrot.slane %v5886, 2
        %v6235 = vrot.slane %v5892, 2
        %v6236 = vrot.slane %v5896, 2
        %v6237 = vrot.slane %v5902, 2
        %v6238 = vrot.slane %v5906, 2
        %v6239 = vrot.slane %v5912, 2
        %v6240 = vrot.slane %v5916, 2
        %v6241 = vrot.slane %v5922, 2
        %v6242 = vrot.slane %v5926, 2
        %v6243 = vrot.slane %v5932, 2
        %v6244 = vrot.slane %v5936, 2
        %v6245 = vrot.slane %v5942, 2
        %v6246 = vrot.slane %v5946, 2
        %v6247 = vrot.slane %v5952, 2
        %v6248 = vrot.slane %v5956, 2
        %v6249 = vrot.slane %v5962, 2
        %v6250 = vrot.slane %v5966, 2
        %v6251 = vrot.slane %v5972, 2
        %v6252 = vrot.slane %v5976, 2
        %v6253 = vsel %vm4287, %v6251, %v6252
        %v6254 = vsel %vm4287, %v6250, %v6251
        %v6255 = vsel %vm4287, %v6248, %v6249
        %v6256 = vsel %vm4287, %v6247, %v6248
        %v6257 = vsel %vm4287, %v6245, %v6246
        %v6258 = vsel %vm4287, %v6244, %v6245
        %v6259 = vsel %vm4287, %v6242, %v6243
        %v6260 = vsel %vm4287, %v6241, %v6242
        %v6261 = vsel %vm4287, %v6239, %v6240
        %v6262 = vsel %vm4287, %v6238, %v6239
        %v6263 = vsel %vm4287, %v6236, %v6237
        %v6264 = vsel %vm4287, %v6235, %v6236
        %v6265 = vsel %vm4287, %v6233, %v6234
        %v6266 = vsel %vm4287, %v6232, %v6233
        %v6267 = vsel %vm4287, %v6230, %v6231
        %v6268 = vsel %vm4287, %v6229, %v6230
        %v6269 = vsel %vm4287, %v6227, %v6228
        %v6270 = vsel %vm4287, %v6226, %v6227
        %v6271 = vsel %vm4287, %v6224, %v6225
        %v6272 = vsel %vm4287, %v6223, %v6224
        %v6273 = vsel %vm4287, %v6221, %v6222
        %v6274 = vsel %vm4287, %v6220, %v6221
        %v6275 = vsel %vm4287, %v6218, %v6219
        %v6276 = vsel %vm4287, %v6217, %v6218
        %v6277 = vsel %vm4287, %v6215, %v6216
        %v6278 = vsel %vm4287, %v6214, %v6215
        %v6279 = vsel %vm4287, %v6212, %v6213
        %v6280 = vsel %vm4287, %v6211, %v6212
        %v6281 = vsel %vm4287, %v6209, %v6210
        %v6282 = vsel %vm4287, %v6208, %v6209
        %v6283 = vsel %vm4287, %v6206, %v6207
        %v6284 = vsel %vm4287, %v6205, %v6206
        %v6285 = vrot.slane %v5744, 4
        %v6286 = vrot.slane %v5748, 4
        %v6287 = vrot.slane %v5754, 4
        %v6288 = vrot.slane %v5758, 4
        %v6289 = vrot.slane %v5764, 4
        %v6290 = vrot.slane %v5768, 4
        %v6291 = vrot.slane %v5774, 4
        %v6292 = vrot.slane %v5778, 4
        %v6293 = vrot.slane %v5784, 4
        %v6294 = vrot.slane %v5788, 4
        %v6295 = vrot.slane %v5794, 4
        %v6296 = vrot.slane %v5798, 4
        %v6297 = vrot.slane %v5804, 4
        %v6298 = vrot.slane %v5808, 4
        %v6299 = vrot.slane %v5814, 4
        %v6300 = vrot.slane %v5818, 4
        %v6301 = vrot.slane %v5824, 4
        %v6302 = vrot.slane %v5828, 4
        %v6303 = vrot.slane %v5834, 4
        %v6304 = vrot.slane %v5838, 4
        %v6305 = vrot.slane %v5844, 4
        %v6306 = vrot.slane %v5848, 4
        %v6307 = vrot.slane %v5854, 4
        %v6308 = vrot.slane %v5858, 4
        %v6309 = vrot.slane %v5864, 4
        %v6310 = vrot.slane %v5868, 4
        %v6311 = vrot.slane %v5874, 4
        %v6312 = vrot.slane %v5878, 4
        %v6313 = vrot.slane %v5884, 4
        %v6314 = vrot.slane %v5888, 4
        %v6315 = vrot.slane %v5894, 4
        %v6316 = vrot.slane %v5898, 4
        %v6317 = vrot.slane %v5904, 4
        %v6318 = vrot.slane %v5908, 4
        %v6319 = vrot.slane %v5914, 4
        %v6320 = vrot.slane %v5918, 4
        %v6321 = vrot.slane %v5924, 4
        %v6322 = vrot.slane %v5928, 4
        %v6323 = vrot.slane %v5934, 4
        %v6324 = vrot.slane %v5938, 4
        %v6325 = vrot.slane %v5944, 4
        %v6326 = vrot.slane %v5948, 4
        %v6327 = vrot.slane %v5954, 4
        %v6328 = vrot.slane %v5958, 4
        %v6329 = vrot.slane %v5964, 4
        %v6330 = vrot.slane %v5968, 4
        %v6331 = vrot.slane %v5974, 4
        %v6332 = vrot.slane %v5978, 4
        %v6333 = vsel %vm1091, %v6331, %v6332
        %v6334 = vsel %vm1091, %v6330, %v6331
        %v6335 = vsel %vm1091, %v6328, %v6329
        %v6336 = vsel %vm1091, %v6327, %v6328
        %v6337 = vsel %vm1091, %v6325, %v6326
        %v6338 = vsel %vm1091, %v6324, %v6325
        %v6339 = vsel %vm1091, %v6322, %v6323
        %v6340 = vsel %vm1091, %v6321, %v6322
        %v6341 = vsel %vm1091, %v6319, %v6320
        %v6342 = vsel %vm1091, %v6318, %v6319
        %v6343 = vsel %vm1091, %v6316, %v6317
        %v6344 = vsel %vm1091, %v6315, %v6316
        %v6345 = vsel %vm1091, %v6313, %v6314
        %v6346 = vsel %vm1091, %v6312, %v6313
        %v6347 = vsel %vm1091, %v6310, %v6311
        %v6348 = vsel %vm1091, %v6309, %v6310
        %v6349 = vsel %vm1091, %v6307, %v6308
        %v6350 = vsel %vm1091, %v6306, %v6307
        %v6351 = vsel %vm1091, %v6304, %v6305
        %v6352 = vsel %vm1091, %v6303, %v6304
        %v6353 = vsel %vm1091, %v6301, %v6302
        %v6354 = vsel %vm1091, %v6300, %v6301
        %v6355 = vsel %vm1091, %v6298, %v6299
        %v6356 = vsel %vm1091, %v6297, %v6298
        %v6357 = vsel %vm1091, %v6295, %v6296
        %v6358 = vsel %vm1091, %v6294, %v6295
        %v6359 = vsel %vm1091, %v6292, %v6293
        %v6360 = vsel %vm1091, %v6291, %v6292
        %v6361 = vsel %vm1091, %v6289, %v6290
        %v6362 = vsel %vm1091, %v6288, %v6289
        %v6363 = vsel %vm1091, %v6286, %v6287
        %v6364 = vsel %vm1091, %v6285, %v6286
        %v6365 = vadd.f32 %v6284, %v6364
        %v6366 = vadd.f32 %v6283, %v6363
        %v6367 = vadd.f32 %v6282, %v6362
        %v6368 = vadd.f32 %v6281, %v6361
        %v6369 = vadd.f32 %v6280, %v6360
        %v6370 = vadd.f32 %v6279, %v6359
        %v6371 = vadd.f32 %v6278, %v6358
        %v6372 = vadd.f32 %v6277, %v6357
        %v6373 = vadd.f32 %v6276, %v6356
        %v6374 = vadd.f32 %v6275, %v6355
        %v6375 = vadd.f32 %v6274, %v6354
        %v6376 = vadd.f32 %v6273, %v6353
        %v6377 = vadd.f32 %v6272, %v6352
        %v6378 = vadd.f32 %v6271, %v6351
        %v6379 = vadd.f32 %v6270, %v6350
        %v6380 = vadd.f32 %v6269, %v6349
        %v6381 = vadd.f32 %v6268, %v6348
        %v6382 = vadd.f32 %v6267, %v6347
        %v6383 = vadd.f32 %v6266, %v6346
        %v6384 = vadd.f32 %v6265, %v6345
        %v6385 = vadd.f32 %v6264, %v6344
        %v6386 = vadd.f32 %v6263, %v6343
        %v6387 = vadd.f32 %v6262, %v6342
        %v6388 = vadd.f32 %v6261, %v6341
        %v6389 = vadd.f32 %v6260, %v6340
        %v6390 = vadd.f32 %v6259, %v6339
        %v6391 = vadd.f32 %v6258, %v6338
        %v6392 = vadd.f32 %v6257, %v6337
        %v6393 = vadd.f32 %v6256, %v6336
        %v6394 = vadd.f32 %v6255, %v6335
        %v6395 = vadd.f32 %v6254, %v6334
        %v6396 = vadd.f32 %v6253, %v6333
        %v6397 = vrot.slane %v6015, 6
        %v6398 = vrot.slane %v6018, 6
        %v6399 = vrot.slane %v6023, 6
        %v6400 = vrot.slane %v6026, 6
        %v6401 = vrot.slane %v6031, 6
        %v6402 = vrot.slane %v6034, 6
        %v6403 = vrot.slane %v6039, 6
        %v6404 = vrot.slane %v6042, 6
        %v6405 = vrot.slane %v6047, 6
        %v6406 = vrot.slane %v6050, 6
        %v6407 = vrot.slane %v6055, 6
        %v6408 = vrot.slane %v6058, 6
        %v6409 = vrot.slane %v6063, 6
        %v6410 = vrot.slane %v6066, 6
        %v6411 = vrot.slane %v6071, 6
        %v6412 = vrot.slane %v6074, 6
        %v6413 = vrot.slane %v6079, 6
        %v6414 = vrot.slane %v6082, 6
        %v6415 = vrot.slane %v6087, 6
        %v6416 = vrot.slane %v6090, 6
        %v6417 = vrot.slane %v6095, 6
        %v6418 = vrot.slane %v6098, 6
        %v6419 = vrot.slane %v6103, 6
        %v6420 = vrot.slane %v6106, 6
        %v6421 = vrot.slane %v6111, 6
        %v6422 = vrot.slane %v6114, 6
        %v6423 = vrot.slane %v6119, 6
        %v6424 = vrot.slane %v6122, 6
        %v6425 = vrot.slane %v6127, 6
        %v6426 = vrot.slane %v6130, 6
        %v6427 = vrot.slane %v6135, 6
        %v6428 = vrot.slane %v6138, 6
        %v6429 = vrot.slane %v6143, 6
        %v6430 = vrot.slane %v6146, 6
        %v6431 = vrot.slane %v6151, 6
        %v6432 = vrot.slane %v6154, 6
        %v6433 = vrot.slane %v6159, 6
        %v6434 = vrot.slane %v6162, 6
        %v6435 = vrot.slane %v6167, 6
        %v6436 = vrot.slane %v6170, 6
        %v6437 = vrot.slane %v6175, 6
        %v6438 = vrot.slane %v6178, 6
        %v6439 = vrot.slane %v6183, 6
        %v6440 = vrot.slane %v6186, 6
        %v6441 = vrot.slane %v6191, 6
        %v6442 = vrot.slane %v6194, 6
        %v6443 = vrot.slane %v6199, 6
        %v6444 = vrot.slane %v6202, 6
        %v6445 = vsel %vm4480, %v6443, %v6444
        %v6446 = vsel %vm4480, %v6442, %v6443
        %v6447 = vsel %vm4480, %v6440, %v6441
        %v6448 = vsel %vm4480, %v6439, %v6440
        %v6449 = vsel %vm4480, %v6437, %v6438
        %v6450 = vsel %vm4480, %v6436, %v6437
        %v6451 = vsel %vm4480, %v6434, %v6435
        %v6452 = vsel %vm4480, %v6433, %v6434
        %v6453 = vsel %vm4480, %v6431, %v6432
        %v6454 = vsel %vm4480, %v6430, %v6431
        %v6455 = vsel %vm4480, %v6428, %v6429
        %v6456 = vsel %vm4480, %v6427, %v6428
        %v6457 = vsel %vm4480, %v6425, %v6426
        %v6458 = vsel %vm4480, %v6424, %v6425
        %v6459 = vsel %vm4480, %v6422, %v6423
        %v6460 = vsel %vm4480, %v6421, %v6422
        %v6461 = vsel %vm4480, %v6419, %v6420
        %v6462 = vsel %vm4480, %v6418, %v6419
        %v6463 = vsel %vm4480, %v6416, %v6417
        %v6464 = vsel %vm4480, %v6415, %v6416
        %v6465 = vsel %vm4480, %v6413, %v6414
        %v6466 = vsel %vm4480, %v6412, %v6413
        %v6467 = vsel %vm4480, %v6410, %v6411
        %v6468 = vsel %vm4480, %v6409, %v6410
        %v6469 = vsel %vm4480, %v6407, %v6408
        %v6470 = vsel %vm4480, %v6406, %v6407
        %v6471 = vsel %vm4480, %v6404, %v6405
        %v6472 = vsel %vm4480, %v6403, %v6404
        %v6473 = vsel %vm4480, %v6401, %v6402
        %v6474 = vsel %vm4480, %v6400, %v6401
        %v6475 = vsel %vm4480, %v6398, %v6399
        %v6476 = vsel %vm4480, %v6397, %v6398
        %v6477 = vadd.f32 %v6365, %v6476
        %v6478 = vadd.f32 %v6366, %v6475
        %v6479 = vadd.f32 %v6367, %v6474
        %v6480 = vadd.f32 %v6368, %v6473
        %v6481 = vadd.f32 %v6369, %v6472
        %v6482 = vadd.f32 %v6370, %v6471
        %v6483 = vadd.f32 %v6371, %v6470
        %v6484 = vadd.f32 %v6372, %v6469
        %v6485 = vadd.f32 %v6373, %v6468
        %v6486 = vadd.f32 %v6374, %v6467
        %v6487 = vadd.f32 %v6375, %v6466
        %v6488 = vadd.f32 %v6376, %v6465
        %v6489 = vadd.f32 %v6377, %v6464
        %v6490 = vadd.f32 %v6378, %v6463
        %v6491 = vadd.f32 %v6379, %v6462
        %v6492 = vadd.f32 %v6380, %v6461
        %v6493 = vadd.f32 %v6381, %v6460
        %v6494 = vadd.f32 %v6382, %v6459
        %v6495 = vadd.f32 %v6383, %v6458
        %v6496 = vadd.f32 %v6384, %v6457
        %v6497 = vadd.f32 %v6385, %v6456
        %v6498 = vadd.f32 %v6386, %v6455
        %v6499 = vadd.f32 %v6387, %v6454
        %v6500 = vadd.f32 %v6388, %v6453
        %v6501 = vadd.f32 %v6389, %v6452
        %v6502 = vadd.f32 %v6390, %v6451
        %v6503 = vadd.f32 %v6391, %v6450
        %v6504 = vadd.f32 %v6392, %v6449
        %v6505 = vadd.f32 %v6393, %v6448
        %v6506 = vadd.f32 %v6394, %v6447
        %v6507 = vadd.f32 %v6395, %v6446
        %v6508 = vadd.f32 %v6396, %v6445
        %v6509 = vadd.f32 %v5407, %v6477
        %v6510 = vadd.f32 %v5408, %v6478
        %v6511 = vadd.f32 %v5409, %v6479
        %v6512 = vadd.f32 %v5410, %v6480
        %v6513 = vadd.f32 %v5411, %v6481
        %v6514 = vadd.f32 %v5412, %v6482
        %v6515 = vadd.f32 %v5413, %v6483
        %v6516 = vadd.f32 %v5414, %v6484
        %v6517 = vadd.f32 %v5415, %v6485
        %v6518 = vadd.f32 %v5416, %v6486
        %v6519 = vadd.f32 %v5417, %v6487
        %v6520 = vadd.f32 %v5418, %v6488
        %v6521 = vadd.f32 %v5419, %v6489
        %v6522 = vadd.f32 %v5420, %v6490
        %v6523 = vadd.f32 %v5421, %v6491
        %v6524 = vadd.f32 %v5422, %v6492
        %v6525 = vadd.f32 %v5423, %v6493
        %v6526 = vadd.f32 %v5424, %v6494
        %v6527 = vadd.f32 %v5425, %v6495
        %v6528 = vadd.f32 %v5426, %v6496
        %v6529 = vadd.f32 %v5427, %v6497
        %v6530 = vadd.f32 %v5428, %v6498
        %v6531 = vadd.f32 %v5429, %v6499
        %v6532 = vadd.f32 %v5430, %v6500
        %v6533 = vadd.f32 %v5431, %v6501
        %v6534 = vadd.f32 %v5432, %v6502
        %v6535 = vadd.f32 %v5433, %v6503
        %v6536 = vadd.f32 %v5434, %v6504
        %v6537 = vadd.f32 %v5435, %v6505
        %v6538 = vadd.f32 %v5436, %v6506
        %v6539 = vadd.f32 %v5437, %v6507
        %v6540 = vadd.f32 %v5438, %v6508
        %v6541 = vld [vmem:[%s191] sm:$0xf]
        %v6542 = vld [vmem:[%s191 + $0x4] sm:$0xf]
        %v6543 = vld [vmem:[%s191 + $0x8] sm:$0xf]
        %v6544 = vld [vmem:[%s191 + $0xc] sm:$0xf]
        %v6545 = vld [vmem:[%s191 + $0x10] sm:$0xf]
        %v6546 = vld [vmem:[%s191 + $0x14] sm:$0xf]
        %v6547 = vld [vmem:[%s191 + $0x18] sm:$0xf]
        %v6548 = vld [vmem:[%s191 + $0x1c] sm:$0xf]
        %v6549 = vld [vmem:[%s191 + $0x20] sm:$0xf]
        %v6550 = vld [vmem:[%s191 + $0x24] sm:$0xf]
        %v6551 = vld [vmem:[%s191 + $0x28] sm:$0xf]
        %v6552 = vld [vmem:[%s191 + $0x2c] sm:$0xf]
        %v6553 = vld [vmem:[%s191 + $0x30] sm:$0xf]
        %v6554 = vld [vmem:[%s191 + $0x34] sm:$0xf]
        %v6555 = vld [vmem:[%s191 + $0x38] sm:$0xf]
        %v6556 = vld [vmem:[%s191 + $0x3c] sm:$0xf]
        %v6557 = vld [vmem:[%s191 + $0x40] sm:$0xf]
        %v6558 = vld [vmem:[%s191 + $0x44] sm:$0xf]
        %v6559 = vld [vmem:[%s191 + $0x48] sm:$0xf]
        %v6560 = vld [vmem:[%s191 + $0x4c] sm:$0xf]
        %v6561 = vld [vmem:[%s191 + $0x50] sm:$0xf]
        %v6562 = vld [vmem:[%s191 + $0x54] sm:$0xf]
        %v6563 = vld [vmem:[%s191 + $0x58] sm:$0xf]
        %v6564 = vld [vmem:[%s191 + $0x5c] sm:$0xf]
        %v6565 = vld [vmem:[%s191 + $0x60] sm:$0xf]
        %v6566 = vld [vmem:[%s191 + $0x64] sm:$0xf]
        %v6567 = vld [vmem:[%s191 + $0x68] sm:$0xf]
        %v6568 = vld [vmem:[%s191 + $0x6c] sm:$0xf]
        %v6569 = vld [vmem:[%s191 + $0x70] sm:$0xf]
        %v6570 = vld [vmem:[%s191 + $0x74] sm:$0xf]
        %v6571 = vld [vmem:[%s191 + $0x78] sm:$0xf]
        %v6572 = vld [vmem:[%s191 + $0x7c] sm:$0xf]
        %v6573 = vld [vmem:[%s191 + $0x80] sm:$0xf]
        %v6574 = vld [vmem:[%s191 + $0x84] sm:$0xf]
        %v6575 = vld [vmem:[%s191 + $0x88] sm:$0xf]
        %v6576 = vld [vmem:[%s191 + $0x8c] sm:$0xf]
        %v6577 = vld [vmem:[%s191 + $0x90] sm:$0xf]
        %v6578 = vld [vmem:[%s191 + $0x94] sm:$0xf]
        %v6579 = vld [vmem:[%s191 + $0x98] sm:$0xf]
        %v6580 = vld [vmem:[%s191 + $0x9c] sm:$0xf]
        %v6581 = vld [vmem:[%s191 + $0xa0] sm:$0xf]
        %v6582 = vld [vmem:[%s191 + $0xa4] sm:$0xf]
        %v6583 = vld [vmem:[%s191 + $0xa8] sm:$0xf]
        %v6584 = vld [vmem:[%s191 + $0xac] sm:$0xf]
        %v6585 = vld [vmem:[%s191 + $0xb0] sm:$0xf]
        %v6586 = vld [vmem:[%s191 + $0xb4] sm:$0xf]
        %v6587 = vld [vmem:[%s191 + $0xb8] sm:$0xf]
        %v6588 = vld [vmem:[%s191 + $0xbc] sm:$0xf]
        %s6589 = scalar_lea.vmem %s1, 36
        %v6590 = vld [vmem:[%s6589] sm:$0x3f]
        %v6639 = vunpack.c.l.b16 %v6541
        %v6640 = vunpack.c.l.b16 %v6542
        %v6641 = vunpack.c.l.b16 %v6543
        %v6642 = vunpack.c.l.b16 %v6544
        %v6643 = vunpack.c.l.b16 %v6545
        %v6644 = vunpack.c.l.b16 %v6546
        %v6645 = vunpack.c.l.b16 %v6547
        %v6646 = vunpack.c.l.b16 %v6548
        %v6647 = vunpack.c.l.b16 %v6549
        %v6648 = vunpack.c.l.b16 %v6550
        %v6649 = vunpack.c.l.b16 %v6551
        %v6650 = vunpack.c.l.b16 %v6552
        %v6651 = vunpack.c.l.b16 %v6553
        %v6652 = vunpack.c.l.b16 %v6554
        %v6653 = vunpack.c.l.b16 %v6555
        %v6654 = vunpack.c.l.b16 %v6556
        %v6655 = vunpack.c.l.b16 %v6557
        %v6656 = vunpack.c.l.b16 %v6558
        %v6657 = vunpack.c.l.b16 %v6559
        %v6658 = vunpack.c.l.b16 %v6560
        %v6659 = vunpack.c.l.b16 %v6561
        %v6660 = vunpack.c.l.b16 %v6562
        %v6661 = vunpack.c.l.b16 %v6563
        %v6662 = vunpack.c.l.b16 %v6564
        %v6663 = vunpack.c.l.b16 %v6565
        %v6664 = vunpack.c.l.b16 %v6566
        %v6665 = vunpack.c.l.b16 %v6567
        %v6666 = vunpack.c.l.b16 %v6568
        %v6667 = vunpack.c.l.b16 %v6569
        %v6668 = vunpack.c.l.b16 %v6570
        %v6669 = vunpack.c.l.b16 %v6571
        %v6670 = vunpack.c.l.b16 %v6572
        %v6671 = vunpack.c.l.b16 %v6573
        %v6672 = vunpack.c.l.b16 %v6574
        %v6673 = vunpack.c.l.b16 %v6575
        %v6674 = vunpack.c.l.b16 %v6576
        %v6675 = vunpack.c.l.b16 %v6577
        %v6676 = vunpack.c.l.b16 %v6578
        %v6677 = vunpack.c.l.b16 %v6579
        %v6678 = vunpack.c.l.b16 %v6580
        %v6679 = vunpack.c.l.b16 %v6581
        %v6680 = vunpack.c.l.b16 %v6582
        %v6681 = vunpack.c.l.b16 %v6583
        %v6682 = vunpack.c.l.b16 %v6584
        %v6683 = vunpack.c.l.b16 %v6585
        %v6684 = vunpack.c.l.b16 %v6586
        %v6685 = vunpack.c.l.b16 %v6587
        %v6686 = vunpack.c.l.b16 %v6588
        %v6687 = vpack.c.b16 %v6640, %v6639
        %v6688 = vpack.c.b16 %v6642, %v6641
        %v6689 = vpack.c.b16 %v6644, %v6643
        %v6690 = vpack.c.b16 %v6646, %v6645
        %v6691 = vpack.c.b16 %v6648, %v6647
        %v6692 = vpack.c.b16 %v6650, %v6649
        %v6693 = vpack.c.b16 %v6652, %v6651
        %v6694 = vpack.c.b16 %v6654, %v6653
        %v6695 = vpack.c.b16 %v6656, %v6655
        %v6696 = vpack.c.b16 %v6658, %v6657
        %v6697 = vpack.c.b16 %v6660, %v6659
        %v6698 = vpack.c.b16 %v6662, %v6661
        %v6699 = vpack.c.b16 %v6664, %v6663
        %v6700 = vpack.c.b16 %v6666, %v6665
        %v6701 = vpack.c.b16 %v6668, %v6667
        %v6702 = vpack.c.b16 %v6670, %v6669
        %v6703 = vpack.c.b16 %v6672, %v6671
        %v6704 = vpack.c.b16 %v6674, %v6673
        %v6705 = vpack.c.b16 %v6676, %v6675
        %v6706 = vpack.c.b16 %v6678, %v6677
        %v6707 = vpack.c.b16 %v6680, %v6679
        %v6708 = vpack.c.b16 %v6682, %v6681
        %v6709 = vpack.c.b16 %v6684, %v6683
        %v6710 = vpack.c.b16 %v6686, %v6685
        %v6712 = vcombine.high %v6590, %v6590
        %v6714 = vunpack.c.l.s4 1983009808
        %v6715 = vunpack.c.0.s8 %v6714
        %v6716 = vlaneseq
        %v6717 = vshrl.u32 %v6716, 7
        %v6718 = vsub.s32 %v6715, %v6717
        %v6719 = vrot.slane %v6590, %v6718
        %v6721 = vunpack.c.l.s4 1983009808
        %v6722 = vunpack.c.0.s8 %v6721
        %v6723 = vlaneseq
        %v6724 = vshrl.u32 %v6723, 7
        %v6725 = vsub.s32 %v6722, %v6724
        %v6726 = vrot.slane %v6712, %v6725
        %v6727 = vcombine.high %v6719, %v6719
        %v6729 = vsel %vm379, %v6687, 0
        %v6732 = vsel %vm379, %v6688, 0
        %v6735 = vsel %vm379, %v6689, 0
        %v6738 = vsel %vm379, %v6690, 0
        %v6741 = vsel %vm379, %v6691, 0
        %v6744 = vsel %vm379, %v6692, 0
        %v6747 = vsel %vm379, %v6693, 0
        %v6750 = vsel %vm379, %v6694, 0
        %v6753 = vsel %vm379, %v6695, 0
        %v6756 = vsel %vm379, %v6696, 0
        %v6759 = vsel %vm379, %v6697, 0
        %v6762 = vsel %vm379, %v6698, 0
        %v6765 = vsel %vm379, %v6699, 0
        %v6768 = vsel %vm379, %v6700, 0
        %v6771 = vsel %vm379, %v6701, 0
        %v6774 = vsel %vm379, %v6702, 0
        %v6777 = vsel %vm379, %v6703, 0
        %v6780 = vsel %vm379, %v6704, 0
        %v6783 = vsel %vm379, %v6705, 0
        %v6786 = vsel %vm379, %v6706, 0
        %v6789 = vsel %vm379, %v6707, 0
        %v6792 = vsel %vm379, %v6708, 0
        %v6795 = vsel %vm379, %v6709, 0
        %v6798 = vsel %vm379, %v6710, 0
        %v6801 = vsel %vm452, %v6719, 0
        %v6804 = vsel %vm452, %v6727, 0
        %v6807 = vsel %vm452, %v6726, 0
        %6809 = vmatprep.subr.bf16.mxu0 %v6804
        %6810 = vmatpush1.bf16.msra.mxu0 %v6801
        %6811 = vmatprep.subr.bf16.mxu0 0
        %6812 = vmatpush1.bf16.msra.mxu0 0
        %6813 = vmatprep.subr.bf16.mxu0 0
        %6814 = vmatpush1.bf16.msra.mxu0 0
        %6815 = vmatprep.subr.bf16.mxu0 0
        %6816 = vmatpush1.bf16.msra.mxu0 0
        %6817 = vmatprep.subr.bf16.mxu0 0
        %6818 = vmatpush1.bf16.msra.mxu0 0
        %6819 = vmatprep.subr.bf16.mxu0 0
        %6820 = vmatpush1.bf16.msra.mxu0 0
        %6821 = vmatprep.subr.bf16.mxu0 0
        %6822 = vmatpush1.bf16.msra.mxu0 0
        %6823 = vmatprep.subr.bf16.mxu0 0
        %6824 = vmatpush1.bf16.msra.mxu0 0
        %6825 = vmatprep.subr.bf16.mxu0 0
        %6826 = vmatpush1.bf16.msra.mxu0 0
        %6827 = vmatprep.subr.bf16.mxu0 0
        %6828 = vmatpush1.bf16.msra.mxu0 0
        %6829 = vmatprep.subr.bf16.mxu0 0
        %6830 = vmatpush1.bf16.msra.mxu0 0
        %6831 = vmatprep.subr.bf16.mxu0 0
        %6832 = vmatpush1.bf16.msra.mxu0 0
        %6833 = vmatprep.subr.bf16.mxu0 0
        %6834 = vmatpush1.bf16.msra.mxu0 0
        %6835 = vmatprep.subr.bf16.mxu0 0
        %6836 = vmatpush1.bf16.msra.mxu0 0
        %6837 = vmatprep.subr.bf16.mxu0 0
        %6838 = vmatpush1.bf16.msra.mxu0 0
        %6839 = vmatprep.subr.bf16.mxu0 0
        %6840 = vmatpush1.bf16.msra.mxu0 0
        %6841 = vmatprep.mubr.bf16.mxu0 0
        %6842 = vmatmul.mubr.bf16.gmra.mrb[0].mxu0 %v6729
        %v6843 = vpop.f32.mrb[0].mxu0
        %v6844 = vadd.f32 0.0, %v6843
        %v6845 = vpop.f32.mrb[0].mxu0
        %v6846 = vadd.f32 0.0, %v6845
        %v6847 = vpop.f32.mrb[0].mxu0
        %v6848 = vadd.f32 0.0, %v6847
        %v6849 = vpop.f32.mrb[0].mxu0
        %v6850 = vadd.f32 0.0, %v6849
        %6851 = vmatprep.mubr.bf16.mxu0 0
        %6852 = vmatmul.mubr.bf16.gmra.mrb[0].mxu0 %v6732
        %v6853 = vpop.f32.mrb[0].mxu0
        %v6854 = vpop.f32.mrb[0].mxu0
        %v6855 = vadd.f32 0.0, %v6854
        %v6856 = vpop.f32.mrb[0].mxu0
        %v6857 = vadd.f32 0.0, %v6856
        %v6858 = vpop.f32.mrb[0].mxu0
        %v6859 = vadd.f32 0.0, %v6858
        %6860 = vmatprep.mubr.bf16.mxu0 0
        %6861 = vmatmul.mubr.bf16.gmra.mrb[0].mxu0 %v6735
        %v6862 = vpop.f32.mrb[0].mxu0
        %v6863 = vadd.f32 0.0, %v6862
        %v6864 = vpop.f32.mrb[0].mxu0
        %v6865 = vadd.f32 0.0, %v6864
        %v6866 = vpop.f32.mrb[0].mxu0
        %v6867 = vpop.f32.mrb[0].mxu0
        %v6868 = vadd.f32 0.0, %v6867
        %6869 = vmatprep.mubr.bf16.mxu0 0
        %6870 = vmatmul.mubr.bf16.gmra.mrb[0].mxu0 %v6738
        %v6871 = vpop.f32.mrb[0].mxu0
        %v6872 = vadd.f32 0.0, %v6871
        %v6873 = vpop.f32.mrb[0].mxu0
        %v6874 = vadd.f32 0.0, %v6873
        %v6875 = vpop.f32.mrb[0].mxu0
        %v6876 = vadd.f32 0.0, %v6875
        %v6877 = vpop.f32.mrb[0].mxu0
        %v6878 = vadd.f32 0.0, %v6877
        %6879 = vmatprep.mubr.bf16.mxu0 0
        %6880 = vmatmul.mubr.bf16.gmra.mrb[0].mxu0 %v6741
        %v6881 = vpop.f32.mrb[0].mxu0
        %v6882 = vpop.f32.mrb[0].mxu0
        %v6883 = vadd.f32 0.0, %v6882
        %v6884 = vpop.f32.mrb[0].mxu0
        %v6885 = vadd.f32 0.0, %v6884
        %v6886 = vpop.f32.mrb[0].mxu0
        %v6887 = vadd.f32 0.0, %v6886
        %6888 = vmatprep.mubr.bf16.mxu0 0
        %6889 = vmatmul.mubr.bf16.gmra.mrb[0].mxu0 %v6744
        %v6890 = vpop.f32.mrb[0].mxu0
        %v6891 = vadd.f32 0.0, %v6890
        %v6892 = vpop.f32.mrb[0].mxu0
        %v6893 = vadd.f32 0.0, %v6892
        %v6894 = vpop.f32.mrb[0].mxu0
        %v6895 = vpop.f32.mrb[0].mxu0
        %v6896 = vadd.f32 0.0, %v6895
        %6897 = vmatprep.mubr.bf16.mxu0 0
        %6898 = vmatmul.mubr.bf16.gmra.mrb[0].mxu0 %v6747
        %v6899 = vpop.f32.mrb[0].mxu0
        %v6900 = vadd.f32 0.0, %v6899
        %v6901 = vpop.f32.mrb[0].mxu0
        %v6902 = vadd.f32 0.0, %v6901
        %v6903 = vpop.f32.mrb[0].mxu0
        %v6904 = vadd.f32 0.0, %v6903
        %v6905 = vpop.f32.mrb[0].mxu0
        %v6906 = vadd.f32 0.0, %v6905
        %6907 = vmatprep.mubr.bf16.mxu0 0
        %6908 = vmatmul.mubr.bf16.gmra.mrb[0].mxu0 %v6750
        %v6909 = vpop.f32.mrb[0].mxu0
        %v6910 = vpop.f32.mrb[0].mxu0
        %v6911 = vadd.f32 0.0, %v6910
        %v6912 = vpop.f32.mrb[0].mxu0
        %v6913 = vadd.f32 0.0, %v6912
        %v6914 = vpop.f32.mrb[0].mxu0
        %v6915 = vadd.f32 0.0, %v6914
        %6916 = vmatprep.mubr.bf16.mxu0 0
        %6917 = vmatmul.mubr.bf16.gmra.mrb[0].mxu0 %v6753
        %v6918 = vpop.f32.mrb[0].mxu0
        %v6919 = vadd.f32 0.0, %v6918
        %v6920 = vpop.f32.mrb[0].mxu0
        %v6921 = vadd.f32 0.0, %v6920
        %v6922 = vpop.f32.mrb[0].mxu0
        %v6923 = vpop.f32.mrb[0].mxu0
        %v6924 = vadd.f32 0.0, %v6923
        %6925 = vmatprep.mubr.bf16.mxu0 0
        %6926 = vmatmul.mubr.bf16.gmra.mrb[0].mxu0 %v6756
        %v6927 = vpop.f32.mrb[0].mxu0
        %v6928 = vadd.f32 0.0, %v6927
        %v6929 = vpop.f32.mrb[0].mxu0
        %v6930 = vadd.f32 0.0, %v6929
        %v6931 = vpop.f32.mrb[0].mxu0
        %v6932 = vadd.f32 0.0, %v6931
        %v6933 = vpop.f32.mrb[0].mxu0
        %v6934 = vadd.f32 0.0, %v6933
        %6935 = vmatprep.mubr.bf16.mxu0 0
        %6936 = vmatmul.mubr.bf16.gmra.mrb[0].mxu0 %v6759
        %v6937 = vpop.f32.mrb[0].mxu0
        %v6938 = vpop.f32.mrb[0].mxu0
        %v6939 = vadd.f32 0.0, %v6938
        %v6940 = vpop.f32.mrb[0].mxu0
        %v6941 = vadd.f32 0.0, %v6940
        %v6942 = vpop.f32.mrb[0].mxu0
        %v6943 = vadd.f32 0.0, %v6942
        %6944 = vmatprep.mubr.bf16.mxu0 0
        %6945 = vmatmul.mubr.bf16.gmra.mrb[0].mxu0 %v6762
        %v6946 = vpop.f32.mrb[0].mxu0
        %v6947 = vadd.f32 0.0, %v6946
        %v6948 = vpop.f32.mrb[0].mxu0
        %v6949 = vadd.f32 0.0, %v6948
        %v6950 = vpop.f32.mrb[0].mxu0
        %v6951 = vpop.f32.mrb[0].mxu0
        %v6952 = vadd.f32 0.0, %v6951
        %6953 = vmatprep.mubr.bf16.mxu0 0
        %6954 = vmatmul.mubr.bf16.gmra.mrb[0].mxu0 %v6765
        %v6955 = vpop.f32.mrb[0].mxu0
        %v6956 = vadd.f32 0.0, %v6955
        %v6957 = vpop.f32.mrb[0].mxu0
        %v6958 = vadd.f32 0.0, %v6957
        %v6959 = vpop.f32.mrb[0].mxu0
        %v6960 = vadd.f32 0.0, %v6959
        %v6961 = vpop.f32.mrb[0].mxu0
        %v6962 = vadd.f32 0.0, %v6961
        %6963 = vmatprep.mubr.bf16.mxu0 0
        %6964 = vmatmul.mubr.bf16.gmra.mrb[0].mxu0 %v6768
        %v6965 = vpop.f32.mrb[0].mxu0
        %v6966 = vpop.f32.mrb[0].mxu0
        %v6967 = vadd.f32 0.0, %v6966
        %v6968 = vpop.f32.mrb[0].mxu0
        %v6969 = vadd.f32 0.0, %v6968
        %v6970 = vpop.f32.mrb[0].mxu0
        %v6971 = vadd.f32 0.0, %v6970
        %6972 = vmatprep.mubr.bf16.mxu0 0
        %6973 = vmatmul.mubr.bf16.gmra.mrb[0].mxu0 %v6771
        %v6974 = vpop.f32.mrb[0].mxu0
        %v6975 = vadd.f32 0.0, %v6974
        %v6976 = vpop.f32.mrb[0].mxu0
        %v6977 = vadd.f32 0.0, %v6976
        %v6978 = vpop.f32.mrb[0].mxu0
        %v6979 = vpop.f32.mrb[0].mxu0
        %v6980 = vadd.f32 0.0, %v6979
        %6981 = vmatprep.mubr.bf16.mxu0 0
        %6982 = vmatmul.mubr.bf16.gmra.mrb[0].mxu0 %v6774
        %v6983 = vpop.f32.mrb[0].mxu0
        %v6984 = vadd.f32 0.0, %v6983
        %v6985 = vpop.f32.mrb[0].mxu0
        %v6986 = vadd.f32 0.0, %v6985
        %v6987 = vpop.f32.mrb[0].mxu0
        %v6988 = vadd.f32 0.0, %v6987
        %v6989 = vpop.f32.mrb[0].mxu0
        %v6990 = vadd.f32 0.0, %v6989
        %6991 = vmatprep.mubr.bf16.mxu0 0
        %6992 = vmatmul.mubr.bf16.gmra.mrb[0].mxu0 %v6777
        %v6993 = vpop.f32.mrb[0].mxu0
        %v6994 = vpop.f32.mrb[0].mxu0
        %v6995 = vadd.f32 0.0, %v6994
        %v6996 = vpop.f32.mrb[0].mxu0
        %v6997 = vadd.f32 0.0, %v6996
        %v6998 = vpop.f32.mrb[0].mxu0
        %v6999 = vadd.f32 0.0, %v6998
        %7000 = vmatprep.mubr.bf16.mxu0 0
        %7001 = vmatmul.mubr.bf16.gmra.mrb[0].mxu0 %v6780
        %v7002 = vpop.f32.mrb[0].mxu0
        %v7003 = vadd.f32 0.0, %v7002
        %v7004 = vpop.f32.mrb[0].mxu0
        %v7005 = vadd.f32 0.0, %v7004
        %v7006 = vpop.f32.mrb[0].mxu0
        %v7007 = vpop.f32.mrb[0].mxu0
        %v7008 = vadd.f32 0.0, %v7007
        %7009 = vmatprep.mubr.bf16.mxu0 0
        %7010 = vmatmul.mubr.bf16.gmra.mrb[0].mxu0 %v6783
        %v7011 = vpop.f32.mrb[0].mxu0
        %v7012 = vadd.f32 0.0, %v7011
        %v7013 = vpop.f32.mrb[0].mxu0
        %v7014 = vadd.f32 0.0, %v7013
        %v7015 = vpop.f32.mrb[0].mxu0
        %v7016 = vadd.f32 0.0, %v7015
        %v7017 = vpop.f32.mrb[0].mxu0
        %v7018 = vadd.f32 0.0, %v7017
        %7019 = vmatprep.mubr.bf16.mxu0 0
        %7020 = vmatmul.mubr.bf16.gmra.mrb[0].mxu0 %v6786
        %v7021 = vpop.f32.mrb[0].mxu0
        %v7022 = vpop.f32.mrb[0].mxu0
        %v7023 = vadd.f32 0.0, %v7022
        %v7024 = vpop.f32.mrb[0].mxu0
        %v7025 = vadd.f32 0.0, %v7024
        %v7026 = vpop.f32.mrb[0].mxu0
        %v7027 = vadd.f32 0.0, %v7026
        %7028 = vmatprep.mubr.bf16.mxu0 0
        %7029 = vmatmul.mubr.bf16.gmra.mrb[0].mxu0 %v6789
        %v7030 = vpop.f32.mrb[0].mxu0
        %v7031 = vadd.f32 0.0, %v7030
        %v7032 = vpop.f32.mrb[0].mxu0
        %v7033 = vadd.f32 0.0, %v7032
        %v7034 = vpop.f32.mrb[0].mxu0
        %v7035 = vpop.f32.mrb[0].mxu0
        %v7036 = vadd.f32 0.0, %v7035
        %7037 = vmatprep.mubr.bf16.mxu0 0
        %7038 = vmatmul.mubr.bf16.gmra.mrb[0].mxu0 %v6792
        %v7039 = vpop.f32.mrb[0].mxu0
        %v7040 = vadd.f32 0.0, %v7039
        %v7041 = vpop.f32.mrb[0].mxu0
        %v7042 = vadd.f32 0.0, %v7041
        %v7043 = vpop.f32.mrb[0].mxu0
        %v7044 = vadd.f32 0.0, %v7043
        %v7045 = vpop.f32.mrb[0].mxu0
        %v7046 = vadd.f32 0.0, %v7045
        %7047 = vmatprep.mubr.bf16.mxu0 0
        %7048 = vmatmul.mubr.bf16.gmra.mrb[0].mxu0 %v6795
        %v7049 = vpop.f32.mrb[0].mxu0
        %v7050 = vpop.f32.mrb[0].mxu0
        %v7051 = vadd.f32 0.0, %v7050
        %v7052 = vpop.f32.mrb[0].mxu0
        %v7053 = vadd.f32 0.0, %v7052
        %v7054 = vpop.f32.mrb[0].mxu0
        %v7055 = vadd.f32 0.0, %v7054
        %7056 = vmatprep.mubr.bf16.mxu0 0
        %7057 = vmatmul.mubr.bf16.gmra.mrb[0].mxu0 %v6798
        %v7058 = vpop.f32.mrb[0].mxu0
        %v7059 = vadd.f32 0.0, %v7058
        %v7060 = vpop.f32.mrb[0].mxu0
        %v7061 = vadd.f32 0.0, %v7060
        %v7062 = vpop.f32.mrb[0].mxu0
        %v7063 = vpop.f32.mrb[0].mxu0
        %v7064 = vadd.f32 0.0, %v7063
        %7065 = vdwg.mxu0
        %7066 = vmatprep.subr.bf16.mxu0 0
        %7067 = vmatpush1.bf16.msra.mxu0 %v6807
        %7068 = vmatprep.subr.bf16.mxu0 0
        %7069 = vmatpush1.bf16.msra.mxu0 0
        %7070 = vmatprep.subr.bf16.mxu0 0
        %7071 = vmatpush1.bf16.msra.mxu0 0
        %7072 = vmatprep.subr.bf16.mxu0 0
        %7073 = vmatpush1.bf16.msra.mxu0 0
        %7074 = vmatprep.subr.bf16.mxu0 0
        %7075 = vmatpush1.bf16.msra.mxu0 0
        %7076 = vmatprep.subr.bf16.mxu0 0
        %7077 = vmatpush1.bf16.msra.mxu0 0
        %7078 = vmatprep.subr.bf16.mxu0 0
        %7079 = vmatpush1.bf16.msra.mxu0 0
        %7080 = vmatprep.subr.bf16.mxu0 0
        %7081 = vmatpush1.bf16.msra.mxu0 0
        %7082 = vmatprep.subr.bf16.mxu0 0
        %7083 = vmatpush1.bf16.msra.mxu0 0
        %7084 = vmatprep.subr.bf16.mxu0 0
        %7085 = vmatpush1.bf16.msra.mxu0 0
        %7086 = vmatprep.subr.bf16.mxu0 0
        %7087 = vmatpush1.bf16.msra.mxu0 0
        %7088 = vmatprep.subr.bf16.mxu0 0
        %7089 = vmatpush1.bf16.msra.mxu0 0
        %7090 = vmatprep.subr.bf16.mxu0 0
        %7091 = vmatpush1.bf16.msra.mxu0 0
        %7092 = vmatprep.subr.bf16.mxu0 0
        %7093 = vmatpush1.bf16.msra.mxu0 0
        %7094 = vmatprep.subr.bf16.mxu0 0
        %7095 = vmatpush1.bf16.msra.mxu0 0
        %7096 = vmatprep.subr.bf16.mxu0 0
        %7097 = vmatpush1.bf16.msra.mxu0 0
        %7098 = vmatprep.mubr.bf16.mxu0 0
        %7099 = vmatmul.mubr.bf16.gmra.mrb[0].mxu0 %v6729
        %v7100 = vpop.f32.mrb[0].mxu0
        %v7101 = vpop.f32.mrb[0].mxu0
        %v7102 = vpop.f32.mrb[0].mxu0
        %v7103 = vadd.f32 0.0, %v7102
        %v7104 = vpop.f32.mrb[0].mxu0
        %7105 = vmatprep.mubr.bf16.mxu0 0
        %7106 = vmatmul.mubr.bf16.gmra.mrb[0].mxu0 %v6732
        %v7107 = vpop.f32.mrb[0].mxu0
        %v7108 = vadd.f32 0.0, %v7107
        %v7109 = vpop.f32.mrb[0].mxu0
        %v7110 = vpop.f32.mrb[0].mxu0
        %v7111 = vpop.f32.mrb[0].mxu0
        %7112 = vmatprep.mubr.bf16.mxu0 0
        %7113 = vmatmul.mubr.bf16.gmra.mrb[0].mxu0 %v6735
        %v7114 = vpop.f32.mrb[0].mxu0
        %v7115 = vadd.f32 0.0, %v7114
        %v7116 = vpop.f32.mrb[0].mxu0
        %v7117 = vpop.f32.mrb[0].mxu0
        %v7118 = vadd.f32 0.0, %v7117
        %v7119 = vpop.f32.mrb[0].mxu0
        %7120 = vmatprep.mubr.bf16.mxu0 0
        %7121 = vmatmul.mubr.bf16.gmra.mrb[0].mxu0 %v6738
        %v7122 = vpop.f32.mrb[0].mxu0
        %v7123 = vpop.f32.mrb[0].mxu0
        %v7124 = vpop.f32.mrb[0].mxu0
        %v7125 = vadd.f32 0.0, %v7124
        %v7126 = vpop.f32.mrb[0].mxu0
        %7127 = vmatprep.mubr.bf16.mxu0 0
        %7128 = vmatmul.mubr.bf16.gmra.mrb[0].mxu0 %v6741
        %v7129 = vpop.f32.mrb[0].mxu0
        %v7130 = vadd.f32 0.0, %v7129
        %v7131 = vpop.f32.mrb[0].mxu0
        %v7132 = vpop.f32.mrb[0].mxu0
        %v7133 = vpop.f32.mrb[0].mxu0
        %7134 = vmatprep.mubr.bf16.mxu0 0
        %7135 = vmatmul.mubr.bf16.gmra.mrb[0].mxu0 %v6744
        %v7136 = vpop.f32.mrb[0].mxu0
        %v7137 = vadd.f32 0.0, %v7136
        %v7138 = vpop.f32.mrb[0].mxu0
        %v7139 = vpop.f32.mrb[0].mxu0
        %v7140 = vadd.f32 0.0, %v7139
        %v7141 = vpop.f32.mrb[0].mxu0
        %7142 = vmatprep.mubr.bf16.mxu0 0
        %7143 = vmatmul.mubr.bf16.gmra.mrb[0].mxu0 %v6747
        %v7144 = vpop.f32.mrb[0].mxu0
        %v7145 = vpop.f32.mrb[0].mxu0
        %v7146 = vpop.f32.mrb[0].mxu0
        %v7147 = vadd.f32 0.0, %v7146
        %v7148 = vpop.f32.mrb[0].mxu0
        %7149 = vmatprep.mubr.bf16.mxu0 0
        %7150 = vmatmul.mubr.bf16.gmra.mrb[0].mxu0 %v6750
        %v7151 = vpop.f32.mrb[0].mxu0
        %v7152 = vadd.f32 0.0, %v7151
        %v7153 = vpop.f32.mrb[0].mxu0
        %v7154 = vpop.f32.mrb[0].mxu0
        %v7155 = vpop.f32.mrb[0].mxu0
        %7156 = vmatprep.mubr.bf16.mxu0 0
        %7157 = vmatmul.mubr.bf16.gmra.mrb[0].mxu0 %v6753
        %v7158 = vpop.f32.mrb[0].mxu0
        %v7159 = vadd.f32 0.0, %v7158
        %v7160 = vpop.f32.mrb[0].mxu0
        %v7161 = vpop.f32.mrb[0].mxu0
        %v7162 = vadd.f32 0.0, %v7161
        %v7163 = vpop.f32.mrb[0].mxu0
        %7164 = vmatprep.mubr.bf16.mxu0 0
        %7165 = vmatmul.mubr.bf16.gmra.mrb[0].mxu0 %v6756
        %v7166 = vpop.f32.mrb[0].mxu0
        %v7167 = vpop.f32.mrb[0].mxu0
        %v7168 = vpop.f32.mrb[0].mxu0
        %v7169 = vadd.f32 0.0, %v7168
        %v7170 = vpop.f32.mrb[0].mxu0
        %7171 = vmatprep.mubr.bf16.mxu0 0
        %7172 = vmatmul.mubr.bf16.gmra.mrb[0].mxu0 %v6759
        %v7173 = vpop.f32.mrb[0].mxu0
        %v7174 = vadd.f32 0.0, %v7173
        %v7175 = vpop.f32.mrb[0].mxu0
        %v7176 = vpop.f32.mrb[0].mxu0
        %v7177 = vpop.f32.mrb[0].mxu0
        %7178 = vmatprep.mubr.bf16.mxu0 0
        %7179 = vmatmul.mubr.bf16.gmra.mrb[0].mxu0 %v6762
        %v7180 = vpop.f32.mrb[0].mxu0
        %v7181 = vadd.f32 0.0, %v7180
        %v7182 = vpop.f32.mrb[0].mxu0
        %v7183 = vpop.f32.mrb[0].mxu0
        %v7184 = vadd.f32 0.0, %v7183
        %v7185 = vpop.f32.mrb[0].mxu0
        %7186 = vmatprep.mubr.bf16.mxu0 0
        %7187 = vmatmul.mubr.bf16.gmra.mrb[0].mxu0 %v6765
        %v7188 = vpop.f32.mrb[0].mxu0
        %v7189 = vpop.f32.mrb[0].mxu0
        %v7190 = vpop.f32.mrb[0].mxu0
        %v7191 = vadd.f32 0.0, %v7190
        %v7192 = vpop.f32.mrb[0].mxu0
        %7193 = vmatprep.mubr.bf16.mxu0 0
        %7194 = vmatmul.mubr.bf16.gmra.mrb[0].mxu0 %v6768
        %v7195 = vpop.f32.mrb[0].mxu0
        %v7196 = vadd.f32 0.0, %v7195
        %v7197 = vpop.f32.mrb[0].mxu0
        %v7198 = vpop.f32.mrb[0].mxu0
        %v7199 = vpop.f32.mrb[0].mxu0
        %7200 = vmatprep.mubr.bf16.mxu0 0
        %7201 = vmatmul.mubr.bf16.gmra.mrb[0].mxu0 %v6771
        %v7202 = vpop.f32.mrb[0].mxu0
        %v7203 = vadd.f32 0.0, %v7202
        %v7204 = vpop.f32.mrb[0].mxu0
        %v7205 = vpop.f32.mrb[0].mxu0
        %v7206 = vadd.f32 0.0, %v7205
        %v7207 = vpop.f32.mrb[0].mxu0
        %7208 = vmatprep.mubr.bf16.mxu0 0
        %7209 = vmatmul.mubr.bf16.gmra.mrb[0].mxu0 %v6774
        %v7210 = vpop.f32.mrb[0].mxu0
        %v7211 = vpop.f32.mrb[0].mxu0
        %v7212 = vpop.f32.mrb[0].mxu0
        %v7213 = vadd.f32 0.0, %v7212
        %v7214 = vpop.f32.mrb[0].mxu0
        %7215 = vmatprep.mubr.bf16.mxu0 0
        %7216 = vmatmul.mubr.bf16.gmra.mrb[0].mxu0 %v6777
        %v7217 = vpop.f32.mrb[0].mxu0
        %v7218 = vadd.f32 0.0, %v7217
        %v7219 = vpop.f32.mrb[0].mxu0
        %v7220 = vpop.f32.mrb[0].mxu0
        %v7221 = vpop.f32.mrb[0].mxu0
        %7222 = vmatprep.mubr.bf16.mxu0 0
        %7223 = vmatmul.mubr.bf16.gmra.mrb[0].mxu0 %v6780
        %v7224 = vpop.f32.mrb[0].mxu0
        %v7225 = vadd.f32 0.0, %v7224
        %v7226 = vpop.f32.mrb[0].mxu0
        %v7227 = vpop.f32.mrb[0].mxu0
        %v7228 = vadd.f32 0.0, %v7227
        %v7229 = vpop.f32.mrb[0].mxu0
        %7230 = vmatprep.mubr.bf16.mxu0 0
        %7231 = vmatmul.mubr.bf16.gmra.mrb[0].mxu0 %v6783
        %v7232 = vpop.f32.mrb[0].mxu0
        %v7233 = vpop.f32.mrb[0].mxu0
        %v7234 = vpop.f32.mrb[0].mxu0
        %v7235 = vadd.f32 0.0, %v7234
        %v7236 = vpop.f32.mrb[0].mxu0
        %7237 = vmatprep.mubr.bf16.mxu0 0
        %7238 = vmatmul.mubr.bf16.gmra.mrb[0].mxu0 %v6786
        %v7239 = vpop.f32.mrb[0].mxu0
        %v7240 = vadd.f32 0.0, %v7239
        %v7241 = vpop.f32.mrb[0].mxu0
        %v7242 = vpop.f32.mrb[0].mxu0
        %v7243 = vpop.f32.mrb[0].mxu0
        %7244 = vmatprep.mubr.bf16.mxu0 0
        %7245 = vmatmul.mubr.bf16.gmra.mrb[0].mxu0 %v6789
        %v7246 = vpop.f32.mrb[0].mxu0
        %v7247 = vadd.f32 0.0, %v7246
        %v7248 = vpop.f32.mrb[0].mxu0
        %v7249 = vpop.f32.mrb[0].mxu0
        %v7250 = vadd.f32 0.0, %v7249
        %v7251 = vpop.f32.mrb[0].mxu0
        %7252 = vmatprep.mubr.bf16.mxu0 0
        %7253 = vmatmul.mubr.bf16.gmra.mrb[0].mxu0 %v6792
        %v7254 = vpop.f32.mrb[0].mxu0
        %v7255 = vpop.f32.mrb[0].mxu0
        %v7256 = vpop.f32.mrb[0].mxu0
        %v7257 = vadd.f32 0.0, %v7256
        %v7258 = vpop.f32.mrb[0].mxu0
        %7259 = vmatprep.mubr.bf16.mxu0 0
        %7260 = vmatmul.mubr.bf16.gmra.mrb[0].mxu0 %v6795
        %v7261 = vpop.f32.mrb[0].mxu0
        %v7262 = vadd.f32 0.0, %v7261
        %v7263 = vpop.f32.mrb[0].mxu0
        %v7264 = vpop.f32.mrb[0].mxu0
        %v7265 = vpop.f32.mrb[0].mxu0
        %7266 = vmatprep.mubr.bf16.mxu0 0
        %7267 = vmatmul.mubr.bf16.gmra.mrb[0].mxu0 %v6798
        %v7268 = vpop.f32.mrb[0].mxu0
        %v7269 = vadd.f32 0.0, %v7268
        %v7270 = vpop.f32.mrb[0].mxu0
        %v7271 = vpop.f32.mrb[0].mxu0
        %v7272 = vadd.f32 0.0, %v7271
        %v7273 = vpop.f32.mrb[0].mxu0
        %7274 = vdwg.mxu0
        %v7275 = vrot.slane %v6846, 4
        %v7276 = vrot.slane %v6850, 4
        %v7277 = vrot.slane %v6855, 4
        %v7278 = vrot.slane %v6859, 4
        %v7279 = vrot.slane %v6865, 4
        %v7280 = vrot.slane %v6868, 4
        %v7281 = vrot.slane %v6874, 4
        %v7282 = vrot.slane %v6878, 4
        %v7283 = vrot.slane %v6883, 4
        %v7284 = vrot.slane %v6887, 4
        %v7285 = vrot.slane %v6893, 4
        %v7286 = vrot.slane %v6896, 4
        %v7287 = vrot.slane %v6902, 4
        %v7288 = vrot.slane %v6906, 4
        %v7289 = vrot.slane %v6911, 4
        %v7290 = vrot.slane %v6915, 4
        %v7291 = vrot.slane %v6921, 4
        %v7292 = vrot.slane %v6924, 4
        %v7293 = vrot.slane %v6930, 4
        %v7294 = vrot.slane %v6934, 4
        %v7295 = vrot.slane %v6939, 4
        %v7296 = vrot.slane %v6943, 4
        %v7297 = vrot.slane %v6949, 4
        %v7298 = vrot.slane %v6952, 4
        %v7299 = vrot.slane %v6958, 4
        %v7300 = vrot.slane %v6962, 4
        %v7301 = vrot.slane %v6967, 4
        %v7302 = vrot.slane %v6971, 4
        %v7303 = vrot.slane %v6977, 4
        %v7304 = vrot.slane %v6980, 4
        %v7305 = vrot.slane %v6986, 4
        %v7306 = vrot.slane %v6990, 4
        %v7307 = vrot.slane %v6995, 4
        %v7308 = vrot.slane %v6999, 4
        %v7309 = vrot.slane %v7005, 4
        %v7310 = vrot.slane %v7008, 4
        %v7311 = vrot.slane %v7014, 4
        %v7312 = vrot.slane %v7018, 4
        %v7313 = vrot.slane %v7023, 4
        %v7314 = vrot.slane %v7027, 4
        %v7315 = vrot.slane %v7033, 4
        %v7316 = vrot.slane %v7036, 4
        %v7317 = vrot.slane %v7042, 4
        %v7318 = vrot.slane %v7046, 4
        %v7319 = vrot.slane %v7051, 4
        %v7320 = vrot.slane %v7055, 4
        %v7321 = vrot.slane %v7061, 4
        %v7322 = vrot.slane %v7064, 4
        %v7323 = vsel %vm1091, %v7321, %v7322
        %v7324 = vsel %vm1091, %v7320, %v7321
        %v7325 = vsel %vm1091, %v7318, %v7319
        %v7326 = vsel %vm1091, %v7317, %v7318
        %v7327 = vsel %vm1091, %v7315, %v7316
        %v7328 = vsel %vm1091, %v7314, %v7315
        %v7329 = vsel %vm1091, %v7312, %v7313
        %v7330 = vsel %vm1091, %v7311, %v7312
        %v7331 = vsel %vm1091, %v7309, %v7310
        %v7332 = vsel %vm1091, %v7308, %v7309
        %v7333 = vsel %vm1091, %v7306, %v7307
        %v7334 = vsel %vm1091, %v7305, %v7306
        %v7335 = vsel %vm1091, %v7303, %v7304
        %v7336 = vsel %vm1091, %v7302, %v7303
        %v7337 = vsel %vm1091, %v7300, %v7301
        %v7338 = vsel %vm1091, %v7299, %v7300
        %v7339 = vsel %vm1091, %v7297, %v7298
        %v7340 = vsel %vm1091, %v7296, %v7297
        %v7341 = vsel %vm1091, %v7294, %v7295
        %v7342 = vsel %vm1091, %v7293, %v7294
        %v7343 = vsel %vm1091, %v7291, %v7292
        %v7344 = vsel %vm1091, %v7290, %v7291
        %v7345 = vsel %vm1091, %v7288, %v7289
        %v7346 = vsel %vm1091, %v7287, %v7288
        %v7347 = vsel %vm1091, %v7285, %v7286
        %v7348 = vsel %vm1091, %v7284, %v7285
        %v7349 = vsel %vm1091, %v7282, %v7283
        %v7350 = vsel %vm1091, %v7281, %v7282
        %v7351 = vsel %vm1091, %v7279, %v7280
        %v7352 = vsel %vm1091, %v7278, %v7279
        %v7353 = vsel %vm1091, %v7276, %v7277
        %v7354 = vsel %vm1091, %v7275, %v7276
        %v7355 = vadd.f32 %v6844, %v7354
        %v7356 = vadd.f32 %v6848, %v7353
        %v7357 = vadd.f32 %v6857, %v7352
        %v7358 = vadd.f32 %v6863, %v7351
        %v7359 = vadd.f32 %v6872, %v7350
        %v7360 = vadd.f32 %v6876, %v7349
        %v7361 = vadd.f32 %v6885, %v7348
        %v7362 = vadd.f32 %v6891, %v7347
        %v7363 = vadd.f32 %v6900, %v7346
        %v7364 = vadd.f32 %v6904, %v7345
        %v7365 = vadd.f32 %v6913, %v7344
        %v7366 = vadd.f32 %v6919, %v7343
        %v7367 = vadd.f32 %v6928, %v7342
        %v7368 = vadd.f32 %v6932, %v7341
        %v7369 = vadd.f32 %v6941, %v7340
        %v7370 = vadd.f32 %v6947, %v7339
        %v7371 = vadd.f32 %v6956, %v7338
        %v7372 = vadd.f32 %v6960, %v7337
        %v7373 = vadd.f32 %v6969, %v7336
        %v7374 = vadd.f32 %v6975, %v7335
        %v7375 = vadd.f32 %v6984, %v7334
        %v7376 = vadd.f32 %v6988, %v7333
        %v7377 = vadd.f32 %v6997, %v7332
        %v7378 = vadd.f32 %v7003, %v7331
        %v7379 = vadd.f32 %v7012, %v7330
        %v7380 = vadd.f32 %v7016, %v7329
        %v7381 = vadd.f32 %v7025, %v7328
        %v7382 = vadd.f32 %v7031, %v7327
        %v7383 = vadd.f32 %v7040, %v7326
        %v7384 = vadd.f32 %v7044, %v7325
        %v7385 = vadd.f32 %v7053, %v7324
        %v7386 = vadd.f32 %v7059, %v7323
        %v7387 = vadd.f32 %v7355, %v7103
        %v7388 = vadd.f32 %v7356, %v7108
        %v7389 = vadd.f32 %v7357, %v7115
        %v7390 = vadd.f32 %v7358, %v7118
        %v7391 = vadd.f32 %v7359, %v7125
        %v7392 = vadd.f32 %v7360, %v7130
        %v7393 = vadd.f32 %v7361, %v7137
        %v7394 = vadd.f32 %v7362, %v7140
        %v7395 = vadd.f32 %v7363, %v7147
        %v7396 = vadd.f32 %v7364, %v7152
        %v7397 = vadd.f32 %v7365, %v7159
        %v7398 = vadd.f32 %v7366, %v7162
        %v7399 = vadd.f32 %v7367, %v7169
        %v7400 = vadd.f32 %v7368, %v7174
        %v7401 = vadd.f32 %v7369, %v7181
        %v7402 = vadd.f32 %v7370, %v7184
        %v7403 = vadd.f32 %v7371, %v7191
        %v7404 = vadd.f32 %v7372, %v7196
        %v7405 = vadd.f32 %v7373, %v7203
        %v7406 = vadd.f32 %v7374, %v7206
        %v7407 = vadd.f32 %v7375, %v7213
        %v7408 = vadd.f32 %v7376, %v7218
        %v7409 = vadd.f32 %v7377, %v7225
        %v7410 = vadd.f32 %v7378, %v7228
        %v7411 = vadd.f32 %v7379, %v7235
        %v7412 = vadd.f32 %v7380, %v7240
        %v7413 = vadd.f32 %v7381, %v7247
        %v7414 = vadd.f32 %v7382, %v7250
        %v7415 = vadd.f32 %v7383, %v7257
        %v7416 = vadd.f32 %v7384, %v7262
        %v7417 = vadd.f32 %v7385, %v7269
        %v7418 = vadd.f32 %v7386, %v7272
        %v7419 = vadd.f32 %v6509, %v7387
        %v7420 = vadd.f32 %v6510, %v7388
        %v7421 = vadd.f32 %v6511, %v7389
        %v7422 = vadd.f32 %v6512, %v7390
        %v7423 = vadd.f32 %v6513, %v7391
        %v7424 = vadd.f32 %v6514, %v7392
        %v7425 = vadd.f32 %v6515, %v7393
        %v7426 = vadd.f32 %v6516, %v7394
        %v7427 = vadd.f32 %v6517, %v7395
        %v7428 = vadd.f32 %v6518, %v7396
        %v7429 = vadd.f32 %v6519, %v7397
        %v7430 = vadd.f32 %v6520, %v7398
        %v7431 = vadd.f32 %v6521, %v7399
        %v7432 = vadd.f32 %v6522, %v7400
        %v7433 = vadd.f32 %v6523, %v7401
        %v7434 = vadd.f32 %v6524, %v7402
        %v7435 = vadd.f32 %v6525, %v7403
        %v7436 = vadd.f32 %v6526, %v7404
        %v7437 = vadd.f32 %v6527, %v7405
        %v7438 = vadd.f32 %v6528, %v7406
        %v7439 = vadd.f32 %v6529, %v7407
        %v7440 = vadd.f32 %v6530, %v7408
        %v7441 = vadd.f32 %v6531, %v7409
        %v7442 = vadd.f32 %v6532, %v7410
        %v7443 = vadd.f32 %v6533, %v7411
        %v7444 = vadd.f32 %v6534, %v7412
        %v7445 = vadd.f32 %v6535, %v7413
        %v7446 = vadd.f32 %v6536, %v7414
        %v7447 = vadd.f32 %v6537, %v7415
        %v7448 = vadd.f32 %v6538, %v7416
        %v7449 = vadd.f32 %v6539, %v7417
        %v7450 = vadd.f32 %v6540, %v7418
        %s7451 = scalar_lea.vmem %s1, 42
        %v7452 = vld [vmem:[%s7451] sm:$0x3f]
        %v7454 = vcombine.high %v7452, %v7452
        %v7456 = vunpack.c.l.s4 1983009808
        %v7457 = vunpack.c.0.s8 %v7456
        %v7458 = vlaneseq
        %v7459 = vshrl.u32 %v7458, 7
        %v7460 = vsub.s32 %v7457, %v7459
        %v7461 = vrot.slane %v7452, %v7460
        %v7463 = vunpack.c.l.s4 1983009808
        %v7464 = vunpack.c.0.s8 %v7463
        %v7465 = vlaneseq
        %v7466 = vshrl.u32 %v7465, 7
        %v7467 = vsub.s32 %v7464, %v7466
        %v7468 = vrot.slane %v7454, %v7467
        %v7469 = vcombine.high %v7461, %v7461
        %v7471 = vsel %vm452, %v7461, 0
        %v7474 = vsel %vm452, %v7469, 0
        %v7477 = vsel %vm452, %v7468, 0
        %7479 = vmatprep.subr.bf16.mxu0 %v7474
        %7480 = vmatpush1.bf16.msra.mxu0 %v7471
        %7481 = vmatprep.subr.bf16.mxu0 0
        %7482 = vmatpush1.bf16.msra.mxu0 0
        %7483 = vmatprep.subr.bf16.mxu0 0
        %7484 = vmatpush1.bf16.msra.mxu0 0
        %7485 = vmatprep.subr.bf16.mxu0 0
        %7486 = vmatpush1.bf16.msra.mxu0 0
        %7487 = vmatprep.subr.bf16.mxu0 0
        %7488 = vmatpush1.bf16.msra.mxu0 0
        %7489 = vmatprep.subr.bf16.mxu0 0
        %7490 = vmatpush1.bf16.msra.mxu0 0
        %7491 = vmatprep.subr.bf16.mxu0 0
        %7492 = vmatpush1.bf16.msra.mxu0 0
        %7493 = vmatprep.subr.bf16.mxu0 0
        %7494 = vmatpush1.bf16.msra.mxu0 0
        %7495 = vmatprep.subr.bf16.mxu0 0
        %7496 = vmatpush1.bf16.msra.mxu0 0
        %7497 = vmatprep.subr.bf16.mxu0 0
        %7498 = vmatpush1.bf16.msra.mxu0 0
        %7499 = vmatprep.subr.bf16.mxu0 0
        %7500 = vmatpush1.bf16.msra.mxu0 0
        %7501 = vmatprep.subr.bf16.mxu0 0
        %7502 = vmatpush1.bf16.msra.mxu0 0
        %7503 = vmatprep.subr.bf16.mxu0 0
        %7504 = vmatpush1.bf16.msra.mxu0 0
        %7505 = vmatprep.subr.bf16.mxu0 0
        %7506 = vmatpush1.bf16.msra.mxu0 0
        %7507 = vmatprep.subr.bf16.mxu0 0
        %7508 = vmatpush1.bf16.msra.mxu0 0
        %7509 = vmatprep.subr.bf16.mxu0 0
        %7510 = vmatpush1.bf16.msra.mxu0 0
        %7511 = vmatprep.mubr.bf16.mxu0 0
        %7512 = vmatmul.mubr.bf16.gmra.mrb[0].mxu0 %v1457
        %v7513 = vpop.f32.mrb[0].mxu0
        %v7514 = vadd.f32 0.0, %v7513
        %v7515 = vpop.f32.mrb[0].mxu0
        %v7516 = vadd.f32 0.0, %v7515
        %v7517 = vpop.f32.mrb[0].mxu0
        %v7518 = vadd.f32 0.0, %v7517
        %v7519 = vpop.f32.mrb[0].mxu0
        %v7520 = vadd.f32 0.0, %v7519
        %7521 = vmatprep.mubr.bf16.mxu0 0
        %7522 = vmatmul.mubr.bf16.gmra.mrb[0].mxu0 %v1460
        %v7523 = vpop.f32.mrb[0].mxu0
        %v7524 = vpop.f32.mrb[0].mxu0
        %v7525 = vadd.f32 0.0, %v7524
        %v7526 = vpop.f32.mrb[0].mxu0
        %v7527 = vadd.f32 0.0, %v7526
        %v7528 = vpop.f32.mrb[0].mxu0
        %v7529 = vadd.f32 0.0, %v7528
        %7530 = vmatprep.mubr.bf16.mxu0 0
        %7531 = vmatmul.mubr.bf16.gmra.mrb[0].mxu0 %v1463
        %v7532 = vpop.f32.mrb[0].mxu0
        %v7533 = vadd.f32 0.0, %v7532
        %v7534 = vpop.f32.mrb[0].mxu0
        %v7535 = vadd.f32 0.0, %v7534
        %v7536 = vpop.f32.mrb[0].mxu0
        %v7537 = vpop.f32.mrb[0].mxu0
        %v7538 = vadd.f32 0.0, %v7537
        %7539 = vmatprep.mubr.bf16.mxu0 0
        %7540 = vmatmul.mubr.bf16.gmra.mrb[0].mxu0 %v1466
        %v7541 = vpop.f32.mrb[0].mxu0
        %v7542 = vadd.f32 0.0, %v7541
        %v7543 = vpop.f32.mrb[0].mxu0
        %v7544 = vadd.f32 0.0, %v7543
        %v7545 = vpop.f32.mrb[0].mxu0
        %v7546 = vadd.f32 0.0, %v7545
        %v7547 = vpop.f32.mrb[0].mxu0
        %v7548 = vadd.f32 0.0, %v7547
        %7549 = vmatprep.mubr.bf16.mxu0 0
        %7550 = vmatmul.mubr.bf16.gmra.mrb[0].mxu0 %v1469
        %v7551 = vpop.f32.mrb[0].mxu0
        %v7552 = vpop.f32.mrb[0].mxu0
        %v7553 = vadd.f32 0.0, %v7552
        %v7554 = vpop.f32.mrb[0].mxu0
        %v7555 = vadd.f32 0.0, %v7554
        %v7556 = vpop.f32.mrb[0].mxu0
        %v7557 = vadd.f32 0.0, %v7556
        %7558 = vmatprep.mubr.bf16.mxu0 0
        %7559 = vmatmul.mubr.bf16.gmra.mrb[0].mxu0 %v1472
        %v7560 = vpop.f32.mrb[0].mxu0
        %v7561 = vadd.f32 0.0, %v7560
        %v7562 = vpop.f32.mrb[0].mxu0
        %v7563 = vadd.f32 0.0, %v7562
        %v7564 = vpop.f32.mrb[0].mxu0
        %v7565 = vpop.f32.mrb[0].mxu0
        %v7566 = vadd.f32 0.0, %v7565
        %7567 = vmatprep.mubr.bf16.mxu0 0
        %7568 = vmatmul.mubr.bf16.gmra.mrb[0].mxu0 %v1475
        %v7569 = vpop.f32.mrb[0].mxu0
        %v7570 = vadd.f32 0.0, %v7569
        %v7571 = vpop.f32.mrb[0].mxu0
        %v7572 = vadd.f32 0.0, %v7571
        %v7573 = vpop.f32.mrb[0].mxu0
        %v7574 = vadd.f32 0.0, %v7573
        %v7575 = vpop.f32.mrb[0].mxu0
        %v7576 = vadd.f32 0.0, %v7575
        %7577 = vmatprep.mubr.bf16.mxu0 0
        %7578 = vmatmul.mubr.bf16.gmra.mrb[0].mxu0 %v1478
        %v7579 = vpop.f32.mrb[0].mxu0
        %v7580 = vpop.f32.mrb[0].mxu0
        %v7581 = vadd.f32 0.0, %v7580
        %v7582 = vpop.f32.mrb[0].mxu0
        %v7583 = vadd.f32 0.0, %v7582
        %v7584 = vpop.f32.mrb[0].mxu0
        %v7585 = vadd.f32 0.0, %v7584
        %7586 = vmatprep.mubr.bf16.mxu0 0
        %7587 = vmatmul.mubr.bf16.gmra.mrb[0].mxu0 %v1481
        %v7588 = vpop.f32.mrb[0].mxu0
        %v7589 = vadd.f32 0.0, %v7588
        %v7590 = vpop.f32.mrb[0].mxu0
        %v7591 = vadd.f32 0.0, %v7590
        %v7592 = vpop.f32.mrb[0].mxu0
        %v7593 = vpop.f32.mrb[0].mxu0
        %v7594 = vadd.f32 0.0, %v7593
        %7595 = vmatprep.mubr.bf16.mxu0 0
        %7596 = vmatmul.mubr.bf16.gmra.mrb[0].mxu0 %v1484
        %v7597 = vpop.f32.mrb[0].mxu0
        %v7598 = vadd.f32 0.0, %v7597
        %v7599 = vpop.f32.mrb[0].mxu0
        %v7600 = vadd.f32 0.0, %v7599
        %v7601 = vpop.f32.mrb[0].mxu0
        %v7602 = vadd.f32 0.0, %v7601
        %v7603 = vpop.f32.mrb[0].mxu0
        %v7604 = vadd.f32 0.0, %v7603
        %7605 = vmatprep.mubr.bf16.mxu0 0
        %7606 = vmatmul.mubr.bf16.gmra.mrb[0].mxu0 %v1487
        %v7607 = vpop.f32.mrb[0].mxu0
        %v7608 = vpop.f32.mrb[0].mxu0
        %v7609 = vadd.f32 0.0, %v7608
        %v7610 = vpop.f32.mrb[0].mxu0
        %v7611 = vadd.f32 0.0, %v7610
        %v7612 = vpop.f32.mrb[0].mxu0
        %v7613 = vadd.f32 0.0, %v7612
        %7614 = vmatprep.mubr.bf16.mxu0 0
        %7615 = vmatmul.mubr.bf16.gmra.mrb[0].mxu0 %v1490
        %v7616 = vpop.f32.mrb[0].mxu0
        %v7617 = vadd.f32 0.0, %v7616
        %v7618 = vpop.f32.mrb[0].mxu0
        %v7619 = vadd.f32 0.0, %v7618
        %v7620 = vpop.f32.mrb[0].mxu0
        %v7621 = vpop.f32.mrb[0].mxu0
        %v7622 = vadd.f32 0.0, %v7621
        %7623 = vmatprep.mubr.bf16.mxu0 0
        %7624 = vmatmul.mubr.bf16.gmra.mrb[0].mxu0 %v1493
        %v7625 = vpop.f32.mrb[0].mxu0
        %v7626 = vadd.f32 0.0, %v7625
        %v7627 = vpop.f32.mrb[0].mxu0
        %v7628 = vadd.f32 0.0, %v7627
        %v7629 = vpop.f32.mrb[0].mxu0
        %v7630 = vadd.f32 0.0, %v7629
        %v7631 = vpop.f32.mrb[0].mxu0
        %v7632 = vadd.f32 0.0, %v7631
        %7633 = vmatprep.mubr.bf16.mxu0 0
        %7634 = vmatmul.mubr.bf16.gmra.mrb[0].mxu0 %v1496
        %v7635 = vpop.f32.mrb[0].mxu0
        %v7636 = vpop.f32.mrb[0].mxu0
        %v7637 = vadd.f32 0.0, %v7636
        %v7638 = vpop.f32.mrb[0].mxu0
        %v7639 = vadd.f32 0.0, %v7638
        %v7640 = vpop.f32.mrb[0].mxu0
        %v7641 = vadd.f32 0.0, %v7640
        %7642 = vmatprep.mubr.bf16.mxu0 0
        %7643 = vmatmul.mubr.bf16.gmra.mrb[0].mxu0 %v1499
        %v7644 = vpop.f32.mrb[0].mxu0
        %v7645 = vadd.f32 0.0, %v7644
        %v7646 = vpop.f32.mrb[0].mxu0
        %v7647 = vadd.f32 0.0, %v7646
        %v7648 = vpop.f32.mrb[0].mxu0
        %v7649 = vpop.f32.mrb[0].mxu0
        %v7650 = vadd.f32 0.0, %v7649
        %7651 = vmatprep.mubr.bf16.mxu0 0
        %7652 = vmatmul.mubr.bf16.gmra.mrb[0].mxu0 %v1502
        %v7653 = vpop.f32.mrb[0].mxu0
        %v7654 = vadd.f32 0.0, %v7653
        %v7655 = vpop.f32.mrb[0].mxu0
        %v7656 = vadd.f32 0.0, %v7655
        %v7657 = vpop.f32.mrb[0].mxu0
        %v7658 = vadd.f32 0.0, %v7657
        %v7659 = vpop.f32.mrb[0].mxu0
        %v7660 = vadd.f32 0.0, %v7659
        %7661 = vmatprep.mubr.bf16.mxu0 0
        %7662 = vmatmul.mubr.bf16.gmra.mrb[0].mxu0 %v1505
        %v7663 = vpop.f32.mrb[0].mxu0
        %v7664 = vpop.f32.mrb[0].mxu0
        %v7665 = vadd.f32 0.0, %v7664
        %v7666 = vpop.f32.mrb[0].mxu0
        %v7667 = vadd.f32 0.0, %v7666
        %v7668 = vpop.f32.mrb[0].mxu0
        %v7669 = vadd.f32 0.0, %v7668
        %7670 = vmatprep.mubr.bf16.mxu0 0
        %7671 = vmatmul.mubr.bf16.gmra.mrb[0].mxu0 %v1508
        %v7672 = vpop.f32.mrb[0].mxu0
        %v7673 = vadd.f32 0.0, %v7672
        %v7674 = vpop.f32.mrb[0].mxu0
        %v7675 = vadd.f32 0.0, %v7674
        %v7676 = vpop.f32.mrb[0].mxu0
        %v7677 = vpop.f32.mrb[0].mxu0
        %v7678 = vadd.f32 0.0, %v7677
        %7679 = vmatprep.mubr.bf16.mxu0 0
        %7680 = vmatmul.mubr.bf16.gmra.mrb[0].mxu0 %v1511
        %v7681 = vpop.f32.mrb[0].mxu0
        %v7682 = vadd.f32 0.0, %v7681
        %v7683 = vpop.f32.mrb[0].mxu0
        %v7684 = vadd.f32 0.0, %v7683
        %v7685 = vpop.f32.mrb[0].mxu0
        %v7686 = vadd.f32 0.0, %v7685
        %v7687 = vpop.f32.mrb[0].mxu0
        %v7688 = vadd.f32 0.0, %v7687
        %7689 = vmatprep.mubr.bf16.mxu0 0
        %7690 = vmatmul.mubr.bf16.gmra.mrb[0].mxu0 %v1514
        %v7691 = vpop.f32.mrb[0].mxu0
        %v7692 = vpop.f32.mrb[0].mxu0
        %v7693 = vadd.f32 0.0, %v7692
        %v7694 = vpop.f32.mrb[0].mxu0
        %v7695 = vadd.f32 0.0, %v7694
        %v7696 = vpop.f32.mrb[0].mxu0
        %v7697 = vadd.f32 0.0, %v7696
        %7698 = vmatprep.mubr.bf16.mxu0 0
        %7699 = vmatmul.mubr.bf16.gmra.mrb[0].mxu0 %v1517
        %v7700 = vpop.f32.mrb[0].mxu0
        %v7701 = vadd.f32 0.0, %v7700
        %v7702 = vpop.f32.mrb[0].mxu0
        %v7703 = vadd.f32 0.0, %v7702
        %v7704 = vpop.f32.mrb[0].mxu0
        %v7705 = vpop.f32.mrb[0].mxu0
        %v7706 = vadd.f32 0.0, %v7705
        %7707 = vmatprep.mubr.bf16.mxu0 0
        %7708 = vmatmul.mubr.bf16.gmra.mrb[0].mxu0 %v1520
        %v7709 = vpop.f32.mrb[0].mxu0
        %v7710 = vadd.f32 0.0, %v7709
        %v7711 = vpop.f32.mrb[0].mxu0
        %v7712 = vadd.f32 0.0, %v7711
        %v7713 = vpop.f32.mrb[0].mxu0
        %v7714 = vadd.f32 0.0, %v7713
        %v7715 = vpop.f32.mrb[0].mxu0
        %v7716 = vadd.f32 0.0, %v7715
        %7717 = vmatprep.mubr.bf16.mxu0 0
        %7718 = vmatmul.mubr.bf16.gmra.mrb[0].mxu0 %v1523
        %v7719 = vpop.f32.mrb[0].mxu0
        %v7720 = vpop.f32.mrb[0].mxu0
        %v7721 = vadd.f32 0.0, %v7720
        %v7722 = vpop.f32.mrb[0].mxu0
        %v7723 = vadd.f32 0.0, %v7722
        %v7724 = vpop.f32.mrb[0].mxu0
        %v7725 = vadd.f32 0.0, %v7724
        %7726 = vmatprep.mubr.bf16.mxu0 0
        %7727 = vmatmul.mubr.bf16.gmra.mrb[0].mxu0 %v1526
        %v7728 = vpop.f32.mrb[0].mxu0
        %v7729 = vadd.f32 0.0, %v7728
        %v7730 = vpop.f32.mrb[0].mxu0
        %v7731 = vadd.f32 0.0, %v7730
        %v7732 = vpop.f32.mrb[0].mxu0
        %v7733 = vpop.f32.mrb[0].mxu0
        %v7734 = vadd.f32 0.0, %v7733
        %7735 = vdwg.mxu0
        %7736 = vmatprep.subr.bf16.mxu0 0
        %7737 = vmatpush1.bf16.msra.mxu0 %v7477
        %7738 = vmatprep.subr.bf16.mxu0 0
        %7739 = vmatpush1.bf16.msra.mxu0 0
        %7740 = vmatprep.subr.bf16.mxu0 0
        %7741 = vmatpush1.bf16.msra.mxu0 0
        %7742 = vmatprep.subr.bf16.mxu0 0
        %7743 = vmatpush1.bf16.msra.mxu0 0
        %7744 = vmatprep.subr.bf16.mxu0 0
        %7745 = vmatpush1.bf16.msra.mxu0 0
        %7746 = vmatprep.subr.bf16.mxu0 0
        %7747 = vmatpush1.bf16.msra.mxu0 0
        %7748 = vmatprep.subr.bf16.mxu0 0
        %7749 = vmatpush1.bf16.msra.mxu0 0
        %7750 = vmatprep.subr.bf16.mxu0 0
        %7751 = vmatpush1.bf16.msra.mxu0 0
        %7752 = vmatprep.subr.bf16.mxu0 0
        %7753 = vmatpush1.bf16.msra.mxu0 0
        %7754 = vmatprep.subr.bf16.mxu0 0
        %7755 = vmatpush1.bf16.msra.mxu0 0
        %7756 = vmatprep.subr.bf16.mxu0 0
        %7757 = vmatpush1.bf16.msra.mxu0 0
        %7758 = vmatprep.subr.bf16.mxu0 0
        %7759 = vmatpush1.bf16.msra.mxu0 0
        %7760 = vmatprep.subr.bf16.mxu0 0
        %7761 = vmatpush1.bf16.msra.mxu0 0
        %7762 = vmatprep.subr.bf16.mxu0 0
        %7763 = vmatpush1.bf16.msra.mxu0 0
        %7764 = vmatprep.subr.bf16.mxu0 0
        %7765 = vmatpush1.bf16.msra.mxu0 0
        %7766 = vmatprep.subr.bf16.mxu0 0
        %7767 = vmatpush1.bf16.msra.mxu0 0
        %7768 = vmatprep.mubr.bf16.mxu0 0
        %7769 = vmatmul.mubr.bf16.gmra.mrb[0].mxu0 %v1457
        %v7770 = vpop.f32.mrb[0].mxu0
        %v7771 = vpop.f32.mrb[0].mxu0
        %v7772 = vpop.f32.mrb[0].mxu0
        %v7773 = vadd.f32 0.0, %v7772
        %v7774 = vpop.f32.mrb[0].mxu0
        %7775 = vmatprep.mubr.bf16.mxu0 0
        %7776 = vmatmul.mubr.bf16.gmra.mrb[0].mxu0 %v1460
        %v7777 = vpop.f32.mrb[0].mxu0
        %v7778 = vadd.f32 0.0, %v7777
        %v7779 = vpop.f32.mrb[0].mxu0
        %v7780 = vpop.f32.mrb[0].mxu0
        %v7781 = vpop.f32.mrb[0].mxu0
        %7782 = vmatprep.mubr.bf16.mxu0 0
        %7783 = vmatmul.mubr.bf16.gmra.mrb[0].mxu0 %v1463
        %v7784 = vpop.f32.mrb[0].mxu0
        %v7785 = vadd.f32 0.0, %v7784
        %v7786 = vpop.f32.mrb[0].mxu0
        %v7787 = vpop.f32.mrb[0].mxu0
        %v7788 = vadd.f32 0.0, %v7787
        %v7789 = vpop.f32.mrb[0].mxu0
        %7790 = vmatprep.mubr.bf16.mxu0 0
        %7791 = vmatmul.mubr.bf16.gmra.mrb[0].mxu0 %v1466
        %v7792 = vpop.f32.mrb[0].mxu0
        %v7793 = vpop.f32.mrb[0].mxu0
        %v7794 = vpop.f32.mrb[0].mxu0
        %v7795 = vadd.f32 0.0, %v7794
        %v7796 = vpop.f32.mrb[0].mxu0
        %7797 = vmatprep.mubr.bf16.mxu0 0
        %7798 = vmatmul.mubr.bf16.gmra.mrb[0].mxu0 %v1469
        %v7799 = vpop.f32.mrb[0].mxu0
        %v7800 = vadd.f32 0.0, %v7799
        %v7801 = vpop.f32.mrb[0].mxu0
        %v7802 = vpop.f32.mrb[0].mxu0
        %v7803 = vpop.f32.mrb[0].mxu0
        %7804 = vmatprep.mubr.bf16.mxu0 0
        %7805 = vmatmul.mubr.bf16.gmra.mrb[0].mxu0 %v1472
        %v7806 = vpop.f32.mrb[0].mxu0
        %v7807 = vadd.f32 0.0, %v7806
        %v7808 = vpop.f32.mrb[0].mxu0
        %v7809 = vpop.f32.mrb[0].mxu0
        %v7810 = vadd.f32 0.0, %v7809
        %v7811 = vpop.f32.mrb[0].mxu0
        %7812 = vmatprep.mubr.bf16.mxu0 0
        %7813 = vmatmul.mubr.bf16.gmra.mrb[0].mxu0 %v1475
        %v7814 = vpop.f32.mrb[0].mxu0
        %v7815 = vpop.f32.mrb[0].mxu0
        %v7816 = vpop.f32.mrb[0].mxu0
        %v7817 = vadd.f32 0.0, %v7816
        %v7818 = vpop.f32.mrb[0].mxu0
        %7819 = vmatprep.mubr.bf16.mxu0 0
        %7820 = vmatmul.mubr.bf16.gmra.mrb[0].mxu0 %v1478
        %v7821 = vpop.f32.mrb[0].mxu0
        %v7822 = vadd.f32 0.0, %v7821
        %v7823 = vpop.f32.mrb[0].mxu0
        %v7824 = vpop.f32.mrb[0].mxu0
        %v7825 = vpop.f32.mrb[0].mxu0
        %7826 = vmatprep.mubr.bf16.mxu0 0
        %7827 = vmatmul.mubr.bf16.gmra.mrb[0].mxu0 %v1481
        %v7828 = vpop.f32.mrb[0].mxu0
        %v7829 = vadd.f32 0.0, %v7828
        %v7830 = vpop.f32.mrb[0].mxu0
        %v7831 = vpop.f32.mrb[0].mxu0
        %v7832 = vadd.f32 0.0, %v7831
        %v7833 = vpop.f32.mrb[0].mxu0
        %7834 = vmatprep.mubr.bf16.mxu0 0
        %7835 = vmatmul.mubr.bf16.gmra.mrb[0].mxu0 %v1484
        %v7836 = vpop.f32.mrb[0].mxu0
        %v7837 = vpop.f32.mrb[0].mxu0
        %v7838 = vpop.f32.mrb[0].mxu0
        %v7839 = vadd.f32 0.0, %v7838
        %v7840 = vpop.f32.mrb[0].mxu0
        %7841 = vmatprep.mubr.bf16.mxu0 0
        %7842 = vmatmul.mubr.bf16.gmra.mrb[0].mxu0 %v1487
        %v7843 = vpop.f32.mrb[0].mxu0
        %v7844 = vadd.f32 0.0, %v7843
        %v7845 = vpop.f32.mrb[0].mxu0
        %v7846 = vpop.f32.mrb[0].mxu0
        %v7847 = vpop.f32.mrb[0].mxu0
        %7848 = vmatprep.mubr.bf16.mxu0 0
        %7849 = vmatmul.mubr.bf16.gmra.mrb[0].mxu0 %v1490
        %v7850 = vpop.f32.mrb[0].mxu0
        %v7851 = vadd.f32 0.0, %v7850
        %v7852 = vpop.f32.mrb[0].mxu0
        %v7853 = vpop.f32.mrb[0].mxu0
        %v7854 = vadd.f32 0.0, %v7853
        %v7855 = vpop.f32.mrb[0].mxu0
        %7856 = vmatprep.mubr.bf16.mxu0 0
        %7857 = vmatmul.mubr.bf16.gmra.mrb[0].mxu0 %v1493
        %v7858 = vpop.f32.mrb[0].mxu0
        %v7859 = vpop.f32.mrb[0].mxu0
        %v7860 = vpop.f32.mrb[0].mxu0
        %v7861 = vadd.f32 0.0, %v7860
        %v7862 = vpop.f32.mrb[0].mxu0
        %7863 = vmatprep.mubr.bf16.mxu0 0
        %7864 = vmatmul.mubr.bf16.gmra.mrb[0].mxu0 %v1496
        %v7865 = vpop.f32.mrb[0].mxu0
        %v7866 = vadd.f32 0.0, %v7865
        %v7867 = vpop.f32.mrb[0].mxu0
        %v7868 = vpop.f32.mrb[0].mxu0
        %v7869 = vpop.f32.mrb[0].mxu0
        %7870 = vmatprep.mubr.bf16.mxu0 0
        %7871 = vmatmul.mubr.bf16.gmra.mrb[0].mxu0 %v1499
        %v7872 = vpop.f32.mrb[0].mxu0
        %v7873 = vadd.f32 0.0, %v7872
        %v7874 = vpop.f32.mrb[0].mxu0
        %v7875 = vpop.f32.mrb[0].mxu0
        %v7876 = vadd.f32 0.0, %v7875
        %v7877 = vpop.f32.mrb[0].mxu0
        %7878 = vmatprep.mubr.bf16.mxu0 0
        %7879 = vmatmul.mubr.bf16.gmra.mrb[0].mxu0 %v1502
        %v7880 = vpop.f32.mrb[0].mxu0
        %v7881 = vpop.f32.mrb[0].mxu0
        %v7882 = vpop.f32.mrb[0].mxu0
        %v7883 = vadd.f32 0.0, %v7882
        %v7884 = vpop.f32.mrb[0].mxu0
        %7885 = vmatprep.mubr.bf16.mxu0 0
        %7886 = vmatmul.mubr.bf16.gmra.mrb[0].mxu0 %v1505
        %v7887 = vpop.f32.mrb[0].mxu0
        %v7888 = vadd.f32 0.0, %v7887
        %v7889 = vpop.f32.mrb[0].mxu0
        %v7890 = vpop.f32.mrb[0].mxu0
        %v7891 = vpop.f32.mrb[0].mxu0
        %7892 = vmatprep.mubr.bf16.mxu0 0
        %7893 = vmatmul.mubr.bf16.gmra.mrb[0].mxu0 %v1508
        %v7894 = vpop.f32.mrb[0].mxu0
        %v7895 = vadd.f32 0.0, %v7894
        %v7896 = vpop.f32.mrb[0].mxu0
        %v7897 = vpop.f32.mrb[0].mxu0
        %v7898 = vadd.f32 0.0, %v7897
        %v7899 = vpop.f32.mrb[0].mxu0
        %7900 = vmatprep.mubr.bf16.mxu0 0
        %7901 = vmatmul.mubr.bf16.gmra.mrb[0].mxu0 %v1511
        %v7902 = vpop.f32.mrb[0].mxu0
        %v7903 = vpop.f32.mrb[0].mxu0
        %v7904 = vpop.f32.mrb[0].mxu0
        %v7905 = vadd.f32 0.0, %v7904
        %v7906 = vpop.f32.mrb[0].mxu0
        %7907 = vmatprep.mubr.bf16.mxu0 0
        %7908 = vmatmul.mubr.bf16.gmra.mrb[0].mxu0 %v1514
        %v7909 = vpop.f32.mrb[0].mxu0
        %v7910 = vadd.f32 0.0, %v7909
        %v7911 = vpop.f32.mrb[0].mxu0
        %v7912 = vpop.f32.mrb[0].mxu0
        %v7913 = vpop.f32.mrb[0].mxu0
        %7914 = vmatprep.mubr.bf16.mxu0 0
        %7915 = vmatmul.mubr.bf16.gmra.mrb[0].mxu0 %v1517
        %v7916 = vpop.f32.mrb[0].mxu0
        %v7917 = vadd.f32 0.0, %v7916
        %v7918 = vpop.f32.mrb[0].mxu0
        %v7919 = vpop.f32.mrb[0].mxu0
        %v7920 = vadd.f32 0.0, %v7919
        %v7921 = vpop.f32.mrb[0].mxu0
        %7922 = vmatprep.mubr.bf16.mxu0 0
        %7923 = vmatmul.mubr.bf16.gmra.mrb[0].mxu0 %v1520
        %v7924 = vpop.f32.mrb[0].mxu0
        %v7925 = vpop.f32.mrb[0].mxu0
        %v7926 = vpop.f32.mrb[0].mxu0
        %v7927 = vadd.f32 0.0, %v7926
        %v7928 = vpop.f32.mrb[0].mxu0
        %7929 = vmatprep.mubr.bf16.mxu0 0
        %7930 = vmatmul.mubr.bf16.gmra.mrb[0].mxu0 %v1523
        %v7931 = vpop.f32.mrb[0].mxu0
        %v7932 = vadd.f32 0.0, %v7931
        %v7933 = vpop.f32.mrb[0].mxu0
        %v7934 = vpop.f32.mrb[0].mxu0
        %v7935 = vpop.f32.mrb[0].mxu0
        %7936 = vmatprep.mubr.bf16.mxu0 0
        %7937 = vmatmul.mubr.bf16.gmra.mrb[0].mxu0 %v1526
        %v7938 = vpop.f32.mrb[0].mxu0
        %v7939 = vadd.f32 0.0, %v7938
        %v7940 = vpop.f32.mrb[0].mxu0
        %v7941 = vpop.f32.mrb[0].mxu0
        %v7942 = vadd.f32 0.0, %v7941
        %v7943 = vpop.f32.mrb[0].mxu0
        %7944 = vdwg.mxu0
        %v7945 = vrot.slane %v7516, 4
        %v7946 = vrot.slane %v7520, 4
        %v7947 = vrot.slane %v7525, 4
        %v7948 = vrot.slane %v7529, 4
        %v7949 = vrot.slane %v7535, 4
        %v7950 = vrot.slane %v7538, 4
        %v7951 = vrot.slane %v7544, 4
        %v7952 = vrot.slane %v7548, 4
        %v7953 = vrot.slane %v7553, 4
        %v7954 = vrot.slane %v7557, 4
        %v7955 = vrot.slane %v7563, 4
        %v7956 = vrot.slane %v7566, 4
        %v7957 = vrot.slane %v7572, 4
        %v7958 = vrot.slane %v7576, 4
        %v7959 = vrot.slane %v7581, 4
        %v7960 = vrot.slane %v7585, 4
        %v7961 = vrot.slane %v7591, 4
        %v7962 = vrot.slane %v7594, 4
        %v7963 = vrot.slane %v7600, 4
        %v7964 = vrot.slane %v7604, 4
        %v7965 = vrot.slane %v7609, 4
        %v7966 = vrot.slane %v7613, 4
        %v7967 = vrot.slane %v7619, 4
        %v7968 = vrot.slane %v7622, 4
        %v7969 = vrot.slane %v7628, 4
        %v7970 = vrot.slane %v7632, 4
        %v7971 = vrot.slane %v7637, 4
        %v7972 = vrot.slane %v7641, 4
        %v7973 = vrot.slane %v7647, 4
        %v7974 = vrot.slane %v7650, 4
        %v7975 = vrot.slane %v7656, 4
        %v7976 = vrot.slane %v7660, 4
        %v7977 = vrot.slane %v7665, 4
        %v7978 = vrot.slane %v7669, 4
        %v7979 = vrot.slane %v7675, 4
        %v7980 = vrot.slane %v7678, 4
        %v7981 = vrot.slane %v7684, 4
        %v7982 = vrot.slane %v7688, 4
        %v7983 = vrot.slane %v7693, 4
        %v7984 = vrot.slane %v7697, 4
        %v7985 = vrot.slane %v7703, 4
        %v7986 = vrot.slane %v7706, 4
        %v7987 = vrot.slane %v7712, 4
        %v7988 = vrot.slane %v7716, 4
        %v7989 = vrot.slane %v7721, 4
        %v7990 = vrot.slane %v7725, 4
        %v7991 = vrot.slane %v7731, 4
        %v7992 = vrot.slane %v7734, 4
        %v7993 = vsel %vm1091, %v7991, %v7992
        %v7994 = vsel %vm1091, %v7990, %v7991
        %v7995 = vsel %vm1091, %v7988, %v7989
        %v7996 = vsel %vm1091, %v7987, %v7988
        %v7997 = vsel %vm1091, %v7985, %v7986
        %v7998 = vsel %vm1091, %v7984, %v7985
        %v7999 = vsel %vm1091, %v7982, %v7983
        %v8000 = vsel %vm1091, %v7981, %v7982
        %v8001 = vsel %vm1091, %v7979, %v7980
        %v8002 = vsel %vm1091, %v7978, %v7979
        %v8003 = vsel %vm1091, %v7976, %v7977
        %v8004 = vsel %vm1091, %v7975, %v7976
        %v8005 = vsel %vm1091, %v7973, %v7974
        %v8006 = vsel %vm1091, %v7972, %v7973
        %v8007 = vsel %vm1091, %v7970, %v7971
        %v8008 = vsel %vm1091, %v7969, %v7970
        %v8009 = vsel %vm1091, %v7967, %v7968
        %v8010 = vsel %vm1091, %v7966, %v7967
        %v8011 = vsel %vm1091, %v7964, %v7965
        %v8012 = vsel %vm1091, %v7963, %v7964
        %v8013 = vsel %vm1091, %v7961, %v7962
        %v8014 = vsel %vm1091, %v7960, %v7961
        %v8015 = vsel %vm1091, %v7958, %v7959
        %v8016 = vsel %vm1091, %v7957, %v7958
        %v8017 = vsel %vm1091, %v7955, %v7956
        %v8018 = vsel %vm1091, %v7954, %v7955
        %v8019 = vsel %vm1091, %v7952, %v7953
        %v8020 = vsel %vm1091, %v7951, %v7952
        %v8021 = vsel %vm1091, %v7949, %v7950
        %v8022 = vsel %vm1091, %v7948, %v7949
        %v8023 = vsel %vm1091, %v7946, %v7947
        %v8024 = vsel %vm1091, %v7945, %v7946
        %v8025 = vadd.f32 %v7514, %v8024
        %v8026 = vadd.f32 %v7518, %v8023
        %v8027 = vadd.f32 %v7527, %v8022
        %v8028 = vadd.f32 %v7533, %v8021
        %v8029 = vadd.f32 %v7542, %v8020
        %v8030 = vadd.f32 %v7546, %v8019
        %v8031 = vadd.f32 %v7555, %v8018
        %v8032 = vadd.f32 %v7561, %v8017
        %v8033 = vadd.f32 %v7570, %v8016
        %v8034 = vadd.f32 %v7574, %v8015
        %v8035 = vadd.f32 %v7583, %v8014
        %v8036 = vadd.f32 %v7589, %v8013
        %v8037 = vadd.f32 %v7598, %v8012
        %v8038 = vadd.f32 %v7602, %v8011
        %v8039 = vadd.f32 %v7611, %v8010
        %v8040 = vadd.f32 %v7617, %v8009
        %v8041 = vadd.f32 %v7626, %v8008
        %v8042 = vadd.f32 %v7630, %v8007
        %v8043 = vadd.f32 %v7639, %v8006
        %v8044 = vadd.f32 %v7645, %v8005
        %v8045 = vadd.f32 %v7654, %v8004
        %v8046 = vadd.f32 %v7658, %v8003
        %v8047 = vadd.f32 %v7667, %v8002
        %v8048 = vadd.f32 %v7673, %v8001
        %v8049 = vadd.f32 %v7682, %v8000
        %v8050 = vadd.f32 %v7686, %v7999
        %v8051 = vadd.f32 %v7695, %v7998
        %v8052 = vadd.f32 %v7701, %v7997
        %v8053 = vadd.f32 %v7710, %v7996
        %v8054 = vadd.f32 %v7714, %v7995
        %v8055 = vadd.f32 %v7723, %v7994
        %v8056 = vadd.f32 %v7729, %v7993
        %v8057 = vadd.f32 %v8025, %v7773
        %v8058 = vadd.f32 %v8026, %v7778
        %v8059 = vadd.f32 %v8027, %v7785
        %v8060 = vadd.f32 %v8028, %v7788
        %v8061 = vadd.f32 %v8029, %v7795
        %v8062 = vadd.f32 %v8030, %v7800
        %v8063 = vadd.f32 %v8031, %v7807
        %v8064 = vadd.f32 %v8032, %v7810
        %v8065 = vadd.f32 %v8033, %v7817
        %v8066 = vadd.f32 %v8034, %v7822
        %v8067 = vadd.f32 %v8035, %v7829
        %v8068 = vadd.f32 %v8036, %v7832
        %v8069 = vadd.f32 %v8037, %v7839
        %v8070 = vadd.f32 %v8038, %v7844
        %v8071 = vadd.f32 %v8039, %v7851
        %v8072 = vadd.f32 %v8040, %v7854
        %v8073 = vadd.f32 %v8041, %v7861
        %v8074 = vadd.f32 %v8042, %v7866
        %v8075 = vadd.f32 %v8043, %v7873
        %v8076 = vadd.f32 %v8044, %v7876
        %v8077 = vadd.f32 %v8045, %v7883
        %v8078 = vadd.f32 %v8046, %v7888
        %v8079 = vadd.f32 %v8047, %v7895
        %v8080 = vadd.f32 %v8048, %v7898
        %v8081 = vadd.f32 %v8049, %v7905
        %v8082 = vadd.f32 %v8050, %v7910
        %v8083 = vadd.f32 %v8051, %v7917
        %v8084 = vadd.f32 %v8052, %v7920
        %v8085 = vadd.f32 %v8053, %v7927
        %v8086 = vadd.f32 %v8054, %v7932
        %v8087 = vadd.f32 %v8055, %v7939
        %v8088 = vadd.f32 %v8056, %v7942
        %v8089 = vadd.f32 %v7419, %v8057
        %v8090 = vadd.f32 %v7420, %v8058
        %v8091 = vadd.f32 %v7421, %v8059
        %v8092 = vadd.f32 %v7422, %v8060
        %v8093 = vadd.f32 %v7423, %v8061
        %v8094 = vadd.f32 %v7424, %v8062
        %v8095 = vadd.f32 %v7425, %v8063
        %v8096 = vadd.f32 %v7426, %v8064
        %v8097 = vadd.f32 %v7427, %v8065
        %v8098 = vadd.f32 %v7428, %v8066
        %v8099 = vadd.f32 %v7429, %v8067
        %v8100 = vadd.f32 %v7430, %v8068
        %v8101 = vadd.f32 %v7431, %v8069
        %v8102 = vadd.f32 %v7432, %v8070
        %v8103 = vadd.f32 %v7433, %v8071
        %v8104 = vadd.f32 %v7434, %v8072
        %v8105 = vadd.f32 %v7435, %v8073
        %v8106 = vadd.f32 %v7436, %v8074
        %v8107 = vadd.f32 %v7437, %v8075
        %v8108 = vadd.f32 %v7438, %v8076
        %v8109 = vadd.f32 %v7439, %v8077
        %v8110 = vadd.f32 %v7440, %v8078
        %v8111 = vadd.f32 %v7441, %v8079
        %v8112 = vadd.f32 %v7442, %v8080
        %v8113 = vadd.f32 %v7443, %v8081
        %v8114 = vadd.f32 %v7444, %v8082
        %v8115 = vadd.f32 %v7445, %v8083
        %v8116 = vadd.f32 %v7446, %v8084
        %v8117 = vadd.f32 %v7447, %v8085
        %v8118 = vadd.f32 %v7448, %v8086
        %v8119 = vadd.f32 %v7449, %v8087
        %v8120 = vadd.f32 %v7450, %v8088
        %v8121 = vld [vmem:[%s191 + $0x60] sm:$0xf]
        %v8122 = vld [vmem:[%s191 + $0x64] sm:$0xf]
        %v8123 = vld [vmem:[%s191 + $0x68] sm:$0xf]
        %v8124 = vld [vmem:[%s191 + $0x6c] sm:$0xf]
        %v8125 = vld [vmem:[%s191 + $0x70] sm:$0xf]
        %v8126 = vld [vmem:[%s191 + $0x74] sm:$0xf]
        %v8127 = vld [vmem:[%s191 + $0x78] sm:$0xf]
        %v8128 = vld [vmem:[%s191 + $0x7c] sm:$0xf]
        %v8129 = vld [vmem:[%s191 + $0x80] sm:$0xf]
        %v8130 = vld [vmem:[%s191 + $0x84] sm:$0xf]
        %v8131 = vld [vmem:[%s191 + $0x88] sm:$0xf]
        %v8132 = vld [vmem:[%s191 + $0x8c] sm:$0xf]
        %v8133 = vld [vmem:[%s191 + $0x90] sm:$0xf]
        %v8134 = vld [vmem:[%s191 + $0x94] sm:$0xf]
        %v8135 = vld [vmem:[%s191 + $0x98] sm:$0xf]
        %v8136 = vld [vmem:[%s191 + $0x9c] sm:$0xf]
        %v8137 = vld [vmem:[%s191 + $0xa0] sm:$0xf]
        %v8138 = vld [vmem:[%s191 + $0xa4] sm:$0xf]
        %v8139 = vld [vmem:[%s191 + $0xa8] sm:$0xf]
        %v8140 = vld [vmem:[%s191 + $0xac] sm:$0xf]
        %v8141 = vld [vmem:[%s191 + $0xb0] sm:$0xf]
        %v8142 = vld [vmem:[%s191 + $0xb4] sm:$0xf]
        %v8143 = vld [vmem:[%s191 + $0xb8] sm:$0xf]
        %v8144 = vld [vmem:[%s191 + $0xbc] sm:$0xf]
        %v8145 = vld [vmem:[%s191 + $0xc0] sm:$0xf]
        %v8146 = vld [vmem:[%s191 + $0xc4] sm:$0xf]
        %v8147 = vld [vmem:[%s191 + $0xc8] sm:$0xf]
        %v8148 = vld [vmem:[%s191 + $0xcc] sm:$0xf]
        %v8149 = vld [vmem:[%s191 + $0xd0] sm:$0xf]
        %v8150 = vld [vmem:[%s191 + $0xd4] sm:$0xf]
        %v8151 = vld [vmem:[%s191 + $0xd8] sm:$0xf]
        %v8152 = vld [vmem:[%s191 + $0xdc] sm:$0xf]
        %v8153 = vld [vmem:[%s191 + $0xe0] sm:$0xf]
        %v8154 = vld [vmem:[%s191 + $0xe4] sm:$0xf]
        %v8155 = vld [vmem:[%s191 + $0xe8] sm:$0xf]
        %v8156 = vld [vmem:[%s191 + $0xec] sm:$0xf]
        %v8157 = vld [vmem:[%s191 + $0xf0] sm:$0xf]
        %v8158 = vld [vmem:[%s191 + $0xf4] sm:$0xf]
        %v8159 = vld [vmem:[%s191 + $0xf8] sm:$0xf]
        %v8160 = vld [vmem:[%s191 + $0xfc] sm:$0xf]
        %v8161 = vld [vmem:[%s191 + $0x100] sm:$0xf]
        %v8162 = vld [vmem:[%s191 + $0x104] sm:$0xf]
        %v8163 = vld [vmem:[%s191 + $0x108] sm:$0xf]
        %v8164 = vld [vmem:[%s191 + $0x10c] sm:$0xf]
        %v8165 = vld [vmem:[%s191 + $0x110] sm:$0xf]
        %v8166 = vld [vmem:[%s191 + $0x114] sm:$0xf]
        %v8167 = vld [vmem:[%s191 + $0x118] sm:$0xf]
        %v8168 = vld [vmem:[%s191 + $0x11c] sm:$0xf]
        %s8169 = scalar_lea.vmem %s1, 48
        %v8170 = vld [vmem:[%s8169] sm:$0x3f]
        %v8219 = vunpack.c.l.b16 %v8121
        %v8220 = vunpack.c.l.b16 %v8122
        %v8221 = vunpack.c.l.b16 %v8123
        %v8222 = vunpack.c.l.b16 %v8124
        %v8223 = vunpack.c.l.b16 %v8125
        %v8224 = vunpack.c.l.b16 %v8126
        %v8225 = vunpack.c.l.b16 %v8127
        %v8226 = vunpack.c.l.b16 %v8128
        %v8227 = vunpack.c.l.b16 %v8129
        %v8228 = vunpack.c.l.b16 %v8130
        %v8229 = vunpack.c.l.b16 %v8131
        %v8230 = vunpack.c.l.b16 %v8132
        %v8231 = vunpack.c.l.b16 %v8133
        %v8232 = vunpack.c.l.b16 %v8134
        %v8233 = vunpack.c.l.b16 %v8135
        %v8234 = vunpack.c.l.b16 %v8136
        %v8235 = vunpack.c.l.b16 %v8137
        %v8236 = vunpack.c.l.b16 %v8138
        %v8237 = vunpack.c.l.b16 %v8139
        %v8238 = vunpack.c.l.b16 %v8140
        %v8239 = vunpack.c.l.b16 %v8141
        %v8240 = vunpack.c.l.b16 %v8142
        %v8241 = vunpack.c.l.b16 %v8143
        %v8242 = vunpack.c.l.b16 %v8144
        %v8243 = vunpack.c.l.b16 %v8145
        %v8244 = vunpack.c.l.b16 %v8146
        %v8245 = vunpack.c.l.b16 %v8147
        %v8246 = vunpack.c.l.b16 %v8148
        %v8247 = vunpack.c.l.b16 %v8149
        %v8248 = vunpack.c.l.b16 %v8150
        %v8249 = vunpack.c.l.b16 %v8151
        %v8250 = vunpack.c.l.b16 %v8152
        %v8251 = vunpack.c.l.b16 %v8153
        %v8252 = vunpack.c.l.b16 %v8154
        %v8253 = vunpack.c.l.b16 %v8155
        %v8254 = vunpack.c.l.b16 %v8156
        %v8255 = vunpack.c.l.b16 %v8157
        %v8256 = vunpack.c.l.b16 %v8158
        %v8257 = vunpack.c.l.b16 %v8159
        %v8258 = vunpack.c.l.b16 %v8160
        %v8259 = vunpack.c.l.b16 %v8161
        %v8260 = vunpack.c.l.b16 %v8162
        %v8261 = vunpack.c.l.b16 %v8163
        %v8262 = vunpack.c.l.b16 %v8164
        %v8263 = vunpack.c.l.b16 %v8165
        %v8264 = vunpack.c.l.b16 %v8166
        %v8265 = vunpack.c.l.b16 %v8167
        %v8266 = vunpack.c.l.b16 %v8168
        %v8267 = vpack.c.b16 %v8220, %v8219
        %v8268 = vpack.c.b16 %v8222, %v8221
        %v8269 = vpack.c.b16 %v8224, %v8223
        %v8270 = vpack.c.b16 %v8226, %v8225
        %v8271 = vpack.c.b16 %v8228, %v8227
        %v8272 = vpack.c.b16 %v8230, %v8229
        %v8273 = vpack.c.b16 %v8232, %v8231
        %v8274 = vpack.c.b16 %v8234, %v8233
        %v8275 = vpack.c.b16 %v8236, %v8235
        %v8276 = vpack.c.b16 %v8238, %v8237
        %v8277 = vpack.c.b16 %v8240, %v8239
        %v8278 = vpack.c.b16 %v8242, %v8241
        %v8279 = vpack.c.b16 %v8244, %v8243
        %v8280 = vpack.c.b16 %v8246, %v8245
        %v8281 = vpack.c.b16 %v8248, %v8247
        %v8282 = vpack.c.b16 %v8250, %v8249
        %v8283 = vpack.c.b16 %v8252, %v8251
        %v8284 = vpack.c.b16 %v8254, %v8253
        %v8285 = vpack.c.b16 %v8256, %v8255
        %v8286 = vpack.c.b16 %v8258, %v8257
        %v8287 = vpack.c.b16 %v8260, %v8259
        %v8288 = vpack.c.b16 %v8262, %v8261
        %v8289 = vpack.c.b16 %v8264, %v8263
        %v8290 = vpack.c.b16 %v8266, %v8265
        %v8292 = vcombine.high %v8170, %v8170
        %v8294 = vunpack.c.l.s4 1983009808
        %v8295 = vunpack.c.0.s8 %v8294
        %v8296 = vlaneseq
        %v8297 = vshrl.u32 %v8296, 7
        %v8298 = vsub.s32 %v8295, %v8297
        %v8299 = vrot.slane %v8170, %v8298
        %v8301 = vunpack.c.l.s4 1983009808
        %v8302 = vunpack.c.0.s8 %v8301
        %v8303 = vlaneseq
        %v8304 = vshrl.u32 %v8303, 7
        %v8305 = vsub.s32 %v8302, %v8304
        %v8306 = vrot.slane %v8292, %v8305
        %v8307 = vcombine.high %v8299, %v8299
        %v8309 = vsel %vm379, %v8267, 0
        %v8312 = vsel %vm379, %v8268, 0
        %v8315 = vsel %vm379, %v8269, 0
        %v8318 = vsel %vm379, %v8270, 0
        %v8321 = vsel %vm379, %v8271, 0
        %v8324 = vsel %vm379, %v8272, 0
        %v8327 = vsel %vm379, %v8273, 0
        %v8330 = vsel %vm379, %v8274, 0
        %v8333 = vsel %vm379, %v8275, 0
        %v8336 = vsel %vm379, %v8276, 0
        %v8339 = vsel %vm379, %v8277, 0
        %v8342 = vsel %vm379, %v8278, 0
        %v8345 = vsel %vm379, %v8279, 0
        %v8348 = vsel %vm379, %v8280, 0
        %v8351 = vsel %vm379, %v8281, 0
        %v8354 = vsel %vm379, %v8282, 0
        %v8357 = vsel %vm379, %v8283, 0
        %v8360 = vsel %vm379, %v8284, 0
        %v8363 = vsel %vm379, %v8285, 0
        %v8366 = vsel %vm379, %v8286, 0
        %v8369 = vsel %vm379, %v8287, 0
        %v8372 = vsel %vm379, %v8288, 0
        %v8375 = vsel %vm379, %v8289, 0
        %v8378 = vsel %vm379, %v8290, 0
        %v8381 = vsel %vm452, %v8299, 0
        %v8384 = vsel %vm452, %v8307, 0
        %v8387 = vsel %vm452, %v8306, 0
        %8389 = vmatprep.subr.bf16.mxu0 %v8384
        %8390 = vmatpush1.bf16.msra.mxu0 %v8381
        %8391 = vmatprep.subr.bf16.mxu0 0
        %8392 = vmatpush1.bf16.msra.mxu0 0
        %8393 = vmatprep.subr.bf16.mxu0 0
        %8394 = vmatpush1.bf16.msra.mxu0 0
        %8395 = vmatprep.subr.bf16.mxu0 0
        %8396 = vmatpush1.bf16.msra.mxu0 0
        %8397 = vmatprep.subr.bf16.mxu0 0
        %8398 = vmatpush1.bf16.msra.mxu0 0
        %8399 = vmatprep.subr.bf16.mxu0 0
        %8400 = vmatpush1.bf16.msra.mxu0 0
        %8401 = vmatprep.subr.bf16.mxu0 0
        %8402 = vmatpush1.bf16.msra.mxu0 0
        %8403 = vmatprep.subr.bf16.mxu0 0
        %8404 = vmatpush1.bf16.msra.mxu0 0
        %8405 = vmatprep.subr.bf16.mxu0 0
        %8406 = vmatpush1.bf16.msra.mxu0 0
        %8407 = vmatprep.subr.bf16.mxu0 0
        %8408 = vmatpush1.bf16.msra.mxu0 0
        %8409 = vmatprep.subr.bf16.mxu0 0
        %8410 = vmatpush1.bf16.msra.mxu0 0
        %8411 = vmatprep.subr.bf16.mxu0 0
        %8412 = vmatpush1.bf16.msra.mxu0 0
        %8413 = vmatprep.subr.bf16.mxu0 0
        %8414 = vmatpush1.bf16.msra.mxu0 0
        %8415 = vmatprep.subr.bf16.mxu0 0
        %8416 = vmatpush1.bf16.msra.mxu0 0
        %8417 = vmatprep.subr.bf16.mxu0 0
        %8418 = vmatpush1.bf16.msra.mxu0 0
        %8419 = vmatprep.subr.bf16.mxu0 0
        %8420 = vmatpush1.bf16.msra.mxu0 0
        %8421 = vmatprep.mubr.bf16.mxu0 0
        %8422 = vmatmul.mubr.bf16.gmra.mrb[0].mxu0 %v8309
        %v8423 = vpop.f32.mrb[0].mxu0
        %v8424 = vadd.f32 0.0, %v8423
        %v8425 = vpop.f32.mrb[0].mxu0
        %v8426 = vadd.f32 0.0, %v8425
        %v8427 = vpop.f32.mrb[0].mxu0
        %v8428 = vadd.f32 0.0, %v8427
        %v8429 = vpop.f32.mrb[0].mxu0
        %v8430 = vadd.f32 0.0, %v8429
        %8431 = vmatprep.mubr.bf16.mxu0 0
        %8432 = vmatmul.mubr.bf16.gmra.mrb[0].mxu0 %v8312
        %v8433 = vpop.f32.mrb[0].mxu0
        %v8434 = vpop.f32.mrb[0].mxu0
        %v8435 = vadd.f32 0.0, %v8434
        %v8436 = vpop.f32.mrb[0].mxu0
        %v8437 = vadd.f32 0.0, %v8436
        %v8438 = vpop.f32.mrb[0].mxu0
        %v8439 = vadd.f32 0.0, %v8438
        %8440 = vmatprep.mubr.bf16.mxu0 0
        %8441 = vmatmul.mubr.bf16.gmra.mrb[0].mxu0 %v8315
        %v8442 = vpop.f32.mrb[0].mxu0
        %v8443 = vadd.f32 0.0, %v8442
        %v8444 = vpop.f32.mrb[0].mxu0
        %v8445 = vadd.f32 0.0, %v8444
        %v8446 = vpop.f32.mrb[0].mxu0
        %v8447 = vpop.f32.mrb[0].mxu0
        %v8448 = vadd.f32 0.0, %v8447
        %8449 = vmatprep.mubr.bf16.mxu0 0
        %8450 = vmatmul.mubr.bf16.gmra.mrb[0].mxu0 %v8318
        %v8451 = vpop.f32.mrb[0].mxu0
        %v8452 = vadd.f32 0.0, %v8451
        %v8453 = vpop.f32.mrb[0].mxu0
        %v8454 = vadd.f32 0.0, %v8453
        %v8455 = vpop.f32.mrb[0].mxu0
        %v8456 = vadd.f32 0.0, %v8455
        %v8457 = vpop.f32.mrb[0].mxu0
        %v8458 = vadd.f32 0.0, %v8457
        %8459 = vmatprep.mubr.bf16.mxu0 0
        %8460 = vmatmul.mubr.bf16.gmra.mrb[0].mxu0 %v8321
        %v8461 = vpop.f32.mrb[0].mxu0
        %v8462 = vpop.f32.mrb[0].mxu0
        %v8463 = vadd.f32 0.0, %v8462
        %v8464 = vpop.f32.mrb[0].mxu0
        %v8465 = vadd.f32 0.0, %v8464
        %v8466 = vpop.f32.mrb[0].mxu0
        %v8467 = vadd.f32 0.0, %v8466
        %8468 = vmatprep.mubr.bf16.mxu0 0
        %8469 = vmatmul.mubr.bf16.gmra.mrb[0].mxu0 %v8324
        %v8470 = vpop.f32.mrb[0].mxu0
        %v8471 = vadd.f32 0.0, %v8470
        %v8472 = vpop.f32.mrb[0].mxu0
        %v8473 = vadd.f32 0.0, %v8472
        %v8474 = vpop.f32.mrb[0].mxu0
        %v8475 = vpop.f32.mrb[0].mxu0
        %v8476 = vadd.f32 0.0, %v8475
        %8477 = vmatprep.mubr.bf16.mxu0 0
        %8478 = vmatmul.mubr.bf16.gmra.mrb[0].mxu0 %v8327
        %v8479 = vpop.f32.mrb[0].mxu0
        %v8480 = vadd.f32 0.0, %v8479
        %v8481 = vpop.f32.mrb[0].mxu0
        %v8482 = vadd.f32 0.0, %v8481
        %v8483 = vpop.f32.mrb[0].mxu0
        %v8484 = vadd.f32 0.0, %v8483
        %v8485 = vpop.f32.mrb[0].mxu0
        %v8486 = vadd.f32 0.0, %v8485
        %8487 = vmatprep.mubr.bf16.mxu0 0
        %8488 = vmatmul.mubr.bf16.gmra.mrb[0].mxu0 %v8330
        %v8489 = vpop.f32.mrb[0].mxu0
        %v8490 = vpop.f32.mrb[0].mxu0
        %v8491 = vadd.f32 0.0, %v8490
        %v8492 = vpop.f32.mrb[0].mxu0
        %v8493 = vadd.f32 0.0, %v8492
        %v8494 = vpop.f32.mrb[0].mxu0
        %v8495 = vadd.f32 0.0, %v8494
        %8496 = vmatprep.mubr.bf16.mxu0 0
        %8497 = vmatmul.mubr.bf16.gmra.mrb[0].mxu0 %v8333
        %v8498 = vpop.f32.mrb[0].mxu0
        %v8499 = vadd.f32 0.0, %v8498
        %v8500 = vpop.f32.mrb[0].mxu0
        %v8501 = vadd.f32 0.0, %v8500
        %v8502 = vpop.f32.mrb[0].mxu0
        %v8503 = vpop.f32.mrb[0].mxu0
        %v8504 = vadd.f32 0.0, %v8503
        %8505 = vmatprep.mubr.bf16.mxu0 0
        %8506 = vmatmul.mubr.bf16.gmra.mrb[0].mxu0 %v8336
        %v8507 = vpop.f32.mrb[0].mxu0
        %v8508 = vadd.f32 0.0, %v8507
        %v8509 = vpop.f32.mrb[0].mxu0
        %v8510 = vadd.f32 0.0, %v8509
        %v8511 = vpop.f32.mrb[0].mxu0
        %v8512 = vadd.f32 0.0, %v8511
        %v8513 = vpop.f32.mrb[0].mxu0
        %v8514 = vadd.f32 0.0, %v8513
        %8515 = vmatprep.mubr.bf16.mxu0 0
        %8516 = vmatmul.mubr.bf16.gmra.mrb[0].mxu0 %v8339
        %v8517 = vpop.f32.mrb[0].mxu0
        %v8518 = vpop.f32.mrb[0].mxu0
        %v8519 = vadd.f32 0.0, %v8518
        %v8520 = vpop.f32.mrb[0].mxu0
        %v8521 = vadd.f32 0.0, %v8520
        %v8522 = vpop.f32.mrb[0].mxu0
        %v8523 = vadd.f32 0.0, %v8522
        %8524 = vmatprep.mubr.bf16.mxu0 0
        %8525 = vmatmul.mubr.bf16.gmra.mrb[0].mxu0 %v8342
        %v8526 = vpop.f32.mrb[0].mxu0
        %v8527 = vadd.f32 0.0, %v8526
        %v8528 = vpop.f32.mrb[0].mxu0
        %v8529 = vadd.f32 0.0, %v8528
        %v8530 = vpop.f32.mrb[0].mxu0
        %v8531 = vpop.f32.mrb[0].mxu0
        %v8532 = vadd.f32 0.0, %v8531
        %8533 = vmatprep.mubr.bf16.mxu0 0
        %8534 = vmatmul.mubr.bf16.gmra.mrb[0].mxu0 %v8345
        %v8535 = vpop.f32.mrb[0].mxu0
        %v8536 = vadd.f32 0.0, %v8535
        %v8537 = vpop.f32.mrb[0].mxu0
        %v8538 = vadd.f32 0.0, %v8537
        %v8539 = vpop.f32.mrb[0].mxu0
        %v8540 = vadd.f32 0.0, %v8539
        %v8541 = vpop.f32.mrb[0].mxu0
        %v8542 = vadd.f32 0.0, %v8541
        %8543 = vmatprep.mubr.bf16.mxu0 0
        %8544 = vmatmul.mubr.bf16.gmra.mrb[0].mxu0 %v8348
        %v8545 = vpop.f32.mrb[0].mxu0
        %v8546 = vpop.f32.mrb[0].mxu0
        %v8547 = vadd.f32 0.0, %v8546
        %v8548 = vpop.f32.mrb[0].mxu0
        %v8549 = vadd.f32 0.0, %v8548
        %v8550 = vpop.f32.mrb[0].mxu0
        %v8551 = vadd.f32 0.0, %v8550
        %8552 = vmatprep.mubr.bf16.mxu0 0
        %8553 = vmatmul.mubr.bf16.gmra.mrb[0].mxu0 %v8351
        %v8554 = vpop.f32.mrb[0].mxu0
        %v8555 = vadd.f32 0.0, %v8554
        %v8556 = vpop.f32.mrb[0].mxu0
        %v8557 = vadd.f32 0.0, %v8556
        %v8558 = vpop.f32.mrb[0].mxu0
        %v8559 = vpop.f32.mrb[0].mxu0
        %v8560 = vadd.f32 0.0, %v8559
        %8561 = vmatprep.mubr.bf16.mxu0 0
        %8562 = vmatmul.mubr.bf16.gmra.mrb[0].mxu0 %v8354
        %v8563 = vpop.f32.mrb[0].mxu0
        %v8564 = vadd.f32 0.0, %v8563
        %v8565 = vpop.f32.mrb[0].mxu0
        %v8566 = vadd.f32 0.0, %v8565
        %v8567 = vpop.f32.mrb[0].mxu0
        %v8568 = vadd.f32 0.0, %v8567
        %v8569 = vpop.f32.mrb[0].mxu0
        %v8570 = vadd.f32 0.0, %v8569
        %8571 = vmatprep.mubr.bf16.mxu0 0
        %8572 = vmatmul.mubr.bf16.gmra.mrb[0].mxu0 %v8357
        %v8573 = vpop.f32.mrb[0].mxu0
        %v8574 = vpop.f32.mrb[0].mxu0
        %v8575 = vadd.f32 0.0, %v8574
        %v8576 = vpop.f32.mrb[0].mxu0
        %v8577 = vadd.f32 0.0, %v8576
        %v8578 = vpop.f32.mrb[0].mxu0
        %v8579 = vadd.f32 0.0, %v8578
        %8580 = vmatprep.mubr.bf16.mxu0 0
        %8581 = vmatmul.mubr.bf16.gmra.mrb[0].mxu0 %v8360
        %v8582 = vpop.f32.mrb[0].mxu0
        %v8583 = vadd.f32 0.0, %v8582
        %v8584 = vpop.f32.mrb[0].mxu0
        %v8585 = vadd.f32 0.0, %v8584
        %v8586 = vpop.f32.mrb[0].mxu0
        %v8587 = vpop.f32.mrb[0].mxu0
        %v8588 = vadd.f32 0.0, %v8587
        %8589 = vmatprep.mubr.bf16.mxu0 0
        %8590 = vmatmul.mubr.bf16.gmra.mrb[0].mxu0 %v8363
        %v8591 = vpop.f32.mrb[0].mxu0
        %v8592 = vadd.f32 0.0, %v8591
        %v8593 = vpop.f32.mrb[0].mxu0
        %v8594 = vadd.f32 0.0, %v8593
        %v8595 = vpop.f32.mrb[0].mxu0
        %v8596 = vadd.f32 0.0, %v8595
        %v8597 = vpop.f32.mrb[0].mxu0
        %v8598 = vadd.f32 0.0, %v8597
        %8599 = vmatprep.mubr.bf16.mxu0 0
        %8600 = vmatmul.mubr.bf16.gmra.mrb[0].mxu0 %v8366
        %v8601 = vpop.f32.mrb[0].mxu0
        %v8602 = vpop.f32.mrb[0].mxu0
        %v8603 = vadd.f32 0.0, %v8602
        %v8604 = vpop.f32.mrb[0].mxu0
        %v8605 = vadd.f32 0.0, %v8604
        %v8606 = vpop.f32.mrb[0].mxu0
        %v8607 = vadd.f32 0.0, %v8606
        %8608 = vmatprep.mubr.bf16.mxu0 0
        %8609 = vmatmul.mubr.bf16.gmra.mrb[0].mxu0 %v8369
        %v8610 = vpop.f32.mrb[0].mxu0
        %v8611 = vadd.f32 0.0, %v8610
        %v8612 = vpop.f32.mrb[0].mxu0
        %v8613 = vadd.f32 0.0, %v8612
        %v8614 = vpop.f32.mrb[0].mxu0
        %v8615 = vpop.f32.mrb[0].mxu0
        %v8616 = vadd.f32 0.0, %v8615
        %8617 = vmatprep.mubr.bf16.mxu0 0
        %8618 = vmatmul.mubr.bf16.gmra.mrb[0].mxu0 %v8372
        %v8619 = vpop.f32.mrb[0].mxu0
        %v8620 = vadd.f32 0.0, %v8619
        %v8621 = vpop.f32.mrb[0].mxu0
        %v8622 = vadd.f32 0.0, %v8621
        %v8623 = vpop.f32.mrb[0].mxu0
        %v8624 = vadd.f32 0.0, %v8623
        %v8625 = vpop.f32.mrb[0].mxu0
        %v8626 = vadd.f32 0.0, %v8625
        %8627 = vmatprep.mubr.bf16.mxu0 0
        %8628 = vmatmul.mubr.bf16.gmra.mrb[0].mxu0 %v8375
        %v8629 = vpop.f32.mrb[0].mxu0
        %v8630 = vpop.f32.mrb[0].mxu0
        %v8631 = vadd.f32 0.0, %v8630
        %v8632 = vpop.f32.mrb[0].mxu0
        %v8633 = vadd.f32 0.0, %v8632
        %v8634 = vpop.f32.mrb[0].mxu0
        %v8635 = vadd.f32 0.0, %v8634
        %8636 = vmatprep.mubr.bf16.mxu0 0
        %8637 = vmatmul.mubr.bf16.gmra.mrb[0].mxu0 %v8378
        %v8638 = vpop.f32.mrb[0].mxu0
        %v8639 = vadd.f32 0.0, %v8638
        %v8640 = vpop.f32.mrb[0].mxu0
        %v8641 = vadd.f32 0.0, %v8640
        %v8642 = vpop.f32.mrb[0].mxu0
        %v8643 = vpop.f32.mrb[0].mxu0
        %v8644 = vadd.f32 0.0, %v8643
        %8645 = vdwg.mxu0
        %8646 = vmatprep.subr.bf16.mxu0 0
        %8647 = vmatpush1.bf16.msra.mxu0 %v8387
        %8648 = vmatprep.subr.bf16.mxu0 0
        %8649 = vmatpush1.bf16.msra.mxu0 0
        %8650 = vmatprep.subr.bf16.mxu0 0
        %8651 = vmatpush1.bf16.msra.mxu0 0
        %8652 = vmatprep.subr.bf16.mxu0 0
        %8653 = vmatpush1.bf16.msra.mxu0 0
        %8654 = vmatprep.subr.bf16.mxu0 0
        %8655 = vmatpush1.bf16.msra.mxu0 0
        %8656 = vmatprep.subr.bf16.mxu0 0
        %8657 = vmatpush1.bf16.msra.mxu0 0
        %8658 = vmatprep.subr.bf16.mxu0 0
        %8659 = vmatpush1.bf16.msra.mxu0 0
        %8660 = vmatprep.subr.bf16.mxu0 0
        %8661 = vmatpush1.bf16.msra.mxu0 0
        %8662 = vmatprep.subr.bf16.mxu0 0
        %8663 = vmatpush1.bf16.msra.mxu0 0
        %8664 = vmatprep.subr.bf16.mxu0 0
        %8665 = vmatpush1.bf16.msra.mxu0 0
        %8666 = vmatprep.subr.bf16.mxu0 0
        %8667 = vmatpush1.bf16.msra.mxu0 0
        %8668 = vmatprep.subr.bf16.mxu0 0
        %8669 = vmatpush1.bf16.msra.mxu0 0
        %8670 = vmatprep.subr.bf16.mxu0 0
        %8671 = vmatpush1.bf16.msra.mxu0 0
        %8672 = vmatprep.subr.bf16.mxu0 0
        %8673 = vmatpush1.bf16.msra.mxu0 0
        %8674 = vmatprep.subr.bf16.mxu0 0
        %8675 = vmatpush1.bf16.msra.mxu0 0
        %8676 = vmatprep.subr.bf16.mxu0 0
        %8677 = vmatpush1.bf16.msra.mxu0 0
        %8678 = vmatprep.mubr.bf16.mxu0 0
        %8679 = vmatmul.mubr.bf16.gmra.mrb[0].mxu0 %v8309
        %v8680 = vpop.f32.mrb[0].mxu0
        %v8681 = vpop.f32.mrb[0].mxu0
        %v8682 = vpop.f32.mrb[0].mxu0
        %v8683 = vadd.f32 0.0, %v8682
        %v8684 = vpop.f32.mrb[0].mxu0
        %8685 = vmatprep.mubr.bf16.mxu0 0
        %8686 = vmatmul.mubr.bf16.gmra.mrb[0].mxu0 %v8312
        %v8687 = vpop.f32.mrb[0].mxu0
        %v8688 = vadd.f32 0.0, %v8687
        %v8689 = vpop.f32.mrb[0].mxu0
        %v8690 = vpop.f32.mrb[0].mxu0
        %v8691 = vpop.f32.mrb[0].mxu0
        %8692 = vmatprep.mubr.bf16.mxu0 0
        %8693 = vmatmul.mubr.bf16.gmra.mrb[0].mxu0 %v8315
        %v8694 = vpop.f32.mrb[0].mxu0
        %v8695 = vadd.f32 0.0, %v8694
        %v8696 = vpop.f32.mrb[0].mxu0
        %v8697 = vpop.f32.mrb[0].mxu0
        %v8698 = vadd.f32 0.0, %v8697
        %v8699 = vpop.f32.mrb[0].mxu0
        %8700 = vmatprep.mubr.bf16.mxu0 0
        %8701 = vmatmul.mubr.bf16.gmra.mrb[0].mxu0 %v8318
        %v8702 = vpop.f32.mrb[0].mxu0
        %v8703 = vpop.f32.mrb[0].mxu0
        %v8704 = vpop.f32.mrb[0].mxu0
        %v8705 = vadd.f32 0.0, %v8704
        %v8706 = vpop.f32.mrb[0].mxu0
        %8707 = vmatprep.mubr.bf16.mxu0 0
        %8708 = vmatmul.mubr.bf16.gmra.mrb[0].mxu0 %v8321
        %v8709 = vpop.f32.mrb[0].mxu0
        %v8710 = vadd.f32 0.0, %v8709
        %v8711 = vpop.f32.mrb[0].mxu0
        %v8712 = vpop.f32.mrb[0].mxu0
        %v8713 = vpop.f32.mrb[0].mxu0
        %8714 = vmatprep.mubr.bf16.mxu0 0
        %8715 = vmatmul.mubr.bf16.gmra.mrb[0].mxu0 %v8324
        %v8716 = vpop.f32.mrb[0].mxu0
        %v8717 = vadd.f32 0.0, %v8716
        %v8718 = vpop.f32.mrb[0].mxu0
        %v8719 = vpop.f32.mrb[0].mxu0
        %v8720 = vadd.f32 0.0, %v8719
        %v8721 = vpop.f32.mrb[0].mxu0
        %8722 = vmatprep.mubr.bf16.mxu0 0
        %8723 = vmatmul.mubr.bf16.gmra.mrb[0].mxu0 %v8327
        %v8724 = vpop.f32.mrb[0].mxu0
        %v8725 = vpop.f32.mrb[0].mxu0
        %v8726 = vpop.f32.mrb[0].mxu0
        %v8727 = vadd.f32 0.0, %v8726
        %v8728 = vpop.f32.mrb[0].mxu0
        %8729 = vmatprep.mubr.bf16.mxu0 0
        %8730 = vmatmul.mubr.bf16.gmra.mrb[0].mxu0 %v8330
        %v8731 = vpop.f32.mrb[0].mxu0
        %v8732 = vadd.f32 0.0, %v8731
        %v8733 = vpop.f32.mrb[0].mxu0
        %v8734 = vpop.f32.mrb[0].mxu0
        %v8735 = vpop.f32.mrb[0].mxu0
        %8736 = vmatprep.mubr.bf16.mxu0 0
        %8737 = vmatmul.mubr.bf16.gmra.mrb[0].mxu0 %v8333
        %v8738 = vpop.f32.mrb[0].mxu0
        %v8739 = vadd.f32 0.0, %v8738
        %v8740 = vpop.f32.mrb[0].mxu0
        %v8741 = vpop.f32.mrb[0].mxu0
        %v8742 = vadd.f32 0.0, %v8741
        %v8743 = vpop.f32.mrb[0].mxu0
        %8744 = vmatprep.mubr.bf16.mxu0 0
        %8745 = vmatmul.mubr.bf16.gmra.mrb[0].mxu0 %v8336
        %v8746 = vpop.f32.mrb[0].mxu0
        %v8747 = vpop.f32.mrb[0].mxu0
        %v8748 = vpop.f32.mrb[0].mxu0
        %v8749 = vadd.f32 0.0, %v8748
        %v8750 = vpop.f32.mrb[0].mxu0
        %8751 = vmatprep.mubr.bf16.mxu0 0
        %8752 = vmatmul.mubr.bf16.gmra.mrb[0].mxu0 %v8339
        %v8753 = vpop.f32.mrb[0].mxu0
        %v8754 = vadd.f32 0.0, %v8753
        %v8755 = vpop.f32.mrb[0].mxu0
        %v8756 = vpop.f32.mrb[0].mxu0
        %v8757 = vpop.f32.mrb[0].mxu0
        %8758 = vmatprep.mubr.bf16.mxu0 0
        %8759 = vmatmul.mubr.bf16.gmra.mrb[0].mxu0 %v8342
        %v8760 = vpop.f32.mrb[0].mxu0
        %v8761 = vadd.f32 0.0, %v8760
        %v8762 = vpop.f32.mrb[0].mxu0
        %v8763 = vpop.f32.mrb[0].mxu0
        %v8764 = vadd.f32 0.0, %v8763
        %v8765 = vpop.f32.mrb[0].mxu0
        %8766 = vmatprep.mubr.bf16.mxu0 0
        %8767 = vmatmul.mubr.bf16.gmra.mrb[0].mxu0 %v8345
        %v8768 = vpop.f32.mrb[0].mxu0
        %v8769 = vpop.f32.mrb[0].mxu0
        %v8770 = vpop.f32.mrb[0].mxu0
        %v8771 = vadd.f32 0.0, %v8770
        %v8772 = vpop.f32.mrb[0].mxu0
        %8773 = vmatprep.mubr.bf16.mxu0 0
        %8774 = vmatmul.mubr.bf16.gmra.mrb[0].mxu0 %v8348
        %v8775 = vpop.f32.mrb[0].mxu0
        %v8776 = vadd.f32 0.0, %v8775
        %v8777 = vpop.f32.mrb[0].mxu0
        %v8778 = vpop.f32.mrb[0].mxu0
        %v8779 = vpop.f32.mrb[0].mxu0
        %8780 = vmatprep.mubr.bf16.mxu0 0
        %8781 = vmatmul.mubr.bf16.gmra.mrb[0].mxu0 %v8351
        %v8782 = vpop.f32.mrb[0].mxu0
        %v8783 = vadd.f32 0.0, %v8782
        %v8784 = vpop.f32.mrb[0].mxu0
        %v8785 = vpop.f32.mrb[0].mxu0
        %v8786 = vadd.f32 0.0, %v8785
        %v8787 = vpop.f32.mrb[0].mxu0
        %8788 = vmatprep.mubr.bf16.mxu0 0
        %8789 = vmatmul.mubr.bf16.gmra.mrb[0].mxu0 %v8354
        %v8790 = vpop.f32.mrb[0].mxu0
        %v8791 = vpop.f32.mrb[0].mxu0
        %v8792 = vpop.f32.mrb[0].mxu0
        %v8793 = vadd.f32 0.0, %v8792
        %v8794 = vpop.f32.mrb[0].mxu0
        %8795 = vmatprep.mubr.bf16.mxu0 0
        %8796 = vmatmul.mubr.bf16.gmra.mrb[0].mxu0 %v8357
        %v8797 = vpop.f32.mrb[0].mxu0
        %v8798 = vadd.f32 0.0, %v8797
        %v8799 = vpop.f32.mrb[0].mxu0
        %v8800 = vpop.f32.mrb[0].mxu0
        %v8801 = vpop.f32.mrb[0].mxu0
        %8802 = vmatprep.mubr.bf16.mxu0 0
        %8803 = vmatmul.mubr.bf16.gmra.mrb[0].mxu0 %v8360
        %v8804 = vpop.f32.mrb[0].mxu0
        %v8805 = vadd.f32 0.0, %v8804
        %v8806 = vpop.f32.mrb[0].mxu0
        %v8807 = vpop.f32.mrb[0].mxu0
        %v8808 = vadd.f32 0.0, %v8807
        %v8809 = vpop.f32.mrb[0].mxu0
        %8810 = vmatprep.mubr.bf16.mxu0 0
        %8811 = vmatmul.mubr.bf16.gmra.mrb[0].mxu0 %v8363
        %v8812 = vpop.f32.mrb[0].mxu0
        %v8813 = vpop.f32.mrb[0].mxu0
        %v8814 = vpop.f32.mrb[0].mxu0
        %v8815 = vadd.f32 0.0, %v8814
        %v8816 = vpop.f32.mrb[0].mxu0
        %8817 = vmatprep.mubr.bf16.mxu0 0
        %8818 = vmatmul.mubr.bf16.gmra.mrb[0].mxu0 %v8366
        %v8819 = vpop.f32.mrb[0].mxu0
        %v8820 = vadd.f32 0.0, %v8819
        %v8821 = vpop.f32.mrb[0].mxu0
        %v8822 = vpop.f32.mrb[0].mxu0
        %v8823 = vpop.f32.mrb[0].mxu0
        %8824 = vmatprep.mubr.bf16.mxu0 0
        %8825 = vmatmul.mubr.bf16.gmra.mrb[0].mxu0 %v8369
        %v8826 = vpop.f32.mrb[0].mxu0
        %v8827 = vadd.f32 0.0, %v8826
        %v8828 = vpop.f32.mrb[0].mxu0
        %v8829 = vpop.f32.mrb[0].mxu0
        %v8830 = vadd.f32 0.0, %v8829
        %v8831 = vpop.f32.mrb[0].mxu0
        %8832 = vmatprep.mubr.bf16.mxu0 0
        %8833 = vmatmul.mubr.bf16.gmra.mrb[0].mxu0 %v8372
        %v8834 = vpop.f32.mrb[0].mxu0
        %v8835 = vpop.f32.mrb[0].mxu0
        %v8836 = vpop.f32.mrb[0].mxu0
        %v8837 = vadd.f32 0.0, %v8836
        %v8838 = vpop.f32.mrb[0].mxu0
        %8839 = vmatprep.mubr.bf16.mxu0 0
        %8840 = vmatmul.mubr.bf16.gmra.mrb[0].mxu0 %v8375
        %v8841 = vpop.f32.mrb[0].mxu0
        %v8842 = vadd.f32 0.0, %v8841
        %v8843 = vpop.f32.mrb[0].mxu0
        %v8844 = vpop.f32.mrb[0].mxu0
        %v8845 = vpop.f32.mrb[0].mxu0
        %8846 = vmatprep.mubr.bf16.mxu0 0
        %8847 = vmatmul.mubr.bf16.gmra.mrb[0].mxu0 %v8378
        %v8848 = vpop.f32.mrb[0].mxu0
        %v8849 = vadd.f32 0.0, %v8848
        %v8850 = vpop.f32.mrb[0].mxu0
        %v8851 = vpop.f32.mrb[0].mxu0
        %v8852 = vadd.f32 0.0, %v8851
        %v8853 = vpop.f32.mrb[0].mxu0
        %8854 = vdwg.mxu0
        %v8855 = vrot.slane %v8426, 4
        %v8856 = vrot.slane %v8430, 4
        %v8857 = vrot.slane %v8435, 4
        %v8858 = vrot.slane %v8439, 4
        %v8859 = vrot.slane %v8445, 4
        %v8860 = vrot.slane %v8448, 4
        %v8861 = vrot.slane %v8454, 4
        %v8862 = vrot.slane %v8458, 4
        %v8863 = vrot.slane %v8463, 4
        %v8864 = vrot.slane %v8467, 4
        %v8865 = vrot.slane %v8473, 4
        %v8866 = vrot.slane %v8476, 4
        %v8867 = vrot.slane %v8482, 4
        %v8868 = vrot.slane %v8486, 4
        %v8869 = vrot.slane %v8491, 4
        %v8870 = vrot.slane %v8495, 4
        %v8871 = vrot.slane %v8501, 4
        %v8872 = vrot.slane %v8504, 4
        %v8873 = vrot.slane %v8510, 4
        %v8874 = vrot.slane %v8514, 4
        %v8875 = vrot.slane %v8519, 4
        %v8876 = vrot.slane %v8523, 4
        %v8877 = vrot.slane %v8529, 4
        %v8878 = vrot.slane %v8532, 4
        %v8879 = vrot.slane %v8538, 4
        %v8880 = vrot.slane %v8542, 4
        %v8881 = vrot.slane %v8547, 4
        %v8882 = vrot.slane %v8551, 4
        %v8883 = vrot.slane %v8557, 4
        %v8884 = vrot.slane %v8560, 4
        %v8885 = vrot.slane %v8566, 4
        %v8886 = vrot.slane %v8570, 4
        %v8887 = vrot.slane %v8575, 4
        %v8888 = vrot.slane %v8579, 4
        %v8889 = vrot.slane %v8585, 4
        %v8890 = vrot.slane %v8588, 4
        %v8891 = vrot.slane %v8594, 4
        %v8892 = vrot.slane %v8598, 4
        %v8893 = vrot.slane %v8603, 4
        %v8894 = vrot.slane %v8607, 4
        %v8895 = vrot.slane %v8613, 4
        %v8896 = vrot.slane %v8616, 4
        %v8897 = vrot.slane %v8622, 4
        %v8898 = vrot.slane %v8626, 4
        %v8899 = vrot.slane %v8631, 4
        %v8900 = vrot.slane %v8635, 4
        %v8901 = vrot.slane %v8641, 4
        %v8902 = vrot.slane %v8644, 4
        %v8903 = vsel %vm1091, %v8901, %v8902
        %v8904 = vsel %vm1091, %v8900, %v8901
        %v8905 = vsel %vm1091, %v8898, %v8899
        %v8906 = vsel %vm1091, %v8897, %v8898
        %v8907 = vsel %vm1091, %v8895, %v8896
        %v8908 = vsel %vm1091, %v8894, %v8895
        %v8909 = vsel %vm1091, %v8892, %v8893
        %v8910 = vsel %vm1091, %v8891, %v8892
        %v8911 = vsel %vm1091, %v8889, %v8890
        %v8912 = vsel %vm1091, %v8888, %v8889
        %v8913 = vsel %vm1091, %v8886, %v8887
        %v8914 = vsel %vm1091, %v8885, %v8886
        %v8915 = vsel %vm1091, %v8883, %v8884
        %v8916 = vsel %vm1091, %v8882, %v8883
        %v8917 = vsel %vm1091, %v8880, %v8881
        %v8918 = vsel %vm1091, %v8879, %v8880
        %v8919 = vsel %vm1091, %v8877, %v8878
        %v8920 = vsel %vm1091, %v8876, %v8877
        %v8921 = vsel %vm1091, %v8874, %v8875
        %v8922 = vsel %vm1091, %v8873, %v8874
        %v8923 = vsel %vm1091, %v8871, %v8872
        %v8924 = vsel %vm1091, %v8870, %v8871
        %v8925 = vsel %vm1091, %v8868, %v8869
        %v8926 = vsel %vm1091, %v8867, %v8868
        %v8927 = vsel %vm1091, %v8865, %v8866
        %v8928 = vsel %vm1091, %v8864, %v8865
        %v8929 = vsel %vm1091, %v8862, %v8863
        %v8930 = vsel %vm1091, %v8861, %v8862
        %v8931 = vsel %vm1091, %v8859, %v8860
        %v8932 = vsel %vm1091, %v8858, %v8859
        %v8933 = vsel %vm1091, %v8856, %v8857
        %v8934 = vsel %vm1091, %v8855, %v8856
        %v8935 = vadd.f32 %v8424, %v8934
        %v8936 = vadd.f32 %v8428, %v8933
        %v8937 = vadd.f32 %v8437, %v8932
        %v8938 = vadd.f32 %v8443, %v8931
        %v8939 = vadd.f32 %v8452, %v8930
        %v8940 = vadd.f32 %v8456, %v8929
        %v8941 = vadd.f32 %v8465, %v8928
        %v8942 = vadd.f32 %v8471, %v8927
        %v8943 = vadd.f32 %v8480, %v8926
        %v8944 = vadd.f32 %v8484, %v8925
        %v8945 = vadd.f32 %v8493, %v8924
        %v8946 = vadd.f32 %v8499, %v8923
        %v8947 = vadd.f32 %v8508, %v8922
        %v8948 = vadd.f32 %v8512, %v8921
        %v8949 = vadd.f32 %v8521, %v8920
        %v8950 = vadd.f32 %v8527, %v8919
        %v8951 = vadd.f32 %v8536, %v8918
        %v8952 = vadd.f32 %v8540, %v8917
        %v8953 = vadd.f32 %v8549, %v8916
        %v8954 = vadd.f32 %v8555, %v8915
        %v8955 = vadd.f32 %v8564, %v8914
        %v8956 = vadd.f32 %v8568, %v8913
        %v8957 = vadd.f32 %v8577, %v8912
        %v8958 = vadd.f32 %v8583, %v8911
        %v8959 = vadd.f32 %v8592, %v8910
        %v8960 = vadd.f32 %v8596, %v8909
        %v8961 = vadd.f32 %v8605, %v8908
        %v8962 = vadd.f32 %v8611, %v8907
        %v8963 = vadd.f32 %v8620, %v8906
        %v8964 = vadd.f32 %v8624, %v8905
        %v8965 = vadd.f32 %v8633, %v8904
        %v8966 = vadd.f32 %v8639, %v8903
        %v8967 = vadd.f32 %v8935, %v8683
        %v8968 = vadd.f32 %v8936, %v8688
        %v8969 = vadd.f32 %v8937, %v8695
        %v8970 = vadd.f32 %v8938, %v8698
        %v8971 = vadd.f32 %v8939, %v8705
        %v8972 = vadd.f32 %v8940, %v8710
        %v8973 = vadd.f32 %v8941, %v8717
        %v8974 = vadd.f32 %v8942, %v8720
        %v8975 = vadd.f32 %v8943, %v8727
        %v8976 = vadd.f32 %v8944, %v8732
        %v8977 = vadd.f32 %v8945, %v8739
        %v8978 = vadd.f32 %v8946, %v8742
        %v8979 = vadd.f32 %v8947, %v8749
        %v8980 = vadd.f32 %v8948, %v8754
        %v8981 = vadd.f32 %v8949, %v8761
        %v8982 = vadd.f32 %v8950, %v8764
        %v8983 = vadd.f32 %v8951, %v8771
        %v8984 = vadd.f32 %v8952, %v8776
        %v8985 = vadd.f32 %v8953, %v8783
        %v8986 = vadd.f32 %v8954, %v8786
        %v8987 = vadd.f32 %v8955, %v8793
        %v8988 = vadd.f32 %v8956, %v8798
        %v8989 = vadd.f32 %v8957, %v8805
        %v8990 = vadd.f32 %v8958, %v8808
        %v8991 = vadd.f32 %v8959, %v8815
        %v8992 = vadd.f32 %v8960, %v8820
        %v8993 = vadd.f32 %v8961, %v8827
        %v8994 = vadd.f32 %v8962, %v8830
        %v8995 = vadd.f32 %v8963, %v8837
        %v8996 = vadd.f32 %v8964, %v8842
        %v8997 = vadd.f32 %v8965, %v8849
        %v8998 = vadd.f32 %v8966, %v8852
        %v8999 = vadd.f32 %v8089, %v8967
        %v9000 = vadd.f32 %v8090, %v8968
        %v9001 = vadd.f32 %v8091, %v8969
        %v9002 = vadd.f32 %v8092, %v8970
        %v9003 = vadd.f32 %v8093, %v8971
        %v9004 = vadd.f32 %v8094, %v8972
        %v9005 = vadd.f32 %v8095, %v8973
        %v9006 = vadd.f32 %v8096, %v8974
        %v9007 = vadd.f32 %v8097, %v8975
        %v9008 = vadd.f32 %v8098, %v8976
        %v9009 = vadd.f32 %v8099, %v8977
        %v9010 = vadd.f32 %v8100, %v8978
        %v9011 = vadd.f32 %v8101, %v8979
        %v9012 = vadd.f32 %v8102, %v8980
        %v9013 = vadd.f32 %v8103, %v8981
        %v9014 = vadd.f32 %v8104, %v8982
        %v9015 = vadd.f32 %v8105, %v8983
        %v9016 = vadd.f32 %v8106, %v8984
        %v9017 = vadd.f32 %v8107, %v8985
        %v9018 = vadd.f32 %v8108, %v8986
        %v9019 = vadd.f32 %v8109, %v8987
        %v9020 = vadd.f32 %v8110, %v8988
        %v9021 = vadd.f32 %v8111, %v8989
        %v9022 = vadd.f32 %v8112, %v8990
        %v9023 = vadd.f32 %v8113, %v8991
        %v9024 = vadd.f32 %v8114, %v8992
        %v9025 = vadd.f32 %v8115, %v8993
        %v9026 = vadd.f32 %v8116, %v8994
        %v9027 = vadd.f32 %v8117, %v8995
        %v9028 = vadd.f32 %v8118, %v8996
        %v9029 = vadd.f32 %v8119, %v8997
        %v9030 = vadd.f32 %v8120, %v8998
        %v9031 = vld [vmem:[%s2] sm:$0x1]
        %v9033 = vlaneseq
        %v9034 = vshrl.u32 %v9033, 7
        %v9035 = vsub.s32 0, %v9034
        %v9036 = vrot.slane %v9031, %v9035
        %v9038 = vadd.f32 %v8999, %v9036
        %v9039 = vadd.f32 %v9000, %v9036
        %v9040 = vadd.f32 %v9001, %v9036
        %v9041 = vadd.f32 %v9002, %v9036
        %v9042 = vadd.f32 %v9003, %v9036
        %v9043 = vadd.f32 %v9004, %v9036
        %v9044 = vadd.f32 %v9005, %v9036
        %v9045 = vadd.f32 %v9006, %v9036
        %v9046 = vadd.f32 %v9007, %v9036
        %v9047 = vadd.f32 %v9008, %v9036
        %v9048 = vadd.f32 %v9009, %v9036
        %v9049 = vadd.f32 %v9010, %v9036
        %v9050 = vadd.f32 %v9011, %v9036
        %v9051 = vadd.f32 %v9012, %v9036
        %v9052 = vadd.f32 %v9013, %v9036
        %v9053 = vadd.f32 %v9014, %v9036
        %v9054 = vadd.f32 %v9015, %v9036
        %v9055 = vadd.f32 %v9016, %v9036
        %v9056 = vadd.f32 %v9017, %v9036
        %v9057 = vadd.f32 %v9018, %v9036
        %v9058 = vadd.f32 %v9019, %v9036
        %v9059 = vadd.f32 %v9020, %v9036
        %v9060 = vadd.f32 %v9021, %v9036
        %v9061 = vadd.f32 %v9022, %v9036
        %v9062 = vadd.f32 %v9023, %v9036
        %v9063 = vadd.f32 %v9024, %v9036
        %v9064 = vadd.f32 %v9025, %v9036
        %v9065 = vadd.f32 %v9026, %v9036
        %v9066 = vadd.f32 %v9027, %v9036
        %v9067 = vadd.f32 %v9028, %v9036
        %v9068 = vadd.f32 %v9029, %v9036
        %v9069 = vadd.f32 %v9030, %v9036
        %9070 = vst [vmem:[%s183] sm:$0xff] %v9038
        %9071 = vst [vmem:[%s183 + $0x8] sm:$0xff] %v9039
        %9072 = vst [vmem:[%s183 + $0x10] sm:$0xff] %v9040
        %9073 = vst [vmem:[%s183 + $0x18] sm:$0xff] %v9041
        %9074 = vst [vmem:[%s183 + $0x20] sm:$0xff] %v9042
        %9075 = vst [vmem:[%s183 + $0x28] sm:$0xff] %v9043
        %9076 = vst [vmem:[%s183 + $0x30] sm:$0xff] %v9044
        %9077 = vst [vmem:[%s183 + $0x38] sm:$0xff] %v9045
        %9078 = vst [vmem:[%s183 + $0x40] sm:$0xff] %v9046
        %9079 = vst [vmem:[%s183 + $0x48] sm:$0xff] %v9047
        %9080 = vst [vmem:[%s183 + $0x50] sm:$0xff] %v9048
        %9081 = vst [vmem:[%s183 + $0x58] sm:$0xff] %v9049
        %9082 = vst [vmem:[%s183 + $0x60] sm:$0xff] %v9050
        %9083 = vst [vmem:[%s183 + $0x68] sm:$0xff] %v9051
        %9084 = vst [vmem:[%s183 + $0x70] sm:$0xff] %v9052
        %9085 = vst [vmem:[%s183 + $0x78] sm:$0xff] %v9053
        %9086 = vst [vmem:[%s183 + $0x80] sm:$0xff] %v9054
        %9087 = vst [vmem:[%s183 + $0x88] sm:$0xff] %v9055
        %9088 = vst [vmem:[%s183 + $0x90] sm:$0xff] %v9056
        %9089 = vst [vmem:[%s183 + $0x98] sm:$0xff] %v9057
        %9090 = vst [vmem:[%s183 + $0xa0] sm:$0xff] %v9058
        %9091 = vst [vmem:[%s183 + $0xa8] sm:$0xff] %v9059
        %9092 = vst [vmem:[%s183 + $0xb0] sm:$0xff] %v9060
        %9093 = vst [vmem:[%s183 + $0xb8] sm:$0xff] %v9061
        %9094 = vst [vmem:[%s183 + $0xc0] sm:$0xff] %v9062
        %9095 = vst [vmem:[%s183 + $0xc8] sm:$0xff] %v9063
        %9096 = vst [vmem:[%s183 + $0xd0] sm:$0xff] %v9064
        %9097 = vst [vmem:[%s183 + $0xd8] sm:$0xff] %v9065
        %9098 = vst [vmem:[%s183 + $0xe0] sm:$0xff] %v9066
        %9099 = vst [vmem:[%s183 + $0xe8] sm:$0xff] %v9067
        %9100 = vst [vmem:[%s183 + $0xf0] sm:$0xff] %v9068
        %9101 = vst [vmem:[%s183 + $0xf8] sm:$0xff] %v9069
        %s9102 = sand.u32 %s107, 1
        %s9103 = scalar_lea.sflag [#allocation3], %s9102
        %s9104 = sand.u32 %s107, 1
        %s9105 = smul.addr %s9104, 256
        %s9106 = scalar_lea.vmem [#allocation2], %s9105
        // Predicated region
        $region33: #{tpu_custom_call.1} parent=31 // pred_check
          %p9107 = pneg %p117
        $region34: #{tpu_custom_call.1} parent=31 // pred_check_branch
          %9109 = sbr.rel (%p9107) target = $region36
        $region35: #{tpu_custom_call.1} parent=31 // pred_region
          %s9111 = ssub.s32 4096, 4096
          %9112 = vsyncadd %s9103, %s9111
          %s9113 = smul.addr %s21, 32
          %s9114 = smul.addr %s9113, 128
          %s9115 = scalar_lea.hbm %s3, %s9114
          %s9116 = sshll.u32 %s9106, 4
          %s9117 = int_to_ptr.vmem [resolvable:$true] %s9116
          %9122 = dma.vmem_to_hbm [thread:$0]  %s9117, 4096, %s9115, %s9103, 128, 128, 8
        $region36: #{tpu_custom_call.1} parent=31 // pred_fallthru
          _
      $region32: #{tpu_custom_call.1} parent=5 // pred_fallthru
        _
      %p9123 = scmp.le.s32.totalorder 2, %s12
      // Predicated region
      $region37: #{tpu_custom_call.1} parent=5 // pred_check
        %p9124 = pneg %p9123
      $region38: #{tpu_custom_call.1} parent=5 // pred_check_branch
        %9126 = sbr.rel (%p9124) target = $region40
      $region39: #{tpu_custom_call.1} parent=5 // pred_region
        %s9127 = ssub.s32 %s12, 2
        // Predicated region
        $region41: #{tpu_custom_call.1} parent=39 // pred_check
          %p9128 = pneg %p123
        $region42: #{tpu_custom_call.1} parent=39 // pred_check_branch
          %9130 = sbr.rel (%p9128) target = $region44
        $region43: #{tpu_custom_call.1} parent=39 // pred_region
          %s9131 = sand.u32 %s108, 1
          %s9132 = scalar_lea.sflag [#allocation3], %s9131
          %s9133 = sand.u32 %s108, 1
          %s9134 = smul.addr %s9133, 256
          %s9135 = scalar_lea.vmem [#allocation2], %s9134
          %9136 = dma.done %s9132, 4096
        $region44: #{tpu_custom_call.1} parent=39 // pred_fallthru
          _
      $region40: #{tpu_custom_call.1} parent=5 // pred_fallthru
        _
    $region6: #{tpu_custom_call.1} parent=1 // loop_footer
      %s16 = sadd.s32 1, %s12
    $region7: #{tpu_custom_call.1} parent=1 // loop_footer_branch
      %11 = sbr.rel target = $region3
    $region8: #{tpu_custom_call.1} parent=1 // loop_exit
      _
    %9137 = vsyncpa [#allocation3], 1
    %s9138 = scalar_lea.sflag [#allocation3], 1
    %9139 = vsyncpa %s9138, 1

</llo_original>
